<compile_context>
chip_gen: v7x
topology: tpu7x:2x2x1
jax: 0.10.0
libtpu: 0.0.40
codegen_flags: <defaults>
</compile_context>

<pallas_src>
import functools

import jax
import jax.numpy as jnp
from jax import lax
from jax.experimental import pallas as pl
from jax.experimental.pallas import tpu as pltpu


# ---------------------------------------------------------------------------
# kernels
# ---------------------------------------------------------------------------

def _conv1_kernel(x_ref, w_ref, shift_ref, o_ref, *, hout, wout, cin, cout, hb):
    """Dense 3x3 stride-2 conv (tiny cin=3) + folded BN + ReLU, one image.

    x_ref:     (1, 4*hb, wb, cin)   phase-split padded input (see _phase_split)
    w_ref:     (3, 3, cin, cout)    conv weight with BN scale folded in
    shift_ref: (1, cout)            folded BN shift
    o_ref:     (1, hout*wout, cout)
    """
    x = x_ref[0]
    wmat = w_ref[...]
    acc = jnp.zeros((hout * wout, cout), jnp.float32)
    for kh in range(3):
        for kw in range(3):
            p = (kh % 2) * 2 + (kw % 2)            # phase = 2*row_par + col_par
            r0, c0 = kh // 2, kw // 2
            row0 = p * hb + r0
            tap = x[row0:row0 + hout, c0:c0 + wout, :]        # (hout, wout, cin)
            acc = acc + jnp.dot(tap.reshape(hout * wout, cin), wmat[kh, kw],
                                preferred_element_type=jnp.float32)
    y = acc + shift_ref[0]
    o_ref[0] = jnp.maximum(y, 0.0)


def _dw_block_kernel(x_ref, wdw_ref, wpw_ref, shift_ref, o_ref, *,
                     stride, mult, hout, wout, cin, cout, hb):
    """Depthwise 3x3 -> pointwise 1x1 (BN folded) -> ReLU, one image.

    x_ref:     (1, n_phase*hb, wb, cin)  phase-split (s=2) or padded (s=1) input
    wdw_ref:   (mult, 3, 3, cin)   depthwise taps per channel-multiplier slice
    wpw_ref:   (mult, cin, cout)   pointwise weight, bf16, BN scale folded
    shift_ref: (1, cout)           folded BN shift
    o_ref:     (1, hout*wout, cout)
    """
    x = x_ref[0]
    wdw = wdw_ref[...]
    wpw = wpw_ref[...]

    # Slice the 9 shifted tap views once; reuse across the multiplier loop.
    taps = []
    for kh in range(3):
        for kw in range(3):
            if stride == 2:
                p = (kh % 2) * 2 + (kw % 2)
                r0, c0 = kh // 2, kw // 2
            else:
                p, r0, c0 = 0, kh, kw
            row0 = p * hb + r0
            taps.append((kh, kw, x[row0:row0 + hout, c0:c0 + wout, :]))

    y = jnp.zeros((hout * wout, cout), jnp.float32)
    for m in range(mult):
        # --- depthwise accumulation on the VPU (f32, weights held per-lane) ---
        acc = jnp.zeros((hout, wout, cin), jnp.float32)
        for kh, kw, tap in taps:
            acc = acc + tap * wdw[m, kh, kw]
        # --- pointwise 1x1 slice for this multiplier on the MXU (bf16 in, f32 acc)
        y = y + jnp.dot(acc.reshape(hout * wout, cin).astype(jnp.bfloat16),
                        wpw[m], preferred_element_type=jnp.float32)
    y = y + shift_ref[0]          # BN shift (scale already folded into wpw)
    o_ref[0] = jnp.maximum(y, 0.0)


# ---------------------------------------------------------------------------
# wrappers (layout glue in plain JAX)
# ---------------------------------------------------------------------------

def _fold_bn(gamma, beta, mean, var, eps):
    scale = gamma / jnp.sqrt(var + eps)
    return scale, beta - mean * scale


def _phase_split(x_nhwc):
    """Pad spatially by 1 and pixel-unshuffle into the 4 (row, col) parity
    phases stacked along H:  (N, H, W, C) -> (N, 4*(H//2+1), W//2+1, C),
    so a stride-2 3x3 tap (kh, kw) becomes the unit-stride slice
    rows [p*hb + kh//2 : +hout], cols [kw//2 : +wout], p = 2*(kh%2) + (kw%2)."""
    n, h, w, c = x_nhwc.shape
    assert h % 2 == 0 and w % 2 == 0
    hb, wb = h // 2 + 1, w // 2 + 1
    xp = jnp.pad(x_nhwc, ((0, 0), (1, 1), (1, 1), (0, 0)))
    xp = xp.reshape(n, hb, 2, wb, 2, c)
    xp = jnp.transpose(xp, (0, 2, 4, 1, 3, 5))        # (N, rp, cp, hb, wb, C)
    return xp.reshape(n, 4 * hb, wb, c), hb, wb


def conv3x3_s2_bn_relu(x_nhwc, w_oihw, gamma, beta, mean, var, eps=1e-5):
    n, h, w, cin = x_nhwc.shape
    cout = w_oihw.shape[0]
    hout, wout = h // 2, w // 2
    xph, hb, wb = _phase_split(x_nhwc)

    scale, shift = _fold_bn(gamma, beta, mean, var, eps)
    wk = jnp.transpose(w_oihw, (2, 3, 1, 0)) * scale          # (3,3,cin,cout)
    shift2 = shift.reshape(1, cout)

    kernel = functools.partial(_conv1_kernel, hout=hout, wout=wout,
                               cin=cin, cout=cout, hb=hb)
    out = pl.pallas_call(
        kernel,
        out_shape=jax.ShapeDtypeStruct((n, hout * wout, cout), jnp.float32),
        grid_spec=pltpu.PrefetchScalarGridSpec(
            num_scalar_prefetch=0,
            grid=(n,),
            in_specs=[
                pl.BlockSpec((1, 4 * hb, wb, cin), lambda i: (i, 0, 0, 0)),
                pl.BlockSpec((3, 3, cin, cout), lambda i: (0, 0, 0, 0)),
                pl.BlockSpec((1, cout), lambda i: (0, 0)),
            ],
            out_specs=pl.BlockSpec((1, hout * wout, cout), lambda i: (i, 0, 0)),
        ),
        compiler_params=pltpu.CompilerParams(
            dimension_semantics=("parallel",)),
    )(xph, wk, shift2)
    return out.reshape(n, hout, wout, cout)


def dwconv_bn_relu(x_nhwc, w_dw, w_pw, gamma, beta, mean, var, *,
                   stride, eps=1e-5):
    n, h, w, cin = x_nhwc.shape
    cout = w_dw.shape[0]
    assert cout % cin == 0
    mult = cout // cin

    scale, shift = _fold_bn(gamma, beta, mean, var, eps)

    # Depthwise taps regrouped as (mult, 3, 3, cin):
    # PyTorch grouping: output channel oc = c*mult + m reads input channel c.
    wdw = jnp.transpose(w_dw[:, 0], (1, 2, 0))                 # (3, 3, cout)
    wdw = wdw.reshape(3, 3, cin, mult)
    wdw = jnp.transpose(wdw, (3, 0, 1, 2))                     # (mult, 3, 3, cin)

    # Pointwise weight with BN scale folded, regrouped as (mult, cin, cout), bf16.
    wpw = w_pw[:, :, 0, 0] * scale[:, None]                    # (cout, cout_in)
    wpw = jnp.transpose(wpw)                                   # (cout_in, cout)
    wpw = wpw.reshape(cin, mult, cout)
    wpw = jnp.transpose(wpw, (1, 0, 2)).astype(jnp.bfloat16)   # (mult, cin, cout)

    shift2 = shift.reshape(1, cout)

    if stride == 2:
        hout, wout = h // 2, w // 2
        xin, hb, wb = _phase_split(x_nhwc)
        n_phase = 4
    else:
        hout, wout = h, w
        xin = jnp.pad(x_nhwc, ((0, 0), (1, 1), (1, 1), (0, 0)))
        hb, wb = h + 2, w + 2
        n_phase = 1

    kernel = functools.partial(_dw_block_kernel, stride=stride, mult=mult,
                               hout=hout, wout=wout, cin=cin, cout=cout, hb=hb)
    out = pl.pallas_call(
        kernel,
        out_shape=jax.ShapeDtypeStruct((n, hout * wout, cout), jnp.float32),
        grid_spec=pltpu.PrefetchScalarGridSpec(
            num_scalar_prefetch=0,
            grid=(n,),
            in_specs=[
                pl.BlockSpec((1, n_phase * hb, wb, cin), lambda i: (i, 0, 0, 0)),
                pl.BlockSpec((mult, 3, 3, cin), lambda i: (0, 0, 0, 0)),
                pl.BlockSpec((mult, cin, cout), lambda i: (0, 0, 0)),
                pl.BlockSpec((1, cout), lambda i: (0, 0)),
            ],
            out_specs=pl.BlockSpec((1, hout * wout, cout), lambda i: (i, 0, 0)),
        ),
        compiler_params=pltpu.CompilerParams(
            dimension_semantics=("parallel",)),
    )(xin, wdw, wpw, shift2)
    return out.reshape(n, hout, wout, cout)


def spatial_path_forward(x_nchw, p, eps=1e-5):
    x = jnp.transpose(x_nchw, (0, 2, 3, 1))                    # NCHW -> NHWC
    x = conv3x3_s2_bn_relu(x, p["conv1_w"], p["bn1_g"], p["bn1_b"],
                           p["bn1_m"], p["bn1_v"], eps)
    x = dwconv_bn_relu(x, p["dw1_w"], p["pw1_w"], p["bnd1_g"], p["bnd1_b"],
                       p["bnd1_m"], p["bnd1_v"], stride=2, eps=eps)
    x = dwconv_bn_relu(x, p["dw2_w"], p["pw2_w"], p["bnd2_g"], p["bnd2_b"],
                       p["bnd2_m"], p["bnd2_v"], stride=2, eps=eps)
    x = dwconv_bn_relu(x, p["dw3_w"], p["pw3_w"], p["bnd3_g"], p["bnd3_b"],
                       p["bnd3_m"], p["bnd3_v"], stride=1, eps=eps)
    return jnp.transpose(x, (0, 3, 1, 2))                      # NHWC -> NCHW


# ---------------------------------------------------------------------------
# pure-JAX reference (f32 throughout)
# ---------------------------------------------------------------------------

def _bn_eval(x, g, b, m, v, eps=1e-5):
    return (x - m[None, :, None, None]) * (
        g[None, :, None, None] / jnp.sqrt(v[None, :, None, None] + eps)
    ) + b[None, :, None, None]


def _reference(x, p, eps=1e-5):
    dn = ("NCHW", "OIHW", "NCHW")
    y = lax.conv_general_dilated(x, p["conv1_w"], (2, 2), ((1, 1), (1, 1)),
                                 dimension_numbers=dn)
    y = jnp.maximum(_bn_eval(y, p["bn1_g"], p["bn1_b"], p["bn1_m"],
                             p["bn1_v"], eps), 0.0)
    for name, stride in (("1", 2), ("2", 2), ("3", 1)):
        cin = y.shape[1]
        y = lax.conv_general_dilated(y, p[f"dw{name}_w"], (stride, stride),
                                     ((1, 1), (1, 1)), dimension_numbers=dn,
                                     feature_group_count=cin)
        y = lax.conv_general_dilated(y, p[f"pw{name}_w"], (1, 1),
                                     ((0, 0), (0, 0)), dimension_numbers=dn)
        y = jnp.maximum(_bn_eval(y, p[f"bnd{name}_g"], p[f"bnd{name}_b"],
                                 p[f"bnd{name}_m"], p[f"bnd{name}_v"], eps),
                        0.0)
    return y


if __name__ == "__main__":
    N, H, W = 2, 32, 32
    key = jax.random.PRNGKey(0)
    ks = iter(jax.random.split(key, 32))

    def normal(shape, scl):
        return scl * jax.random.normal(next(ks), shape, jnp.float32)

    def bn_params(c):
        return (1.0 + 0.1 * jax.random.normal(next(ks), (c,), jnp.float32),
                0.1 * jax.random.normal(next(ks), (c,), jnp.float32),
                0.1 * jax.random.normal(next(ks), (c,), jnp.float32),
                1.0 + 0.5 * jax.random.uniform(next(ks), (c,), jnp.float32))

    p = {}
    p["conv1_w"] = normal((32, 3, 3, 3), 1.0 / (27.0 ** 0.5))
    p["bn1_g"], p["bn1_b"], p["bn1_m"], p["bn1_v"] = bn_params(32)

    for name, (cin, cout) in (("1", (32, 64)), ("2", (64, 128)),
                              ("3", (128, 128))):
        p[f"dw{name}_w"] = normal((cout, 1, 3, 3), 1.0 / 3.0)
        p[f"pw{name}_w"] = normal((cout, cout, 1, 1), 1.0 / (cout ** 0.5))
        (p[f"bnd{name}_g"], p[f"bnd{name}_b"],
         p[f"bnd{name}_m"], p[f"bnd{name}_v"]) = bn_params(cout)

    x = jax.random.normal(next(ks), (N, 3, H, W), jnp.float32)

    fwd = jax.jit(spatial_path_forward)
    out = jax.block_until_ready(fwd(x, p))

    ref = _reference(x, p)
    assert out.shape == (N, 128, H // 8, W // 8), out.shape
    max_err = float(jnp.max(jnp.abs(out - ref)))
    # bf16 MXU operands (f32 accumulate) on the pointwise convs -> ~1% budget.
    assert jnp.allclose(out, ref, atol=3e-2, rtol=3e-2), max_err

    print("KERNEL_OK")
</pallas_src>

<mosaic_0001>
module attributes {stable_mosaic.version = 11 : i64} {
  func.func @_conv1_kernel(%arg0: i32, %arg1: memref<1x68x17x3xf32, #tpu.memory_space<vmem>>, %arg2: memref<3x3x3x32xf32, #tpu.memory_space<vmem>>, %arg3: memref<1x32xf32, #tpu.memory_space<vmem>>, %arg4: memref<1x256x32xf32, #tpu.memory_space<vmem>>) attributes {dimension_semantics = [#tpu.dimension_semantics<parallel>], iteration_bounds = array<i64: 2>, scalar_prefetch = 0 : i64, scratch_operands = 0 : i64, tpu.core_type = #tpu.core_type<tc>, window_params = [{transform_indices = @transform_0, window_bounds = array<i64: 1, 68, 17, 3>}, {pipeline_mode = #tpu.pipeline_mode<synchronous>, transform_indices = @transform_1, window_bounds = array<i64: 3, 3, 3, 32>}, {pipeline_mode = #tpu.pipeline_mode<synchronous>, transform_indices = @transform_2, window_bounds = array<i64: 1, 32>}, {transform_indices = @transform_3, window_bounds = array<i64: 1, 256, 32>}]} {
    %c0 = arith.constant 0 : index
    %c0_0 = arith.constant 0 : index
    %c0_1 = arith.constant 0 : index
    %c0_2 = arith.constant 0 : index
    %0 = vector.load %arg1[%c0, %c0_0, %c0_1, %c0_2] : memref<1x68x17x3xf32, #tpu.memory_space<vmem>>, vector<1x68x17x3xf32>
    %1 = vector.shape_cast %0 : vector<1x68x17x3xf32> to vector<68x17x3xf32>
    %c0_3 = arith.constant 0 : index
    %c0_4 = arith.constant 0 : index
    %c0_5 = arith.constant 0 : index
    %c0_6 = arith.constant 0 : index
    %2 = vector.load %arg2[%c0_3, %c0_4, %c0_5, %c0_6] : memref<3x3x3x32xf32, #tpu.memory_space<vmem>>, vector<3x3x3x32xf32>
    %cst = arith.constant 0.000000e+00 : f32
    %3 = vector.broadcast %cst : f32 to vector<256x32xf32>
    %4 = vector.extract_strided_slice %1 {offsets = [0, 0, 0], sizes = [16, 16, 3], strides = [1, 1, 1]} : vector<68x17x3xf32> to vector<16x16x3xf32>
    %5 = vector.shape_cast %4 : vector<16x16x3xf32> to vector<256x3xf32>
    %6 = vector.extract_strided_slice %2 {offsets = [0, 0, 0, 0], sizes = [1, 1, 3, 32], strides = [1, 1, 1, 1]} : vector<3x3x3x32xf32> to vector<1x1x3x32xf32>
    %7 = vector.shape_cast %6 : vector<1x1x3x32xf32> to vector<3x32xf32>
    %cst_7 = arith.constant dense<0.000000e+00> : vector<256x32xf32>
    %8 = tpu.matmul %5, %7, %cst_7 {dimension_numbers = #tpu.dot_dimension_numbers<[1], [0], [0], [1], [0, 0, 1, 1], [], []>} : vector<256x3xf32>, vector<3x32xf32>, vector<256x32xf32> -> vector<256x32xf32>
    %9 = arith.addf %3, %8 : vector<256x32xf32>
    %10 = vector.extract_strided_slice %1 {offsets = [17, 0, 0], sizes = [16, 16, 3], strides = [1, 1, 1]} : vector<68x17x3xf32> to vector<16x16x3xf32>
    %11 = vector.shape_cast %10 : vector<16x16x3xf32> to vector<256x3xf32>
    %12 = vector.extract_strided_slice %2 {offsets = [0, 1, 0, 0], sizes = [1, 1, 3, 32], strides = [1, 1, 1, 1]} : vector<3x3x3x32xf32> to vector<1x1x3x32xf32>
    %13 = vector.shape_cast %12 : vector<1x1x3x32xf32> to vector<3x32xf32>
    %cst_8 = arith.constant dense<0.000000e+00> : vector<256x32xf32>
    %14 = tpu.matmul %11, %13, %cst_8 {dimension_numbers = #tpu.dot_dimension_numbers<[1], [0], [0], [1], [0, 0, 1, 1], [], []>} : vector<256x3xf32>, vector<3x32xf32>, vector<256x32xf32> -> vector<256x32xf32>
    %15 = arith.addf %9, %14 : vector<256x32xf32>
    %16 = vector.extract_strided_slice %1 {offsets = [0, 1, 0], sizes = [16, 16, 3], strides = [1, 1, 1]} : vector<68x17x3xf32> to vector<16x16x3xf32>
    %17 = vector.shape_cast %16 : vector<16x16x3xf32> to vector<256x3xf32>
    %18 = vector.extract_strided_slice %2 {offsets = [0, 2, 0, 0], sizes = [1, 1, 3, 32], strides = [1, 1, 1, 1]} : vector<3x3x3x32xf32> to vector<1x1x3x32xf32>
    %19 = vector.shape_cast %18 : vector<1x1x3x32xf32> to vector<3x32xf32>
    %cst_9 = arith.constant dense<0.000000e+00> : vector<256x32xf32>
    %20 = tpu.matmul %17, %19, %cst_9 {dimension_numbers = #tpu.dot_dimension_numbers<[1], [0], [0], [1], [0, 0, 1, 1], [], []>} : vector<256x3xf32>, vector<3x32xf32>, vector<256x32xf32> -> vector<256x32xf32>
    %21 = arith.addf %15, %20 : vector<256x32xf32>
    %22 = vector.extract_strided_slice %1 {offsets = [34, 0, 0], sizes = [16, 16, 3], strides = [1, 1, 1]} : vector<68x17x3xf32> to vector<16x16x3xf32>
    %23 = vector.shape_cast %22 : vector<16x16x3xf32> to vector<256x3xf32>
    %24 = vector.extract_strided_slice %2 {offsets = [1, 0, 0, 0], sizes = [1, 1, 3, 32], strides = [1, 1, 1, 1]} : vector<3x3x3x32xf32> to vector<1x1x3x32xf32>
    %25 = vector.shape_cast %24 : vector<1x1x3x32xf32> to vector<3x32xf32>
    %cst_10 = arith.constant dense<0.000000e+00> : vector<256x32xf32>
    %26 = tpu.matmul %23, %25, %cst_10 {dimension_numbers = #tpu.dot_dimension_numbers<[1], [0], [0], [1], [0, 0, 1, 1], [], []>} : vector<256x3xf32>, vector<3x32xf32>, vector<256x32xf32> -> vector<256x32xf32>
    %27 = arith.addf %21, %26 : vector<256x32xf32>
    %28 = vector.extract_strided_slice %1 {offsets = [51, 0, 0], sizes = [16, 16, 3], strides = [1, 1, 1]} : vector<68x17x3xf32> to vector<16x16x3xf32>
    %29 = vector.shape_cast %28 : vector<16x16x3xf32> to vector<256x3xf32>
    %30 = vector.extract_strided_slice %2 {offsets = [1, 1, 0, 0], sizes = [1, 1, 3, 32], strides = [1, 1, 1, 1]} : vector<3x3x3x32xf32> to vector<1x1x3x32xf32>
    %31 = vector.shape_cast %30 : vector<1x1x3x32xf32> to vector<3x32xf32>
    %cst_11 = arith.constant dense<0.000000e+00> : vector<256x32xf32>
    %32 = tpu.matmul %29, %31, %cst_11 {dimension_numbers = #tpu.dot_dimension_numbers<[1], [0], [0], [1], [0, 0, 1, 1], [], []>} : vector<256x3xf32>, vector<3x32xf32>, vector<256x32xf32> -> vector<256x32xf32>
    %33 = arith.addf %27, %32 : vector<256x32xf32>
    %34 = vector.extract_strided_slice %1 {offsets = [34, 1, 0], sizes = [16, 16, 3], strides = [1, 1, 1]} : vector<68x17x3xf32> to vector<16x16x3xf32>
    %35 = vector.shape_cast %34 : vector<16x16x3xf32> to vector<256x3xf32>
    %36 = vector.extract_strided_slice %2 {offsets = [1, 2, 0, 0], sizes = [1, 1, 3, 32], strides = [1, 1, 1, 1]} : vector<3x3x3x32xf32> to vector<1x1x3x32xf32>
    %37 = vector.shape_cast %36 : vector<1x1x3x32xf32> to vector<3x32xf32>
    %cst_12 = arith.constant dense<0.000000e+00> : vector<256x32xf32>
    %38 = tpu.matmul %35, %37, %cst_12 {dimension_numbers = #tpu.dot_dimension_numbers<[1], [0], [0], [1], [0, 0, 1, 1], [], []>} : vector<256x3xf32>, vector<3x32xf32>, vector<256x32xf32> -> vector<256x32xf32>
    %39 = arith.addf %33, %38 : vector<256x32xf32>
    %40 = vector.extract_strided_slice %1 {offsets = [1, 0, 0], sizes = [16, 16, 3], strides = [1, 1, 1]} : vector<68x17x3xf32> to vector<16x16x3xf32>
    %41 = vector.shape_cast %40 : vector<16x16x3xf32> to vector<256x3xf32>
    %42 = vector.extract_strided_slice %2 {offsets = [2, 0, 0, 0], sizes = [1, 1, 3, 32], strides = [1, 1, 1, 1]} : vector<3x3x3x32xf32> to vector<1x1x3x32xf32>
    %43 = vector.shape_cast %42 : vector<1x1x3x32xf32> to vector<3x32xf32>
    %cst_13 = arith.constant dense<0.000000e+00> : vector<256x32xf32>
    %44 = tpu.matmul %41, %43, %cst_13 {dimension_numbers = #tpu.dot_dimension_numbers<[1], [0], [0], [1], [0, 0, 1, 1], [], []>} : vector<256x3xf32>, vector<3x32xf32>, vector<256x32xf32> -> vector<256x32xf32>
    %45 = arith.addf %39, %44 : vector<256x32xf32>
    %46 = vector.extract_strided_slice %1 {offsets = [18, 0, 0], sizes = [16, 16, 3], strides = [1, 1, 1]} : vector<68x17x3xf32> to vector<16x16x3xf32>
    %47 = vector.shape_cast %46 : vector<16x16x3xf32> to vector<256x3xf32>
    %48 = vector.extract_strided_slice %2 {offsets = [2, 1, 0, 0], sizes = [1, 1, 3, 32], strides = [1, 1, 1, 1]} : vector<3x3x3x32xf32> to vector<1x1x3x32xf32>
    %49 = vector.shape_cast %48 : vector<1x1x3x32xf32> to vector<3x32xf32>
    %cst_14 = arith.constant dense<0.000000e+00> : vector<256x32xf32>
    %50 = tpu.matmul %47, %49, %cst_14 {dimension_numbers = #tpu.dot_dimension_numbers<[1], [0], [0], [1], [0, 0, 1, 1], [], []>} : vector<256x3xf32>, vector<3x32xf32>, vector<256x32xf32> -> vector<256x32xf32>
    %51 = arith.addf %45, %50 : vector<256x32xf32>
    %52 = vector.extract_strided_slice %1 {offsets = [1, 1, 0], sizes = [16, 16, 3], strides = [1, 1, 1]} : vector<68x17x3xf32> to vector<16x16x3xf32>
    %53 = vector.shape_cast %52 : vector<16x16x3xf32> to vector<256x3xf32>
    %54 = vector.extract_strided_slice %2 {offsets = [2, 2, 0, 0], sizes = [1, 1, 3, 32], strides = [1, 1, 1, 1]} : vector<3x3x3x32xf32> to vector<1x1x3x32xf32>
    %55 = vector.shape_cast %54 : vector<1x1x3x32xf32> to vector<3x32xf32>
    %cst_15 = arith.constant dense<0.000000e+00> : vector<256x32xf32>
    %56 = tpu.matmul %53, %55, %cst_15 {dimension_numbers = #tpu.dot_dimension_numbers<[1], [0], [0], [1], [0, 0, 1, 1], [], []>} : vector<256x3xf32>, vector<3x32xf32>, vector<256x32xf32> -> vector<256x32xf32>
    %57 = arith.addf %51, %56 : vector<256x32xf32>
    %c0_16 = arith.constant 0 : index
    %c0_17 = arith.constant 0 : index
    %58 = vector.load %arg3[%c0_16, %c0_17] : memref<1x32xf32, #tpu.memory_space<vmem>>, vector<1x32xf32>
    %59 = vector.shape_cast %58 : vector<1x32xf32> to vector<32xf32>
    %60 = vector.shape_cast %59 : vector<32xf32> to vector<1x32xf32>
    %61 = vector.broadcast %60 : vector<1x32xf32> to vector<256x32xf32>
    %62 = arith.addf %57, %61 : vector<256x32xf32>
    %cst_18 = arith.constant 0.000000e+00 : f32
    %63 = vector.broadcast %cst_18 : f32 to vector<256x32xf32>
    %64 = arith.maximumf %62, %63 : vector<256x32xf32>
    %c0_19 = arith.constant 0 : index
    %c0_20 = arith.constant 0 : index
    %c0_21 = arith.constant 0 : index
    %65 = vector.load %arg4[%c0_19, %c0_20, %c0_21] : memref<1x256x32xf32, #tpu.memory_space<vmem>>, vector<1x256x32xf32>
    %66 = vector.shape_cast %65 : vector<1x256x32xf32> to vector<256x32xf32>
    %67 = vector.shape_cast %64 : vector<256x32xf32> to vector<1x256x32xf32>
    tpu.vector_store %arg4[%c0_19, %c0_20, %c0_21], %67 {strides = array<i32>} : memref<1x256x32xf32, #tpu.memory_space<vmem>>, vector<1x256x32xf32>,
    return
  }
  func.func @transform_0(%arg0: i32) -> (i32, i32, i32, i32) {
    %c0_i32 = arith.constant 0 : i32
    %c0_i32_0 = arith.constant 0 : i32
    %c0_i32_1 = arith.constant 0 : i32
    %c0_i32_2 = arith.constant 0 : i32
    return %arg0, %c0_i32, %c0_i32_0, %c0_i32_1 : i32, i32, i32, i32
  }
  func.func @transform_1(%arg0: i32) -> (i32, i32, i32, i32) {
    %c0_i32 = arith.constant 0 : i32
    %c0_i32_0 = arith.constant 0 : i32
    %c0_i32_1 = arith.constant 0 : i32
    %c0_i32_2 = arith.constant 0 : i32
    %c0_i32_3 = arith.constant 0 : i32
    return %c0_i32, %c0_i32_0, %c0_i32_1, %c0_i32_2 : i32, i32, i32, i32
  }
  func.func @transform_2(%arg0: i32) -> (i32, i32) {
    %c0_i32 = arith.constant 0 : i32
    %c0_i32_0 = arith.constant 0 : i32
    %c0_i32_1 = arith.constant 0 : i32
    return %c0_i32, %c0_i32_0 : i32, i32
  }
  func.func @transform_3(%arg0: i32) -> (i32, i32, i32) {
    %c0_i32 = arith.constant 0 : i32
    %c0_i32_0 = arith.constant 0 : i32
    %c0_i32_1 = arith.constant 0 : i32
    return %arg0, %c0_i32, %c0_i32_0 : i32, i32, i32
  }
}

module attributes {stable_mosaic.version = 11 : i64} {
  func.func @_dw_block_kernel(%arg0: i32, %arg1: memref<1x36x9x32xf32, #tpu.memory_space<vmem>>, %arg2: memref<2x3x3x32xf32, #tpu.memory_space<vmem>>, %arg3: memref<2x32x64xbf16, #tpu.memory_space<vmem>>, %arg4: memref<1x64xf32, #tpu.memory_space<vmem>>, %arg5: memref<1x64x64xf32, #tpu.memory_space<vmem>>) attributes {dimension_semantics = [#tpu.dimension_semantics<parallel>], iteration_bounds = array<i64: 2>, scalar_prefetch = 0 : i64, scratch_operands = 0 : i64, tpu.core_type = #tpu.core_type<tc>, window_params = [{transform_indices = @transform_0, window_bounds = array<i64: 1, 36, 9, 32>}, {pipeline_mode = #tpu.pipeline_mode<synchronous>, transform_indices = @transform_1, window_bounds = array<i64: 2, 3, 3, 32>}, {pipeline_mode = #tpu.pipeline_mode<synchronous>, transform_indices = @transform_2, window_bounds = array<i64: 2, 32, 64>}, {pipeline_mode = #tpu.pipeline_mode<synchronous>, transform_indices = @transform_3, window_bounds = array<i64: 1, 64>}, {transform_indices = @transform_4, window_bounds = array<i64: 1, 64, 64>}]} {
    %c0 = arith.constant 0 : index
    %c0_0 = arith.constant 0 : index
    %c0_1 = arith.constant 0 : index
    %c0_2 = arith.constant 0 : index
    %0 = vector.load %arg1[%c0, %c0_0, %c0_1, %c0_2] : memref<1x36x9x32xf32, #tpu.memory_space<vmem>>, vector<1x36x9x32xf32>
    %1 = vector.shape_cast %0 : vector<1x36x9x32xf32> to vector<36x9x32xf32>
    %c0_3 = arith.constant 0 : index
    %c0_4 = arith.constant 0 : index
    %c0_5 = arith.constant 0 : index
    %c0_6 = arith.constant 0 : index
    %2 = vector.load %arg2[%c0_3, %c0_4, %c0_5, %c0_6] : memref<2x3x3x32xf32, #tpu.memory_space<vmem>>, vector<2x3x3x32xf32>
    %c0_7 = arith.constant 0 : index
    %c0_8 = arith.constant 0 : index
    %c0_9 = arith.constant 0 : index
    %3 = vector.load %arg3[%c0_7, %c0_8, %c0_9] : memref<2x32x64xbf16, #tpu.memory_space<vmem>>, vector<2x32x64xbf16>
    %4 = vector.extract_strided_slice %1 {offsets = [0, 0, 0], sizes = [8, 8, 32], strides = [1, 1, 1]} : vector<36x9x32xf32> to vector<8x8x32xf32>
    %5 = vector.extract_strided_slice %1 {offsets = [9, 0, 0], sizes = [8, 8, 32], strides = [1, 1, 1]} : vector<36x9x32xf32> to vector<8x8x32xf32>
    %6 = vector.extract_strided_slice %1 {offsets = [0, 1, 0], sizes = [8, 8, 32], strides = [1, 1, 1]} : vector<36x9x32xf32> to vector<8x8x32xf32>
    %7 = vector.extract_strided_slice %1 {offsets = [18, 0, 0], sizes = [8, 8, 32], strides = [1, 1, 1]} : vector<36x9x32xf32> to vector<8x8x32xf32>
    %8 = vector.extract_strided_slice %1 {offsets = [27, 0, 0], sizes = [8, 8, 32], strides = [1, 1, 1]} : vector<36x9x32xf32> to vector<8x8x32xf32>
    %9 = vector.extract_strided_slice %1 {offsets = [18, 1, 0], sizes = [8, 8, 32], strides = [1, 1, 1]} : vector<36x9x32xf32> to vector<8x8x32xf32>
    %10 = vector.extract_strided_slice %1 {offsets = [1, 0, 0], sizes = [8, 8, 32], strides = [1, 1, 1]} : vector<36x9x32xf32> to vector<8x8x32xf32>
    %11 = vector.extract_strided_slice %1 {offsets = [10, 0, 0], sizes = [8, 8, 32], strides = [1, 1, 1]} : vector<36x9x32xf32> to vector<8x8x32xf32>
    %12 = vector.extract_strided_slice %1 {offsets = [1, 1, 0], sizes = [8, 8, 32], strides = [1, 1, 1]} : vector<36x9x32xf32> to vector<8x8x32xf32>
    %cst = arith.constant 0.000000e+00 : f32
    %13 = vector.broadcast %cst : f32 to vector<64x64xf32>
    %cst_10 = arith.constant 0.000000e+00 : f32
    %14 = vector.broadcast %cst_10 : f32 to vector<8x8x32xf32>
    %15 = vector.extract_strided_slice %2 {offsets = [0, 0, 0, 0], sizes = [1, 1, 1, 32], strides = [1, 1, 1, 1]} : vector<2x3x3x32xf32> to vector<1x1x1x32xf32>
    %16 = vector.shape_cast %15 : vector<1x1x1x32xf32> to vector<32xf32>
    %17 = vector.shape_cast %16 : vector<32xf32> to vector<1x1x32xf32>
    %18 = vector.broadcast %17 : vector<1x1x32xf32> to vector<8x8x32xf32>
    %19 = arith.mulf %4, %18 : vector<8x8x32xf32>
    %20 = arith.addf %14, %19 : vector<8x8x32xf32>
    %21 = vector.extract_strided_slice %2 {offsets = [0, 0, 1, 0], sizes = [1, 1, 1, 32], strides = [1, 1, 1, 1]} : vector<2x3x3x32xf32> to vector<1x1x1x32xf32>
    %22 = vector.shape_cast %21 : vector<1x1x1x32xf32> to vector<32xf32>
    %23 = vector.shape_cast %22 : vector<32xf32> to vector<1x1x32xf32>
    %24 = vector.broadcast %23 : vector<1x1x32xf32> to vector<8x8x32xf32>
    %25 = arith.mulf %5, %24 : vector<8x8x32xf32>
    %26 = arith.addf %20, %25 : vector<8x8x32xf32>
    %27 = vector.extract_strided_slice %2 {offsets = [0, 0, 2, 0], sizes = [1, 1, 1, 32], strides = [1, 1, 1, 1]} : vector<2x3x3x32xf32> to vector<1x1x1x32xf32>
    %28 = vector.shape_cast %27 : vector<1x1x1x32xf32> to vector<32xf32>
    %29 = vector.shape_cast %28 : vector<32xf32> to vector<1x1x32xf32>
    %30 = vector.broadcast %29 : vector<1x1x32xf32> to vector<8x8x32xf32>
    %31 = arith.mulf %6, %30 : vector<8x8x32xf32>
    %32 = arith.addf %26, %31 : vector<8x8x32xf32>
    %33 = vector.extract_strided_slice %2 {offsets = [0, 1, 0, 0], sizes = [1, 1, 1, 32], strides = [1, 1, 1, 1]} : vector<2x3x3x32xf32> to vector<1x1x1x32xf32>
    %34 = vector.shape_cast %33 : vector<1x1x1x32xf32> to vector<32xf32>
    %35 = vector.shape_cast %34 : vector<32xf32> to vector<1x1x32xf32>
    %36 = vector.broadcast %35 : vector<1x1x32xf32> to vector<8x8x32xf32>
    %37 = arith.mulf %7, %36 : vector<8x8x32xf32>
    %38 = arith.addf %32, %37 : vector<8x8x32xf32>
    %39 = vector.extract_strided_slice %2 {offsets = [0, 1, 1, 0], sizes = [1, 1, 1, 32], strides = [1, 1, 1, 1]} : vector<2x3x3x32xf32> to vector<1x1x1x32xf32>
    %40 = vector.shape_cast %39 : vector<1x1x1x32xf32> to vector<32xf32>
    %41 = vector.shape_cast %40 : vector<32xf32> to vector<1x1x32xf32>
    %42 = vector.broadcast %41 : vector<1x1x32xf32> to vector<8x8x32xf32>
    %43 = arith.mulf %8, %42 : vector<8x8x32xf32>
    %44 = arith.addf %38, %43 : vector<8x8x32xf32>
    %45 = vector.extract_strided_slice %2 {offsets = [0, 1, 2, 0], sizes = [1, 1, 1, 32], strides = [1, 1, 1, 1]} : vector<2x3x3x32xf32> to vector<1x1x1x32xf32>
    %46 = vector.shape_cast %45 : vector<1x1x1x32xf32> to vector<32xf32>
    %47 = vector.shape_cast %46 : vector<32xf32> to vector<1x1x32xf32>
    %48 = vector.broadcast %47 : vector<1x1x32xf32> to vector<8x8x32xf32>
    %49 = arith.mulf %9, %48 : vector<8x8x32xf32>
    %50 = arith.addf %44, %49 : vector<8x8x32xf32>
    %51 = vector.extract_strided_slice %2 {offsets = [0, 2, 0, 0], sizes = [1, 1, 1, 32], strides = [1, 1, 1, 1]} : vector<2x3x3x32xf32> to vector<1x1x1x32xf32>
    %52 = vector.shape_cast %51 : vector<1x1x1x32xf32> to vector<32xf32>
    %53 = vector.shape_cast %52 : vector<32xf32> to vector<1x1x32xf32>
    %54 = vector.broadcast %53 : vector<1x1x32xf32> to vector<8x8x32xf32>
    %55 = arith.mulf %10, %54 : vector<8x8x32xf32>
    %56 = arith.addf %50, %55 : vector<8x8x32xf32>
    %57 = vector.extract_strided_slice %2 {offsets = [0, 2, 1, 0], sizes = [1, 1, 1, 32], strides = [1, 1, 1, 1]} : vector<2x3x3x32xf32> to vector<1x1x1x32xf32>
    %58 = vector.shape_cast %57 : vector<1x1x1x32xf32> to vector<32xf32>
    %59 = vector.shape_cast %58 : vector<32xf32> to vector<1x1x32xf32>
    %60 = vector.broadcast %59 : vector<1x1x32xf32> to vector<8x8x32xf32>
    %61 = arith.mulf %11, %60 : vector<8x8x32xf32>
    %62 = arith.addf %56, %61 : vector<8x8x32xf32>
    %63 = vector.extract_strided_slice %2 {offsets = [0, 2, 2, 0], sizes = [1, 1, 1, 32], strides = [1, 1, 1, 1]} : vector<2x3x3x32xf32> to vector<1x1x1x32xf32>
    %64 = vector.shape_cast %63 : vector<1x1x1x32xf32> to vector<32xf32>
    %65 = vector.shape_cast %64 : vector<32xf32> to vector<1x1x32xf32>
    %66 = vector.broadcast %65 : vector<1x1x32xf32> to vector<8x8x32xf32>
    %67 = arith.mulf %12, %66 : vector<8x8x32xf32>
    %68 = arith.addf %62, %67 : vector<8x8x32xf32>
    %69 = vector.shape_cast %68 : vector<8x8x32xf32> to vector<64x32xf32>
    %70 = arith.truncf %69 : vector<64x32xf32> to vector<64x32xbf16>
    %71 = vector.extract_strided_slice %3 {offsets = [0, 0, 0], sizes = [1, 32, 64], strides = [1, 1, 1]} : vector<2x32x64xbf16> to vector<1x32x64xbf16>
    %72 = vector.shape_cast %71 : vector<1x32x64xbf16> to vector<32x64xbf16>
    %cst_11 = arith.constant dense<0.000000e+00> : vector<64x64xf32>
    %73 = tpu.matmul %70, %72, %cst_11 {dimension_numbers = #tpu.dot_dimension_numbers<[1], [0], [0], [1], [0, 0, 1, 1], [], []>} : vector<64x32xbf16>, vector<32x64xbf16>, vector<64x64xf32> -> vector<64x64xf32>
    %74 = arith.addf %13, %73 : vector<64x64xf32>
    %cst_12 = arith.constant 0.000000e+00 : f32
    %75 = vector.broadcast %cst_12 : f32 to vector<8x8x32xf32>
    %76 = vector.extract_strided_slice %2 {offsets = [1, 0, 0, 0], sizes = [1, 1, 1, 32], strides = [1, 1, 1, 1]} : vector<2x3x3x32xf32> to vector<1x1x1x32xf32>
    %77 = vector.shape_cast %76 : vector<1x1x1x32xf32> to vector<32xf32>
    %78 = vector.shape_cast %77 : vector<32xf32> to vector<1x1x32xf32>
    %79 = vector.broadcast %78 : vector<1x1x32xf32> to vector<8x8x32xf32>
    %80 = arith.mulf %4, %79 : vector<8x8x32xf32>
    %81 = arith.addf %75, %80 : vector<8x8x32xf32>
    %82 = vector.extract_strided_slice %2 {offsets = [1, 0, 1, 0], sizes = [1, 1, 1, 32], strides = [1, 1, 1, 1]} : vector<2x3x3x32xf32> to vector<1x1x1x32xf32>
    %83 = vector.shape_cast %82 : vector<1x1x1x32xf32> to vector<32xf32>
    %84 = vector.shape_cast %83 : vector<32xf32> to vector<1x1x32xf32>
    %85 = vector.broadcast %84 : vector<1x1x32xf32> to vector<8x8x32xf32>
    %86 = arith.mulf %5, %85 : vector<8x8x32xf32>
    %87 = arith.addf %81, %86 : vector<8x8x32xf32>
    %88 = vector.extract_strided_slice %2 {offsets = [1, 0, 2, 0], sizes = [1, 1, 1, 32], strides = [1, 1, 1, 1]} : vector<2x3x3x32xf32> to vector<1x1x1x32xf32>
    %89 = vector.shape_cast %88 : vector<1x1x1x32xf32> to vector<32xf32>
    %90 = vector.shape_cast %89 : vector<32xf32> to vector<1x1x32xf32>
    %91 = vector.broadcast %90 : vector<1x1x32xf32> to vector<8x8x32xf32>
    %92 = arith.mulf %6, %91 : vector<8x8x32xf32>
    %93 = arith.addf %87, %92 : vector<8x8x32xf32>
    %94 = vector.extract_strided_slice %2 {offsets = [1, 1, 0, 0], sizes = [1, 1, 1, 32], strides = [1, 1, 1, 1]} : vector<2x3x3x32xf32> to vector<1x1x1x32xf32>
    %95 = vector.shape_cast %94 : vector<1x1x1x32xf32> to vector<32xf32>
    %96 = vector.shape_cast %95 : vector<32xf32> to vector<1x1x32xf32>
    %97 = vector.broadcast %96 : vector<1x1x32xf32> to vector<8x8x32xf32>
    %98 = arith.mulf %7, %97 : vector<8x8x32xf32>
    %99 = arith.addf %93, %98 : vector<8x8x32xf32>
    %100 = vector.extract_strided_slice %2 {offsets = [1, 1, 1, 0], sizes = [1, 1, 1, 32], strides = [1, 1, 1, 1]} : vector<2x3x3x32xf32> to vector<1x1x1x32xf32>
    %101 = vector.shape_cast %100 : vector<1x1x1x32xf32> to vector<32xf32>
    %102 = vector.shape_cast %101 : vector<32xf32> to vector<1x1x32xf32>
    %103 = vector.broadcast %102 : vector<1x1x32xf32> to vector<8x8x32xf32>
    %104 = arith.mulf %8, %103 : vector<8x8x32xf32>
    %105 = arith.addf %99, %104 : vector<8x8x32xf32>
    %106 = vector.extract_strided_slice %2 {offsets = [1, 1, 2, 0], sizes = [1, 1, 1, 32], strides = [1, 1, 1, 1]} : vector<2x3x3x32xf32> to vector<1x1x1x32xf32>
    %107 = vector.shape_cast %106 : vector<1x1x1x32xf32> to vector<32xf32>
    %108 = vector.shape_cast %107 : vector<32xf32> to vector<1x1x32xf32>
    %109 = vector.broadcast %108 : vector<1x1x32xf32> to vector<8x8x32xf32>
    %110 = arith.mulf %9, %109 : vector<8x8x32xf32>
    %111 = arith.addf %105, %110 : vector<8x8x32xf32>
    %112 = vector.extract_strided_slice %2 {offsets = [1, 2, 0, 0], sizes = [1, 1, 1, 32], strides = [1, 1, 1, 1]} : vector<2x3x3x32xf32> to vector<1x1x1x32xf32>
    %113 = vector.shape_cast %112 : vector<1x1x1x32xf32> to vector<32xf32>
    %114 = vector.shape_cast %113 : vector<32xf32> to vector<1x1x32xf32>
    %115 = vector.broadcast %114 : vector<1x1x32xf32> to vector<8x8x32xf32>
    %116 = arith.mulf %10, %115 : vector<8x8x32xf32>
    %117 = arith.addf %111, %116 : vector<8x8x32xf32>
    %118 = vector.extract_strided_slice %2 {offsets = [1, 2, 1, 0], sizes = [1, 1, 1, 32], strides = [1, 1, 1, 1]} : vector<2x3x3x32xf32> to vector<1x1x1x32xf32>
    %119 = vector.shape_cast %118 : vector<1x1x1x32xf32> to vector<32xf32>
    %120 = vector.shape_cast %119 : vector<32xf32> to vector<1x1x32xf32>
    %121 = vector.broadcast %120 : vector<1x1x32xf32> to vector<8x8x32xf32>
    %122 = arith.mulf %11, %121 : vector<8x8x32xf32>
    %123 = arith.addf %117, %122 : vector<8x8x32xf32>
    %124 = vector.extract_strided_slice %2 {offsets = [1, 2, 2, 0], sizes = [1, 1, 1, 32], strides = [1, 1, 1, 1]} : vector<2x3x3x32xf32> to vector<1x1x1x32xf32>
    %125 = vector.shape_cast %124 : vector<1x1x1x32xf32> to vector<32xf32>
    %126 = vector.shape_cast %125 : vector<32xf32> to vector<1x1x32xf32>
    %127 = vector.broadcast %126 : vector<1x1x32xf32> to vector<8x8x32xf32>
    %128 = arith.mulf %12, %127 : vector<8x8x32xf32>
    %129 = arith.addf %123, %128 : vector<8x8x32xf32>
    %130 = vector.shape_cast %129 : vector<8x8x32xf32> to vector<64x32xf32>
    %131 = arith.truncf %130 : vector<64x32xf32> to vector<64x32xbf16>
    %132 = vector.extract_strided_slice %3 {offsets = [1, 0, 0], sizes = [1, 32, 64], strides = [1, 1, 1]} : vector<2x32x64xbf16> to vector<1x32x64xbf16>
    %133 = vector.shape_cast %132 : vector<1x32x64xbf16> to vector<32x64xbf16>
    %cst_13 = arith.constant dense<0.000000e+00> : vector<64x64xf32>
    %134 = tpu.matmul %131, %133, %cst_13 {dimension_numbers = #tpu.dot_dimension_numbers<[1], [0], [0], [1], [0, 0, 1, 1], [], []>} : vector<64x32xbf16>, vector<32x64xbf16>, vector<64x64xf32> -> vector<64x64xf32>
    %135 = arith.addf %74, %134 : vector<64x64xf32>
    %c0_14 = arith.constant 0 : index
    %c0_15 = arith.constant 0 : index
    %136 = vector.load %arg4[%c0_14, %c0_15] : memref<1x64xf32, #tpu.memory_space<vmem>>, vector<1x64xf32>
    %137 = vector.shape_cast %136 : vector<1x64xf32> to vector<64xf32>
    %138 = vector.shape_cast %137 : vector<64xf32> to vector<1x64xf32>
    %139 = vector.broadcast %138 : vector<1x64xf32> to vector<64x64xf32>
    %140 = arith.addf %135, %139 : vector<64x64xf32>
    %cst_16 = arith.constant 0.000000e+00 : f32
    %141 = vector.broadcast %cst_16 : f32 to vector<64x64xf32>
    %142 = arith.maximumf %140, %141 : vector<64x64xf32>
    %c0_17 = arith.constant 0 : index
    %c0_18 = arith.constant 0 : index
    %c0_19 = arith.constant 0 : index
    %143 = vector.load %arg5[%c0_17, %c0_18, %c0_19] : memref<1x64x64xf32, #tpu.memory_space<vmem>>, vector<1x64x64xf32>
    %144 = vector.shape_cast %143 : vector<1x64x64xf32> to vector<64x64xf32>
    %145 = vector.shape_cast %142 : vector<64x64xf32> to vector<1x64x64xf32>
    tpu.vector_store %arg5[%c0_17, %c0_18, %c0_19], %145 {strides = array<i32>} : memref<1x64x64xf32, #tpu.memory_space<vmem>>, vector<1x64x64xf32>,
    return
  }
  func.func @transform_0(%arg0: i32) -> (i32, i32, i32, i32) {
    %c0_i32 = arith.constant 0 : i32
    %c0_i32_0 = arith.constant 0 : i32
    %c0_i32_1 = arith.constant 0 : i32
    %c0_i32_2 = arith.constant 0 : i32
    return %arg0, %c0_i32, %c0_i32_0, %c0_i32_1 : i32, i32, i32, i32
  }
  func.func @transform_1(%arg0: i32) -> (i32, i32, i32, i32) {
    %c0_i32 = arith.constant 0 : i32
    %c0_i32_0 = arith.constant 0 : i32
    %c0_i32_1 = arith.constant 0 : i32
    %c0_i32_2 = arith.constant 0 : i32
    %c0_i32_3 = arith.constant 0 : i32
    return %c0_i32, %c0_i32_0, %c0_i32_1, %c0_i32_2 : i32, i32, i32, i32
  }
  func.func @transform_2(%arg0: i32) -> (i32, i32, i32) {
    %c0_i32 = arith.constant 0 : i32
    %c0_i32_0 = arith.constant 0 : i32
    %c0_i32_1 = arith.constant 0 : i32
    %c0_i32_2 = arith.constant 0 : i32
    return %c0_i32, %c0_i32_0, %c0_i32_1 : i32, i32, i32
  }
  func.func @transform_3(%arg0: i32) -> (i32, i32) {
    %c0_i32 = arith.constant 0 : i32
    %c0_i32_0 = arith.constant 0 : i32
    %c0_i32_1 = arith.constant 0 : i32
    return %c0_i32, %c0_i32_0 : i32, i32
  }
  func.func @transform_4(%arg0: i32) -> (i32, i32, i32) {
    %c0_i32 = arith.constant 0 : i32
    %c0_i32_0 = arith.constant 0 : i32
    %c0_i32_1 = arith.constant 0 : i32
    return %arg0, %c0_i32, %c0_i32_0 : i32, i32, i32
  }
}

module attributes {stable_mosaic.version = 11 : i64} {
  func.func @_dw_block_kernel(%arg0: i32, %arg1: memref<1x20x5x64xf32, #tpu.memory_space<vmem>>, %arg2: memref<2x3x3x64xf32, #tpu.memory_space<vmem>>, %arg3: memref<2x64x128xbf16, #tpu.memory_space<vmem>>, %arg4: memref<1x128xf32, #tpu.memory_space<vmem>>, %arg5: memref<1x16x128xf32, #tpu.memory_space<vmem>>) attributes {dimension_semantics = [#tpu.dimension_semantics<parallel>], iteration_bounds = array<i64: 2>, scalar_prefetch = 0 : i64, scratch_operands = 0 : i64, tpu.core_type = #tpu.core_type<tc>, window_params = [{transform_indices = @transform_0, window_bounds = array<i64: 1, 20, 5, 64>}, {pipeline_mode = #tpu.pipeline_mode<synchronous>, transform_indices = @transform_1, window_bounds = array<i64: 2, 3, 3, 64>}, {pipeline_mode = #tpu.pipeline_mode<synchronous>, transform_indices = @transform_2, window_bounds = array<i64: 2, 64, 128>}, {pipeline_mode = #tpu.pipeline_mode<synchronous>, transform_indices = @transform_3, window_bounds = array<i64: 1, 128>}, {transform_indices = @transform_4, window_bounds = array<i64: 1, 16, 128>}]} {
    %c0 = arith.constant 0 : index
    %c0_0 = arith.constant 0 : index
    %c0_1 = arith.constant 0 : index
    %c0_2 = arith.constant 0 : index
    %0 = vector.load %arg1[%c0, %c0_0, %c0_1, %c0_2] : memref<1x20x5x64xf32, #tpu.memory_space<vmem>>, vector<1x20x5x64xf32>
    %1 = vector.shape_cast %0 : vector<1x20x5x64xf32> to vector<20x5x64xf32>
    %c0_3 = arith.constant 0 : index
    %c0_4 = arith.constant 0 : index
    %c0_5 = arith.constant 0 : index
    %c0_6 = arith.constant 0 : index
    %2 = vector.load %arg2[%c0_3, %c0_4, %c0_5, %c0_6] : memref<2x3x3x64xf32, #tpu.memory_space<vmem>>, vector<2x3x3x64xf32>
    %c0_7 = arith.constant 0 : index
    %c0_8 = arith.constant 0 : index
    %c0_9 = arith.constant 0 : index
    %3 = vector.load %arg3[%c0_7, %c0_8, %c0_9] : memref<2x64x128xbf16, #tpu.memory_space<vmem>>, vector<2x64x128xbf16>
    %4 = vector.extract_strided_slice %1 {offsets = [0, 0, 0], sizes = [4, 4, 64], strides = [1, 1, 1]} : vector<20x5x64xf32> to vector<4x4x64xf32>
    %5 = vector.extract_strided_slice %1 {offsets = [5, 0, 0], sizes = [4, 4, 64], strides = [1, 1, 1]} : vector<20x5x64xf32> to vector<4x4x64xf32>
    %6 = vector.extract_strided_slice %1 {offsets = [0, 1, 0], sizes = [4, 4, 64], strides = [1, 1, 1]} : vector<20x5x64xf32> to vector<4x4x64xf32>
    %7 = vector.extract_strided_slice %1 {offsets = [10, 0, 0], sizes = [4, 4, 64], strides = [1, 1, 1]} : vector<20x5x64xf32> to vector<4x4x64xf32>
    %8 = vector.extract_strided_slice %1 {offsets = [15, 0, 0], sizes = [4, 4, 64], strides = [1, 1, 1]} : vector<20x5x64xf32> to vector<4x4x64xf32>
    %9 = vector.extract_strided_slice %1 {offsets = [10, 1, 0], sizes = [4, 4, 64], strides = [1, 1, 1]} : vector<20x5x64xf32> to vector<4x4x64xf32>
    %10 = vector.extract_strided_slice %1 {offsets = [1, 0, 0], sizes = [4, 4, 64], strides = [1, 1, 1]} : vector<20x5x64xf32> to vector<4x4x64xf32>
    %11 = vector.extract_strided_slice %1 {offsets = [6, 0, 0], sizes = [4, 4, 64], strides = [1, 1, 1]} : vector<20x5x64xf32> to vector<4x4x64xf32>
    %12 = vector.extract_strided_slice %1 {offsets = [1, 1, 0], sizes = [4, 4, 64], strides = [1, 1, 1]} : vector<20x5x64xf32> to vector<4x4x64xf32>
    %cst = arith.constant 0.000000e+00 : f32
    %13 = vector.broadcast %cst : f32 to vector<16x128xf32>
    %cst_10 = arith.constant 0.000000e+00 : f32
    %14 = vector.broadcast %cst_10 : f32 to vector<4x4x64xf32>
    %15 = vector.extract_strided_slice %2 {offsets = [0, 0, 0, 0], sizes = [1, 1, 1, 64], strides = [1, 1, 1, 1]} : vector<2x3x3x64xf32> to vector<1x1x1x64xf32>
    %16 = vector.shape_cast %15 : vector<1x1x1x64xf32> to vector<64xf32>
    %17 = vector.shape_cast %16 : vector<64xf32> to vector<1x1x64xf32>
    %18 = vector.broadcast %17 : vector<1x1x64xf32> to vector<4x4x64xf32>
    %19 = arith.mulf %4, %18 : vector<4x4x64xf32>
    %20 = arith.addf %14, %19 : vector<4x4x64xf32>
    %21 = vector.extract_strided_slice %2 {offsets = [0, 0, 1, 0], sizes = [1, 1, 1, 64], strides = [1, 1, 1, 1]} : vector<2x3x3x64xf32> to vector<1x1x1x64xf32>
    %22 = vector.shape_cast %21 : vector<1x1x1x64xf32> to vector<64xf32>
    %23 = vector.shape_cast %22 : vector<64xf32> to vector<1x1x64xf32>
    %24 = vector.broadcast %23 : vector<1x1x64xf32> to vector<4x4x64xf32>
    %25 = arith.mulf %5, %24 : vector<4x4x64xf32>
    %26 = arith.addf %20, %25 : vector<4x4x64xf32>
    %27 = vector.extract_strided_slice %2 {offsets = [0, 0, 2, 0], sizes = [1, 1, 1, 64], strides = [1, 1, 1, 1]} : vector<2x3x3x64xf32> to vector<1x1x1x64xf32>
    %28 = vector.shape_cast %27 : vector<1x1x1x64xf32> to vector<64xf32>
    %29 = vector.shape_cast %28 : vector<64xf32> to vector<1x1x64xf32>
    %30 = vector.broadcast %29 : vector<1x1x64xf32> to vector<4x4x64xf32>
    %31 = arith.mulf %6, %30 : vector<4x4x64xf32>
    %32 = arith.addf %26, %31 : vector<4x4x64xf32>
    %33 = vector.extract_strided_slice %2 {offsets = [0, 1, 0, 0], sizes = [1, 1, 1, 64], strides = [1, 1, 1, 1]} : vector<2x3x3x64xf32> to vector<1x1x1x64xf32>
    %34 = vector.shape_cast %33 : vector<1x1x1x64xf32> to vector<64xf32>
    %35 = vector.shape_cast %34 : vector<64xf32> to vector<1x1x64xf32>
    %36 = vector.broadcast %35 : vector<1x1x64xf32> to vector<4x4x64xf32>
    %37 = arith.mulf %7, %36 : vector<4x4x64xf32>
    %38 = arith.addf %32, %37 : vector<4x4x64xf32>
    %39 = vector.extract_strided_slice %2 {offsets = [0, 1, 1, 0], sizes = [1, 1, 1, 64], strides = [1, 1, 1, 1]} : vector<2x3x3x64xf32> to vector<1x1x1x64xf32>
    %40 = vector.shape_cast %39 : vector<1x1x1x64xf32> to vector<64xf32>
    %41 = vector.shape_cast %40 : vector<64xf32> to vector<1x1x64xf32>
    %42 = vector.broadcast %41 : vector<1x1x64xf32> to vector<4x4x64xf32>
    %43 = arith.mulf %8, %42 : vector<4x4x64xf32>
    %44 = arith.addf %38, %43 : vector<4x4x64xf32>
    %45 = vector.extract_strided_slice %2 {offsets = [0, 1, 2, 0], sizes = [1, 1, 1, 64], strides = [1, 1, 1, 1]} : vector<2x3x3x64xf32> to vector<1x1x1x64xf32>
    %46 = vector.shape_cast %45 : vector<1x1x1x64xf32> to vector<64xf32>
    %47 = vector.shape_cast %46 : vector<64xf32> to vector<1x1x64xf32>
    %48 = vector.broadcast %47 : vector<1x1x64xf32> to vector<4x4x64xf32>
    %49 = arith.mulf %9, %48 : vector<4x4x64xf32>
    %50 = arith.addf %44, %49 : vector<4x4x64xf32>
    %51 = vector.extract_strided_slice %2 {offsets = [0, 2, 0, 0], sizes = [1, 1, 1, 64], strides = [1, 1, 1, 1]} : vector<2x3x3x64xf32> to vector<1x1x1x64xf32>
    %52 = vector.shape_cast %51 : vector<1x1x1x64xf32> to vector<64xf32>
    %53 = vector.shape_cast %52 : vector<64xf32> to vector<1x1x64xf32>
    %54 = vector.broadcast %53 : vector<1x1x64xf32> to vector<4x4x64xf32>
    %55 = arith.mulf %10, %54 : vector<4x4x64xf32>
    %56 = arith.addf %50, %55 : vector<4x4x64xf32>
    %57 = vector.extract_strided_slice %2 {offsets = [0, 2, 1, 0], sizes = [1, 1, 1, 64], strides = [1, 1, 1, 1]} : vector<2x3x3x64xf32> to vector<1x1x1x64xf32>
    %58 = vector.shape_cast %57 : vector<1x1x1x64xf32> to vector<64xf32>
    %59 = vector.shape_cast %58 : vector<64xf32> to vector<1x1x64xf32>
    %60 = vector.broadcast %59 : vector<1x1x64xf32> to vector<4x4x64xf32>
    %61 = arith.mulf %11, %60 : vector<4x4x64xf32>
    %62 = arith.addf %56, %61 : vector<4x4x64xf32>
    %63 = vector.extract_strided_slice %2 {offsets = [0, 2, 2, 0], sizes = [1, 1, 1, 64], strides = [1, 1, 1, 1]} : vector<2x3x3x64xf32> to vector<1x1x1x64xf32>
    %64 = vector.shape_cast %63 : vector<1x1x1x64xf32> to vector<64xf32>
    %65 = vector.shape_cast %64 : vector<64xf32> to vector<1x1x64xf32>
    %66 = vector.broadcast %65 : vector<1x1x64xf32> to vector<4x4x64xf32>
    %67 = arith.mulf %12, %66 : vector<4x4x64xf32>
    %68 = arith.addf %62, %67 : vector<4x4x64xf32>
    %69 = vector.shape_cast %68 : vector<4x4x64xf32> to vector<16x64xf32>
    %70 = arith.truncf %69 : vector<16x64xf32> to vector<16x64xbf16>
    %71 = vector.extract_strided_slice %3 {offsets = [0, 0, 0], sizes = [1, 64, 128], strides = [1, 1, 1]} : vector<2x64x128xbf16> to vector<1x64x128xbf16>
    %72 = vector.shape_cast %71 : vector<1x64x128xbf16> to vector<64x128xbf16>
    %cst_11 = arith.constant dense<0.000000e+00> : vector<16x128xf32>
    %73 = tpu.matmul %70, %72, %cst_11 {dimension_numbers = #tpu.dot_dimension_numbers<[1], [0], [0], [1], [0, 0, 1, 1], [], []>} : vector<16x64xbf16>, vector<64x128xbf16>, vector<16x128xf32> -> vector<16x128xf32>
    %74 = arith.addf %13, %73 : vector<16x128xf32>
    %cst_12 = arith.constant 0.000000e+00 : f32
    %75 = vector.broadcast %cst_12 : f32 to vector<4x4x64xf32>
    %76 = vector.extract_strided_slice %2 {offsets = [1, 0, 0, 0], sizes = [1, 1, 1, 64], strides = [1, 1, 1, 1]} : vector<2x3x3x64xf32> to vector<1x1x1x64xf32>
    %77 = vector.shape_cast %76 : vector<1x1x1x64xf32> to vector<64xf32>
    %78 = vector.shape_cast %77 : vector<64xf32> to vector<1x1x64xf32>
    %79 = vector.broadcast %78 : vector<1x1x64xf32> to vector<4x4x64xf32>
    %80 = arith.mulf %4, %79 : vector<4x4x64xf32>
    %81 = arith.addf %75, %80 : vector<4x4x64xf32>
    %82 = vector.extract_strided_slice %2 {offsets = [1, 0, 1, 0], sizes = [1, 1, 1, 64], strides = [1, 1, 1, 1]} : vector<2x3x3x64xf32> to vector<1x1x1x64xf32>
    %83 = vector.shape_cast %82 : vector<1x1x1x64xf32> to vector<64xf32>
    %84 = vector.shape_cast %83 : vector<64xf32> to vector<1x1x64xf32>
    %85 = vector.broadcast %84 : vector<1x1x64xf32> to vector<4x4x64xf32>
    %86 = arith.mulf %5, %85 : vector<4x4x64xf32>
    %87 = arith.addf %81, %86 : vector<4x4x64xf32>
    %88 = vector.extract_strided_slice %2 {offsets = [1, 0, 2, 0], sizes = [1, 1, 1, 64], strides = [1, 1, 1, 1]} : vector<2x3x3x64xf32> to vector<1x1x1x64xf32>
    %89 = vector.shape_cast %88 : vector<1x1x1x64xf32> to vector<64xf32>
    %90 = vector.shape_cast %89 : vector<64xf32> to vector<1x1x64xf32>
    %91 = vector.broadcast %90 : vector<1x1x64xf32> to vector<4x4x64xf32>
    %92 = arith.mulf %6, %91 : vector<4x4x64xf32>
    %93 = arith.addf %87, %92 : vector<4x4x64xf32>
    %94 = vector.extract_strided_slice %2 {offsets = [1, 1, 0, 0], sizes = [1, 1, 1, 64], strides = [1, 1, 1, 1]} : vector<2x3x3x64xf32> to vector<1x1x1x64xf32>
    %95 = vector.shape_cast %94 : vector<1x1x1x64xf32> to vector<64xf32>
    %96 = vector.shape_cast %95 : vector<64xf32> to vector<1x1x64xf32>
    %97 = vector.broadcast %96 : vector<1x1x64xf32> to vector<4x4x64xf32>
    %98 = arith.mulf %7, %97 : vector<4x4x64xf32>
    %99 = arith.addf %93, %98 : vector<4x4x64xf32>
    %100 = vector.extract_strided_slice %2 {offsets = [1, 1, 1, 0], sizes = [1, 1, 1, 64], strides = [1, 1, 1, 1]} : vector<2x3x3x64xf32> to vector<1x1x1x64xf32>
    %101 = vector.shape_cast %100 : vector<1x1x1x64xf32> to vector<64xf32>
    %102 = vector.shape_cast %101 : vector<64xf32> to vector<1x1x64xf32>
    %103 = vector.broadcast %102 : vector<1x1x64xf32> to vector<4x4x64xf32>
    %104 = arith.mulf %8, %103 : vector<4x4x64xf32>
    %105 = arith.addf %99, %104 : vector<4x4x64xf32>
    %106 = vector.extract_strided_slice %2 {offsets = [1, 1, 2, 0], sizes = [1, 1, 1, 64], strides = [1, 1, 1, 1]} : vector<2x3x3x64xf32> to vector<1x1x1x64xf32>
    %107 = vector.shape_cast %106 : vector<1x1x1x64xf32> to vector<64xf32>
    %108 = vector.shape_cast %107 : vector<64xf32> to vector<1x1x64xf32>
    %109 = vector.broadcast %108 : vector<1x1x64xf32> to vector<4x4x64xf32>
    %110 = arith.mulf %9, %109 : vector<4x4x64xf32>
    %111 = arith.addf %105, %110 : vector<4x4x64xf32>
    %112 = vector.extract_strided_slice %2 {offsets = [1, 2, 0, 0], sizes = [1, 1, 1, 64], strides = [1, 1, 1, 1]} : vector<2x3x3x64xf32> to vector<1x1x1x64xf32>
    %113 = vector.shape_cast %112 : vector<1x1x1x64xf32> to vector<64xf32>
    %114 = vector.shape_cast %113 : vector<64xf32> to vector<1x1x64xf32>
    %115 = vector.broadcast %114 : vector<1x1x64xf32> to vector<4x4x64xf32>
    %116 = arith.mulf %10, %115 : vector<4x4x64xf32>
    %117 = arith.addf %111, %116 : vector<4x4x64xf32>
    %118 = vector.extract_strided_slice %2 {offsets = [1, 2, 1, 0], sizes = [1, 1, 1, 64], strides = [1, 1, 1, 1]} : vector<2x3x3x64xf32> to vector<1x1x1x64xf32>
    %119 = vector.shape_cast %118 : vector<1x1x1x64xf32> to vector<64xf32>
    %120 = vector.shape_cast %119 : vector<64xf32> to vector<1x1x64xf32>
    %121 = vector.broadcast %120 : vector<1x1x64xf32> to vector<4x4x64xf32>
    %122 = arith.mulf %11, %121 : vector<4x4x64xf32>
    %123 = arith.addf %117, %122 : vector<4x4x64xf32>
    %124 = vector.extract_strided_slice %2 {offsets = [1, 2, 2, 0], sizes = [1, 1, 1, 64], strides = [1, 1, 1, 1]} : vector<2x3x3x64xf32> to vector<1x1x1x64xf32>
    %125 = vector.shape_cast %124 : vector<1x1x1x64xf32> to vector<64xf32>
    %126 = vector.shape_cast %125 : vector<64xf32> to vector<1x1x64xf32>
    %127 = vector.broadcast %126 : vector<1x1x64xf32> to vector<4x4x64xf32>
    %128 = arith.mulf %12, %127 : vector<4x4x64xf32>
    %129 = arith.addf %123, %128 : vector<4x4x64xf32>
    %130 = vector.shape_cast %129 : vector<4x4x64xf32> to vector<16x64xf32>
    %131 = arith.truncf %130 : vector<16x64xf32> to vector<16x64xbf16>
    %132 = vector.extract_strided_slice %3 {offsets = [1, 0, 0], sizes = [1, 64, 128], strides = [1, 1, 1]} : vector<2x64x128xbf16> to vector<1x64x128xbf16>
    %133 = vector.shape_cast %132 : vector<1x64x128xbf16> to vector<64x128xbf16>
    %cst_13 = arith.constant dense<0.000000e+00> : vector<16x128xf32>
    %134 = tpu.matmul %131, %133, %cst_13 {dimension_numbers = #tpu.dot_dimension_numbers<[1], [0], [0], [1], [0, 0, 1, 1], [], []>} : vector<16x64xbf16>, vector<64x128xbf16>, vector<16x128xf32> -> vector<16x128xf32>
    %135 = arith.addf %74, %134 : vector<16x128xf32>
    %c0_14 = arith.constant 0 : index
    %c0_15 = arith.constant 0 : index
    %136 = vector.load %arg4[%c0_14, %c0_15] : memref<1x128xf32, #tpu.memory_space<vmem>>, vector<1x128xf32>
    %137 = vector.shape_cast %136 : vector<1x128xf32> to vector<128xf32>
    %138 = vector.shape_cast %137 : vector<128xf32> to vector<1x128xf32>
    %139 = vector.broadcast %138 : vector<1x128xf32> to vector<16x128xf32>
    %140 = arith.addf %135, %139 : vector<16x128xf32>
    %cst_16 = arith.constant 0.000000e+00 : f32
    %141 = vector.broadcast %cst_16 : f32 to vector<16x128xf32>
    %142 = arith.maximumf %140, %141 : vector<16x128xf32>
    %c0_17 = arith.constant 0 : index
    %c0_18 = arith.constant 0 : index
    %c0_19 = arith.constant 0 : index
    %143 = vector.load %arg5[%c0_17, %c0_18, %c0_19] : memref<1x16x128xf32, #tpu.memory_space<vmem>>, vector<1x16x128xf32>
    %144 = vector.shape_cast %143 : vector<1x16x128xf32> to vector<16x128xf32>
    %145 = vector.shape_cast %142 : vector<16x128xf32> to vector<1x16x128xf32>
    tpu.vector_store %arg5[%c0_17, %c0_18, %c0_19], %145 {strides = array<i32>} : memref<1x16x128xf32, #tpu.memory_space<vmem>>, vector<1x16x128xf32>,
    return
  }
  func.func @transform_0(%arg0: i32) -> (i32, i32, i32, i32) {
    %c0_i32 = arith.constant 0 : i32
    %c0_i32_0 = arith.constant 0 : i32
    %c0_i32_1 = arith.constant 0 : i32
    %c0_i32_2 = arith.constant 0 : i32
    return %arg0, %c0_i32, %c0_i32_0, %c0_i32_1 : i32, i32, i32, i32
  }
  func.func @transform_1(%arg0: i32) -> (i32, i32, i32, i32) {
    %c0_i32 = arith.constant 0 : i32
    %c0_i32_0 = arith.constant 0 : i32
    %c0_i32_1 = arith.constant 0 : i32
    %c0_i32_2 = arith.constant 0 : i32
    %c0_i32_3 = arith.constant 0 : i32
    return %c0_i32, %c0_i32_0, %c0_i32_1, %c0_i32_2 : i32, i32, i32, i32
  }
  func.func @transform_2(%arg0: i32) -> (i32, i32, i32) {
    %c0_i32 = arith.constant 0 : i32
    %c0_i32_0 = arith.constant 0 : i32
    %c0_i32_1 = arith.constant 0 : i32
    %c0_i32_2 = arith.constant 0 : i32
    return %c0_i32, %c0_i32_0, %c0_i32_1 : i32, i32, i32
  }
  func.func @transform_3(%arg0: i32) -> (i32, i32) {
    %c0_i32 = arith.constant 0 : i32
    %c0_i32_0 = arith.constant 0 : i32
    %c0_i32_1 = arith.constant 0 : i32
    return %c0_i32, %c0_i32_0 : i32, i32
  }
  func.func @transform_4(%arg0: i32) -> (i32, i32, i32) {
    %c0_i32 = arith.constant 0 : i32
    %c0_i32_0 = arith.constant 0 : i32
    %c0_i32_1 = arith.constant 0 : i32
    return %arg0, %c0_i32, %c0_i32_0 : i32, i32, i32
  }
}

module attributes {stable_mosaic.version = 11 : i64} {
  func.func @_dw_block_kernel(%arg0: i32, %arg1: memref<1x6x6x128xf32, #tpu.memory_space<vmem>>, %arg2: memref<1x3x3x128xf32, #tpu.memory_space<vmem>>, %arg3: memref<1x128x128xbf16, #tpu.memory_space<vmem>>, %arg4: memref<1x128xf32, #tpu.memory_space<vmem>>, %arg5: memref<1x16x128xf32, #tpu.memory_space<vmem>>) attributes {dimension_semantics = [#tpu.dimension_semantics<parallel>], iteration_bounds = array<i64: 2>, scalar_prefetch = 0 : i64, scratch_operands = 0 : i64, tpu.core_type = #tpu.core_type<tc>, window_params = [{transform_indices = @transform_0, window_bounds = array<i64: 1, 6, 6, 128>}, {pipeline_mode = #tpu.pipeline_mode<synchronous>, transform_indices = @transform_1, window_bounds = array<i64: 1, 3, 3, 128>}, {pipeline_mode = #tpu.pipeline_mode<synchronous>, transform_indices = @transform_2, window_bounds = array<i64: 1, 128, 128>}, {pipeline_mode = #tpu.pipeline_mode<synchronous>, transform_indices = @transform_3, window_bounds = array<i64: 1, 128>}, {transform_indices = @transform_4, window_bounds = array<i64: 1, 16, 128>}]} {
    %c0 = arith.constant 0 : index
    %c0_0 = arith.constant 0 : index
    %c0_1 = arith.constant 0 : index
    %c0_2 = arith.constant 0 : index
    %0 = vector.load %arg1[%c0, %c0_0, %c0_1, %c0_2] : memref<1x6x6x128xf32, #tpu.memory_space<vmem>>, vector<1x6x6x128xf32>
    %1 = vector.shape_cast %0 : vector<1x6x6x128xf32> to vector<6x6x128xf32>
    %c0_3 = arith.constant 0 : index
    %c0_4 = arith.constant 0 : index
    %c0_5 = arith.constant 0 : index
    %c0_6 = arith.constant 0 : index
    %2 = vector.load %arg2[%c0_3, %c0_4, %c0_5, %c0_6] : memref<1x3x3x128xf32, #tpu.memory_space<vmem>>, vector<1x3x3x128xf32>
    %c0_7 = arith.constant 0 : index
    %c0_8 = arith.constant 0 : index
    %c0_9 = arith.constant 0 : index
    %3 = vector.load %arg3[%c0_7, %c0_8, %c0_9] : memref<1x128x128xbf16, #tpu.memory_space<vmem>>, vector<1x128x128xbf16>
    %4 = vector.extract_strided_slice %1 {offsets = [0, 0, 0], sizes = [4, 4, 128], strides = [1, 1, 1]} : vector<6x6x128xf32> to vector<4x4x128xf32>
    %5 = vector.extract_strided_slice %1 {offsets = [0, 1, 0], sizes = [4, 4, 128], strides = [1, 1, 1]} : vector<6x6x128xf32> to vector<4x4x128xf32>
    %6 = vector.extract_strided_slice %1 {offsets = [0, 2, 0], sizes = [4, 4, 128], strides = [1, 1, 1]} : vector<6x6x128xf32> to vector<4x4x128xf32>
    %7 = vector.extract_strided_slice %1 {offsets = [1, 0, 0], sizes = [4, 4, 128], strides = [1, 1, 1]} : vector<6x6x128xf32> to vector<4x4x128xf32>
    %8 = vector.extract_strided_slice %1 {offsets = [1, 1, 0], sizes = [4, 4, 128], strides = [1, 1, 1]} : vector<6x6x128xf32> to vector<4x4x128xf32>
    %9 = vector.extract_strided_slice %1 {offsets = [1, 2, 0], sizes = [4, 4, 128], strides = [1, 1, 1]} : vector<6x6x128xf32> to vector<4x4x128xf32>
    %10 = vector.extract_strided_slice %1 {offsets = [2, 0, 0], sizes = [4, 4, 128], strides = [1, 1, 1]} : vector<6x6x128xf32> to vector<4x4x128xf32>
    %11 = vector.extract_strided_slice %1 {offsets = [2, 1, 0], sizes = [4, 4, 128], strides = [1, 1, 1]} : vector<6x6x128xf32> to vector<4x4x128xf32>
    %12 = vector.extract_strided_slice %1 {offsets = [2, 2, 0], sizes = [4, 4, 128], strides = [1, 1, 1]} : vector<6x6x128xf32> to vector<4x4x128xf32>
    %cst = arith.constant 0.000000e+00 : f32
    %13 = vector.broadcast %cst : f32 to vector<16x128xf32>
    %cst_10 = arith.constant 0.000000e+00 : f32
    %14 = vector.broadcast %cst_10 : f32 to vector<4x4x128xf32>
    %15 = vector.extract_strided_slice %2 {offsets = [0, 0, 0, 0], sizes = [1, 1, 1, 128], strides = [1, 1, 1, 1]} : vector<1x3x3x128xf32> to vector<1x1x1x128xf32>
    %16 = vector.shape_cast %15 : vector<1x1x1x128xf32> to vector<128xf32>
    %17 = vector.shape_cast %16 : vector<128xf32> to vector<1x1x128xf32>
    %18 = vector.broadcast %17 : vector<1x1x128xf32> to vector<4x4x128xf32>
    %19 = arith.mulf %4, %18 : vector<4x4x128xf32>
    %20 = arith.addf %14, %19 : vector<4x4x128xf32>
    %21 = vector.extract_strided_slice %2 {offsets = [0, 0, 1, 0], sizes = [1, 1, 1, 128], strides = [1, 1, 1, 1]} : vector<1x3x3x128xf32> to vector<1x1x1x128xf32>
    %22 = vector.shape_cast %21 : vector<1x1x1x128xf32> to vector<128xf32>
    %23 = vector.shape_cast %22 : vector<128xf32> to vector<1x1x128xf32>
    %24 = vector.broadcast %23 : vector<1x1x128xf32> to vector<4x4x128xf32>
    %25 = arith.mulf %5, %24 : vector<4x4x128xf32>
    %26 = arith.addf %20, %25 : vector<4x4x128xf32>
    %27 = vector.extract_strided_slice %2 {offsets = [0, 0, 2, 0], sizes = [1, 1, 1, 128], strides = [1, 1, 1, 1]} : vector<1x3x3x128xf32> to vector<1x1x1x128xf32>
    %28 = vector.shape_cast %27 : vector<1x1x1x128xf32> to vector<128xf32>
    %29 = vector.shape_cast %28 : vector<128xf32> to vector<1x1x128xf32>
    %30 = vector.broadcast %29 : vector<1x1x128xf32> to vector<4x4x128xf32>
    %31 = arith.mulf %6, %30 : vector<4x4x128xf32>
    %32 = arith.addf %26, %31 : vector<4x4x128xf32>
    %33 = vector.extract_strided_slice %2 {offsets = [0, 1, 0, 0], sizes = [1, 1, 1, 128], strides = [1, 1, 1, 1]} : vector<1x3x3x128xf32> to vector<1x1x1x128xf32>
    %34 = vector.shape_cast %33 : vector<1x1x1x128xf32> to vector<128xf32>
    %35 = vector.shape_cast %34 : vector<128xf32> to vector<1x1x128xf32>
    %36 = vector.broadcast %35 : vector<1x1x128xf32> to vector<4x4x128xf32>
    %37 = arith.mulf %7, %36 : vector<4x4x128xf32>
    %38 = arith.addf %32, %37 : vector<4x4x128xf32>
    %39 = vector.extract_strided_slice %2 {offsets = [0, 1, 1, 0], sizes = [1, 1, 1, 128], strides = [1, 1, 1, 1]} : vector<1x3x3x128xf32> to vector<1x1x1x128xf32>
    %40 = vector.shape_cast %39 : vector<1x1x1x128xf32> to vector<128xf32>
    %41 = vector.shape_cast %40 : vector<128xf32> to vector<1x1x128xf32>
    %42 = vector.broadcast %41 : vector<1x1x128xf32> to vector<4x4x128xf32>
    %43 = arith.mulf %8, %42 : vector<4x4x128xf32>
    %44 = arith.addf %38, %43 : vector<4x4x128xf32>
    %45 = vector.extract_strided_slice %2 {offsets = [0, 1, 2, 0], sizes = [1, 1, 1, 128], strides = [1, 1, 1, 1]} : vector<1x3x3x128xf32> to vector<1x1x1x128xf32>
    %46 = vector.shape_cast %45 : vector<1x1x1x128xf32> to vector<128xf32>
    %47 = vector.shape_cast %46 : vector<128xf32> to vector<1x1x128xf32>
    %48 = vector.broadcast %47 : vector<1x1x128xf32> to vector<4x4x128xf32>
    %49 = arith.mulf %9, %48 : vector<4x4x128xf32>
    %50 = arith.addf %44, %49 : vector<4x4x128xf32>
    %51 = vector.extract_strided_slice %2 {offsets = [0, 2, 0, 0], sizes = [1, 1, 1, 128], strides = [1, 1, 1, 1]} : vector<1x3x3x128xf32> to vector<1x1x1x128xf32>
    %52 = vector.shape_cast %51 : vector<1x1x1x128xf32> to vector<128xf32>
    %53 = vector.shape_cast %52 : vector<128xf32> to vector<1x1x128xf32>
    %54 = vector.broadcast %53 : vector<1x1x128xf32> to vector<4x4x128xf32>
    %55 = arith.mulf %10, %54 : vector<4x4x128xf32>
    %56 = arith.addf %50, %55 : vector<4x4x128xf32>
    %57 = vector.extract_strided_slice %2 {offsets = [0, 2, 1, 0], sizes = [1, 1, 1, 128], strides = [1, 1, 1, 1]} : vector<1x3x3x128xf32> to vector<1x1x1x128xf32>
    %58 = vector.shape_cast %57 : vector<1x1x1x128xf32> to vector<128xf32>
    %59 = vector.shape_cast %58 : vector<128xf32> to vector<1x1x128xf32>
    %60 = vector.broadcast %59 : vector<1x1x128xf32> to vector<4x4x128xf32>
    %61 = arith.mulf %11, %60 : vector<4x4x128xf32>
    %62 = arith.addf %56, %61 : vector<4x4x128xf32>
    %63 = vector.extract_strided_slice %2 {offsets = [0, 2, 2, 0], sizes = [1, 1, 1, 128], strides = [1, 1, 1, 1]} : vector<1x3x3x128xf32> to vector<1x1x1x128xf32>
    %64 = vector.shape_cast %63 : vector<1x1x1x128xf32> to vector<128xf32>
    %65 = vector.shape_cast %64 : vector<128xf32> to vector<1x1x128xf32>
    %66 = vector.broadcast %65 : vector<1x1x128xf32> to vector<4x4x128xf32>
    %67 = arith.mulf %12, %66 : vector<4x4x128xf32>
    %68 = arith.addf %62, %67 : vector<4x4x128xf32>
    %69 = vector.shape_cast %68 : vector<4x4x128xf32> to vector<16x128xf32>
    %70 = arith.truncf %69 : vector<16x128xf32> to vector<16x128xbf16>
    %71 = vector.shape_cast %3 : vector<1x128x128xbf16> to vector<128x128xbf16>
    %cst_11 = arith.constant dense<0.000000e+00> : vector<16x128xf32>
    %72 = tpu.matmul %70, %71, %cst_11 {dimension_numbers = #tpu.dot_dimension_numbers<[1], [0], [0], [1], [0, 0, 1, 1], [], []>} : vector<16x128xbf16>, vector<128x128xbf16>, vector<16x128xf32> -> vector<16x128xf32>
    %73 = arith.addf %13, %72 : vector<16x128xf32>
    %c0_12 = arith.constant 0 : index
    %c0_13 = arith.constant 0 : index
    %74 = vector.load %arg4[%c0_12, %c0_13] : memref<1x128xf32, #tpu.memory_space<vmem>>, vector<1x128xf32>
    %75 = vector.shape_cast %74 : vector<1x128xf32> to vector<128xf32>
    %76 = vector.shape_cast %75 : vector<128xf32> to vector<1x128xf32>
    %77 = vector.broadcast %76 : vector<1x128xf32> to vector<16x128xf32>
    %78 = arith.addf %73, %77 : vector<16x128xf32>
    %cst_14 = arith.constant 0.000000e+00 : f32
    %79 = vector.broadcast %cst_14 : f32 to vector<16x128xf32>
    %80 = arith.maximumf %78, %79 : vector<16x128xf32>
    %c0_15 = arith.constant 0 : index
    %c0_16 = arith.constant 0 : index
    %c0_17 = arith.constant 0 : index
    %81 = vector.load %arg5[%c0_15, %c0_16, %c0_17] : memref<1x16x128xf32, #tpu.memory_space<vmem>>, vector<1x16x128xf32>
    %82 = vector.shape_cast %81 : vector<1x16x128xf32> to vector<16x128xf32>
    %83 = vector.shape_cast %80 : vector<16x128xf32> to vector<1x16x128xf32>
    tpu.vector_store %arg5[%c0_15, %c0_16, %c0_17], %83 {strides = array<i32>} : memref<1x16x128xf32, #tpu.memory_space<vmem>>, vector<1x16x128xf32>,
    return
  }
  func.func @transform_0(%arg0: i32) -> (i32, i32, i32, i32) {
    %c0_i32 = arith.constant 0 : i32
    %c0_i32_0 = arith.constant 0 : i32
    %c0_i32_1 = arith.constant 0 : i32
    %c0_i32_2 = arith.constant 0 : i32
    return %arg0, %c0_i32, %c0_i32_0, %c0_i32_1 : i32, i32, i32, i32
  }
  func.func @transform_1(%arg0: i32) -> (i32, i32, i32, i32) {
    %c0_i32 = arith.constant 0 : i32
    %c0_i32_0 = arith.constant 0 : i32
    %c0_i32_1 = arith.constant 0 : i32
    %c0_i32_2 = arith.constant 0 : i32
    %c0_i32_3 = arith.constant 0 : i32
    return %c0_i32, %c0_i32_0, %c0_i32_1, %c0_i32_2 : i32, i32, i32, i32
  }
  func.func @transform_2(%arg0: i32) -> (i32, i32, i32) {
    %c0_i32 = arith.constant 0 : i32
    %c0_i32_0 = arith.constant 0 : i32
    %c0_i32_1 = arith.constant 0 : i32
    %c0_i32_2 = arith.constant 0 : i32
    return %c0_i32, %c0_i32_0, %c0_i32_1 : i32, i32, i32
  }
  func.func @transform_3(%arg0: i32) -> (i32, i32) {
    %c0_i32 = arith.constant 0 : i32
    %c0_i32_0 = arith.constant 0 : i32
    %c0_i32_1 = arith.constant 0 : i32
    return %c0_i32, %c0_i32_0 : i32, i32
  }
  func.func @transform_4(%arg0: i32) -> (i32, i32, i32) {
    %c0_i32 = arith.constant 0 : i32
    %c0_i32_0 = arith.constant 0 : i32
    %c0_i32_1 = arith.constant 0 : i32
    return %arg0, %c0_i32, %c0_i32_0 : i32, i32, i32
  }
}

</mosaic_0001>

<llo_original>
// kernel: spatial_path_forward.4
$region0: #{spatial_path_forward.4}
  #allocation0 [shape = 'u32[]', space=smem, size = 0x4, offset = 0x4, fixed_abs, tag = 'smem constant byte address 0x4 - core index']
  #allocation1 [shape = 'u32[144,128]{1,0:T(1,128)}', space=vmem, size = 0x12000, scoped, tag = 'internal scratch']
  %s0 = inlined_call_operand.vmem [shape: f32[2,68,17,3], index: 0, kind: input, shape index: {}]
  %s1 = inlined_call_operand.vmem [shape: f32[3,3,3,32], index: 1, kind: input, shape index: {}]
  %s2 = inlined_call_operand.vmem [shape: f32[1,32], index: 2, kind: input, shape index: {}]
  %s3 = inlined_call_operand.vmem [shape: f32[2,256,32], index: 3, kind: output, shape index: {}]
  %s4 = sld [smem:[#allocation0]]
  $region45: #{spatial_path_forward.4} parent=0
    _
  %s6 = ssub.s32 1, %s4
  %s7 = scalar_select 0, %s6, %s4
  loop: start=0, step=1, limit=4
  $region2: #{spatial_path_forward.4} parent=0 // loop_pre_header
    _
  $region3: #{spatial_path_forward.4} parent=0 // loop_header
    %s9 = sphi 0, %s13
    %p10 = scmp.ge.s32.totalorder %s9, 4
    %s19 = sphi 0, %s21
    %s22 = sphi 0, %s19
    %s23 = sphi 0, %s22
    %s39 = sphi 0, %s23
    %s43 = sphi 0, %s43
    %s45 = sphi 0, %s43
    %s46 = sphi 0, %s45
    %s60 = sphi 0, %s46
    %s64 = sphi 0, %s64
    %s66 = sphi 0, %s64
    %s67 = sphi 0, %s66
    %s81 = sphi 0, %s67
    %s87 = sphi 0, %s89
    %s90 = sphi 0, %s87
    %s91 = sphi 0, %s90
    %s107 = sphi 0, %s91
  $region4: #{spatial_path_forward.4} parent=0 // loop_header_branch
    %12 = sbr.rel (%p10) target = $region8
  $region5: #{spatial_path_forward.4} parent=0 // loop_body
    %s14 = ssub.s32 %s9, 1
    %s15 = ssub.s32 %s9, 2
    %s16 = sadd.s32 %s9, 1
    %s17 = ssub.s32 %s9, %s16
    %p18 = scmp.eq.s32.totalorder %s17, 0
    %s20 = sadd.s32 %s19, 1
    %s21 = scalar_select %p18, %s19, %s20
    %p24 = pneg %p18
    %p25 = scmp.eq.s32.totalorder %s9, 1
    %p26 = por %p24, %p25
    %p27 = scmp.ne.s32.totalorder %s19, %s22
    %p28 = scmp.eq.s32.totalorder %s9, 0
    %p29 = por %p27, %p28
    %p30 = scmp.ne.s32.totalorder %s19, %s22
    %p31 = scmp.eq.s32.totalorder %s14, 1
    %p32 = por %p30, %p31
    %p33 = scmp.ne.s32.totalorder %s22, %s23
    %p34 = scmp.eq.s32.totalorder %s14, 0
    %p35 = por %p33, %p34
    %p36 = scmp.ne.s32.totalorder %s22, %s23
    %p37 = scmp.eq.s32.totalorder %s15, 1
    %p38 = por %p36, %p37
    %p40 = scmp.ne.s32.totalorder %s23, %s39
    %p41 = scmp.eq.s32.totalorder %s15, 0
    %p42 = por %p40, %p41
    %s44 = sadd.s32 %s43, 1
    %p47 = scmp.eq.s32.totalorder %s9, 1
    %p48 = scmp.ne.s32.totalorder %s43, %s45
    %p49 = scmp.eq.s32.totalorder %s9, 0
    %p50 = por %p48, %p49
    %p51 = scmp.ne.s32.totalorder %s43, %s45
    %p52 = scmp.eq.s32.totalorder %s14, 1
    %p53 = por %p51, %p52
    %p54 = scmp.ne.s32.totalorder %s45, %s46
    %p55 = scmp.eq.s32.totalorder %s14, 0
    %p56 = por %p54, %p55
    %p57 = scmp.ne.s32.totalorder %s45, %s46
    %p58 = scmp.eq.s32.totalorder %s15, 1
    %p59 = por %p57, %p58
    %p61 = scmp.ne.s32.totalorder %s46, %s60
    %p62 = scmp.eq.s32.totalorder %s15, 0
    %p63 = por %p61, %p62
    %s65 = sadd.s32 %s64, 1
    %p68 = scmp.eq.s32.totalorder %s9, 1
    %p69 = scmp.ne.s32.totalorder %s64, %s66
    %p70 = scmp.eq.s32.totalorder %s9, 0
    %p71 = por %p69, %p70
    %p72 = scmp.ne.s32.totalorder %s64, %s66
    %p73 = scmp.eq.s32.totalorder %s14, 1
    %p74 = por %p72, %p73
    %p75 = scmp.ne.s32.totalorder %s66, %s67
    %p76 = scmp.eq.s32.totalorder %s14, 0
    %p77 = por %p75, %p76
    %p78 = scmp.ne.s32.totalorder %s66, %s67
    %p79 = scmp.eq.s32.totalorder %s15, 1
    %p80 = por %p78, %p79
    %p82 = scmp.ne.s32.totalorder %s67, %s81
    %p83 = scmp.eq.s32.totalorder %s15, 0
    %p84 = por %p82, %p83
    %s85 = ssub.s32 %s9, %s16
    %p86 = scmp.eq.s32.totalorder %s85, 0
    %s88 = sadd.s32 %s87, 1
    %s89 = scalar_select %p86, %s87, %s88
    %p92 = pneg %p86
    %p93 = scmp.eq.s32.totalorder %s9, 1
    %p94 = por %p92, %p93
    %p95 = scmp.ne.s32.totalorder %s87, %s90
    %p96 = scmp.eq.s32.totalorder %s9, 0
    %p97 = por %p95, %p96
    %p98 = scmp.ne.s32.totalorder %s87, %s90
    %p99 = scmp.eq.s32.totalorder %s14, 1
    %p100 = por %p98, %p99
    %p101 = scmp.ne.s32.totalorder %s90, %s91
    %p102 = scmp.eq.s32.totalorder %s14, 0
    %p103 = por %p101, %p102
    %p104 = scmp.ne.s32.totalorder %s90, %s91
    %p105 = scmp.eq.s32.totalorder %s15, 1
    %p106 = por %p104, %p105
    %p108 = scmp.ne.s32.totalorder %s91, %s107
    %p109 = scmp.eq.s32.totalorder %s15, 0
    %p110 = por %p108, %p109
    %p111 = scmp.le.s32.totalorder 1, %s9
    %p112 = scmp.lt.s32.totalorder %s9, 3
    %p113 = pnand %p111, %p112
    %p114 = pneg %p113
    // Predicated region
    $region9: #{spatial_path_forward.4} parent=5 // pred_check
      _
    $region10: #{spatial_path_forward.4} parent=5 // pred_check_branch
      %116 = sbr.rel (%p113) target = $region12
    $region11: #{spatial_path_forward.4} parent=5 // pred_region
      %s117 = ssub.s32 %s9, 1
      // Predicated region
      $region13: #{spatial_path_forward.4} parent=11 // pred_check
        %p118 = pneg %p56
      $region14: #{spatial_path_forward.4} parent=11 // pred_check_branch
        %120 = sbr.rel (%p118) target = $region16
      $region15: #{spatial_path_forward.4} parent=11 // pred_region
        _
      $region16: #{spatial_path_forward.4} parent=11 // pred_fallthru
        _
      // Predicated region
      $region17: #{spatial_path_forward.4} parent=11 // pred_check
        %p121 = pneg %p77
      $region18: #{spatial_path_forward.4} parent=11 // pred_check_branch
        %123 = sbr.rel (%p121) target = $region20
      $region19: #{spatial_path_forward.4} parent=11 // pred_region
        _
      $region20: #{spatial_path_forward.4} parent=11 // pred_fallthru
        _
    $region12: #{spatial_path_forward.4} parent=5 // pred_fallthru
      _
    %p124 = scmp.lt.s32.totalorder %s9, 2
    // Predicated region
    $region21: #{spatial_path_forward.4} parent=5 // pred_check
      %p125 = pneg %p124
    $region22: #{spatial_path_forward.4} parent=5 // pred_check_branch
      %127 = sbr.rel (%p125) target = $region24
    $region23: #{spatial_path_forward.4} parent=5 // pred_region
      // Predicated region
      $region25: #{spatial_path_forward.4} parent=23 // pred_check
        %p128 = pneg %p29
      $region26: #{spatial_path_forward.4} parent=23 // pred_check_branch
        %130 = sbr.rel (%p128) target = $region28
      $region27: #{spatial_path_forward.4} parent=23 // pred_region
        %p131 = scmp.lt.s32.totalorder %s9, 1
        %s132 = scalar_select %p131, %s9, 1
        %s133 = smul.addr %s132, 204
        %s134 = smul.addr %s133, 8
        %s135 = scalar_lea.vmem %s0, %s134
      $region28: #{spatial_path_forward.4} parent=23 // pred_fallthru
        _
    $region24: #{spatial_path_forward.4} parent=5 // pred_fallthru
      _
    %p136 = scmp.le.s32.totalorder 1, %s9
    %p137 = scmp.lt.s32.totalorder %s9, 3
    %p138 = pnand %p136, %p137
    %p139 = pneg %p138
    // Predicated region
    $region29: #{spatial_path_forward.4} parent=5 // pred_check
      _
    $region30: #{spatial_path_forward.4} parent=5 // pred_check_branch
      %141 = sbr.rel (%p138) target = $region32
    $region31: #{spatial_path_forward.4} parent=5 // pred_region
      %s142 = ssub.s32 %s9, 1
      %p143 = scmp.lt.s32.totalorder %s14, 1
      %s144 = scalar_select %p143, %s14, 1
      %s145 = smul.addr %s144, 204
      %s146 = smul.addr %s145, 8
      %s147 = scalar_lea.vmem %s0, %s146
      %p148 = pneg %p35
      %p149 = pneg %p32
      %p150 = pneg %p56
      %p151 = pneg %p53
      %p152 = pneg %p77
      %p153 = pneg %p74
      %p154 = pneg %p103
      %p155 = pneg %p100
      %p156 = scmp.lt.s32.totalorder %s14, 1
      %s157 = scalar_select %p156, %s14, 1
      %s158 = smul.addr %s157, 32
      %s159 = smul.addr %s158, 8
      %s160 = scalar_lea.vmem %s3, %s159
      %p161 = scmp.lt.s32.totalorder %s14, 1
      %s162 = scalar_select %p161, %s14, 1
      %s163 = smul.addr %s162, 204
      %s164 = smul.addr %s163, 8
      %s165 = scalar_lea.vmem %s0, %s164
      %p166 = scmp.lt.s32.totalorder %s14, 1
      %s167 = scalar_select %p166, %s14, 1
      %s168 = smul.addr %s167, 32
      %s169 = smul.addr %s168, 8
      %s170 = scalar_lea.vmem %s3, %s169
      %v171 = vld [vmem:[%s165] sm:$0xff]
      %v172 = vld [vmem:[%s165 + $0x8] sm:$0xff]
      %v173 = vld [vmem:[%s165 + $0x10] sm:$0x1]
      %v174 = vld [vmem:[%s165 + $0x18] sm:$0xff]
      %v175 = vld [vmem:[%s165 + $0x20] sm:$0xff]
      %v176 = vld [vmem:[%s165 + $0x28] sm:$0x1]
      %v177 = vld [vmem:[%s165 + $0x30] sm:$0xff]
      %v178 = vld [vmem:[%s165 + $0x38] sm:$0xff]
      %v179 = vld [vmem:[%s165 + $0x40] sm:$0x1]
      %v180 = vld [vmem:[%s165 + $0x48] sm:$0xff]
      %v181 = vld [vmem:[%s165 + $0x50] sm:$0xff]
      %v182 = vld [vmem:[%s165 + $0x58] sm:$0x1]
      %v183 = vld [vmem:[%s165 + $0x60] sm:$0xff]
      %v184 = vld [vmem:[%s165 + $0x68] sm:$0xff]
      %v185 = vld [vmem:[%s165 + $0x70] sm:$0x1]
      %v186 = vld [vmem:[%s165 + $0x78] sm:$0xff]
      %v187 = vld [vmem:[%s165 + $0x80] sm:$0xff]
      %v188 = vld [vmem:[%s165 + $0x88] sm:$0x1]
      %v189 = vld [vmem:[%s165 + $0x90] sm:$0xff]
      %v190 = vld [vmem:[%s165 + $0x98] sm:$0xff]
      %v191 = vld [vmem:[%s165 + $0xa0] sm:$0x1]
      %v192 = vld [vmem:[%s165 + $0xa8] sm:$0xff]
      %v193 = vld [vmem:[%s165 + $0xb0] sm:$0xff]
      %v194 = vld [vmem:[%s165 + $0xb8] sm:$0x1]
      %v195 = vld [vmem:[%s165 + $0xc0] sm:$0xff]
      %v196 = vld [vmem:[%s165 + $0xc8] sm:$0xff]
      %v197 = vld [vmem:[%s165 + $0xd0] sm:$0x1]
      %v198 = vld [vmem:[%s165 + $0xd8] sm:$0xff]
      %v199 = vld [vmem:[%s165 + $0xe0] sm:$0xff]
      %v200 = vld [vmem:[%s165 + $0xe8] sm:$0x1]
      %v201 = vld [vmem:[%s165 + $0xf0] sm:$0xff]
      %v202 = vld [vmem:[%s165 + $0xf8] sm:$0xff]
      %v203 = vld [vmem:[%s165 + $0x100] sm:$0x1]
      %v204 = vld [vmem:[%s165 + $0x108] sm:$0xff]
      %v205 = vld [vmem:[%s165 + $0x110] sm:$0xff]
      %v206 = vld [vmem:[%s165 + $0x118] sm:$0x1]
      %v207 = vld [vmem:[%s165 + $0x120] sm:$0xff]
      %v208 = vld [vmem:[%s165 + $0x128] sm:$0xff]
      %v209 = vld [vmem:[%s165 + $0x130] sm:$0x1]
      %v210 = vld [vmem:[%s165 + $0x138] sm:$0xff]
      %v211 = vld [vmem:[%s165 + $0x140] sm:$0xff]
      %v212 = vld [vmem:[%s165 + $0x148] sm:$0x1]
      %v213 = vld [vmem:[%s165 + $0x150] sm:$0xff]
      %v214 = vld [vmem:[%s165 + $0x158] sm:$0xff]
      %v215 = vld [vmem:[%s165 + $0x160] sm:$0x1]
      %v216 = vld [vmem:[%s165 + $0x168] sm:$0xff]
      %v217 = vld [vmem:[%s165 + $0x170] sm:$0xff]
      %v218 = vld [vmem:[%s165 + $0x178] sm:$0x1]
      %v219 = vld [vmem:[%s165 + $0x180] sm:$0xff]
      %v220 = vld [vmem:[%s165 + $0x188] sm:$0xff]
      %v221 = vld [vmem:[%s165 + $0x190] sm:$0x1]
      %v222 = vld [vmem:[%s165 + $0x198] sm:$0xff]
      %v223 = vld [vmem:[%s165 + $0x1a0] sm:$0xff]
      %v224 = vld [vmem:[%s165 + $0x1b0] sm:$0xff]
      %v225 = vld [vmem:[%s165 + $0x1b8] sm:$0xff]
      %v226 = vld [vmem:[%s165 + $0x1c8] sm:$0xff]
      %v227 = vld [vmem:[%s165 + $0x1d0] sm:$0xff]
      %v228 = vld [vmem:[%s165 + $0x1e0] sm:$0xff]
      %v229 = vld [vmem:[%s165 + $0x1e8] sm:$0xff]
      %v230 = vld [vmem:[%s165 + $0x1f8] sm:$0xff]
      %v231 = vld [vmem:[%s165 + $0x200] sm:$0xff]
      %v232 = vld [vmem:[%s165 + $0x210] sm:$0xff]
      %v233 = vld [vmem:[%s165 + $0x218] sm:$0xff]
      %v234 = vld [vmem:[%s165 + $0x228] sm:$0xff]
      %v235 = vld [vmem:[%s165 + $0x230] sm:$0xff]
      %v236 = vld [vmem:[%s165 + $0x240] sm:$0xff]
      %v237 = vld [vmem:[%s165 + $0x248] sm:$0xff]
      %v238 = vld [vmem:[%s165 + $0x258] sm:$0xff]
      %v239 = vld [vmem:[%s165 + $0x260] sm:$0xff]
      %v240 = vld [vmem:[%s165 + $0x270] sm:$0xff]
      %v241 = vld [vmem:[%s165 + $0x278] sm:$0xff]
      %v242 = vld [vmem:[%s165 + $0x288] sm:$0xff]
      %v243 = vld [vmem:[%s165 + $0x290] sm:$0xff]
      %v244 = vld [vmem:[%s165 + $0x2a0] sm:$0xff]
      %v245 = vld [vmem:[%s165 + $0x2a8] sm:$0xff]
      %v246 = vld [vmem:[%s165 + $0x2b8] sm:$0xff]
      %v247 = vld [vmem:[%s165 + $0x2c0] sm:$0xff]
      %v248 = vld [vmem:[%s165 + $0x2d0] sm:$0xff]
      %v249 = vld [vmem:[%s165 + $0x2d8] sm:$0xff]
      %v250 = vld [vmem:[%s165 + $0x2e8] sm:$0xff]
      %v251 = vld [vmem:[%s165 + $0x2f0] sm:$0xff]
      %v252 = vld [vmem:[%s165 + $0x300] sm:$0xff]
      %v253 = vld [vmem:[%s165 + $0x308] sm:$0xff]
      %v254 = vld [vmem:[%s165 + $0x318] sm:$0xff]
      %v255 = vld [vmem:[%s165 + $0x320] sm:$0xff]
      %v256 = vld [vmem:[%s165 + $0x330] sm:$0xff]
      %v257 = vld [vmem:[%s165 + $0x338] sm:$0xff]
      %v258 = vld [vmem:[%s165 + $0x340] sm:$0x1]
      %v259 = vld [vmem:[%s165 + $0x348] sm:$0xff]
      %v260 = vld [vmem:[%s165 + $0x350] sm:$0xff]
      %v261 = vld [vmem:[%s165 + $0x358] sm:$0x1]
      %v262 = vld [vmem:[%s165 + $0x360] sm:$0xff]
      %v263 = vld [vmem:[%s165 + $0x368] sm:$0xff]
      %v264 = vld [vmem:[%s165 + $0x370] sm:$0x1]
      %v265 = vld [vmem:[%s165 + $0x378] sm:$0xff]
      %v266 = vld [vmem:[%s165 + $0x380] sm:$0xff]
      %v267 = vld [vmem:[%s165 + $0x388] sm:$0x1]
      %v268 = vld [vmem:[%s165 + $0x390] sm:$0xff]
      %v269 = vld [vmem:[%s165 + $0x398] sm:$0xff]
      %v270 = vld [vmem:[%s165 + $0x3a0] sm:$0x1]
      %v271 = vld [vmem:[%s165 + $0x3a8] sm:$0xff]
      %v272 = vld [vmem:[%s165 + $0x3b0] sm:$0xff]
      %v273 = vld [vmem:[%s165 + $0x3b8] sm:$0x1]
      %v274 = vld [vmem:[%s165 + $0x3c0] sm:$0xff]
      %v275 = vld [vmem:[%s165 + $0x3c8] sm:$0xff]
      %v276 = vld [vmem:[%s165 + $0x3d0] sm:$0x1]
      %v277 = vld [vmem:[%s165 + $0x3d8] sm:$0xff]
      %v278 = vld [vmem:[%s165 + $0x3e0] sm:$0xff]
      %v279 = vld [vmem:[%s165 + $0x3e8] sm:$0x1]
      %v280 = vld [vmem:[%s165 + $0x3f0] sm:$0xff]
      %v281 = vld [vmem:[%s165 + $0x3f8] sm:$0xff]
      %v282 = vld [vmem:[%s165 + $0x400] sm:$0x1]
      %v283 = vld [vmem:[%s165 + $0x408] sm:$0xff]
      %v284 = vld [vmem:[%s165 + $0x410] sm:$0xff]
      %v285 = vld [vmem:[%s165 + $0x418] sm:$0x1]
      %v286 = vld [vmem:[%s165 + $0x420] sm:$0xff]
      %v287 = vld [vmem:[%s165 + $0x428] sm:$0xff]
      %v288 = vld [vmem:[%s165 + $0x430] sm:$0x1]
      %v289 = vld [vmem:[%s165 + $0x438] sm:$0xff]
      %v290 = vld [vmem:[%s165 + $0x440] sm:$0xff]
      %v291 = vld [vmem:[%s165 + $0x448] sm:$0x1]
      %v292 = vld [vmem:[%s165 + $0x450] sm:$0xff]
      %v293 = vld [vmem:[%s165 + $0x458] sm:$0xff]
      %v294 = vld [vmem:[%s165 + $0x460] sm:$0x1]
      %v295 = vld [vmem:[%s165 + $0x468] sm:$0xff]
      %v296 = vld [vmem:[%s165 + $0x470] sm:$0xff]
      %v297 = vld [vmem:[%s165 + $0x478] sm:$0x1]
      %v298 = vld [vmem:[%s165 + $0x480] sm:$0xff]
      %v299 = vld [vmem:[%s165 + $0x488] sm:$0xff]
      %v300 = vld [vmem:[%s165 + $0x490] sm:$0x1]
      %v301 = vld [vmem:[%s165 + $0x498] sm:$0xff]
      %v302 = vld [vmem:[%s165 + $0x4a0] sm:$0xff]
      %v303 = vld [vmem:[%s165 + $0x4a8] sm:$0x1]
      %v304 = vld [vmem:[%s165 + $0x4c8] sm:$0xff]
      %v305 = vld [vmem:[%s165 + $0x4d0] sm:$0xff]
      %v306 = vld [vmem:[%s165 + $0x4e0] sm:$0xff]
      %v307 = vld [vmem:[%s165 + $0x4e8] sm:$0xff]
      %v308 = vld [vmem:[%s165 + $0x4f8] sm:$0xff]
      %v309 = vld [vmem:[%s165 + $0x500] sm:$0xff]
      %v310 = vld [vmem:[%s165 + $0x510] sm:$0xff]
      %v311 = vld [vmem:[%s165 + $0x518] sm:$0xff]
      %v312 = vld [vmem:[%s165 + $0x528] sm:$0xff]
      %v313 = vld [vmem:[%s165 + $0x530] sm:$0xff]
      %v314 = vld [vmem:[%s165 + $0x540] sm:$0xff]
      %v315 = vld [vmem:[%s165 + $0x548] sm:$0xff]
      %v316 = vld [vmem:[%s165 + $0x558] sm:$0xff]
      %v317 = vld [vmem:[%s165 + $0x560] sm:$0xff]
      %v318 = vld [vmem:[%s165 + $0x570] sm:$0xff]
      %v319 = vld [vmem:[%s165 + $0x578] sm:$0xff]
      %v320 = vld [vmem:[%s165 + $0x588] sm:$0xff]
      %v321 = vld [vmem:[%s165 + $0x590] sm:$0xff]
      %v322 = vld [vmem:[%s165 + $0x5a0] sm:$0xff]
      %v323 = vld [vmem:[%s165 + $0x5a8] sm:$0xff]
      %v324 = vld [vmem:[%s165 + $0x5b8] sm:$0xff]
      %v325 = vld [vmem:[%s165 + $0x5c0] sm:$0xff]
      %v326 = vld [vmem:[%s165 + $0x5d0] sm:$0xff]
      %v327 = vld [vmem:[%s165 + $0x5d8] sm:$0xff]
      %v328 = vld [vmem:[%s165 + $0x5e8] sm:$0xff]
      %v329 = vld [vmem:[%s165 + $0x5f0] sm:$0xff]
      %v330 = vld [vmem:[%s165 + $0x600] sm:$0xff]
      %v331 = vld [vmem:[%s165 + $0x608] sm:$0xff]
      %v332 = vld [vmem:[%s165 + $0x618] sm:$0xff]
      %v333 = vld [vmem:[%s165 + $0x620] sm:$0xff]
      %v334 = vld [vmem:[%s165 + $0x630] sm:$0xff]
      %v335 = vld [vmem:[%s165 + $0x638] sm:$0xff]
      %v336 = vld [vmem:[%s1] sm:$0x7]
      %v337 = vld [vmem:[%s1 + $0x4] sm:$0x7]
      %v338 = vld [vmem:[%s1 + $0x8] sm:$0x7]
      %v339 = vld [vmem:[%s1 + $0xc] sm:$0x7]
      %v340 = vld [vmem:[%s1 + $0x10] sm:$0x7]
      %v341 = vld [vmem:[%s1 + $0x14] sm:$0x7]
      %v342 = vld [vmem:[%s1 + $0x18] sm:$0x7]
      %v343 = vld [vmem:[%s1 + $0x1c] sm:$0x7]
      %v344 = vld [vmem:[%s1 + $0x20] sm:$0x7]
      %vm345 = vcmask 23552
      %v347 = vsel %vm345, %v222, 0
      %v350 = vsel %vm345, %v223, 0
      %v353 = vsel %vm345, %v224, 0
      %v356 = vsel %vm345, %v225, 0
      %v359 = vsel %vm345, %v226, 0
      %v362 = vsel %vm345, %v227, 0
      %v365 = vsel %vm345, %v228, 0
      %v368 = vsel %vm345, %v229, 0
      %v371 = vsel %vm345, %v230, 0
      %v374 = vsel %vm345, %v231, 0
      %v377 = vsel %vm345, %v232, 0
      %v380 = vsel %vm345, %v233, 0
      %v383 = vsel %vm345, %v234, 0
      %v386 = vsel %vm345, %v235, 0
      %v389 = vsel %vm345, %v236, 0
      %v392 = vsel %vm345, %v237, 0
      %v395 = vsel %vm345, %v238, 0
      %v398 = vsel %vm345, %v239, 0
      %v401 = vsel %vm345, %v240, 0
      %v404 = vsel %vm345, %v241, 0
      %v407 = vsel %vm345, %v242, 0
      %v410 = vsel %vm345, %v243, 0
      %v413 = vsel %vm345, %v244, 0
      %v416 = vsel %vm345, %v245, 0
      %v419 = vsel %vm345, %v246, 0
      %v422 = vsel %vm345, %v247, 0
      %v425 = vsel %vm345, %v248, 0
      %v428 = vsel %vm345, %v249, 0
      %v431 = vsel %vm345, %v250, 0
      %v434 = vsel %vm345, %v251, 0
      %v437 = vsel %vm345, %v252, 0
      %v440 = vsel %vm345, %v253, 0
      %vm442 = vcmask 1042432
      %v444 = vsel %vm442, %v337, 0
      %446 = vmatprep.subr.mxu0 0.0
      %447 = vmatpush1.msra.mxu0 %v444
      %448 = vmatprep.subr.mxu0 0.0
      %449 = vmatpush1.msra.mxu0 0.0
      %450 = vmatprep.subr.mxu0 0.0
      %451 = vmatpush1.msra.mxu0 0.0
      %452 = vmatprep.subr.mxu0 0.0
      %453 = vmatpush1.msra.mxu0 0.0
      %454 = vmatprep.subr.mxu0 0.0
      %455 = vmatpush1.msra.mxu0 0.0
      %456 = vmatprep.subr.mxu0 0.0
      %457 = vmatpush1.msra.mxu0 0.0
      %458 = vmatprep.subr.mxu0 0.0
      %459 = vmatpush1.msra.mxu0 0.0
      %460 = vmatprep.subr.mxu0 0.0
      %461 = vmatpush1.msra.mxu0 0.0
      %462 = vmatprep.subr.mxu0 0.0
      %463 = vmatpush1.msra.mxu0 0.0
      %464 = vmatprep.subr.mxu0 0.0
      %465 = vmatpush1.msra.mxu0 0.0
      %466 = vmatprep.subr.mxu0 0.0
      %467 = vmatpush1.msra.mxu0 0.0
      %468 = vmatprep.subr.mxu0 0.0
      %469 = vmatpush1.msra.mxu0 0.0
      %470 = vmatprep.subr.mxu0 0.0
      %471 = vmatpush1.msra.mxu0 0.0
      %472 = vmatprep.subr.mxu0 0.0
      %473 = vmatpush1.msra.mxu0 0.0
      %474 = vmatprep.subr.mxu0 0.0
      %475 = vmatpush1.msra.mxu0 0.0
      %476 = vmatprep.subr.mxu0 0.0
      %477 = vmatpush1.msra.mxu0 0.0
      %478 = vmatprep.subr.mxu0 0.0
      %479 = vmatpush1.msra.mxu0 0.0
      %480 = vmatprep.subr.mxu0 0.0
      %481 = vmatpush1.msra.mxu0 0.0
      %482 = vmatprep.subr.mxu0 0.0
      %483 = vmatpush1.msra.mxu0 0.0
      %484 = vmatprep.subr.mxu0 0.0
      %485 = vmatpush1.msra.mxu0 0.0
      %486 = vmatprep.subr.mxu0 0.0
      %487 = vmatpush1.msra.mxu0 0.0
      %488 = vmatprep.subr.mxu0 0.0
      %489 = vmatpush1.msra.mxu0 0.0
      %490 = vmatprep.subr.mxu0 0.0
      %491 = vmatpush1.msra.mxu0 0.0
      %492 = vmatprep.subr.mxu0 0.0
      %493 = vmatpush1.msra.mxu0 0.0
      %494 = vmatprep.subr.mxu0 0.0
      %495 = vmatpush1.msra.mxu0 0.0
      %496 = vmatprep.subr.mxu0 0.0
      %497 = vmatpush1.msra.mxu0 0.0
      %498 = vmatprep.subr.mxu0 0.0
      %499 = vmatpush1.msra.mxu0 0.0
      %500 = vmatprep.subr.mxu0 0.0
      %501 = vmatpush1.msra.mxu0 0.0
      %502 = vmatprep.subr.mxu0 0.0
      %503 = vmatpush1.msra.mxu0 0.0
      %504 = vmatprep.subr.mxu0 0.0
      %505 = vmatpush1.msra.mxu0 0.0
      %506 = vmatprep.subr.mxu0 0.0
      %507 = vmatpush1.msra.mxu0 0.0
      %508 = vmatprep.subr.mxu0 0.0
      %509 = vmatpush1.msra.mxu0 0.0
      %510 = vmatprep.mubr.f32.mxu0 0.0
      %511 = vmatmul.mubr.f32.gmra.mrb[0].mxu0 %v347
      %v512 = vpop.f32.mrb[0].mxu0
      %v513 = vadd.f32 0.0, %v512
      %v514 = vpop.f32.mrb[0].mxu0
      %515 = vmatprep.mubr.f32.mxu0 0.0
      %516 = vmatmul.mubr.f32.gmra.mrb[0].mxu0 %v350
      %v517 = vpop.f32.mrb[0].mxu0
      %v518 = vadd.f32 0.0, %v517
      %v519 = vpop.f32.mrb[0].mxu0
      %520 = vmatprep.mubr.f32.mxu0 0.0
      %521 = vmatmul.mubr.f32.gmra.mrb[0].mxu0 %v353
      %v522 = vpop.f32.mrb[0].mxu0
      %v523 = vadd.f32 0.0, %v522
      %v524 = vpop.f32.mrb[0].mxu0
      %525 = vmatprep.mubr.f32.mxu0 0.0
      %526 = vmatmul.mubr.f32.gmra.mrb[0].mxu0 %v356
      %v527 = vpop.f32.mrb[0].mxu0
      %v528 = vadd.f32 0.0, %v527
      %v529 = vpop.f32.mrb[0].mxu0
      %530 = vmatprep.mubr.f32.mxu0 0.0
      %531 = vmatmul.mubr.f32.gmra.mrb[0].mxu0 %v359
      %v532 = vpop.f32.mrb[0].mxu0
      %v533 = vadd.f32 0.0, %v532
      %v534 = vpop.f32.mrb[0].mxu0
      %535 = vmatprep.mubr.f32.mxu0 0.0
      %536 = vmatmul.mubr.f32.gmra.mrb[0].mxu0 %v362
      %v537 = vpop.f32.mrb[0].mxu0
      %v538 = vadd.f32 0.0, %v537
      %v539 = vpop.f32.mrb[0].mxu0
      %540 = vmatprep.mubr.f32.mxu0 0.0
      %541 = vmatmul.mubr.f32.gmra.mrb[0].mxu0 %v365
      %v542 = vpop.f32.mrb[0].mxu0
      %v543 = vadd.f32 0.0, %v542
      %v544 = vpop.f32.mrb[0].mxu0
      %545 = vmatprep.mubr.f32.mxu0 0.0
      %546 = vmatmul.mubr.f32.gmra.mrb[0].mxu0 %v368
      %v547 = vpop.f32.mrb[0].mxu0
      %v548 = vadd.f32 0.0, %v547
      %v549 = vpop.f32.mrb[0].mxu0
      %550 = vmatprep.mubr.f32.mxu0 0.0
      %551 = vmatmul.mubr.f32.gmra.mrb[0].mxu0 %v371
      %v552 = vpop.f32.mrb[0].mxu0
      %v553 = vadd.f32 0.0, %v552
      %v554 = vpop.f32.mrb[0].mxu0
      %555 = vmatprep.mubr.f32.mxu0 0.0
      %556 = vmatmul.mubr.f32.gmra.mrb[0].mxu0 %v374
      %v557 = vpop.f32.mrb[0].mxu0
      %v558 = vadd.f32 0.0, %v557
      %v559 = vpop.f32.mrb[0].mxu0
      %560 = vmatprep.mubr.f32.mxu0 0.0
      %561 = vmatmul.mubr.f32.gmra.mrb[0].mxu0 %v377
      %v562 = vpop.f32.mrb[0].mxu0
      %v563 = vadd.f32 0.0, %v562
      %v564 = vpop.f32.mrb[0].mxu0
      %565 = vmatprep.mubr.f32.mxu0 0.0
      %566 = vmatmul.mubr.f32.gmra.mrb[0].mxu0 %v380
      %v567 = vpop.f32.mrb[0].mxu0
      %v568 = vadd.f32 0.0, %v567
      %v569 = vpop.f32.mrb[0].mxu0
      %570 = vmatprep.mubr.f32.mxu0 0.0
      %571 = vmatmul.mubr.f32.gmra.mrb[0].mxu0 %v383
      %v572 = vpop.f32.mrb[0].mxu0
      %v573 = vadd.f32 0.0, %v572
      %v574 = vpop.f32.mrb[0].mxu0
      %575 = vmatprep.mubr.f32.mxu0 0.0
      %576 = vmatmul.mubr.f32.gmra.mrb[0].mxu0 %v386
      %v577 = vpop.f32.mrb[0].mxu0
      %v578 = vadd.f32 0.0, %v577
      %v579 = vpop.f32.mrb[0].mxu0
      %580 = vmatprep.mubr.f32.mxu0 0.0
      %581 = vmatmul.mubr.f32.gmra.mrb[0].mxu0 %v389
      %v582 = vpop.f32.mrb[0].mxu0
      %v583 = vadd.f32 0.0, %v582
      %v584 = vpop.f32.mrb[0].mxu0
      %585 = vmatprep.mubr.f32.mxu0 0.0
      %586 = vmatmul.mubr.f32.gmra.mrb[0].mxu0 %v392
      %v587 = vpop.f32.mrb[0].mxu0
      %v588 = vadd.f32 0.0, %v587
      %v589 = vpop.f32.mrb[0].mxu0
      %590 = vmatprep.mubr.f32.mxu0 0.0
      %591 = vmatmul.mubr.f32.gmra.mrb[0].mxu0 %v395
      %v592 = vpop.f32.mrb[0].mxu0
      %v593 = vadd.f32 0.0, %v592
      %v594 = vpop.f32.mrb[0].mxu0
      %595 = vmatprep.mubr.f32.mxu0 0.0
      %596 = vmatmul.mubr.f32.gmra.mrb[0].mxu0 %v398
      %v597 = vpop.f32.mrb[0].mxu0
      %v598 = vadd.f32 0.0, %v597
      %v599 = vpop.f32.mrb[0].mxu0
      %600 = vmatprep.mubr.f32.mxu0 0.0
      %601 = vmatmul.mubr.f32.gmra.mrb[0].mxu0 %v401
      %v602 = vpop.f32.mrb[0].mxu0
      %v603 = vadd.f32 0.0, %v602
      %v604 = vpop.f32.mrb[0].mxu0
      %605 = vmatprep.mubr.f32.mxu0 0.0
      %606 = vmatmul.mubr.f32.gmra.mrb[0].mxu0 %v404
      %v607 = vpop.f32.mrb[0].mxu0
      %v608 = vadd.f32 0.0, %v607
      %v609 = vpop.f32.mrb[0].mxu0
      %610 = vmatprep.mubr.f32.mxu0 0.0
      %611 = vmatmul.mubr.f32.gmra.mrb[0].mxu0 %v407
      %v612 = vpop.f32.mrb[0].mxu0
      %v613 = vadd.f32 0.0, %v612
      %v614 = vpop.f32.mrb[0].mxu0
      %615 = vmatprep.mubr.f32.mxu0 0.0
      %616 = vmatmul.mubr.f32.gmra.mrb[0].mxu0 %v410
      %v617 = vpop.f32.mrb[0].mxu0
      %v618 = vadd.f32 0.0, %v617
      %v619 = vpop.f32.mrb[0].mxu0
      %620 = vmatprep.mubr.f32.mxu0 0.0
      %621 = vmatmul.mubr.f32.gmra.mrb[0].mxu0 %v413
      %v622 = vpop.f32.mrb[0].mxu0
      %v623 = vadd.f32 0.0, %v622
      %v624 = vpop.f32.mrb[0].mxu0
      %625 = vmatprep.mubr.f32.mxu0 0.0
      %626 = vmatmul.mubr.f32.gmra.mrb[0].mxu0 %v416
      %v627 = vpop.f32.mrb[0].mxu0
      %v628 = vadd.f32 0.0, %v627
      %v629 = vpop.f32.mrb[0].mxu0
      %630 = vmatprep.mubr.f32.mxu0 0.0
      %631 = vmatmul.mubr.f32.gmra.mrb[0].mxu0 %v419
      %v632 = vpop.f32.mrb[0].mxu0
      %v633 = vadd.f32 0.0, %v632
      %v634 = vpop.f32.mrb[0].mxu0
      %635 = vmatprep.mubr.f32.mxu0 0.0
      %636 = vmatmul.mubr.f32.gmra.mrb[0].mxu0 %v422
      %v637 = vpop.f32.mrb[0].mxu0
      %v638 = vadd.f32 0.0, %v637
      %v639 = vpop.f32.mrb[0].mxu0
      %640 = vmatprep.mubr.f32.mxu0 0.0
      %641 = vmatmul.mubr.f32.gmra.mrb[0].mxu0 %v425
      %v642 = vpop.f32.mrb[0].mxu0
      %v643 = vadd.f32 0.0, %v642
      %v644 = vpop.f32.mrb[0].mxu0
      %645 = vmatprep.mubr.f32.mxu0 0.0
      %646 = vmatmul.mubr.f32.gmra.mrb[0].mxu0 %v428
      %v647 = vpop.f32.mrb[0].mxu0
      %v648 = vadd.f32 0.0, %v647
      %v649 = vpop.f32.mrb[0].mxu0
      %650 = vmatprep.mubr.f32.mxu0 0.0
      %651 = vmatmul.mubr.f32.gmra.mrb[0].mxu0 %v431
      %v652 = vpop.f32.mrb[0].mxu0
      %v653 = vadd.f32 0.0, %v652
      %v654 = vpop.f32.mrb[0].mxu0
      %655 = vmatprep.mubr.f32.mxu0 0.0
      %656 = vmatmul.mubr.f32.gmra.mrb[0].mxu0 %v434
      %v657 = vpop.f32.mrb[0].mxu0
      %v658 = vadd.f32 0.0, %v657
      %v659 = vpop.f32.mrb[0].mxu0
      %660 = vmatprep.mubr.f32.mxu0 0.0
      %661 = vmatmul.mubr.f32.gmra.mrb[0].mxu0 %v437
      %v662 = vpop.f32.mrb[0].mxu0
      %v663 = vadd.f32 0.0, %v662
      %v664 = vpop.f32.mrb[0].mxu0
      %665 = vmatprep.mubr.f32.mxu0 0.0
      %666 = vmatmul.mubr.f32.gmra.mrb[0].mxu0 %v440
      %v667 = vpop.f32.mrb[0].mxu0
      %v668 = vadd.f32 0.0, %v667
      %v669 = vpop.f32.mrb[0].mxu0
      %670 = vdwg.mxu0
      %v672 = vsel %vm345, %v171, 0
      %v675 = vsel %vm345, %v172, 0
      %v678 = vsel %vm345, %v174, 0
      %v681 = vsel %vm345, %v175, 0
      %v684 = vsel %vm345, %v177, 0
      %v687 = vsel %vm345, %v178, 0
      %v690 = vsel %vm345, %v180, 0
      %v693 = vsel %vm345, %v181, 0
      %v696 = vsel %vm345, %v183, 0
      %v699 = vsel %vm345, %v184, 0
      %v702 = vsel %vm345, %v186, 0
      %v705 = vsel %vm345, %v187, 0
      %v708 = vsel %vm345, %v189, 0
      %v711 = vsel %vm345, %v190, 0
      %v714 = vsel %vm345, %v192, 0
      %v717 = vsel %vm345, %v193, 0
      %v720 = vsel %vm345, %v195, 0
      %v723 = vsel %vm345, %v196, 0
      %v726 = vsel %vm345, %v198, 0
      %v729 = vsel %vm345, %v199, 0
      %v732 = vsel %vm345, %v201, 0
      %v735 = vsel %vm345, %v202, 0
      %v738 = vsel %vm345, %v204, 0
      %v741 = vsel %vm345, %v205, 0
      %v744 = vsel %vm345, %v207, 0
      %v747 = vsel %vm345, %v208, 0
      %v750 = vsel %vm345, %v210, 0
      %v753 = vsel %vm345, %v211, 0
      %v756 = vsel %vm345, %v213, 0
      %v759 = vsel %vm345, %v214, 0
      %v762 = vsel %vm345, %v216, 0
      %v765 = vsel %vm345, %v217, 0
      %v768 = vsel %vm442, %v336, 0
      %770 = vmatprep.subr.mxu0 0.0
      %771 = vmatpush1.msra.mxu0 %v768
      %772 = vmatprep.subr.mxu0 0.0
      %773 = vmatpush1.msra.mxu0 0.0
      %774 = vmatprep.subr.mxu0 0.0
      %775 = vmatpush1.msra.mxu0 0.0
      %776 = vmatprep.subr.mxu0 0.0
      %777 = vmatpush1.msra.mxu0 0.0
      %778 = vmatprep.subr.mxu0 0.0
      %779 = vmatpush1.msra.mxu0 0.0
      %780 = vmatprep.subr.mxu0 0.0
      %781 = vmatpush1.msra.mxu0 0.0
      %782 = vmatprep.subr.mxu0 0.0
      %783 = vmatpush1.msra.mxu0 0.0
      %784 = vmatprep.subr.mxu0 0.0
      %785 = vmatpush1.msra.mxu0 0.0
      %786 = vmatprep.subr.mxu0 0.0
      %787 = vmatpush1.msra.mxu0 0.0
      %788 = vmatprep.subr.mxu0 0.0
      %789 = vmatpush1.msra.mxu0 0.0
      %790 = vmatprep.subr.mxu0 0.0
      %791 = vmatpush1.msra.mxu0 0.0
      %792 = vmatprep.subr.mxu0 0.0
      %793 = vmatpush1.msra.mxu0 0.0
      %794 = vmatprep.subr.mxu0 0.0
      %795 = vmatpush1.msra.mxu0 0.0
      %796 = vmatprep.subr.mxu0 0.0
      %797 = vmatpush1.msra.mxu0 0.0
      %798 = vmatprep.subr.mxu0 0.0
      %799 = vmatpush1.msra.mxu0 0.0
      %800 = vmatprep.subr.mxu0 0.0
      %801 = vmatpush1.msra.mxu0 0.0
      %802 = vmatprep.subr.mxu0 0.0
      %803 = vmatpush1.msra.mxu0 0.0
      %804 = vmatprep.subr.mxu0 0.0
      %805 = vmatpush1.msra.mxu0 0.0
      %806 = vmatprep.subr.mxu0 0.0
      %807 = vmatpush1.msra.mxu0 0.0
      %808 = vmatprep.subr.mxu0 0.0
      %809 = vmatpush1.msra.mxu0 0.0
      %810 = vmatprep.subr.mxu0 0.0
      %811 = vmatpush1.msra.mxu0 0.0
      %812 = vmatprep.subr.mxu0 0.0
      %813 = vmatpush1.msra.mxu0 0.0
      %814 = vmatprep.subr.mxu0 0.0
      %815 = vmatpush1.msra.mxu0 0.0
      %816 = vmatprep.subr.mxu0 0.0
      %817 = vmatpush1.msra.mxu0 0.0
      %818 = vmatprep.subr.mxu0 0.0
      %819 = vmatpush1.msra.mxu0 0.0
      %820 = vmatprep.subr.mxu0 0.0
      %821 = vmatpush1.msra.mxu0 0.0
      %822 = vmatprep.subr.mxu0 0.0
      %823 = vmatpush1.msra.mxu0 0.0
      %824 = vmatprep.subr.mxu0 0.0
      %825 = vmatpush1.msra.mxu0 0.0
      %826 = vmatprep.subr.mxu0 0.0
      %827 = vmatpush1.msra.mxu0 0.0
      %828 = vmatprep.subr.mxu0 0.0
      %829 = vmatpush1.msra.mxu0 0.0
      %830 = vmatprep.subr.mxu0 0.0
      %831 = vmatpush1.msra.mxu0 0.0
      %832 = vmatprep.subr.mxu0 0.0
      %833 = vmatpush1.msra.mxu0 0.0
      %834 = vmatprep.mubr.f32.mxu0 0.0
      %835 = vmatmul.mubr.f32.gmra.mrb[0].mxu0 %v672
      %v836 = vpop.f32.mrb[0].mxu0
      %v837 = vadd.f32 %v513, %v836
      %v838 = vpop.f32.mrb[0].mxu0
      %839 = vmatprep.mubr.f32.mxu0 0.0
      %840 = vmatmul.mubr.f32.gmra.mrb[0].mxu0 %v675
      %v841 = vpop.f32.mrb[0].mxu0
      %v842 = vadd.f32 %v518, %v841
      %v843 = vpop.f32.mrb[0].mxu0
      %844 = vmatprep.mubr.f32.mxu0 0.0
      %845 = vmatmul.mubr.f32.gmra.mrb[0].mxu0 %v678
      %v846 = vpop.f32.mrb[0].mxu0
      %v847 = vadd.f32 %v523, %v846
      %v848 = vpop.f32.mrb[0].mxu0
      %849 = vmatprep.mubr.f32.mxu0 0.0
      %850 = vmatmul.mubr.f32.gmra.mrb[0].mxu0 %v681
      %v851 = vpop.f32.mrb[0].mxu0
      %v852 = vadd.f32 %v528, %v851
      %v853 = vpop.f32.mrb[0].mxu0
      %854 = vmatprep.mubr.f32.mxu0 0.0
      %855 = vmatmul.mubr.f32.gmra.mrb[0].mxu0 %v684
      %v856 = vpop.f32.mrb[0].mxu0
      %v857 = vadd.f32 %v533, %v856
      %v858 = vpop.f32.mrb[0].mxu0
      %859 = vmatprep.mubr.f32.mxu0 0.0
      %860 = vmatmul.mubr.f32.gmra.mrb[0].mxu0 %v687
      %v861 = vpop.f32.mrb[0].mxu0
      %v862 = vadd.f32 %v538, %v861
      %v863 = vpop.f32.mrb[0].mxu0
      %864 = vmatprep.mubr.f32.mxu0 0.0
      %865 = vmatmul.mubr.f32.gmra.mrb[0].mxu0 %v690
      %v866 = vpop.f32.mrb[0].mxu0
      %v867 = vadd.f32 %v543, %v866
      %v868 = vpop.f32.mrb[0].mxu0
      %869 = vmatprep.mubr.f32.mxu0 0.0
      %870 = vmatmul.mubr.f32.gmra.mrb[0].mxu0 %v693
      %v871 = vpop.f32.mrb[0].mxu0
      %v872 = vadd.f32 %v548, %v871
      %v873 = vpop.f32.mrb[0].mxu0
      %874 = vmatprep.mubr.f32.mxu0 0.0
      %875 = vmatmul.mubr.f32.gmra.mrb[0].mxu0 %v696
      %v876 = vpop.f32.mrb[0].mxu0
      %v877 = vadd.f32 %v553, %v876
      %v878 = vpop.f32.mrb[0].mxu0
      %879 = vmatprep.mubr.f32.mxu0 0.0
      %880 = vmatmul.mubr.f32.gmra.mrb[0].mxu0 %v699
      %v881 = vpop.f32.mrb[0].mxu0
      %v882 = vadd.f32 %v558, %v881
      %v883 = vpop.f32.mrb[0].mxu0
      %884 = vmatprep.mubr.f32.mxu0 0.0
      %885 = vmatmul.mubr.f32.gmra.mrb[0].mxu0 %v702
      %v886 = vpop.f32.mrb[0].mxu0
      %v887 = vadd.f32 %v563, %v886
      %v888 = vpop.f32.mrb[0].mxu0
      %889 = vmatprep.mubr.f32.mxu0 0.0
      %890 = vmatmul.mubr.f32.gmra.mrb[0].mxu0 %v705
      %v891 = vpop.f32.mrb[0].mxu0
      %v892 = vadd.f32 %v568, %v891
      %v893 = vpop.f32.mrb[0].mxu0
      %894 = vmatprep.mubr.f32.mxu0 0.0
      %895 = vmatmul.mubr.f32.gmra.mrb[0].mxu0 %v708
      %v896 = vpop.f32.mrb[0].mxu0
      %v897 = vadd.f32 %v573, %v896
      %v898 = vpop.f32.mrb[0].mxu0
      %899 = vmatprep.mubr.f32.mxu0 0.0
      %900 = vmatmul.mubr.f32.gmra.mrb[0].mxu0 %v711
      %v901 = vpop.f32.mrb[0].mxu0
      %v902 = vadd.f32 %v578, %v901
      %v903 = vpop.f32.mrb[0].mxu0
      %904 = vmatprep.mubr.f32.mxu0 0.0
      %905 = vmatmul.mubr.f32.gmra.mrb[0].mxu0 %v714
      %v906 = vpop.f32.mrb[0].mxu0
      %v907 = vadd.f32 %v583, %v906
      %v908 = vpop.f32.mrb[0].mxu0
      %909 = vmatprep.mubr.f32.mxu0 0.0
      %910 = vmatmul.mubr.f32.gmra.mrb[0].mxu0 %v717
      %v911 = vpop.f32.mrb[0].mxu0
      %v912 = vadd.f32 %v588, %v911
      %v913 = vpop.f32.mrb[0].mxu0
      %914 = vmatprep.mubr.f32.mxu0 0.0
      %915 = vmatmul.mubr.f32.gmra.mrb[0].mxu0 %v720
      %v916 = vpop.f32.mrb[0].mxu0
      %v917 = vadd.f32 %v593, %v916
      %v918 = vpop.f32.mrb[0].mxu0
      %919 = vmatprep.mubr.f32.mxu0 0.0
      %920 = vmatmul.mubr.f32.gmra.mrb[0].mxu0 %v723
      %v921 = vpop.f32.mrb[0].mxu0
      %v922 = vadd.f32 %v598, %v921
      %v923 = vpop.f32.mrb[0].mxu0
      %924 = vmatprep.mubr.f32.mxu0 0.0
      %925 = vmatmul.mubr.f32.gmra.mrb[0].mxu0 %v726
      %v926 = vpop.f32.mrb[0].mxu0
      %v927 = vadd.f32 %v603, %v926
      %v928 = vpop.f32.mrb[0].mxu0
      %929 = vmatprep.mubr.f32.mxu0 0.0
      %930 = vmatmul.mubr.f32.gmra.mrb[0].mxu0 %v729
      %v931 = vpop.f32.mrb[0].mxu0
      %v932 = vadd.f32 %v608, %v931
      %v933 = vpop.f32.mrb[0].mxu0
      %934 = vmatprep.mubr.f32.mxu0 0.0
      %935 = vmatmul.mubr.f32.gmra.mrb[0].mxu0 %v732
      %v936 = vpop.f32.mrb[0].mxu0
      %v937 = vadd.f32 %v613, %v936
      %v938 = vpop.f32.mrb[0].mxu0
      %939 = vmatprep.mubr.f32.mxu0 0.0
      %940 = vmatmul.mubr.f32.gmra.mrb[0].mxu0 %v735
      %v941 = vpop.f32.mrb[0].mxu0
      %v942 = vadd.f32 %v618, %v941
      %v943 = vpop.f32.mrb[0].mxu0
      %944 = vmatprep.mubr.f32.mxu0 0.0
      %945 = vmatmul.mubr.f32.gmra.mrb[0].mxu0 %v738
      %v946 = vpop.f32.mrb[0].mxu0
      %v947 = vadd.f32 %v623, %v946
      %v948 = vpop.f32.mrb[0].mxu0
      %949 = vmatprep.mubr.f32.mxu0 0.0
      %950 = vmatmul.mubr.f32.gmra.mrb[0].mxu0 %v741
      %v951 = vpop.f32.mrb[0].mxu0
      %v952 = vadd.f32 %v628, %v951
      %v953 = vpop.f32.mrb[0].mxu0
      %954 = vmatprep.mubr.f32.mxu0 0.0
      %955 = vmatmul.mubr.f32.gmra.mrb[0].mxu0 %v744
      %v956 = vpop.f32.mrb[0].mxu0
      %v957 = vadd.f32 %v633, %v956
      %v958 = vpop.f32.mrb[0].mxu0
      %959 = vmatprep.mubr.f32.mxu0 0.0
      %960 = vmatmul.mubr.f32.gmra.mrb[0].mxu0 %v747
      %v961 = vpop.f32.mrb[0].mxu0
      %v962 = vadd.f32 %v638, %v961
      %v963 = vpop.f32.mrb[0].mxu0
      %964 = vmatprep.mubr.f32.mxu0 0.0
      %965 = vmatmul.mubr.f32.gmra.mrb[0].mxu0 %v750
      %v966 = vpop.f32.mrb[0].mxu0
      %v967 = vadd.f32 %v643, %v966
      %v968 = vpop.f32.mrb[0].mxu0
      %969 = vmatprep.mubr.f32.mxu0 0.0
      %970 = vmatmul.mubr.f32.gmra.mrb[0].mxu0 %v753
      %v971 = vpop.f32.mrb[0].mxu0
      %v972 = vadd.f32 %v648, %v971
      %v973 = vpop.f32.mrb[0].mxu0
      %974 = vmatprep.mubr.f32.mxu0 0.0
      %975 = vmatmul.mubr.f32.gmra.mrb[0].mxu0 %v756
      %v976 = vpop.f32.mrb[0].mxu0
      %v977 = vadd.f32 %v653, %v976
      %v978 = vpop.f32.mrb[0].mxu0
      %979 = vmatprep.mubr.f32.mxu0 0.0
      %980 = vmatmul.mubr.f32.gmra.mrb[0].mxu0 %v759
      %v981 = vpop.f32.mrb[0].mxu0
      %v982 = vadd.f32 %v658, %v981
      %v983 = vpop.f32.mrb[0].mxu0
      %984 = vmatprep.mubr.f32.mxu0 0.0
      %985 = vmatmul.mubr.f32.gmra.mrb[0].mxu0 %v762
      %v986 = vpop.f32.mrb[0].mxu0
      %v987 = vadd.f32 %v663, %v986
      %v988 = vpop.f32.mrb[0].mxu0
      %989 = vmatprep.mubr.f32.mxu0 0.0
      %990 = vmatmul.mubr.f32.gmra.mrb[0].mxu0 %v765
      %v991 = vpop.f32.mrb[0].mxu0
      %v992 = vadd.f32 %v668, %v991
      %v993 = vpop.f32.mrb[0].mxu0
      %994 = vdwg.mxu0
      %vm1011 = vcmask 1046528
      %v1012 = vrot.slane %v171, 1
      %v1013 = vrot.slane %v172, 1
      %v1014 = vsel %vm1011, %v1012, %v1013
      %v1015 = vrot.slane %v173, 1
      %v1016 = vsel %vm1011, %v1013, %v1015
      %v1017 = vrot.slane %v174, 1
      %v1018 = vrot.slane %v175, 1
      %v1019 = vsel %vm1011, %v1017, %v1018
      %v1020 = vrot.slane %v176, 1
      %v1021 = vsel %vm1011, %v1018, %v1020
      %v1022 = vrot.slane %v177, 1
      %v1023 = vrot.slane %v178, 1
      %v1024 = vsel %vm1011, %v1022, %v1023
      %v1025 = vrot.slane %v179, 1
      %v1026 = vsel %vm1011, %v1023, %v1025
      %v1027 = vrot.slane %v180, 1
      %v1028 = vrot.slane %v181, 1
      %v1029 = vsel %vm1011, %v1027, %v1028
      %v1030 = vrot.slane %v182, 1
      %v1031 = vsel %vm1011, %v1028, %v1030
      %v1032 = vrot.slane %v183, 1
      %v1033 = vrot.slane %v184, 1
      %v1034 = vsel %vm1011, %v1032, %v1033
      %v1035 = vrot.slane %v185, 1
      %v1036 = vsel %vm1011, %v1033, %v1035
      %v1037 = vrot.slane %v186, 1
      %v1038 = vrot.slane %v187, 1
      %v1039 = vsel %vm1011, %v1037, %v1038
      %v1040 = vrot.slane %v188, 1
      %v1041 = vsel %vm1011, %v1038, %v1040
      %v1042 = vrot.slane %v189, 1
      %v1043 = vrot.slane %v190, 1
      %v1044 = vsel %vm1011, %v1042, %v1043
      %v1045 = vrot.slane %v191, 1
      %v1046 = vsel %vm1011, %v1043, %v1045
      %v1047 = vrot.slane %v192, 1
      %v1048 = vrot.slane %v193, 1
      %v1049 = vsel %vm1011, %v1047, %v1048
      %v1050 = vrot.slane %v194, 1
      %v1051 = vsel %vm1011, %v1048, %v1050
      %v1052 = vrot.slane %v195, 1
      %v1053 = vrot.slane %v196, 1
      %v1054 = vsel %vm1011, %v1052, %v1053
      %v1055 = vrot.slane %v197, 1
      %v1056 = vsel %vm1011, %v1053, %v1055
      %v1057 = vrot.slane %v198, 1
      %v1058 = vrot.slane %v199, 1
      %v1059 = vsel %vm1011, %v1057, %v1058
      %v1060 = vrot.slane %v200, 1
      %v1061 = vsel %vm1011, %v1058, %v1060
      %v1062 = vrot.slane %v201, 1
      %v1063 = vrot.slane %v202, 1
      %v1064 = vsel %vm1011, %v1062, %v1063
      %v1065 = vrot.slane %v203, 1
      %v1066 = vsel %vm1011, %v1063, %v1065
      %v1067 = vrot.slane %v204, 1
      %v1068 = vrot.slane %v205, 1
      %v1069 = vsel %vm1011, %v1067, %v1068
      %v1070 = vrot.slane %v206, 1
      %v1071 = vsel %vm1011, %v1068, %v1070
      %v1072 = vrot.slane %v207, 1
      %v1073 = vrot.slane %v208, 1
      %v1074 = vsel %vm1011, %v1072, %v1073
      %v1075 = vrot.slane %v209, 1
      %v1076 = vsel %vm1011, %v1073, %v1075
      %v1077 = vrot.slane %v210, 1
      %v1078 = vrot.slane %v211, 1
      %v1079 = vsel %vm1011, %v1077, %v1078
      %v1080 = vrot.slane %v212, 1
      %v1081 = vsel %vm1011, %v1078, %v1080
      %v1082 = vrot.slane %v213, 1
      %v1083 = vrot.slane %v214, 1
      %v1084 = vsel %vm1011, %v1082, %v1083
      %v1085 = vrot.slane %v215, 1
      %v1086 = vsel %vm1011, %v1083, %v1085
      %v1087 = vrot.slane %v216, 1
      %v1088 = vrot.slane %v217, 1
      %v1089 = vsel %vm1011, %v1087, %v1088
      %v1090 = vrot.slane %v218, 1
      %v1091 = vsel %vm1011, %v1088, %v1090
      %v1092 = vsel %vm345, %v1014, 0
      %v1094 = vsel %vm345, %v1016, 0
      %v1096 = vsel %vm345, %v1019, 0
      %v1098 = vsel %vm345, %v1021, 0
      %v1100 = vsel %vm345, %v1024, 0
      %v1102 = vsel %vm345, %v1026, 0
      %v1104 = vsel %vm345, %v1029, 0
      %v1106 = vsel %vm345, %v1031, 0
      %v1108 = vsel %vm345, %v1034, 0
      %v1110 = vsel %vm345, %v1036, 0
      %v1112 = vsel %vm345, %v1039, 0
      %v1114 = vsel %vm345, %v1041, 0
      %v1116 = vsel %vm345, %v1044, 0
      %v1118 = vsel %vm345, %v1046, 0
      %v1120 = vsel %vm345, %v1049, 0
      %v1122 = vsel %vm345, %v1051, 0
      %v1124 = vsel %vm345, %v1054, 0
      %v1126 = vsel %vm345, %v1056, 0
      %v1128 = vsel %vm345, %v1059, 0
      %v1130 = vsel %vm345, %v1061, 0
      %v1132 = vsel %vm345, %v1064, 0
      %v1134 = vsel %vm345, %v1066, 0
      %v1136 = vsel %vm345, %v1069, 0
      %v1138 = vsel %vm345, %v1071, 0
      %v1140 = vsel %vm345, %v1074, 0
      %v1142 = vsel %vm345, %v1076, 0
      %v1144 = vsel %vm345, %v1079, 0
      %v1146 = vsel %vm345, %v1081, 0
      %v1148 = vsel %vm345, %v1084, 0
      %v1150 = vsel %vm345, %v1086, 0
      %v1152 = vsel %vm345, %v1089, 0
      %v1154 = vsel %vm345, %v1091, 0
      %v1157 = vsel %vm442, %v338, 0
      %1159 = vmatprep.subr.mxu0 0.0
      %1160 = vmatpush1.msra.mxu0 %v1157
      %1161 = vmatprep.subr.mxu0 0.0
      %1162 = vmatpush1.msra.mxu0 0.0
      %1163 = vmatprep.subr.mxu0 0.0
      %1164 = vmatpush1.msra.mxu0 0.0
      %1165 = vmatprep.subr.mxu0 0.0
      %1166 = vmatpush1.msra.mxu0 0.0
      %1167 = vmatprep.subr.mxu0 0.0
      %1168 = vmatpush1.msra.mxu0 0.0
      %1169 = vmatprep.subr.mxu0 0.0
      %1170 = vmatpush1.msra.mxu0 0.0
      %1171 = vmatprep.subr.mxu0 0.0
      %1172 = vmatpush1.msra.mxu0 0.0
      %1173 = vmatprep.subr.mxu0 0.0
      %1174 = vmatpush1.msra.mxu0 0.0
      %1175 = vmatprep.subr.mxu0 0.0
      %1176 = vmatpush1.msra.mxu0 0.0
      %1177 = vmatprep.subr.mxu0 0.0
      %1178 = vmatpush1.msra.mxu0 0.0
      %1179 = vmatprep.subr.mxu0 0.0
      %1180 = vmatpush1.msra.mxu0 0.0
      %1181 = vmatprep.subr.mxu0 0.0
      %1182 = vmatpush1.msra.mxu0 0.0
      %1183 = vmatprep.subr.mxu0 0.0
      %1184 = vmatpush1.msra.mxu0 0.0
      %1185 = vmatprep.subr.mxu0 0.0
      %1186 = vmatpush1.msra.mxu0 0.0
      %1187 = vmatprep.subr.mxu0 0.0
      %1188 = vmatpush1.msra.mxu0 0.0
      %1189 = vmatprep.subr.mxu0 0.0
      %1190 = vmatpush1.msra.mxu0 0.0
      %1191 = vmatprep.subr.mxu0 0.0
      %1192 = vmatpush1.msra.mxu0 0.0
      %1193 = vmatprep.subr.mxu0 0.0
      %1194 = vmatpush1.msra.mxu0 0.0
      %1195 = vmatprep.subr.mxu0 0.0
      %1196 = vmatpush1.msra.mxu0 0.0
      %1197 = vmatprep.subr.mxu0 0.0
      %1198 = vmatpush1.msra.mxu0 0.0
      %1199 = vmatprep.subr.mxu0 0.0
      %1200 = vmatpush1.msra.mxu0 0.0
      %1201 = vmatprep.subr.mxu0 0.0
      %1202 = vmatpush1.msra.mxu0 0.0
      %1203 = vmatprep.subr.mxu0 0.0
      %1204 = vmatpush1.msra.mxu0 0.0
      %1205 = vmatprep.subr.mxu0 0.0
      %1206 = vmatpush1.msra.mxu0 0.0
      %1207 = vmatprep.subr.mxu0 0.0
      %1208 = vmatpush1.msra.mxu0 0.0
      %1209 = vmatprep.subr.mxu0 0.0
      %1210 = vmatpush1.msra.mxu0 0.0
      %1211 = vmatprep.subr.mxu0 0.0
      %1212 = vmatpush1.msra.mxu0 0.0
      %1213 = vmatprep.subr.mxu0 0.0
      %1214 = vmatpush1.msra.mxu0 0.0
      %1215 = vmatprep.subr.mxu0 0.0
      %1216 = vmatpush1.msra.mxu0 0.0
      %1217 = vmatprep.subr.mxu0 0.0
      %1218 = vmatpush1.msra.mxu0 0.0
      %1219 = vmatprep.subr.mxu0 0.0
      %1220 = vmatpush1.msra.mxu0 0.0
      %1221 = vmatprep.subr.mxu0 0.0
      %1222 = vmatpush1.msra.mxu0 0.0
      %1223 = vmatprep.mubr.f32.mxu0 0.0
      %1224 = vmatmul.mubr.f32.gmra.mrb[0].mxu0 %v1092
      %v1225 = vpop.f32.mrb[0].mxu0
      %v1226 = vadd.f32 0.0, %v1225
      %v1227 = vpop.f32.mrb[0].mxu0
      %1228 = vmatprep.mubr.f32.mxu0 0.0
      %1229 = vmatmul.mubr.f32.gmra.mrb[0].mxu0 %v1094
      %v1230 = vpop.f32.mrb[0].mxu0
      %v1231 = vadd.f32 0.0, %v1230
      %v1232 = vpop.f32.mrb[0].mxu0
      %1233 = vmatprep.mubr.f32.mxu0 0.0
      %1234 = vmatmul.mubr.f32.gmra.mrb[0].mxu0 %v1096
      %v1235 = vpop.f32.mrb[0].mxu0
      %v1236 = vadd.f32 0.0, %v1235
      %v1237 = vpop.f32.mrb[0].mxu0
      %1238 = vmatprep.mubr.f32.mxu0 0.0
      %1239 = vmatmul.mubr.f32.gmra.mrb[0].mxu0 %v1098
      %v1240 = vpop.f32.mrb[0].mxu0
      %v1241 = vadd.f32 0.0, %v1240
      %v1242 = vpop.f32.mrb[0].mxu0
      %1243 = vmatprep.mubr.f32.mxu0 0.0
      %1244 = vmatmul.mubr.f32.gmra.mrb[0].mxu0 %v1100
      %v1245 = vpop.f32.mrb[0].mxu0
      %v1246 = vadd.f32 0.0, %v1245
      %v1247 = vpop.f32.mrb[0].mxu0
      %1248 = vmatprep.mubr.f32.mxu0 0.0
      %1249 = vmatmul.mubr.f32.gmra.mrb[0].mxu0 %v1102
      %v1250 = vpop.f32.mrb[0].mxu0
      %v1251 = vadd.f32 0.0, %v1250
      %v1252 = vpop.f32.mrb[0].mxu0
      %1253 = vmatprep.mubr.f32.mxu0 0.0
      %1254 = vmatmul.mubr.f32.gmra.mrb[0].mxu0 %v1104
      %v1255 = vpop.f32.mrb[0].mxu0
      %v1256 = vadd.f32 0.0, %v1255
      %v1257 = vpop.f32.mrb[0].mxu0
      %1258 = vmatprep.mubr.f32.mxu0 0.0
      %1259 = vmatmul.mubr.f32.gmra.mrb[0].mxu0 %v1106
      %v1260 = vpop.f32.mrb[0].mxu0
      %v1261 = vadd.f32 0.0, %v1260
      %v1262 = vpop.f32.mrb[0].mxu0
      %1263 = vmatprep.mubr.f32.mxu0 0.0
      %1264 = vmatmul.mubr.f32.gmra.mrb[0].mxu0 %v1108
      %v1265 = vpop.f32.mrb[0].mxu0
      %v1266 = vadd.f32 0.0, %v1265
      %v1267 = vpop.f32.mrb[0].mxu0
      %1268 = vmatprep.mubr.f32.mxu0 0.0
      %1269 = vmatmul.mubr.f32.gmra.mrb[0].mxu0 %v1110
      %v1270 = vpop.f32.mrb[0].mxu0
      %v1271 = vadd.f32 0.0, %v1270
      %v1272 = vpop.f32.mrb[0].mxu0
      %1273 = vmatprep.mubr.f32.mxu0 0.0
      %1274 = vmatmul.mubr.f32.gmra.mrb[0].mxu0 %v1112
      %v1275 = vpop.f32.mrb[0].mxu0
      %v1276 = vadd.f32 0.0, %v1275
      %v1277 = vpop.f32.mrb[0].mxu0
      %1278 = vmatprep.mubr.f32.mxu0 0.0
      %1279 = vmatmul.mubr.f32.gmra.mrb[0].mxu0 %v1114
      %v1280 = vpop.f32.mrb[0].mxu0
      %v1281 = vadd.f32 0.0, %v1280
      %v1282 = vpop.f32.mrb[0].mxu0
      %1283 = vmatprep.mubr.f32.mxu0 0.0
      %1284 = vmatmul.mubr.f32.gmra.mrb[0].mxu0 %v1116
      %v1285 = vpop.f32.mrb[0].mxu0
      %v1286 = vadd.f32 0.0, %v1285
      %v1287 = vpop.f32.mrb[0].mxu0
      %1288 = vmatprep.mubr.f32.mxu0 0.0
      %1289 = vmatmul.mubr.f32.gmra.mrb[0].mxu0 %v1118
      %v1290 = vpop.f32.mrb[0].mxu0
      %v1291 = vadd.f32 0.0, %v1290
      %v1292 = vpop.f32.mrb[0].mxu0
      %1293 = vmatprep.mubr.f32.mxu0 0.0
      %1294 = vmatmul.mubr.f32.gmra.mrb[0].mxu0 %v1120
      %v1295 = vpop.f32.mrb[0].mxu0
      %v1296 = vadd.f32 0.0, %v1295
      %v1297 = vpop.f32.mrb[0].mxu0
      %1298 = vmatprep.mubr.f32.mxu0 0.0
      %1299 = vmatmul.mubr.f32.gmra.mrb[0].mxu0 %v1122
      %v1300 = vpop.f32.mrb[0].mxu0
      %v1301 = vadd.f32 0.0, %v1300
      %v1302 = vpop.f32.mrb[0].mxu0
      %1303 = vmatprep.mubr.f32.mxu0 0.0
      %1304 = vmatmul.mubr.f32.gmra.mrb[0].mxu0 %v1124
      %v1305 = vpop.f32.mrb[0].mxu0
      %v1306 = vadd.f32 0.0, %v1305
      %v1307 = vpop.f32.mrb[0].mxu0
      %1308 = vmatprep.mubr.f32.mxu0 0.0
      %1309 = vmatmul.mubr.f32.gmra.mrb[0].mxu0 %v1126
      %v1310 = vpop.f32.mrb[0].mxu0
      %v1311 = vadd.f32 0.0, %v1310
      %v1312 = vpop.f32.mrb[0].mxu0
      %1313 = vmatprep.mubr.f32.mxu0 0.0
      %1314 = vmatmul.mubr.f32.gmra.mrb[0].mxu0 %v1128
      %v1315 = vpop.f32.mrb[0].mxu0
      %v1316 = vadd.f32 0.0, %v1315
      %v1317 = vpop.f32.mrb[0].mxu0
      %1318 = vmatprep.mubr.f32.mxu0 0.0
      %1319 = vmatmul.mubr.f32.gmra.mrb[0].mxu0 %v1130
      %v1320 = vpop.f32.mrb[0].mxu0
      %v1321 = vadd.f32 0.0, %v1320
      %v1322 = vpop.f32.mrb[0].mxu0
      %1323 = vmatprep.mubr.f32.mxu0 0.0
      %1324 = vmatmul.mubr.f32.gmra.mrb[0].mxu0 %v1132
      %v1325 = vpop.f32.mrb[0].mxu0
      %v1326 = vadd.f32 0.0, %v1325
      %v1327 = vpop.f32.mrb[0].mxu0
      %1328 = vmatprep.mubr.f32.mxu0 0.0
      %1329 = vmatmul.mubr.f32.gmra.mrb[0].mxu0 %v1134
      %v1330 = vpop.f32.mrb[0].mxu0
      %v1331 = vadd.f32 0.0, %v1330
      %v1332 = vpop.f32.mrb[0].mxu0
      %1333 = vmatprep.mubr.f32.mxu0 0.0
      %1334 = vmatmul.mubr.f32.gmra.mrb[0].mxu0 %v1136
      %v1335 = vpop.f32.mrb[0].mxu0
      %v1336 = vadd.f32 0.0, %v1335
      %v1337 = vpop.f32.mrb[0].mxu0
      %1338 = vmatprep.mubr.f32.mxu0 0.0
      %1339 = vmatmul.mubr.f32.gmra.mrb[0].mxu0 %v1138
      %v1340 = vpop.f32.mrb[0].mxu0
      %v1341 = vadd.f32 0.0, %v1340
      %v1342 = vpop.f32.mrb[0].mxu0
      %1343 = vmatprep.mubr.f32.mxu0 0.0
      %1344 = vmatmul.mubr.f32.gmra.mrb[0].mxu0 %v1140
      %v1345 = vpop.f32.mrb[0].mxu0
      %v1346 = vadd.f32 0.0, %v1345
      %v1347 = vpop.f32.mrb[0].mxu0
      %1348 = vmatprep.mubr.f32.mxu0 0.0
      %1349 = vmatmul.mubr.f32.gmra.mrb[0].mxu0 %v1142
      %v1350 = vpop.f32.mrb[0].mxu0
      %v1351 = vadd.f32 0.0, %v1350
      %v1352 = vpop.f32.mrb[0].mxu0
      %1353 = vmatprep.mubr.f32.mxu0 0.0
      %1354 = vmatmul.mubr.f32.gmra.mrb[0].mxu0 %v1144
      %v1355 = vpop.f32.mrb[0].mxu0
      %v1356 = vadd.f32 0.0, %v1355
      %v1357 = vpop.f32.mrb[0].mxu0
      %1358 = vmatprep.mubr.f32.mxu0 0.0
      %1359 = vmatmul.mubr.f32.gmra.mrb[0].mxu0 %v1146
      %v1360 = vpop.f32.mrb[0].mxu0
      %v1361 = vadd.f32 0.0, %v1360
      %v1362 = vpop.f32.mrb[0].mxu0
      %1363 = vmatprep.mubr.f32.mxu0 0.0
      %1364 = vmatmul.mubr.f32.gmra.mrb[0].mxu0 %v1148
      %v1365 = vpop.f32.mrb[0].mxu0
      %v1366 = vadd.f32 0.0, %v1365
      %v1367 = vpop.f32.mrb[0].mxu0
      %1368 = vmatprep.mubr.f32.mxu0 0.0
      %1369 = vmatmul.mubr.f32.gmra.mrb[0].mxu0 %v1150
      %v1370 = vpop.f32.mrb[0].mxu0
      %v1371 = vadd.f32 0.0, %v1370
      %v1372 = vpop.f32.mrb[0].mxu0
      %1373 = vmatprep.mubr.f32.mxu0 0.0
      %1374 = vmatmul.mubr.f32.gmra.mrb[0].mxu0 %v1152
      %v1375 = vpop.f32.mrb[0].mxu0
      %v1376 = vadd.f32 0.0, %v1375
      %v1377 = vpop.f32.mrb[0].mxu0
      %1378 = vmatprep.mubr.f32.mxu0 0.0
      %1379 = vmatmul.mubr.f32.gmra.mrb[0].mxu0 %v1154
      %v1380 = vpop.f32.mrb[0].mxu0
      %v1381 = vadd.f32 0.0, %v1380
      %v1382 = vpop.f32.mrb[0].mxu0
      %1383 = vdwg.mxu0
      %v1384 = vadd.f32 %v837, %v1226
      %v1385 = vadd.f32 %v842, %v1231
      %v1386 = vadd.f32 %v847, %v1236
      %v1387 = vadd.f32 %v852, %v1241
      %v1388 = vadd.f32 %v857, %v1246
      %v1389 = vadd.f32 %v862, %v1251
      %v1390 = vadd.f32 %v867, %v1256
      %v1391 = vadd.f32 %v872, %v1261
      %v1392 = vadd.f32 %v877, %v1266
      %v1393 = vadd.f32 %v882, %v1271
      %v1394 = vadd.f32 %v887, %v1276
      %v1395 = vadd.f32 %v892, %v1281
      %v1396 = vadd.f32 %v897, %v1286
      %v1397 = vadd.f32 %v902, %v1291
      %v1398 = vadd.f32 %v907, %v1296
      %v1399 = vadd.f32 %v912, %v1301
      %v1400 = vadd.f32 %v917, %v1306
      %v1401 = vadd.f32 %v922, %v1311
      %v1402 = vadd.f32 %v927, %v1316
      %v1403 = vadd.f32 %v932, %v1321
      %v1404 = vadd.f32 %v937, %v1326
      %v1405 = vadd.f32 %v942, %v1331
      %v1406 = vadd.f32 %v947, %v1336
      %v1407 = vadd.f32 %v952, %v1341
      %v1408 = vadd.f32 %v957, %v1346
      %v1409 = vadd.f32 %v962, %v1351
      %v1410 = vadd.f32 %v967, %v1356
      %v1411 = vadd.f32 %v972, %v1361
      %v1412 = vadd.f32 %v977, %v1366
      %v1413 = vadd.f32 %v982, %v1371
      %v1414 = vadd.f32 %v987, %v1376
      %v1415 = vadd.f32 %v992, %v1381
      %v1417 = vsel %vm345, %v256, 0
      %v1420 = vsel %vm345, %v257, 0
      %v1423 = vsel %vm345, %v259, 0
      %v1426 = vsel %vm345, %v260, 0
      %v1429 = vsel %vm345, %v262, 0
      %v1432 = vsel %vm345, %v263, 0
      %v1435 = vsel %vm345, %v265, 0
      %v1438 = vsel %vm345, %v266, 0
      %v1441 = vsel %vm345, %v268, 0
      %v1444 = vsel %vm345, %v269, 0
      %v1447 = vsel %vm345, %v271, 0
      %v1450 = vsel %vm345, %v272, 0
      %v1453 = vsel %vm345, %v274, 0
      %v1456 = vsel %vm345, %v275, 0
      %v1459 = vsel %vm345, %v277, 0
      %v1462 = vsel %vm345, %v278, 0
      %v1465 = vsel %vm345, %v280, 0
      %v1468 = vsel %vm345, %v281, 0
      %v1471 = vsel %vm345, %v283, 0
      %v1474 = vsel %vm345, %v284, 0
      %v1477 = vsel %vm345, %v286, 0
      %v1480 = vsel %vm345, %v287, 0
      %v1483 = vsel %vm345, %v289, 0
      %v1486 = vsel %vm345, %v290, 0
      %v1489 = vsel %vm345, %v292, 0
      %v1492 = vsel %vm345, %v293, 0
      %v1495 = vsel %vm345, %v295, 0
      %v1498 = vsel %vm345, %v296, 0
      %v1501 = vsel %vm345, %v298, 0
      %v1504 = vsel %vm345, %v299, 0
      %v1507 = vsel %vm345, %v301, 0
      %v1510 = vsel %vm345, %v302, 0
      %v1513 = vsel %vm442, %v339, 0
      %1515 = vmatprep.subr.mxu0 0.0
      %1516 = vmatpush1.msra.mxu0 %v1513
      %1517 = vmatprep.subr.mxu0 0.0
      %1518 = vmatpush1.msra.mxu0 0.0
      %1519 = vmatprep.subr.mxu0 0.0
      %1520 = vmatpush1.msra.mxu0 0.0
      %1521 = vmatprep.subr.mxu0 0.0
      %1522 = vmatpush1.msra.mxu0 0.0
      %1523 = vmatprep.subr.mxu0 0.0
      %1524 = vmatpush1.msra.mxu0 0.0
      %1525 = vmatprep.subr.mxu0 0.0
      %1526 = vmatpush1.msra.mxu0 0.0
      %1527 = vmatprep.subr.mxu0 0.0
      %1528 = vmatpush1.msra.mxu0 0.0
      %1529 = vmatprep.subr.mxu0 0.0
      %1530 = vmatpush1.msra.mxu0 0.0
      %1531 = vmatprep.subr.mxu0 0.0
      %1532 = vmatpush1.msra.mxu0 0.0
      %1533 = vmatprep.subr.mxu0 0.0
      %1534 = vmatpush1.msra.mxu0 0.0
      %1535 = vmatprep.subr.mxu0 0.0
      %1536 = vmatpush1.msra.mxu0 0.0
      %1537 = vmatprep.subr.mxu0 0.0
      %1538 = vmatpush1.msra.mxu0 0.0
      %1539 = vmatprep.subr.mxu0 0.0
      %1540 = vmatpush1.msra.mxu0 0.0
      %1541 = vmatprep.subr.mxu0 0.0
      %1542 = vmatpush1.msra.mxu0 0.0
      %1543 = vmatprep.subr.mxu0 0.0
      %1544 = vmatpush1.msra.mxu0 0.0
      %1545 = vmatprep.subr.mxu0 0.0
      %1546 = vmatpush1.msra.mxu0 0.0
      %1547 = vmatprep.subr.mxu0 0.0
      %1548 = vmatpush1.msra.mxu0 0.0
      %1549 = vmatprep.subr.mxu0 0.0
      %1550 = vmatpush1.msra.mxu0 0.0
      %1551 = vmatprep.subr.mxu0 0.0
      %1552 = vmatpush1.msra.mxu0 0.0
      %1553 = vmatprep.subr.mxu0 0.0
      %1554 = vmatpush1.msra.mxu0 0.0
      %1555 = vmatprep.subr.mxu0 0.0
      %1556 = vmatpush1.msra.mxu0 0.0
      %1557 = vmatprep.subr.mxu0 0.0
      %1558 = vmatpush1.msra.mxu0 0.0
      %1559 = vmatprep.subr.mxu0 0.0
      %1560 = vmatpush1.msra.mxu0 0.0
      %1561 = vmatprep.subr.mxu0 0.0
      %1562 = vmatpush1.msra.mxu0 0.0
      %1563 = vmatprep.subr.mxu0 0.0
      %1564 = vmatpush1.msra.mxu0 0.0
      %1565 = vmatprep.subr.mxu0 0.0
      %1566 = vmatpush1.msra.mxu0 0.0
      %1567 = vmatprep.subr.mxu0 0.0
      %1568 = vmatpush1.msra.mxu0 0.0
      %1569 = vmatprep.subr.mxu0 0.0
      %1570 = vmatpush1.msra.mxu0 0.0
      %1571 = vmatprep.subr.mxu0 0.0
      %1572 = vmatpush1.msra.mxu0 0.0
      %1573 = vmatprep.subr.mxu0 0.0
      %1574 = vmatpush1.msra.mxu0 0.0
      %1575 = vmatprep.subr.mxu0 0.0
      %1576 = vmatpush1.msra.mxu0 0.0
      %1577 = vmatprep.subr.mxu0 0.0
      %1578 = vmatpush1.msra.mxu0 0.0
      %1579 = vmatprep.mubr.f32.mxu0 0.0
      %1580 = vmatmul.mubr.f32.gmra.mrb[0].mxu0 %v1417
      %v1581 = vpop.f32.mrb[0].mxu0
      %v1582 = vadd.f32 0.0, %v1581
      %v1583 = vpop.f32.mrb[0].mxu0
      %1584 = vmatprep.mubr.f32.mxu0 0.0
      %1585 = vmatmul.mubr.f32.gmra.mrb[0].mxu0 %v1420
      %v1586 = vpop.f32.mrb[0].mxu0
      %v1587 = vadd.f32 0.0, %v1586
      %v1588 = vpop.f32.mrb[0].mxu0
      %1589 = vmatprep.mubr.f32.mxu0 0.0
      %1590 = vmatmul.mubr.f32.gmra.mrb[0].mxu0 %v1423
      %v1591 = vpop.f32.mrb[0].mxu0
      %v1592 = vadd.f32 0.0, %v1591
      %v1593 = vpop.f32.mrb[0].mxu0
      %1594 = vmatprep.mubr.f32.mxu0 0.0
      %1595 = vmatmul.mubr.f32.gmra.mrb[0].mxu0 %v1426
      %v1596 = vpop.f32.mrb[0].mxu0
      %v1597 = vadd.f32 0.0, %v1596
      %v1598 = vpop.f32.mrb[0].mxu0
      %1599 = vmatprep.mubr.f32.mxu0 0.0
      %1600 = vmatmul.mubr.f32.gmra.mrb[0].mxu0 %v1429
      %v1601 = vpop.f32.mrb[0].mxu0
      %v1602 = vadd.f32 0.0, %v1601
      %v1603 = vpop.f32.mrb[0].mxu0
      %1604 = vmatprep.mubr.f32.mxu0 0.0
      %1605 = vmatmul.mubr.f32.gmra.mrb[0].mxu0 %v1432
      %v1606 = vpop.f32.mrb[0].mxu0
      %v1607 = vadd.f32 0.0, %v1606
      %v1608 = vpop.f32.mrb[0].mxu0
      %1609 = vmatprep.mubr.f32.mxu0 0.0
      %1610 = vmatmul.mubr.f32.gmra.mrb[0].mxu0 %v1435
      %v1611 = vpop.f32.mrb[0].mxu0
      %v1612 = vadd.f32 0.0, %v1611
      %v1613 = vpop.f32.mrb[0].mxu0
      %1614 = vmatprep.mubr.f32.mxu0 0.0
      %1615 = vmatmul.mubr.f32.gmra.mrb[0].mxu0 %v1438
      %v1616 = vpop.f32.mrb[0].mxu0
      %v1617 = vadd.f32 0.0, %v1616
      %v1618 = vpop.f32.mrb[0].mxu0
      %1619 = vmatprep.mubr.f32.mxu0 0.0
      %1620 = vmatmul.mubr.f32.gmra.mrb[0].mxu0 %v1441
      %v1621 = vpop.f32.mrb[0].mxu0
      %v1622 = vadd.f32 0.0, %v1621
      %v1623 = vpop.f32.mrb[0].mxu0
      %1624 = vmatprep.mubr.f32.mxu0 0.0
      %1625 = vmatmul.mubr.f32.gmra.mrb[0].mxu0 %v1444
      %v1626 = vpop.f32.mrb[0].mxu0
      %v1627 = vadd.f32 0.0, %v1626
      %v1628 = vpop.f32.mrb[0].mxu0
      %1629 = vmatprep.mubr.f32.mxu0 0.0
      %1630 = vmatmul.mubr.f32.gmra.mrb[0].mxu0 %v1447
      %v1631 = vpop.f32.mrb[0].mxu0
      %v1632 = vadd.f32 0.0, %v1631
      %v1633 = vpop.f32.mrb[0].mxu0
      %1634 = vmatprep.mubr.f32.mxu0 0.0
      %1635 = vmatmul.mubr.f32.gmra.mrb[0].mxu0 %v1450
      %v1636 = vpop.f32.mrb[0].mxu0
      %v1637 = vadd.f32 0.0, %v1636
      %v1638 = vpop.f32.mrb[0].mxu0
      %1639 = vmatprep.mubr.f32.mxu0 0.0
      %1640 = vmatmul.mubr.f32.gmra.mrb[0].mxu0 %v1453
      %v1641 = vpop.f32.mrb[0].mxu0
      %v1642 = vadd.f32 0.0, %v1641
      %v1643 = vpop.f32.mrb[0].mxu0
      %1644 = vmatprep.mubr.f32.mxu0 0.0
      %1645 = vmatmul.mubr.f32.gmra.mrb[0].mxu0 %v1456
      %v1646 = vpop.f32.mrb[0].mxu0
      %v1647 = vadd.f32 0.0, %v1646
      %v1648 = vpop.f32.mrb[0].mxu0
      %1649 = vmatprep.mubr.f32.mxu0 0.0
      %1650 = vmatmul.mubr.f32.gmra.mrb[0].mxu0 %v1459
      %v1651 = vpop.f32.mrb[0].mxu0
      %v1652 = vadd.f32 0.0, %v1651
      %v1653 = vpop.f32.mrb[0].mxu0
      %1654 = vmatprep.mubr.f32.mxu0 0.0
      %1655 = vmatmul.mubr.f32.gmra.mrb[0].mxu0 %v1462
      %v1656 = vpop.f32.mrb[0].mxu0
      %v1657 = vadd.f32 0.0, %v1656
      %v1658 = vpop.f32.mrb[0].mxu0
      %1659 = vmatprep.mubr.f32.mxu0 0.0
      %1660 = vmatmul.mubr.f32.gmra.mrb[0].mxu0 %v1465
      %v1661 = vpop.f32.mrb[0].mxu0
      %v1662 = vadd.f32 0.0, %v1661
      %v1663 = vpop.f32.mrb[0].mxu0
      %1664 = vmatprep.mubr.f32.mxu0 0.0
      %1665 = vmatmul.mubr.f32.gmra.mrb[0].mxu0 %v1468
      %v1666 = vpop.f32.mrb[0].mxu0
      %v1667 = vadd.f32 0.0, %v1666
      %v1668 = vpop.f32.mrb[0].mxu0
      %1669 = vmatprep.mubr.f32.mxu0 0.0
      %1670 = vmatmul.mubr.f32.gmra.mrb[0].mxu0 %v1471
      %v1671 = vpop.f32.mrb[0].mxu0
      %v1672 = vadd.f32 0.0, %v1671
      %v1673 = vpop.f32.mrb[0].mxu0
      %1674 = vmatprep.mubr.f32.mxu0 0.0
      %1675 = vmatmul.mubr.f32.gmra.mrb[0].mxu0 %v1474
      %v1676 = vpop.f32.mrb[0].mxu0
      %v1677 = vadd.f32 0.0, %v1676
      %v1678 = vpop.f32.mrb[0].mxu0
      %1679 = vmatprep.mubr.f32.mxu0 0.0
      %1680 = vmatmul.mubr.f32.gmra.mrb[0].mxu0 %v1477
      %v1681 = vpop.f32.mrb[0].mxu0
      %v1682 = vadd.f32 0.0, %v1681
      %v1683 = vpop.f32.mrb[0].mxu0
      %1684 = vmatprep.mubr.f32.mxu0 0.0
      %1685 = vmatmul.mubr.f32.gmra.mrb[0].mxu0 %v1480
      %v1686 = vpop.f32.mrb[0].mxu0
      %v1687 = vadd.f32 0.0, %v1686
      %v1688 = vpop.f32.mrb[0].mxu0
      %1689 = vmatprep.mubr.f32.mxu0 0.0
      %1690 = vmatmul.mubr.f32.gmra.mrb[0].mxu0 %v1483
      %v1691 = vpop.f32.mrb[0].mxu0
      %v1692 = vadd.f32 0.0, %v1691
      %v1693 = vpop.f32.mrb[0].mxu0
      %1694 = vmatprep.mubr.f32.mxu0 0.0
      %1695 = vmatmul.mubr.f32.gmra.mrb[0].mxu0 %v1486
      %v1696 = vpop.f32.mrb[0].mxu0
      %v1697 = vadd.f32 0.0, %v1696
      %v1698 = vpop.f32.mrb[0].mxu0
      %1699 = vmatprep.mubr.f32.mxu0 0.0
      %1700 = vmatmul.mubr.f32.gmra.mrb[0].mxu0 %v1489
      %v1701 = vpop.f32.mrb[0].mxu0
      %v1702 = vadd.f32 0.0, %v1701
      %v1703 = vpop.f32.mrb[0].mxu0
      %1704 = vmatprep.mubr.f32.mxu0 0.0
      %1705 = vmatmul.mubr.f32.gmra.mrb[0].mxu0 %v1492
      %v1706 = vpop.f32.mrb[0].mxu0
      %v1707 = vadd.f32 0.0, %v1706
      %v1708 = vpop.f32.mrb[0].mxu0
      %1709 = vmatprep.mubr.f32.mxu0 0.0
      %1710 = vmatmul.mubr.f32.gmra.mrb[0].mxu0 %v1495
      %v1711 = vpop.f32.mrb[0].mxu0
      %v1712 = vadd.f32 0.0, %v1711
      %v1713 = vpop.f32.mrb[0].mxu0
      %1714 = vmatprep.mubr.f32.mxu0 0.0
      %1715 = vmatmul.mubr.f32.gmra.mrb[0].mxu0 %v1498
      %v1716 = vpop.f32.mrb[0].mxu0
      %v1717 = vadd.f32 0.0, %v1716
      %v1718 = vpop.f32.mrb[0].mxu0
      %1719 = vmatprep.mubr.f32.mxu0 0.0
      %1720 = vmatmul.mubr.f32.gmra.mrb[0].mxu0 %v1501
      %v1721 = vpop.f32.mrb[0].mxu0
      %v1722 = vadd.f32 0.0, %v1721
      %v1723 = vpop.f32.mrb[0].mxu0
      %1724 = vmatprep.mubr.f32.mxu0 0.0
      %1725 = vmatmul.mubr.f32.gmra.mrb[0].mxu0 %v1504
      %v1726 = vpop.f32.mrb[0].mxu0
      %v1727 = vadd.f32 0.0, %v1726
      %v1728 = vpop.f32.mrb[0].mxu0
      %1729 = vmatprep.mubr.f32.mxu0 0.0
      %1730 = vmatmul.mubr.f32.gmra.mrb[0].mxu0 %v1507
      %v1731 = vpop.f32.mrb[0].mxu0
      %v1732 = vadd.f32 0.0, %v1731
      %v1733 = vpop.f32.mrb[0].mxu0
      %1734 = vmatprep.mubr.f32.mxu0 0.0
      %1735 = vmatmul.mubr.f32.gmra.mrb[0].mxu0 %v1510
      %v1736 = vpop.f32.mrb[0].mxu0
      %v1737 = vadd.f32 0.0, %v1736
      %v1738 = vpop.f32.mrb[0].mxu0
      %1739 = vdwg.mxu0
      %v1740 = vadd.f32 %v1384, %v1582
      %v1741 = vadd.f32 %v1385, %v1587
      %v1742 = vadd.f32 %v1386, %v1592
      %v1743 = vadd.f32 %v1387, %v1597
      %v1744 = vadd.f32 %v1388, %v1602
      %v1745 = vadd.f32 %v1389, %v1607
      %v1746 = vadd.f32 %v1390, %v1612
      %v1747 = vadd.f32 %v1391, %v1617
      %v1748 = vadd.f32 %v1392, %v1622
      %v1749 = vadd.f32 %v1393, %v1627
      %v1750 = vadd.f32 %v1394, %v1632
      %v1751 = vadd.f32 %v1395, %v1637
      %v1752 = vadd.f32 %v1396, %v1642
      %v1753 = vadd.f32 %v1397, %v1647
      %v1754 = vadd.f32 %v1398, %v1652
      %v1755 = vadd.f32 %v1399, %v1657
      %v1756 = vadd.f32 %v1400, %v1662
      %v1757 = vadd.f32 %v1401, %v1667
      %v1758 = vadd.f32 %v1402, %v1672
      %v1759 = vadd.f32 %v1403, %v1677
      %v1760 = vadd.f32 %v1404, %v1682
      %v1761 = vadd.f32 %v1405, %v1687
      %v1762 = vadd.f32 %v1406, %v1692
      %v1763 = vadd.f32 %v1407, %v1697
      %v1764 = vadd.f32 %v1408, %v1702
      %v1765 = vadd.f32 %v1409, %v1707
      %v1766 = vadd.f32 %v1410, %v1712
      %v1767 = vadd.f32 %v1411, %v1717
      %v1768 = vadd.f32 %v1412, %v1722
      %v1769 = vadd.f32 %v1413, %v1727
      %v1770 = vadd.f32 %v1414, %v1732
      %v1771 = vadd.f32 %v1415, %v1737
      %v1773 = vsel %vm345, %v304, 0
      %v1776 = vsel %vm345, %v305, 0
      %v1779 = vsel %vm345, %v306, 0
      %v1782 = vsel %vm345, %v307, 0
      %v1785 = vsel %vm345, %v308, 0
      %v1788 = vsel %vm345, %v309, 0
      %v1791 = vsel %vm345, %v310, 0
      %v1794 = vsel %vm345, %v311, 0
      %v1797 = vsel %vm345, %v312, 0
      %v1800 = vsel %vm345, %v313, 0
      %v1803 = vsel %vm345, %v314, 0
      %v1806 = vsel %vm345, %v315, 0
      %v1809 = vsel %vm345, %v316, 0
      %v1812 = vsel %vm345, %v317, 0
      %v1815 = vsel %vm345, %v318, 0
      %v1818 = vsel %vm345, %v319, 0
      %v1821 = vsel %vm345, %v320, 0
      %v1824 = vsel %vm345, %v321, 0
      %v1827 = vsel %vm345, %v322, 0
      %v1830 = vsel %vm345, %v323, 0
      %v1833 = vsel %vm345, %v324, 0
      %v1836 = vsel %vm345, %v325, 0
      %v1839 = vsel %vm345, %v326, 0
      %v1842 = vsel %vm345, %v327, 0
      %v1845 = vsel %vm345, %v328, 0
      %v1848 = vsel %vm345, %v329, 0
      %v1851 = vsel %vm345, %v330, 0
      %v1854 = vsel %vm345, %v331, 0
      %v1857 = vsel %vm345, %v332, 0
      %v1860 = vsel %vm345, %v333, 0
      %v1863 = vsel %vm345, %v334, 0
      %v1866 = vsel %vm345, %v335, 0
      %v1869 = vsel %vm442, %v340, 0
      %1871 = vmatprep.subr.mxu0 0.0
      %1872 = vmatpush1.msra.mxu0 %v1869
      %1873 = vmatprep.subr.mxu0 0.0
      %1874 = vmatpush1.msra.mxu0 0.0
      %1875 = vmatprep.subr.mxu0 0.0
      %1876 = vmatpush1.msra.mxu0 0.0
      %1877 = vmatprep.subr.mxu0 0.0
      %1878 = vmatpush1.msra.mxu0 0.0
      %1879 = vmatprep.subr.mxu0 0.0
      %1880 = vmatpush1.msra.mxu0 0.0
      %1881 = vmatprep.subr.mxu0 0.0
      %1882 = vmatpush1.msra.mxu0 0.0
      %1883 = vmatprep.subr.mxu0 0.0
      %1884 = vmatpush1.msra.mxu0 0.0
      %1885 = vmatprep.subr.mxu0 0.0
      %1886 = vmatpush1.msra.mxu0 0.0
      %1887 = vmatprep.subr.mxu0 0.0
      %1888 = vmatpush1.msra.mxu0 0.0
      %1889 = vmatprep.subr.mxu0 0.0
      %1890 = vmatpush1.msra.mxu0 0.0
      %1891 = vmatprep.subr.mxu0 0.0
      %1892 = vmatpush1.msra.mxu0 0.0
      %1893 = vmatprep.subr.mxu0 0.0
      %1894 = vmatpush1.msra.mxu0 0.0
      %1895 = vmatprep.subr.mxu0 0.0
      %1896 = vmatpush1.msra.mxu0 0.0
      %1897 = vmatprep.subr.mxu0 0.0
      %1898 = vmatpush1.msra.mxu0 0.0
      %1899 = vmatprep.subr.mxu0 0.0
      %1900 = vmatpush1.msra.mxu0 0.0
      %1901 = vmatprep.subr.mxu0 0.0
      %1902 = vmatpush1.msra.mxu0 0.0
      %1903 = vmatprep.subr.mxu0 0.0
      %1904 = vmatpush1.msra.mxu0 0.0
      %1905 = vmatprep.subr.mxu0 0.0
      %1906 = vmatpush1.msra.mxu0 0.0
      %1907 = vmatprep.subr.mxu0 0.0
      %1908 = vmatpush1.msra.mxu0 0.0
      %1909 = vmatprep.subr.mxu0 0.0
      %1910 = vmatpush1.msra.mxu0 0.0
      %1911 = vmatprep.subr.mxu0 0.0
      %1912 = vmatpush1.msra.mxu0 0.0
      %1913 = vmatprep.subr.mxu0 0.0
      %1914 = vmatpush1.msra.mxu0 0.0
      %1915 = vmatprep.subr.mxu0 0.0
      %1916 = vmatpush1.msra.mxu0 0.0
      %1917 = vmatprep.subr.mxu0 0.0
      %1918 = vmatpush1.msra.mxu0 0.0
      %1919 = vmatprep.subr.mxu0 0.0
      %1920 = vmatpush1.msra.mxu0 0.0
      %1921 = vmatprep.subr.mxu0 0.0
      %1922 = vmatpush1.msra.mxu0 0.0
      %1923 = vmatprep.subr.mxu0 0.0
      %1924 = vmatpush1.msra.mxu0 0.0
      %1925 = vmatprep.subr.mxu0 0.0
      %1926 = vmatpush1.msra.mxu0 0.0
      %1927 = vmatprep.subr.mxu0 0.0
      %1928 = vmatpush1.msra.mxu0 0.0
      %1929 = vmatprep.subr.mxu0 0.0
      %1930 = vmatpush1.msra.mxu0 0.0
      %1931 = vmatprep.subr.mxu0 0.0
      %1932 = vmatpush1.msra.mxu0 0.0
      %1933 = vmatprep.subr.mxu0 0.0
      %1934 = vmatpush1.msra.mxu0 0.0
      %1935 = vmatprep.mubr.f32.mxu0 0.0
      %1936 = vmatmul.mubr.f32.gmra.mrb[0].mxu0 %v1773
      %v1937 = vpop.f32.mrb[0].mxu0
      %v1938 = vadd.f32 0.0, %v1937
      %v1939 = vpop.f32.mrb[0].mxu0
      %1940 = vmatprep.mubr.f32.mxu0 0.0
      %1941 = vmatmul.mubr.f32.gmra.mrb[0].mxu0 %v1776
      %v1942 = vpop.f32.mrb[0].mxu0
      %v1943 = vadd.f32 0.0, %v1942
      %v1944 = vpop.f32.mrb[0].mxu0
      %1945 = vmatprep.mubr.f32.mxu0 0.0
      %1946 = vmatmul.mubr.f32.gmra.mrb[0].mxu0 %v1779
      %v1947 = vpop.f32.mrb[0].mxu0
      %v1948 = vadd.f32 0.0, %v1947
      %v1949 = vpop.f32.mrb[0].mxu0
      %1950 = vmatprep.mubr.f32.mxu0 0.0
      %1951 = vmatmul.mubr.f32.gmra.mrb[0].mxu0 %v1782
      %v1952 = vpop.f32.mrb[0].mxu0
      %v1953 = vadd.f32 0.0, %v1952
      %v1954 = vpop.f32.mrb[0].mxu0
      %1955 = vmatprep.mubr.f32.mxu0 0.0
      %1956 = vmatmul.mubr.f32.gmra.mrb[0].mxu0 %v1785
      %v1957 = vpop.f32.mrb[0].mxu0
      %v1958 = vadd.f32 0.0, %v1957
      %v1959 = vpop.f32.mrb[0].mxu0
      %1960 = vmatprep.mubr.f32.mxu0 0.0
      %1961 = vmatmul.mubr.f32.gmra.mrb[0].mxu0 %v1788
      %v1962 = vpop.f32.mrb[0].mxu0
      %v1963 = vadd.f32 0.0, %v1962
      %v1964 = vpop.f32.mrb[0].mxu0
      %1965 = vmatprep.mubr.f32.mxu0 0.0
      %1966 = vmatmul.mubr.f32.gmra.mrb[0].mxu0 %v1791
      %v1967 = vpop.f32.mrb[0].mxu0
      %v1968 = vadd.f32 0.0, %v1967
      %v1969 = vpop.f32.mrb[0].mxu0
      %1970 = vmatprep.mubr.f32.mxu0 0.0
      %1971 = vmatmul.mubr.f32.gmra.mrb[0].mxu0 %v1794
      %v1972 = vpop.f32.mrb[0].mxu0
      %v1973 = vadd.f32 0.0, %v1972
      %v1974 = vpop.f32.mrb[0].mxu0
      %1975 = vmatprep.mubr.f32.mxu0 0.0
      %1976 = vmatmul.mubr.f32.gmra.mrb[0].mxu0 %v1797
      %v1977 = vpop.f32.mrb[0].mxu0
      %v1978 = vadd.f32 0.0, %v1977
      %v1979 = vpop.f32.mrb[0].mxu0
      %1980 = vmatprep.mubr.f32.mxu0 0.0
      %1981 = vmatmul.mubr.f32.gmra.mrb[0].mxu0 %v1800
      %v1982 = vpop.f32.mrb[0].mxu0
      %v1983 = vadd.f32 0.0, %v1982
      %v1984 = vpop.f32.mrb[0].mxu0
      %1985 = vmatprep.mubr.f32.mxu0 0.0
      %1986 = vmatmul.mubr.f32.gmra.mrb[0].mxu0 %v1803
      %v1987 = vpop.f32.mrb[0].mxu0
      %v1988 = vadd.f32 0.0, %v1987
      %v1989 = vpop.f32.mrb[0].mxu0
      %1990 = vmatprep.mubr.f32.mxu0 0.0
      %1991 = vmatmul.mubr.f32.gmra.mrb[0].mxu0 %v1806
      %v1992 = vpop.f32.mrb[0].mxu0
      %v1993 = vadd.f32 0.0, %v1992
      %v1994 = vpop.f32.mrb[0].mxu0
      %1995 = vmatprep.mubr.f32.mxu0 0.0
      %1996 = vmatmul.mubr.f32.gmra.mrb[0].mxu0 %v1809
      %v1997 = vpop.f32.mrb[0].mxu0
      %v1998 = vadd.f32 0.0, %v1997
      %v1999 = vpop.f32.mrb[0].mxu0
      %2000 = vmatprep.mubr.f32.mxu0 0.0
      %2001 = vmatmul.mubr.f32.gmra.mrb[0].mxu0 %v1812
      %v2002 = vpop.f32.mrb[0].mxu0
      %v2003 = vadd.f32 0.0, %v2002
      %v2004 = vpop.f32.mrb[0].mxu0
      %2005 = vmatprep.mubr.f32.mxu0 0.0
      %2006 = vmatmul.mubr.f32.gmra.mrb[0].mxu0 %v1815
      %v2007 = vpop.f32.mrb[0].mxu0
      %v2008 = vadd.f32 0.0, %v2007
      %v2009 = vpop.f32.mrb[0].mxu0
      %2010 = vmatprep.mubr.f32.mxu0 0.0
      %2011 = vmatmul.mubr.f32.gmra.mrb[0].mxu0 %v1818
      %v2012 = vpop.f32.mrb[0].mxu0
      %v2013 = vadd.f32 0.0, %v2012
      %v2014 = vpop.f32.mrb[0].mxu0
      %2015 = vmatprep.mubr.f32.mxu0 0.0
      %2016 = vmatmul.mubr.f32.gmra.mrb[0].mxu0 %v1821
      %v2017 = vpop.f32.mrb[0].mxu0
      %v2018 = vadd.f32 0.0, %v2017
      %v2019 = vpop.f32.mrb[0].mxu0
      %2020 = vmatprep.mubr.f32.mxu0 0.0
      %2021 = vmatmul.mubr.f32.gmra.mrb[0].mxu0 %v1824
      %v2022 = vpop.f32.mrb[0].mxu0
      %v2023 = vadd.f32 0.0, %v2022
      %v2024 = vpop.f32.mrb[0].mxu0
      %2025 = vmatprep.mubr.f32.mxu0 0.0
      %2026 = vmatmul.mubr.f32.gmra.mrb[0].mxu0 %v1827
      %v2027 = vpop.f32.mrb[0].mxu0
      %v2028 = vadd.f32 0.0, %v2027
      %v2029 = vpop.f32.mrb[0].mxu0
      %2030 = vmatprep.mubr.f32.mxu0 0.0
      %2031 = vmatmul.mubr.f32.gmra.mrb[0].mxu0 %v1830
      %v2032 = vpop.f32.mrb[0].mxu0
      %v2033 = vadd.f32 0.0, %v2032
      %v2034 = vpop.f32.mrb[0].mxu0
      %2035 = vmatprep.mubr.f32.mxu0 0.0
      %2036 = vmatmul.mubr.f32.gmra.mrb[0].mxu0 %v1833
      %v2037 = vpop.f32.mrb[0].mxu0
      %v2038 = vadd.f32 0.0, %v2037
      %v2039 = vpop.f32.mrb[0].mxu0
      %2040 = vmatprep.mubr.f32.mxu0 0.0
      %2041 = vmatmul.mubr.f32.gmra.mrb[0].mxu0 %v1836
      %v2042 = vpop.f32.mrb[0].mxu0
      %v2043 = vadd.f32 0.0, %v2042
      %v2044 = vpop.f32.mrb[0].mxu0
      %2045 = vmatprep.mubr.f32.mxu0 0.0
      %2046 = vmatmul.mubr.f32.gmra.mrb[0].mxu0 %v1839
      %v2047 = vpop.f32.mrb[0].mxu0
      %v2048 = vadd.f32 0.0, %v2047
      %v2049 = vpop.f32.mrb[0].mxu0
      %2050 = vmatprep.mubr.f32.mxu0 0.0
      %2051 = vmatmul.mubr.f32.gmra.mrb[0].mxu0 %v1842
      %v2052 = vpop.f32.mrb[0].mxu0
      %v2053 = vadd.f32 0.0, %v2052
      %v2054 = vpop.f32.mrb[0].mxu0
      %2055 = vmatprep.mubr.f32.mxu0 0.0
      %2056 = vmatmul.mubr.f32.gmra.mrb[0].mxu0 %v1845
      %v2057 = vpop.f32.mrb[0].mxu0
      %v2058 = vadd.f32 0.0, %v2057
      %v2059 = vpop.f32.mrb[0].mxu0
      %2060 = vmatprep.mubr.f32.mxu0 0.0
      %2061 = vmatmul.mubr.f32.gmra.mrb[0].mxu0 %v1848
      %v2062 = vpop.f32.mrb[0].mxu0
      %v2063 = vadd.f32 0.0, %v2062
      %v2064 = vpop.f32.mrb[0].mxu0
      %2065 = vmatprep.mubr.f32.mxu0 0.0
      %2066 = vmatmul.mubr.f32.gmra.mrb[0].mxu0 %v1851
      %v2067 = vpop.f32.mrb[0].mxu0
      %v2068 = vadd.f32 0.0, %v2067
      %v2069 = vpop.f32.mrb[0].mxu0
      %2070 = vmatprep.mubr.f32.mxu0 0.0
      %2071 = vmatmul.mubr.f32.gmra.mrb[0].mxu0 %v1854
      %v2072 = vpop.f32.mrb[0].mxu0
      %v2073 = vadd.f32 0.0, %v2072
      %v2074 = vpop.f32.mrb[0].mxu0
      %2075 = vmatprep.mubr.f32.mxu0 0.0
      %2076 = vmatmul.mubr.f32.gmra.mrb[0].mxu0 %v1857
      %v2077 = vpop.f32.mrb[0].mxu0
      %v2078 = vadd.f32 0.0, %v2077
      %v2079 = vpop.f32.mrb[0].mxu0
      %2080 = vmatprep.mubr.f32.mxu0 0.0
      %2081 = vmatmul.mubr.f32.gmra.mrb[0].mxu0 %v1860
      %v2082 = vpop.f32.mrb[0].mxu0
      %v2083 = vadd.f32 0.0, %v2082
      %v2084 = vpop.f32.mrb[0].mxu0
      %2085 = vmatprep.mubr.f32.mxu0 0.0
      %2086 = vmatmul.mubr.f32.gmra.mrb[0].mxu0 %v1863
      %v2087 = vpop.f32.mrb[0].mxu0
      %v2088 = vadd.f32 0.0, %v2087
      %v2089 = vpop.f32.mrb[0].mxu0
      %2090 = vmatprep.mubr.f32.mxu0 0.0
      %2091 = vmatmul.mubr.f32.gmra.mrb[0].mxu0 %v1866
      %v2092 = vpop.f32.mrb[0].mxu0
      %v2093 = vadd.f32 0.0, %v2092
      %v2094 = vpop.f32.mrb[0].mxu0
      %2095 = vdwg.mxu0
      %v2096 = vadd.f32 %v1740, %v1938
      %v2097 = vadd.f32 %v1741, %v1943
      %v2098 = vadd.f32 %v1742, %v1948
      %v2099 = vadd.f32 %v1743, %v1953
      %v2100 = vadd.f32 %v1744, %v1958
      %v2101 = vadd.f32 %v1745, %v1963
      %v2102 = vadd.f32 %v1746, %v1968
      %v2103 = vadd.f32 %v1747, %v1973
      %v2104 = vadd.f32 %v1748, %v1978
      %v2105 = vadd.f32 %v1749, %v1983
      %v2106 = vadd.f32 %v1750, %v1988
      %v2107 = vadd.f32 %v1751, %v1993
      %v2108 = vadd.f32 %v1752, %v1998
      %v2109 = vadd.f32 %v1753, %v2003
      %v2110 = vadd.f32 %v1754, %v2008
      %v2111 = vadd.f32 %v1755, %v2013
      %v2112 = vadd.f32 %v1756, %v2018
      %v2113 = vadd.f32 %v1757, %v2023
      %v2114 = vadd.f32 %v1758, %v2028
      %v2115 = vadd.f32 %v1759, %v2033
      %v2116 = vadd.f32 %v1760, %v2038
      %v2117 = vadd.f32 %v1761, %v2043
      %v2118 = vadd.f32 %v1762, %v2048
      %v2119 = vadd.f32 %v1763, %v2053
      %v2120 = vadd.f32 %v1764, %v2058
      %v2121 = vadd.f32 %v1765, %v2063
      %v2122 = vadd.f32 %v1766, %v2068
      %v2123 = vadd.f32 %v1767, %v2073
      %v2124 = vadd.f32 %v1768, %v2078
      %v2125 = vadd.f32 %v1769, %v2083
      %v2126 = vadd.f32 %v1770, %v2088
      %v2127 = vadd.f32 %v1771, %v2093
      %v2144 = vrot.slane %v256, 1
      %v2145 = vrot.slane %v257, 1
      %v2146 = vsel %vm1011, %v2144, %v2145
      %v2147 = vrot.slane %v258, 1
      %v2148 = vsel %vm1011, %v2145, %v2147
      %v2149 = vrot.slane %v259, 1
      %v2150 = vrot.slane %v260, 1
      %v2151 = vsel %vm1011, %v2149, %v2150
      %v2152 = vrot.slane %v261, 1
      %v2153 = vsel %vm1011, %v2150, %v2152
      %v2154 = vrot.slane %v262, 1
      %v2155 = vrot.slane %v263, 1
      %v2156 = vsel %vm1011, %v2154, %v2155
      %v2157 = vrot.slane %v264, 1
      %v2158 = vsel %vm1011, %v2155, %v2157
      %v2159 = vrot.slane %v265, 1
      %v2160 = vrot.slane %v266, 1
      %v2161 = vsel %vm1011, %v2159, %v2160
      %v2162 = vrot.slane %v267, 1
      %v2163 = vsel %vm1011, %v2160, %v2162
      %v2164 = vrot.slane %v268, 1
      %v2165 = vrot.slane %v269, 1
      %v2166 = vsel %vm1011, %v2164, %v2165
      %v2167 = vrot.slane %v270, 1
      %v2168 = vsel %vm1011, %v2165, %v2167
      %v2169 = vrot.slane %v271, 1
      %v2170 = vrot.slane %v272, 1
      %v2171 = vsel %vm1011, %v2169, %v2170
      %v2172 = vrot.slane %v273, 1
      %v2173 = vsel %vm1011, %v2170, %v2172
      %v2174 = vrot.slane %v274, 1
      %v2175 = vrot.slane %v275, 1
      %v2176 = vsel %vm1011, %v2174, %v2175
      %v2177 = vrot.slane %v276, 1
      %v2178 = vsel %vm1011, %v2175, %v2177
      %v2179 = vrot.slane %v277, 1
      %v2180 = vrot.slane %v278, 1
      %v2181 = vsel %vm1011, %v2179, %v2180
      %v2182 = vrot.slane %v279, 1
      %v2183 = vsel %vm1011, %v2180, %v2182
      %v2184 = vrot.slane %v280, 1
      %v2185 = vrot.slane %v281, 1
      %v2186 = vsel %vm1011, %v2184, %v2185
      %v2187 = vrot.slane %v282, 1
      %v2188 = vsel %vm1011, %v2185, %v2187
      %v2189 = vrot.slane %v283, 1
      %v2190 = vrot.slane %v284, 1
      %v2191 = vsel %vm1011, %v2189, %v2190
      %v2192 = vrot.slane %v285, 1
      %v2193 = vsel %vm1011, %v2190, %v2192
      %v2194 = vrot.slane %v286, 1
      %v2195 = vrot.slane %v287, 1
      %v2196 = vsel %vm1011, %v2194, %v2195
      %v2197 = vrot.slane %v288, 1
      %v2198 = vsel %vm1011, %v2195, %v2197
      %v2199 = vrot.slane %v289, 1
      %v2200 = vrot.slane %v290, 1
      %v2201 = vsel %vm1011, %v2199, %v2200
      %v2202 = vrot.slane %v291, 1
      %v2203 = vsel %vm1011, %v2200, %v2202
      %v2204 = vrot.slane %v292, 1
      %v2205 = vrot.slane %v293, 1
      %v2206 = vsel %vm1011, %v2204, %v2205
      %v2207 = vrot.slane %v294, 1
      %v2208 = vsel %vm1011, %v2205, %v2207
      %v2209 = vrot.slane %v295, 1
      %v2210 = vrot.slane %v296, 1
      %v2211 = vsel %vm1011, %v2209, %v2210
      %v2212 = vrot.slane %v297, 1
      %v2213 = vsel %vm1011, %v2210, %v2212
      %v2214 = vrot.slane %v298, 1
      %v2215 = vrot.slane %v299, 1
      %v2216 = vsel %vm1011, %v2214, %v2215
      %v2217 = vrot.slane %v300, 1
      %v2218 = vsel %vm1011, %v2215, %v2217
      %v2219 = vrot.slane %v301, 1
      %v2220 = vrot.slane %v302, 1
      %v2221 = vsel %vm1011, %v2219, %v2220
      %v2222 = vrot.slane %v303, 1
      %v2223 = vsel %vm1011, %v2220, %v2222
      %v2224 = vsel %vm345, %v2146, 0
      %v2226 = vsel %vm345, %v2148, 0
      %v2228 = vsel %vm345, %v2151, 0
      %v2230 = vsel %vm345, %v2153, 0
      %v2232 = vsel %vm345, %v2156, 0
      %v2234 = vsel %vm345, %v2158, 0
      %v2236 = vsel %vm345, %v2161, 0
      %v2238 = vsel %vm345, %v2163, 0
      %v2240 = vsel %vm345, %v2166, 0
      %v2242 = vsel %vm345, %v2168, 0
      %v2244 = vsel %vm345, %v2171, 0
      %v2246 = vsel %vm345, %v2173, 0
      %v2248 = vsel %vm345, %v2176, 0
      %v2250 = vsel %vm345, %v2178, 0
      %v2252 = vsel %vm345, %v2181, 0
      %v2254 = vsel %vm345, %v2183, 0
      %v2256 = vsel %vm345, %v2186, 0
      %v2258 = vsel %vm345, %v2188, 0
      %v2260 = vsel %vm345, %v2191, 0
      %v2262 = vsel %vm345, %v2193, 0
      %v2264 = vsel %vm345, %v2196, 0
      %v2266 = vsel %vm345, %v2198, 0
      %v2268 = vsel %vm345, %v2201, 0
      %v2270 = vsel %vm345, %v2203, 0
      %v2272 = vsel %vm345, %v2206, 0
      %v2274 = vsel %vm345, %v2208, 0
      %v2276 = vsel %vm345, %v2211, 0
      %v2278 = vsel %vm345, %v2213, 0
      %v2280 = vsel %vm345, %v2216, 0
      %v2282 = vsel %vm345, %v2218, 0
      %v2284 = vsel %vm345, %v2221, 0
      %v2286 = vsel %vm345, %v2223, 0
      %v2289 = vsel %vm442, %v341, 0
      %2291 = vmatprep.subr.mxu0 0.0
      %2292 = vmatpush1.msra.mxu0 %v2289
      %2293 = vmatprep.subr.mxu0 0.0
      %2294 = vmatpush1.msra.mxu0 0.0
      %2295 = vmatprep.subr.mxu0 0.0
      %2296 = vmatpush1.msra.mxu0 0.0
      %2297 = vmatprep.subr.mxu0 0.0
      %2298 = vmatpush1.msra.mxu0 0.0
      %2299 = vmatprep.subr.mxu0 0.0
      %2300 = vmatpush1.msra.mxu0 0.0
      %2301 = vmatprep.subr.mxu0 0.0
      %2302 = vmatpush1.msra.mxu0 0.0
      %2303 = vmatprep.subr.mxu0 0.0
      %2304 = vmatpush1.msra.mxu0 0.0
      %2305 = vmatprep.subr.mxu0 0.0
      %2306 = vmatpush1.msra.mxu0 0.0
      %2307 = vmatprep.subr.mxu0 0.0
      %2308 = vmatpush1.msra.mxu0 0.0
      %2309 = vmatprep.subr.mxu0 0.0
      %2310 = vmatpush1.msra.mxu0 0.0
      %2311 = vmatprep.subr.mxu0 0.0
      %2312 = vmatpush1.msra.mxu0 0.0
      %2313 = vmatprep.subr.mxu0 0.0
      %2314 = vmatpush1.msra.mxu0 0.0
      %2315 = vmatprep.subr.mxu0 0.0
      %2316 = vmatpush1.msra.mxu0 0.0
      %2317 = vmatprep.subr.mxu0 0.0
      %2318 = vmatpush1.msra.mxu0 0.0
      %2319 = vmatprep.subr.mxu0 0.0
      %2320 = vmatpush1.msra.mxu0 0.0
      %2321 = vmatprep.subr.mxu0 0.0
      %2322 = vmatpush1.msra.mxu0 0.0
      %2323 = vmatprep.subr.mxu0 0.0
      %2324 = vmatpush1.msra.mxu0 0.0
      %2325 = vmatprep.subr.mxu0 0.0
      %2326 = vmatpush1.msra.mxu0 0.0
      %2327 = vmatprep.subr.mxu0 0.0
      %2328 = vmatpush1.msra.mxu0 0.0
      %2329 = vmatprep.subr.mxu0 0.0
      %2330 = vmatpush1.msra.mxu0 0.0
      %2331 = vmatprep.subr.mxu0 0.0
      %2332 = vmatpush1.msra.mxu0 0.0
      %2333 = vmatprep.subr.mxu0 0.0
      %2334 = vmatpush1.msra.mxu0 0.0
      %2335 = vmatprep.subr.mxu0 0.0
      %2336 = vmatpush1.msra.mxu0 0.0
      %2337 = vmatprep.subr.mxu0 0.0
      %2338 = vmatpush1.msra.mxu0 0.0
      %2339 = vmatprep.subr.mxu0 0.0
      %2340 = vmatpush1.msra.mxu0 0.0
      %2341 = vmatprep.subr.mxu0 0.0
      %2342 = vmatpush1.msra.mxu0 0.0
      %2343 = vmatprep.subr.mxu0 0.0
      %2344 = vmatpush1.msra.mxu0 0.0
      %2345 = vmatprep.subr.mxu0 0.0
      %2346 = vmatpush1.msra.mxu0 0.0
      %2347 = vmatprep.subr.mxu0 0.0
      %2348 = vmatpush1.msra.mxu0 0.0
      %2349 = vmatprep.subr.mxu0 0.0
      %2350 = vmatpush1.msra.mxu0 0.0
      %2351 = vmatprep.subr.mxu0 0.0
      %2352 = vmatpush1.msra.mxu0 0.0
      %2353 = vmatprep.subr.mxu0 0.0
      %2354 = vmatpush1.msra.mxu0 0.0
      %2355 = vmatprep.mubr.f32.mxu0 0.0
      %2356 = vmatmul.mubr.f32.gmra.mrb[0].mxu0 %v2224
      %v2357 = vpop.f32.mrb[0].mxu0
      %v2358 = vadd.f32 0.0, %v2357
      %v2359 = vpop.f32.mrb[0].mxu0
      %2360 = vmatprep.mubr.f32.mxu0 0.0
      %2361 = vmatmul.mubr.f32.gmra.mrb[0].mxu0 %v2226
      %v2362 = vpop.f32.mrb[0].mxu0
      %v2363 = vadd.f32 0.0, %v2362
      %v2364 = vpop.f32.mrb[0].mxu0
      %2365 = vmatprep.mubr.f32.mxu0 0.0
      %2366 = vmatmul.mubr.f32.gmra.mrb[0].mxu0 %v2228
      %v2367 = vpop.f32.mrb[0].mxu0
      %v2368 = vadd.f32 0.0, %v2367
      %v2369 = vpop.f32.mrb[0].mxu0
      %2370 = vmatprep.mubr.f32.mxu0 0.0
      %2371 = vmatmul.mubr.f32.gmra.mrb[0].mxu0 %v2230
      %v2372 = vpop.f32.mrb[0].mxu0
      %v2373 = vadd.f32 0.0, %v2372
      %v2374 = vpop.f32.mrb[0].mxu0
      %2375 = vmatprep.mubr.f32.mxu0 0.0
      %2376 = vmatmul.mubr.f32.gmra.mrb[0].mxu0 %v2232
      %v2377 = vpop.f32.mrb[0].mxu0
      %v2378 = vadd.f32 0.0, %v2377
      %v2379 = vpop.f32.mrb[0].mxu0
      %2380 = vmatprep.mubr.f32.mxu0 0.0
      %2381 = vmatmul.mubr.f32.gmra.mrb[0].mxu0 %v2234
      %v2382 = vpop.f32.mrb[0].mxu0
      %v2383 = vadd.f32 0.0, %v2382
      %v2384 = vpop.f32.mrb[0].mxu0
      %2385 = vmatprep.mubr.f32.mxu0 0.0
      %2386 = vmatmul.mubr.f32.gmra.mrb[0].mxu0 %v2236
      %v2387 = vpop.f32.mrb[0].mxu0
      %v2388 = vadd.f32 0.0, %v2387
      %v2389 = vpop.f32.mrb[0].mxu0
      %2390 = vmatprep.mubr.f32.mxu0 0.0
      %2391 = vmatmul.mubr.f32.gmra.mrb[0].mxu0 %v2238
      %v2392 = vpop.f32.mrb[0].mxu0
      %v2393 = vadd.f32 0.0, %v2392
      %v2394 = vpop.f32.mrb[0].mxu0
      %2395 = vmatprep.mubr.f32.mxu0 0.0
      %2396 = vmatmul.mubr.f32.gmra.mrb[0].mxu0 %v2240
      %v2397 = vpop.f32.mrb[0].mxu0
      %v2398 = vadd.f32 0.0, %v2397
      %v2399 = vpop.f32.mrb[0].mxu0
      %2400 = vmatprep.mubr.f32.mxu0 0.0
      %2401 = vmatmul.mubr.f32.gmra.mrb[0].mxu0 %v2242
      %v2402 = vpop.f32.mrb[0].mxu0
      %v2403 = vadd.f32 0.0, %v2402
      %v2404 = vpop.f32.mrb[0].mxu0
      %2405 = vmatprep.mubr.f32.mxu0 0.0
      %2406 = vmatmul.mubr.f32.gmra.mrb[0].mxu0 %v2244
      %v2407 = vpop.f32.mrb[0].mxu0
      %v2408 = vadd.f32 0.0, %v2407
      %v2409 = vpop.f32.mrb[0].mxu0
      %2410 = vmatprep.mubr.f32.mxu0 0.0
      %2411 = vmatmul.mubr.f32.gmra.mrb[0].mxu0 %v2246
      %v2412 = vpop.f32.mrb[0].mxu0
      %v2413 = vadd.f32 0.0, %v2412
      %v2414 = vpop.f32.mrb[0].mxu0
      %2415 = vmatprep.mubr.f32.mxu0 0.0
      %2416 = vmatmul.mubr.f32.gmra.mrb[0].mxu0 %v2248
      %v2417 = vpop.f32.mrb[0].mxu0
      %v2418 = vadd.f32 0.0, %v2417
      %v2419 = vpop.f32.mrb[0].mxu0
      %2420 = vmatprep.mubr.f32.mxu0 0.0
      %2421 = vmatmul.mubr.f32.gmra.mrb[0].mxu0 %v2250
      %v2422 = vpop.f32.mrb[0].mxu0
      %v2423 = vadd.f32 0.0, %v2422
      %v2424 = vpop.f32.mrb[0].mxu0
      %2425 = vmatprep.mubr.f32.mxu0 0.0
      %2426 = vmatmul.mubr.f32.gmra.mrb[0].mxu0 %v2252
      %v2427 = vpop.f32.mrb[0].mxu0
      %v2428 = vadd.f32 0.0, %v2427
      %v2429 = vpop.f32.mrb[0].mxu0
      %2430 = vmatprep.mubr.f32.mxu0 0.0
      %2431 = vmatmul.mubr.f32.gmra.mrb[0].mxu0 %v2254
      %v2432 = vpop.f32.mrb[0].mxu0
      %v2433 = vadd.f32 0.0, %v2432
      %v2434 = vpop.f32.mrb[0].mxu0
      %2435 = vmatprep.mubr.f32.mxu0 0.0
      %2436 = vmatmul.mubr.f32.gmra.mrb[0].mxu0 %v2256
      %v2437 = vpop.f32.mrb[0].mxu0
      %v2438 = vadd.f32 0.0, %v2437
      %v2439 = vpop.f32.mrb[0].mxu0
      %2440 = vmatprep.mubr.f32.mxu0 0.0
      %2441 = vmatmul.mubr.f32.gmra.mrb[0].mxu0 %v2258
      %v2442 = vpop.f32.mrb[0].mxu0
      %v2443 = vadd.f32 0.0, %v2442
      %v2444 = vpop.f32.mrb[0].mxu0
      %2445 = vmatprep.mubr.f32.mxu0 0.0
      %2446 = vmatmul.mubr.f32.gmra.mrb[0].mxu0 %v2260
      %v2447 = vpop.f32.mrb[0].mxu0
      %v2448 = vadd.f32 0.0, %v2447
      %v2449 = vpop.f32.mrb[0].mxu0
      %2450 = vmatprep.mubr.f32.mxu0 0.0
      %2451 = vmatmul.mubr.f32.gmra.mrb[0].mxu0 %v2262
      %v2452 = vpop.f32.mrb[0].mxu0
      %v2453 = vadd.f32 0.0, %v2452
      %v2454 = vpop.f32.mrb[0].mxu0
      %2455 = vmatprep.mubr.f32.mxu0 0.0
      %2456 = vmatmul.mubr.f32.gmra.mrb[0].mxu0 %v2264
      %v2457 = vpop.f32.mrb[0].mxu0
      %v2458 = vadd.f32 0.0, %v2457
      %v2459 = vpop.f32.mrb[0].mxu0
      %2460 = vmatprep.mubr.f32.mxu0 0.0
      %2461 = vmatmul.mubr.f32.gmra.mrb[0].mxu0 %v2266
      %v2462 = vpop.f32.mrb[0].mxu0
      %v2463 = vadd.f32 0.0, %v2462
      %v2464 = vpop.f32.mrb[0].mxu0
      %2465 = vmatprep.mubr.f32.mxu0 0.0
      %2466 = vmatmul.mubr.f32.gmra.mrb[0].mxu0 %v2268
      %v2467 = vpop.f32.mrb[0].mxu0
      %v2468 = vadd.f32 0.0, %v2467
      %v2469 = vpop.f32.mrb[0].mxu0
      %2470 = vmatprep.mubr.f32.mxu0 0.0
      %2471 = vmatmul.mubr.f32.gmra.mrb[0].mxu0 %v2270
      %v2472 = vpop.f32.mrb[0].mxu0
      %v2473 = vadd.f32 0.0, %v2472
      %v2474 = vpop.f32.mrb[0].mxu0
      %2475 = vmatprep.mubr.f32.mxu0 0.0
      %2476 = vmatmul.mubr.f32.gmra.mrb[0].mxu0 %v2272
      %v2477 = vpop.f32.mrb[0].mxu0
      %v2478 = vadd.f32 0.0, %v2477
      %v2479 = vpop.f32.mrb[0].mxu0
      %2480 = vmatprep.mubr.f32.mxu0 0.0
      %2481 = vmatmul.mubr.f32.gmra.mrb[0].mxu0 %v2274
      %v2482 = vpop.f32.mrb[0].mxu0
      %v2483 = vadd.f32 0.0, %v2482
      %v2484 = vpop.f32.mrb[0].mxu0
      %2485 = vmatprep.mubr.f32.mxu0 0.0
      %2486 = vmatmul.mubr.f32.gmra.mrb[0].mxu0 %v2276
      %v2487 = vpop.f32.mrb[0].mxu0
      %v2488 = vadd.f32 0.0, %v2487
      %v2489 = vpop.f32.mrb[0].mxu0
      %2490 = vmatprep.mubr.f32.mxu0 0.0
      %2491 = vmatmul.mubr.f32.gmra.mrb[0].mxu0 %v2278
      %v2492 = vpop.f32.mrb[0].mxu0
      %v2493 = vadd.f32 0.0, %v2492
      %v2494 = vpop.f32.mrb[0].mxu0
      %2495 = vmatprep.mubr.f32.mxu0 0.0
      %2496 = vmatmul.mubr.f32.gmra.mrb[0].mxu0 %v2280
      %v2497 = vpop.f32.mrb[0].mxu0
      %v2498 = vadd.f32 0.0, %v2497
      %v2499 = vpop.f32.mrb[0].mxu0
      %2500 = vmatprep.mubr.f32.mxu0 0.0
      %2501 = vmatmul.mubr.f32.gmra.mrb[0].mxu0 %v2282
      %v2502 = vpop.f32.mrb[0].mxu0
      %v2503 = vadd.f32 0.0, %v2502
      %v2504 = vpop.f32.mrb[0].mxu0
      %2505 = vmatprep.mubr.f32.mxu0 0.0
      %2506 = vmatmul.mubr.f32.gmra.mrb[0].mxu0 %v2284
      %v2507 = vpop.f32.mrb[0].mxu0
      %v2508 = vadd.f32 0.0, %v2507
      %v2509 = vpop.f32.mrb[0].mxu0
      %2510 = vmatprep.mubr.f32.mxu0 0.0
      %2511 = vmatmul.mubr.f32.gmra.mrb[0].mxu0 %v2286
      %v2512 = vpop.f32.mrb[0].mxu0
      %v2513 = vadd.f32 0.0, %v2512
      %v2514 = vpop.f32.mrb[0].mxu0
      %2515 = vdwg.mxu0
      %v2516 = vadd.f32 %v2096, %v2358
      %v2517 = vadd.f32 %v2097, %v2363
      %v2518 = vadd.f32 %v2098, %v2368
      %v2519 = vadd.f32 %v2099, %v2373
      %v2520 = vadd.f32 %v2100, %v2378
      %v2521 = vadd.f32 %v2101, %v2383
      %v2522 = vadd.f32 %v2102, %v2388
      %v2523 = vadd.f32 %v2103, %v2393
      %v2524 = vadd.f32 %v2104, %v2398
      %v2525 = vadd.f32 %v2105, %v2403
      %v2526 = vadd.f32 %v2106, %v2408
      %v2527 = vadd.f32 %v2107, %v2413
      %v2528 = vadd.f32 %v2108, %v2418
      %v2529 = vadd.f32 %v2109, %v2423
      %v2530 = vadd.f32 %v2110, %v2428
      %v2531 = vadd.f32 %v2111, %v2433
      %v2532 = vadd.f32 %v2112, %v2438
      %v2533 = vadd.f32 %v2113, %v2443
      %v2534 = vadd.f32 %v2114, %v2448
      %v2535 = vadd.f32 %v2115, %v2453
      %v2536 = vadd.f32 %v2116, %v2458
      %v2537 = vadd.f32 %v2117, %v2463
      %v2538 = vadd.f32 %v2118, %v2468
      %v2539 = vadd.f32 %v2119, %v2473
      %v2540 = vadd.f32 %v2120, %v2478
      %v2541 = vadd.f32 %v2121, %v2483
      %v2542 = vadd.f32 %v2122, %v2488
      %v2543 = vadd.f32 %v2123, %v2493
      %v2544 = vadd.f32 %v2124, %v2498
      %v2545 = vadd.f32 %v2125, %v2503
      %v2546 = vadd.f32 %v2126, %v2508
      %v2547 = vadd.f32 %v2127, %v2513
      %v2549 = vsel %vm345, %v219, 0
      %v2552 = vsel %vm345, %v220, 0
      %v2555 = vsel %vm442, %v342, 0
      %2557 = vmatprep.subr.mxu0 0.0
      %2558 = vmatpush1.msra.mxu0 %v2555
      %2559 = vmatprep.subr.mxu0 0.0
      %2560 = vmatpush1.msra.mxu0 0.0
      %2561 = vmatprep.subr.mxu0 0.0
      %2562 = vmatpush1.msra.mxu0 0.0
      %2563 = vmatprep.subr.mxu0 0.0
      %2564 = vmatpush1.msra.mxu0 0.0
      %2565 = vmatprep.subr.mxu0 0.0
      %2566 = vmatpush1.msra.mxu0 0.0
      %2567 = vmatprep.subr.mxu0 0.0
      %2568 = vmatpush1.msra.mxu0 0.0
      %2569 = vmatprep.subr.mxu0 0.0
      %2570 = vmatpush1.msra.mxu0 0.0
      %2571 = vmatprep.subr.mxu0 0.0
      %2572 = vmatpush1.msra.mxu0 0.0
      %2573 = vmatprep.subr.mxu0 0.0
      %2574 = vmatpush1.msra.mxu0 0.0
      %2575 = vmatprep.subr.mxu0 0.0
      %2576 = vmatpush1.msra.mxu0 0.0
      %2577 = vmatprep.subr.mxu0 0.0
      %2578 = vmatpush1.msra.mxu0 0.0
      %2579 = vmatprep.subr.mxu0 0.0
      %2580 = vmatpush1.msra.mxu0 0.0
      %2581 = vmatprep.subr.mxu0 0.0
      %2582 = vmatpush1.msra.mxu0 0.0
      %2583 = vmatprep.subr.mxu0 0.0
      %2584 = vmatpush1.msra.mxu0 0.0
      %2585 = vmatprep.subr.mxu0 0.0
      %2586 = vmatpush1.msra.mxu0 0.0
      %2587 = vmatprep.subr.mxu0 0.0
      %2588 = vmatpush1.msra.mxu0 0.0
      %2589 = vmatprep.subr.mxu0 0.0
      %2590 = vmatpush1.msra.mxu0 0.0
      %2591 = vmatprep.subr.mxu0 0.0
      %2592 = vmatpush1.msra.mxu0 0.0
      %2593 = vmatprep.subr.mxu0 0.0
      %2594 = vmatpush1.msra.mxu0 0.0
      %2595 = vmatprep.subr.mxu0 0.0
      %2596 = vmatpush1.msra.mxu0 0.0
      %2597 = vmatprep.subr.mxu0 0.0
      %2598 = vmatpush1.msra.mxu0 0.0
      %2599 = vmatprep.subr.mxu0 0.0
      %2600 = vmatpush1.msra.mxu0 0.0
      %2601 = vmatprep.subr.mxu0 0.0
      %2602 = vmatpush1.msra.mxu0 0.0
      %2603 = vmatprep.subr.mxu0 0.0
      %2604 = vmatpush1.msra.mxu0 0.0
      %2605 = vmatprep.subr.mxu0 0.0
      %2606 = vmatpush1.msra.mxu0 0.0
      %2607 = vmatprep.subr.mxu0 0.0
      %2608 = vmatpush1.msra.mxu0 0.0
      %2609 = vmatprep.subr.mxu0 0.0
      %2610 = vmatpush1.msra.mxu0 0.0
      %2611 = vmatprep.subr.mxu0 0.0
      %2612 = vmatpush1.msra.mxu0 0.0
      %2613 = vmatprep.subr.mxu0 0.0
      %2614 = vmatpush1.msra.mxu0 0.0
      %2615 = vmatprep.subr.mxu0 0.0
      %2616 = vmatpush1.msra.mxu0 0.0
      %2617 = vmatprep.subr.mxu0 0.0
      %2618 = vmatpush1.msra.mxu0 0.0
      %2619 = vmatprep.subr.mxu0 0.0
      %2620 = vmatpush1.msra.mxu0 0.0
      %2621 = vmatprep.mubr.f32.mxu0 0.0
      %2622 = vmatmul.mubr.f32.gmra.mrb[0].mxu0 %v678
      %v2623 = vpop.f32.mrb[0].mxu0
      %v2624 = vadd.f32 0.0, %v2623
      %v2625 = vpop.f32.mrb[0].mxu0
      %2626 = vmatprep.mubr.f32.mxu0 0.0
      %2627 = vmatmul.mubr.f32.gmra.mrb[0].mxu0 %v681
      %v2628 = vpop.f32.mrb[0].mxu0
      %v2629 = vadd.f32 0.0, %v2628
      %v2630 = vpop.f32.mrb[0].mxu0
      %2631 = vmatprep.mubr.f32.mxu0 0.0
      %2632 = vmatmul.mubr.f32.gmra.mrb[0].mxu0 %v684
      %v2633 = vpop.f32.mrb[0].mxu0
      %v2634 = vadd.f32 0.0, %v2633
      %v2635 = vpop.f32.mrb[0].mxu0
      %2636 = vmatprep.mubr.f32.mxu0 0.0
      %2637 = vmatmul.mubr.f32.gmra.mrb[0].mxu0 %v687
      %v2638 = vpop.f32.mrb[0].mxu0
      %v2639 = vadd.f32 0.0, %v2638
      %v2640 = vpop.f32.mrb[0].mxu0
      %2641 = vmatprep.mubr.f32.mxu0 0.0
      %2642 = vmatmul.mubr.f32.gmra.mrb[0].mxu0 %v690
      %v2643 = vpop.f32.mrb[0].mxu0
      %v2644 = vadd.f32 0.0, %v2643
      %v2645 = vpop.f32.mrb[0].mxu0
      %2646 = vmatprep.mubr.f32.mxu0 0.0
      %2647 = vmatmul.mubr.f32.gmra.mrb[0].mxu0 %v693
      %v2648 = vpop.f32.mrb[0].mxu0
      %v2649 = vadd.f32 0.0, %v2648
      %v2650 = vpop.f32.mrb[0].mxu0
      %2651 = vmatprep.mubr.f32.mxu0 0.0
      %2652 = vmatmul.mubr.f32.gmra.mrb[0].mxu0 %v696
      %v2653 = vpop.f32.mrb[0].mxu0
      %v2654 = vadd.f32 0.0, %v2653
      %v2655 = vpop.f32.mrb[0].mxu0
      %2656 = vmatprep.mubr.f32.mxu0 0.0
      %2657 = vmatmul.mubr.f32.gmra.mrb[0].mxu0 %v699
      %v2658 = vpop.f32.mrb[0].mxu0
      %v2659 = vadd.f32 0.0, %v2658
      %v2660 = vpop.f32.mrb[0].mxu0
      %2661 = vmatprep.mubr.f32.mxu0 0.0
      %2662 = vmatmul.mubr.f32.gmra.mrb[0].mxu0 %v702
      %v2663 = vpop.f32.mrb[0].mxu0
      %v2664 = vadd.f32 0.0, %v2663
      %v2665 = vpop.f32.mrb[0].mxu0
      %2666 = vmatprep.mubr.f32.mxu0 0.0
      %2667 = vmatmul.mubr.f32.gmra.mrb[0].mxu0 %v705
      %v2668 = vpop.f32.mrb[0].mxu0
      %v2669 = vadd.f32 0.0, %v2668
      %v2670 = vpop.f32.mrb[0].mxu0
      %2671 = vmatprep.mubr.f32.mxu0 0.0
      %2672 = vmatmul.mubr.f32.gmra.mrb[0].mxu0 %v708
      %v2673 = vpop.f32.mrb[0].mxu0
      %v2674 = vadd.f32 0.0, %v2673
      %v2675 = vpop.f32.mrb[0].mxu0
      %2676 = vmatprep.mubr.f32.mxu0 0.0
      %2677 = vmatmul.mubr.f32.gmra.mrb[0].mxu0 %v711
      %v2678 = vpop.f32.mrb[0].mxu0
      %v2679 = vadd.f32 0.0, %v2678
      %v2680 = vpop.f32.mrb[0].mxu0
      %2681 = vmatprep.mubr.f32.mxu0 0.0
      %2682 = vmatmul.mubr.f32.gmra.mrb[0].mxu0 %v714
      %v2683 = vpop.f32.mrb[0].mxu0
      %v2684 = vadd.f32 0.0, %v2683
      %v2685 = vpop.f32.mrb[0].mxu0
      %2686 = vmatprep.mubr.f32.mxu0 0.0
      %2687 = vmatmul.mubr.f32.gmra.mrb[0].mxu0 %v717
      %v2688 = vpop.f32.mrb[0].mxu0
      %v2689 = vadd.f32 0.0, %v2688
      %v2690 = vpop.f32.mrb[0].mxu0
      %2691 = vmatprep.mubr.f32.mxu0 0.0
      %2692 = vmatmul.mubr.f32.gmra.mrb[0].mxu0 %v720
      %v2693 = vpop.f32.mrb[0].mxu0
      %v2694 = vadd.f32 0.0, %v2693
      %v2695 = vpop.f32.mrb[0].mxu0
      %2696 = vmatprep.mubr.f32.mxu0 0.0
      %2697 = vmatmul.mubr.f32.gmra.mrb[0].mxu0 %v723
      %v2698 = vpop.f32.mrb[0].mxu0
      %v2699 = vadd.f32 0.0, %v2698
      %v2700 = vpop.f32.mrb[0].mxu0
      %2701 = vmatprep.mubr.f32.mxu0 0.0
      %2702 = vmatmul.mubr.f32.gmra.mrb[0].mxu0 %v726
      %v2703 = vpop.f32.mrb[0].mxu0
      %v2704 = vadd.f32 0.0, %v2703
      %v2705 = vpop.f32.mrb[0].mxu0
      %2706 = vmatprep.mubr.f32.mxu0 0.0
      %2707 = vmatmul.mubr.f32.gmra.mrb[0].mxu0 %v729
      %v2708 = vpop.f32.mrb[0].mxu0
      %v2709 = vadd.f32 0.0, %v2708
      %v2710 = vpop.f32.mrb[0].mxu0
      %2711 = vmatprep.mubr.f32.mxu0 0.0
      %2712 = vmatmul.mubr.f32.gmra.mrb[0].mxu0 %v732
      %v2713 = vpop.f32.mrb[0].mxu0
      %v2714 = vadd.f32 0.0, %v2713
      %v2715 = vpop.f32.mrb[0].mxu0
      %2716 = vmatprep.mubr.f32.mxu0 0.0
      %2717 = vmatmul.mubr.f32.gmra.mrb[0].mxu0 %v735
      %v2718 = vpop.f32.mrb[0].mxu0
      %v2719 = vadd.f32 0.0, %v2718
      %v2720 = vpop.f32.mrb[0].mxu0
      %2721 = vmatprep.mubr.f32.mxu0 0.0
      %2722 = vmatmul.mubr.f32.gmra.mrb[0].mxu0 %v738
      %v2723 = vpop.f32.mrb[0].mxu0
      %v2724 = vadd.f32 0.0, %v2723
      %v2725 = vpop.f32.mrb[0].mxu0
      %2726 = vmatprep.mubr.f32.mxu0 0.0
      %2727 = vmatmul.mubr.f32.gmra.mrb[0].mxu0 %v741
      %v2728 = vpop.f32.mrb[0].mxu0
      %v2729 = vadd.f32 0.0, %v2728
      %v2730 = vpop.f32.mrb[0].mxu0
      %2731 = vmatprep.mubr.f32.mxu0 0.0
      %2732 = vmatmul.mubr.f32.gmra.mrb[0].mxu0 %v744
      %v2733 = vpop.f32.mrb[0].mxu0
      %v2734 = vadd.f32 0.0, %v2733
      %v2735 = vpop.f32.mrb[0].mxu0
      %2736 = vmatprep.mubr.f32.mxu0 0.0
      %2737 = vmatmul.mubr.f32.gmra.mrb[0].mxu0 %v747
      %v2738 = vpop.f32.mrb[0].mxu0
      %v2739 = vadd.f32 0.0, %v2738
      %v2740 = vpop.f32.mrb[0].mxu0
      %2741 = vmatprep.mubr.f32.mxu0 0.0
      %2742 = vmatmul.mubr.f32.gmra.mrb[0].mxu0 %v750
      %v2743 = vpop.f32.mrb[0].mxu0
      %v2744 = vadd.f32 0.0, %v2743
      %v2745 = vpop.f32.mrb[0].mxu0
      %2746 = vmatprep.mubr.f32.mxu0 0.0
      %2747 = vmatmul.mubr.f32.gmra.mrb[0].mxu0 %v753
      %v2748 = vpop.f32.mrb[0].mxu0
      %v2749 = vadd.f32 0.0, %v2748
      %v2750 = vpop.f32.mrb[0].mxu0
      %2751 = vmatprep.mubr.f32.mxu0 0.0
      %2752 = vmatmul.mubr.f32.gmra.mrb[0].mxu0 %v756
      %v2753 = vpop.f32.mrb[0].mxu0
      %v2754 = vadd.f32 0.0, %v2753
      %v2755 = vpop.f32.mrb[0].mxu0
      %2756 = vmatprep.mubr.f32.mxu0 0.0
      %2757 = vmatmul.mubr.f32.gmra.mrb[0].mxu0 %v759
      %v2758 = vpop.f32.mrb[0].mxu0
      %v2759 = vadd.f32 0.0, %v2758
      %v2760 = vpop.f32.mrb[0].mxu0
      %2761 = vmatprep.mubr.f32.mxu0 0.0
      %2762 = vmatmul.mubr.f32.gmra.mrb[0].mxu0 %v762
      %v2763 = vpop.f32.mrb[0].mxu0
      %v2764 = vadd.f32 0.0, %v2763
      %v2765 = vpop.f32.mrb[0].mxu0
      %2766 = vmatprep.mubr.f32.mxu0 0.0
      %2767 = vmatmul.mubr.f32.gmra.mrb[0].mxu0 %v765
      %v2768 = vpop.f32.mrb[0].mxu0
      %v2769 = vadd.f32 0.0, %v2768
      %v2770 = vpop.f32.mrb[0].mxu0
      %2771 = vmatprep.mubr.f32.mxu0 0.0
      %2772 = vmatmul.mubr.f32.gmra.mrb[0].mxu0 %v2549
      %v2773 = vpop.f32.mrb[0].mxu0
      %v2774 = vadd.f32 0.0, %v2773
      %v2775 = vpop.f32.mrb[0].mxu0
      %2776 = vmatprep.mubr.f32.mxu0 0.0
      %2777 = vmatmul.mubr.f32.gmra.mrb[0].mxu0 %v2552
      %v2778 = vpop.f32.mrb[0].mxu0
      %v2779 = vadd.f32 0.0, %v2778
      %v2780 = vpop.f32.mrb[0].mxu0
      %2781 = vdwg.mxu0
      %v2782 = vadd.f32 %v2516, %v2624
      %v2783 = vadd.f32 %v2517, %v2629
      %v2784 = vadd.f32 %v2518, %v2634
      %v2785 = vadd.f32 %v2519, %v2639
      %v2786 = vadd.f32 %v2520, %v2644
      %v2787 = vadd.f32 %v2521, %v2649
      %v2788 = vadd.f32 %v2522, %v2654
      %v2789 = vadd.f32 %v2523, %v2659
      %v2790 = vadd.f32 %v2524, %v2664
      %v2791 = vadd.f32 %v2525, %v2669
      %v2792 = vadd.f32 %v2526, %v2674
      %v2793 = vadd.f32 %v2527, %v2679
      %v2794 = vadd.f32 %v2528, %v2684
      %v2795 = vadd.f32 %v2529, %v2689
      %v2796 = vadd.f32 %v2530, %v2694
      %v2797 = vadd.f32 %v2531, %v2699
      %v2798 = vadd.f32 %v2532, %v2704
      %v2799 = vadd.f32 %v2533, %v2709
      %v2800 = vadd.f32 %v2534, %v2714
      %v2801 = vadd.f32 %v2535, %v2719
      %v2802 = vadd.f32 %v2536, %v2724
      %v2803 = vadd.f32 %v2537, %v2729
      %v2804 = vadd.f32 %v2538, %v2734
      %v2805 = vadd.f32 %v2539, %v2739
      %v2806 = vadd.f32 %v2540, %v2744
      %v2807 = vadd.f32 %v2541, %v2749
      %v2808 = vadd.f32 %v2542, %v2754
      %v2809 = vadd.f32 %v2543, %v2759
      %v2810 = vadd.f32 %v2544, %v2764
      %v2811 = vadd.f32 %v2545, %v2769
      %v2812 = vadd.f32 %v2546, %v2774
      %v2813 = vadd.f32 %v2547, %v2779
      %v2815 = vsel %vm345, %v254, 0
      %v2818 = vsel %vm345, %v255, 0
      %v2821 = vsel %vm442, %v343, 0
      %2823 = vmatprep.subr.mxu0 0.0
      %2824 = vmatpush1.msra.mxu0 %v2821
      %2825 = vmatprep.subr.mxu0 0.0
      %2826 = vmatpush1.msra.mxu0 0.0
      %2827 = vmatprep.subr.mxu0 0.0
      %2828 = vmatpush1.msra.mxu0 0.0
      %2829 = vmatprep.subr.mxu0 0.0
      %2830 = vmatpush1.msra.mxu0 0.0
      %2831 = vmatprep.subr.mxu0 0.0
      %2832 = vmatpush1.msra.mxu0 0.0
      %2833 = vmatprep.subr.mxu0 0.0
      %2834 = vmatpush1.msra.mxu0 0.0
      %2835 = vmatprep.subr.mxu0 0.0
      %2836 = vmatpush1.msra.mxu0 0.0
      %2837 = vmatprep.subr.mxu0 0.0
      %2838 = vmatpush1.msra.mxu0 0.0
      %2839 = vmatprep.subr.mxu0 0.0
      %2840 = vmatpush1.msra.mxu0 0.0
      %2841 = vmatprep.subr.mxu0 0.0
      %2842 = vmatpush1.msra.mxu0 0.0
      %2843 = vmatprep.subr.mxu0 0.0
      %2844 = vmatpush1.msra.mxu0 0.0
      %2845 = vmatprep.subr.mxu0 0.0
      %2846 = vmatpush1.msra.mxu0 0.0
      %2847 = vmatprep.subr.mxu0 0.0
      %2848 = vmatpush1.msra.mxu0 0.0
      %2849 = vmatprep.subr.mxu0 0.0
      %2850 = vmatpush1.msra.mxu0 0.0
      %2851 = vmatprep.subr.mxu0 0.0
      %2852 = vmatpush1.msra.mxu0 0.0
      %2853 = vmatprep.subr.mxu0 0.0
      %2854 = vmatpush1.msra.mxu0 0.0
      %2855 = vmatprep.subr.mxu0 0.0
      %2856 = vmatpush1.msra.mxu0 0.0
      %2857 = vmatprep.subr.mxu0 0.0
      %2858 = vmatpush1.msra.mxu0 0.0
      %2859 = vmatprep.subr.mxu0 0.0
      %2860 = vmatpush1.msra.mxu0 0.0
      %2861 = vmatprep.subr.mxu0 0.0
      %2862 = vmatpush1.msra.mxu0 0.0
      %2863 = vmatprep.subr.mxu0 0.0
      %2864 = vmatpush1.msra.mxu0 0.0
      %2865 = vmatprep.subr.mxu0 0.0
      %2866 = vmatpush1.msra.mxu0 0.0
      %2867 = vmatprep.subr.mxu0 0.0
      %2868 = vmatpush1.msra.mxu0 0.0
      %2869 = vmatprep.subr.mxu0 0.0
      %2870 = vmatpush1.msra.mxu0 0.0
      %2871 = vmatprep.subr.mxu0 0.0
      %2872 = vmatpush1.msra.mxu0 0.0
      %2873 = vmatprep.subr.mxu0 0.0
      %2874 = vmatpush1.msra.mxu0 0.0
      %2875 = vmatprep.subr.mxu0 0.0
      %2876 = vmatpush1.msra.mxu0 0.0
      %2877 = vmatprep.subr.mxu0 0.0
      %2878 = vmatpush1.msra.mxu0 0.0
      %2879 = vmatprep.subr.mxu0 0.0
      %2880 = vmatpush1.msra.mxu0 0.0
      %2881 = vmatprep.subr.mxu0 0.0
      %2882 = vmatpush1.msra.mxu0 0.0
      %2883 = vmatprep.subr.mxu0 0.0
      %2884 = vmatpush1.msra.mxu0 0.0
      %2885 = vmatprep.subr.mxu0 0.0
      %2886 = vmatpush1.msra.mxu0 0.0
      %2887 = vmatprep.mubr.f32.mxu0 0.0
      %2888 = vmatmul.mubr.f32.gmra.mrb[0].mxu0 %v353
      %v2889 = vpop.f32.mrb[0].mxu0
      %v2890 = vadd.f32 0.0, %v2889
      %v2891 = vpop.f32.mrb[0].mxu0
      %2892 = vmatprep.mubr.f32.mxu0 0.0
      %2893 = vmatmul.mubr.f32.gmra.mrb[0].mxu0 %v356
      %v2894 = vpop.f32.mrb[0].mxu0
      %v2895 = vadd.f32 0.0, %v2894
      %v2896 = vpop.f32.mrb[0].mxu0
      %2897 = vmatprep.mubr.f32.mxu0 0.0
      %2898 = vmatmul.mubr.f32.gmra.mrb[0].mxu0 %v359
      %v2899 = vpop.f32.mrb[0].mxu0
      %v2900 = vadd.f32 0.0, %v2899
      %v2901 = vpop.f32.mrb[0].mxu0
      %2902 = vmatprep.mubr.f32.mxu0 0.0
      %2903 = vmatmul.mubr.f32.gmra.mrb[0].mxu0 %v362
      %v2904 = vpop.f32.mrb[0].mxu0
      %v2905 = vadd.f32 0.0, %v2904
      %v2906 = vpop.f32.mrb[0].mxu0
      %2907 = vmatprep.mubr.f32.mxu0 0.0
      %2908 = vmatmul.mubr.f32.gmra.mrb[0].mxu0 %v365
      %v2909 = vpop.f32.mrb[0].mxu0
      %v2910 = vadd.f32 0.0, %v2909
      %v2911 = vpop.f32.mrb[0].mxu0
      %2912 = vmatprep.mubr.f32.mxu0 0.0
      %2913 = vmatmul.mubr.f32.gmra.mrb[0].mxu0 %v368
      %v2914 = vpop.f32.mrb[0].mxu0
      %v2915 = vadd.f32 0.0, %v2914
      %v2916 = vpop.f32.mrb[0].mxu0
      %2917 = vmatprep.mubr.f32.mxu0 0.0
      %2918 = vmatmul.mubr.f32.gmra.mrb[0].mxu0 %v371
      %v2919 = vpop.f32.mrb[0].mxu0
      %v2920 = vadd.f32 0.0, %v2919
      %v2921 = vpop.f32.mrb[0].mxu0
      %2922 = vmatprep.mubr.f32.mxu0 0.0
      %2923 = vmatmul.mubr.f32.gmra.mrb[0].mxu0 %v374
      %v2924 = vpop.f32.mrb[0].mxu0
      %v2925 = vadd.f32 0.0, %v2924
      %v2926 = vpop.f32.mrb[0].mxu0
      %2927 = vmatprep.mubr.f32.mxu0 0.0
      %2928 = vmatmul.mubr.f32.gmra.mrb[0].mxu0 %v377
      %v2929 = vpop.f32.mrb[0].mxu0
      %v2930 = vadd.f32 0.0, %v2929
      %v2931 = vpop.f32.mrb[0].mxu0
      %2932 = vmatprep.mubr.f32.mxu0 0.0
      %2933 = vmatmul.mubr.f32.gmra.mrb[0].mxu0 %v380
      %v2934 = vpop.f32.mrb[0].mxu0
      %v2935 = vadd.f32 0.0, %v2934
      %v2936 = vpop.f32.mrb[0].mxu0
      %2937 = vmatprep.mubr.f32.mxu0 0.0
      %2938 = vmatmul.mubr.f32.gmra.mrb[0].mxu0 %v383
      %v2939 = vpop.f32.mrb[0].mxu0
      %v2940 = vadd.f32 0.0, %v2939
      %v2941 = vpop.f32.mrb[0].mxu0
      %2942 = vmatprep.mubr.f32.mxu0 0.0
      %2943 = vmatmul.mubr.f32.gmra.mrb[0].mxu0 %v386
      %v2944 = vpop.f32.mrb[0].mxu0
      %v2945 = vadd.f32 0.0, %v2944
      %v2946 = vpop.f32.mrb[0].mxu0
      %2947 = vmatprep.mubr.f32.mxu0 0.0
      %2948 = vmatmul.mubr.f32.gmra.mrb[0].mxu0 %v389
      %v2949 = vpop.f32.mrb[0].mxu0
      %v2950 = vadd.f32 0.0, %v2949
      %v2951 = vpop.f32.mrb[0].mxu0
      %2952 = vmatprep.mubr.f32.mxu0 0.0
      %2953 = vmatmul.mubr.f32.gmra.mrb[0].mxu0 %v392
      %v2954 = vpop.f32.mrb[0].mxu0
      %v2955 = vadd.f32 0.0, %v2954
      %v2956 = vpop.f32.mrb[0].mxu0
      %2957 = vmatprep.mubr.f32.mxu0 0.0
      %2958 = vmatmul.mubr.f32.gmra.mrb[0].mxu0 %v395
      %v2959 = vpop.f32.mrb[0].mxu0
      %v2960 = vadd.f32 0.0, %v2959
      %v2961 = vpop.f32.mrb[0].mxu0
      %2962 = vmatprep.mubr.f32.mxu0 0.0
      %2963 = vmatmul.mubr.f32.gmra.mrb[0].mxu0 %v398
      %v2964 = vpop.f32.mrb[0].mxu0
      %v2965 = vadd.f32 0.0, %v2964
      %v2966 = vpop.f32.mrb[0].mxu0
      %2967 = vmatprep.mubr.f32.mxu0 0.0
      %2968 = vmatmul.mubr.f32.gmra.mrb[0].mxu0 %v401
      %v2969 = vpop.f32.mrb[0].mxu0
      %v2970 = vadd.f32 0.0, %v2969
      %v2971 = vpop.f32.mrb[0].mxu0
      %2972 = vmatprep.mubr.f32.mxu0 0.0
      %2973 = vmatmul.mubr.f32.gmra.mrb[0].mxu0 %v404
      %v2974 = vpop.f32.mrb[0].mxu0
      %v2975 = vadd.f32 0.0, %v2974
      %v2976 = vpop.f32.mrb[0].mxu0
      %2977 = vmatprep.mubr.f32.mxu0 0.0
      %2978 = vmatmul.mubr.f32.gmra.mrb[0].mxu0 %v407
      %v2979 = vpop.f32.mrb[0].mxu0
      %v2980 = vadd.f32 0.0, %v2979
      %v2981 = vpop.f32.mrb[0].mxu0
      %2982 = vmatprep.mubr.f32.mxu0 0.0
      %2983 = vmatmul.mubr.f32.gmra.mrb[0].mxu0 %v410
      %v2984 = vpop.f32.mrb[0].mxu0
      %v2985 = vadd.f32 0.0, %v2984
      %v2986 = vpop.f32.mrb[0].mxu0
      %2987 = vmatprep.mubr.f32.mxu0 0.0
      %2988 = vmatmul.mubr.f32.gmra.mrb[0].mxu0 %v413
      %v2989 = vpop.f32.mrb[0].mxu0
      %v2990 = vadd.f32 0.0, %v2989
      %v2991 = vpop.f32.mrb[0].mxu0
      %2992 = vmatprep.mubr.f32.mxu0 0.0
      %2993 = vmatmul.mubr.f32.gmra.mrb[0].mxu0 %v416
      %v2994 = vpop.f32.mrb[0].mxu0
      %v2995 = vadd.f32 0.0, %v2994
      %v2996 = vpop.f32.mrb[0].mxu0
      %2997 = vmatprep.mubr.f32.mxu0 0.0
      %2998 = vmatmul.mubr.f32.gmra.mrb[0].mxu0 %v419
      %v2999 = vpop.f32.mrb[0].mxu0
      %v3000 = vadd.f32 0.0, %v2999
      %v3001 = vpop.f32.mrb[0].mxu0
      %3002 = vmatprep.mubr.f32.mxu0 0.0
      %3003 = vmatmul.mubr.f32.gmra.mrb[0].mxu0 %v422
      %v3004 = vpop.f32.mrb[0].mxu0
      %v3005 = vadd.f32 0.0, %v3004
      %v3006 = vpop.f32.mrb[0].mxu0
      %3007 = vmatprep.mubr.f32.mxu0 0.0
      %3008 = vmatmul.mubr.f32.gmra.mrb[0].mxu0 %v425
      %v3009 = vpop.f32.mrb[0].mxu0
      %v3010 = vadd.f32 0.0, %v3009
      %v3011 = vpop.f32.mrb[0].mxu0
      %3012 = vmatprep.mubr.f32.mxu0 0.0
      %3013 = vmatmul.mubr.f32.gmra.mrb[0].mxu0 %v428
      %v3014 = vpop.f32.mrb[0].mxu0
      %v3015 = vadd.f32 0.0, %v3014
      %v3016 = vpop.f32.mrb[0].mxu0
      %3017 = vmatprep.mubr.f32.mxu0 0.0
      %3018 = vmatmul.mubr.f32.gmra.mrb[0].mxu0 %v431
      %v3019 = vpop.f32.mrb[0].mxu0
      %v3020 = vadd.f32 0.0, %v3019
      %v3021 = vpop.f32.mrb[0].mxu0
      %3022 = vmatprep.mubr.f32.mxu0 0.0
      %3023 = vmatmul.mubr.f32.gmra.mrb[0].mxu0 %v434
      %v3024 = vpop.f32.mrb[0].mxu0
      %v3025 = vadd.f32 0.0, %v3024
      %v3026 = vpop.f32.mrb[0].mxu0
      %3027 = vmatprep.mubr.f32.mxu0 0.0
      %3028 = vmatmul.mubr.f32.gmra.mrb[0].mxu0 %v437
      %v3029 = vpop.f32.mrb[0].mxu0
      %v3030 = vadd.f32 0.0, %v3029
      %v3031 = vpop.f32.mrb[0].mxu0
      %3032 = vmatprep.mubr.f32.mxu0 0.0
      %3033 = vmatmul.mubr.f32.gmra.mrb[0].mxu0 %v440
      %v3034 = vpop.f32.mrb[0].mxu0
      %v3035 = vadd.f32 0.0, %v3034
      %v3036 = vpop.f32.mrb[0].mxu0
      %3037 = vmatprep.mubr.f32.mxu0 0.0
      %3038 = vmatmul.mubr.f32.gmra.mrb[0].mxu0 %v2815
      %v3039 = vpop.f32.mrb[0].mxu0
      %v3040 = vadd.f32 0.0, %v3039
      %v3041 = vpop.f32.mrb[0].mxu0
      %3042 = vmatprep.mubr.f32.mxu0 0.0
      %3043 = vmatmul.mubr.f32.gmra.mrb[0].mxu0 %v2818
      %v3044 = vpop.f32.mrb[0].mxu0
      %v3045 = vadd.f32 0.0, %v3044
      %v3046 = vpop.f32.mrb[0].mxu0
      %3047 = vdwg.mxu0
      %v3048 = vadd.f32 %v2782, %v2890
      %v3049 = vadd.f32 %v2783, %v2895
      %v3050 = vadd.f32 %v2784, %v2900
      %v3051 = vadd.f32 %v2785, %v2905
      %v3052 = vadd.f32 %v2786, %v2910
      %v3053 = vadd.f32 %v2787, %v2915
      %v3054 = vadd.f32 %v2788, %v2920
      %v3055 = vadd.f32 %v2789, %v2925
      %v3056 = vadd.f32 %v2790, %v2930
      %v3057 = vadd.f32 %v2791, %v2935
      %v3058 = vadd.f32 %v2792, %v2940
      %v3059 = vadd.f32 %v2793, %v2945
      %v3060 = vadd.f32 %v2794, %v2950
      %v3061 = vadd.f32 %v2795, %v2955
      %v3062 = vadd.f32 %v2796, %v2960
      %v3063 = vadd.f32 %v2797, %v2965
      %v3064 = vadd.f32 %v2798, %v2970
      %v3065 = vadd.f32 %v2799, %v2975
      %v3066 = vadd.f32 %v2800, %v2980
      %v3067 = vadd.f32 %v2801, %v2985
      %v3068 = vadd.f32 %v2802, %v2990
      %v3069 = vadd.f32 %v2803, %v2995
      %v3070 = vadd.f32 %v2804, %v3000
      %v3071 = vadd.f32 %v2805, %v3005
      %v3072 = vadd.f32 %v2806, %v3010
      %v3073 = vadd.f32 %v2807, %v3015
      %v3074 = vadd.f32 %v2808, %v3020
      %v3075 = vadd.f32 %v2809, %v3025
      %v3076 = vadd.f32 %v2810, %v3030
      %v3077 = vadd.f32 %v2811, %v3035
      %v3078 = vadd.f32 %v2812, %v3040
      %v3079 = vadd.f32 %v2813, %v3045
      %v3081 = vrot.slane %v219, 1
      %v3082 = vrot.slane %v220, 1
      %v3083 = vsel %vm1011, %v3081, %v3082
      %v3084 = vrot.slane %v221, 1
      %v3085 = vsel %vm1011, %v3082, %v3084
      %v3086 = vsel %vm345, %v3083, 0
      %v3088 = vsel %vm345, %v3085, 0
      %v3091 = vsel %vm442, %v344, 0
      %3093 = vmatprep.subr.mxu0 0.0
      %3094 = vmatpush1.msra.mxu0 %v3091
      %3095 = vmatprep.subr.mxu0 0.0
      %3096 = vmatpush1.msra.mxu0 0.0
      %3097 = vmatprep.subr.mxu0 0.0
      %3098 = vmatpush1.msra.mxu0 0.0
      %3099 = vmatprep.subr.mxu0 0.0
      %3100 = vmatpush1.msra.mxu0 0.0
      %3101 = vmatprep.subr.mxu0 0.0
      %3102 = vmatpush1.msra.mxu0 0.0
      %3103 = vmatprep.subr.mxu0 0.0
      %3104 = vmatpush1.msra.mxu0 0.0
      %3105 = vmatprep.subr.mxu0 0.0
      %3106 = vmatpush1.msra.mxu0 0.0
      %3107 = vmatprep.subr.mxu0 0.0
      %3108 = vmatpush1.msra.mxu0 0.0
      %3109 = vmatprep.subr.mxu0 0.0
      %3110 = vmatpush1.msra.mxu0 0.0
      %3111 = vmatprep.subr.mxu0 0.0
      %3112 = vmatpush1.msra.mxu0 0.0
      %3113 = vmatprep.subr.mxu0 0.0
      %3114 = vmatpush1.msra.mxu0 0.0
      %3115 = vmatprep.subr.mxu0 0.0
      %3116 = vmatpush1.msra.mxu0 0.0
      %3117 = vmatprep.subr.mxu0 0.0
      %3118 = vmatpush1.msra.mxu0 0.0
      %3119 = vmatprep.subr.mxu0 0.0
      %3120 = vmatpush1.msra.mxu0 0.0
      %3121 = vmatprep.subr.mxu0 0.0
      %3122 = vmatpush1.msra.mxu0 0.0
      %3123 = vmatprep.subr.mxu0 0.0
      %3124 = vmatpush1.msra.mxu0 0.0
      %3125 = vmatprep.subr.mxu0 0.0
      %3126 = vmatpush1.msra.mxu0 0.0
      %3127 = vmatprep.subr.mxu0 0.0
      %3128 = vmatpush1.msra.mxu0 0.0
      %3129 = vmatprep.subr.mxu0 0.0
      %3130 = vmatpush1.msra.mxu0 0.0
      %3131 = vmatprep.subr.mxu0 0.0
      %3132 = vmatpush1.msra.mxu0 0.0
      %3133 = vmatprep.subr.mxu0 0.0
      %3134 = vmatpush1.msra.mxu0 0.0
      %3135 = vmatprep.subr.mxu0 0.0
      %3136 = vmatpush1.msra.mxu0 0.0
      %3137 = vmatprep.subr.mxu0 0.0
      %3138 = vmatpush1.msra.mxu0 0.0
      %3139 = vmatprep.subr.mxu0 0.0
      %3140 = vmatpush1.msra.mxu0 0.0
      %3141 = vmatprep.subr.mxu0 0.0
      %3142 = vmatpush1.msra.mxu0 0.0
      %3143 = vmatprep.subr.mxu0 0.0
      %3144 = vmatpush1.msra.mxu0 0.0
      %3145 = vmatprep.subr.mxu0 0.0
      %3146 = vmatpush1.msra.mxu0 0.0
      %3147 = vmatprep.subr.mxu0 0.0
      %3148 = vmatpush1.msra.mxu0 0.0
      %3149 = vmatprep.subr.mxu0 0.0
      %3150 = vmatpush1.msra.mxu0 0.0
      %3151 = vmatprep.subr.mxu0 0.0
      %3152 = vmatpush1.msra.mxu0 0.0
      %3153 = vmatprep.subr.mxu0 0.0
      %3154 = vmatpush1.msra.mxu0 0.0
      %3155 = vmatprep.subr.mxu0 0.0
      %3156 = vmatpush1.msra.mxu0 0.0
      %3157 = vmatprep.mubr.f32.mxu0 0.0
      %3158 = vmatmul.mubr.f32.gmra.mrb[0].mxu0 %v1096
      %v3159 = vpop.f32.mrb[0].mxu0
      %v3160 = vadd.f32 0.0, %v3159
      %v3161 = vpop.f32.mrb[0].mxu0
      %3162 = vmatprep.mubr.f32.mxu0 0.0
      %3163 = vmatmul.mubr.f32.gmra.mrb[0].mxu0 %v1098
      %v3164 = vpop.f32.mrb[0].mxu0
      %v3165 = vadd.f32 0.0, %v3164
      %v3166 = vpop.f32.mrb[0].mxu0
      %3167 = vmatprep.mubr.f32.mxu0 0.0
      %3168 = vmatmul.mubr.f32.gmra.mrb[0].mxu0 %v1100
      %v3169 = vpop.f32.mrb[0].mxu0
      %v3170 = vadd.f32 0.0, %v3169
      %v3171 = vpop.f32.mrb[0].mxu0
      %3172 = vmatprep.mubr.f32.mxu0 0.0
      %3173 = vmatmul.mubr.f32.gmra.mrb[0].mxu0 %v1102
      %v3174 = vpop.f32.mrb[0].mxu0
      %v3175 = vadd.f32 0.0, %v3174
      %v3176 = vpop.f32.mrb[0].mxu0
      %3177 = vmatprep.mubr.f32.mxu0 0.0
      %3178 = vmatmul.mubr.f32.gmra.mrb[0].mxu0 %v1104
      %v3179 = vpop.f32.mrb[0].mxu0
      %v3180 = vadd.f32 0.0, %v3179
      %v3181 = vpop.f32.mrb[0].mxu0
      %3182 = vmatprep.mubr.f32.mxu0 0.0
      %3183 = vmatmul.mubr.f32.gmra.mrb[0].mxu0 %v1106
      %v3184 = vpop.f32.mrb[0].mxu0
      %v3185 = vadd.f32 0.0, %v3184
      %v3186 = vpop.f32.mrb[0].mxu0
      %3187 = vmatprep.mubr.f32.mxu0 0.0
      %3188 = vmatmul.mubr.f32.gmra.mrb[0].mxu0 %v1108
      %v3189 = vpop.f32.mrb[0].mxu0
      %v3190 = vadd.f32 0.0, %v3189
      %v3191 = vpop.f32.mrb[0].mxu0
      %3192 = vmatprep.mubr.f32.mxu0 0.0
      %3193 = vmatmul.mubr.f32.gmra.mrb[0].mxu0 %v1110
      %v3194 = vpop.f32.mrb[0].mxu0
      %v3195 = vadd.f32 0.0, %v3194
      %v3196 = vpop.f32.mrb[0].mxu0
      %3197 = vmatprep.mubr.f32.mxu0 0.0
      %3198 = vmatmul.mubr.f32.gmra.mrb[0].mxu0 %v1112
      %v3199 = vpop.f32.mrb[0].mxu0
      %v3200 = vadd.f32 0.0, %v3199
      %v3201 = vpop.f32.mrb[0].mxu0
      %3202 = vmatprep.mubr.f32.mxu0 0.0
      %3203 = vmatmul.mubr.f32.gmra.mrb[0].mxu0 %v1114
      %v3204 = vpop.f32.mrb[0].mxu0
      %v3205 = vadd.f32 0.0, %v3204
      %v3206 = vpop.f32.mrb[0].mxu0
      %3207 = vmatprep.mubr.f32.mxu0 0.0
      %3208 = vmatmul.mubr.f32.gmra.mrb[0].mxu0 %v1116
      %v3209 = vpop.f32.mrb[0].mxu0
      %v3210 = vadd.f32 0.0, %v3209
      %v3211 = vpop.f32.mrb[0].mxu0
      %3212 = vmatprep.mubr.f32.mxu0 0.0
      %3213 = vmatmul.mubr.f32.gmra.mrb[0].mxu0 %v1118
      %v3214 = vpop.f32.mrb[0].mxu0
      %v3215 = vadd.f32 0.0, %v3214
      %v3216 = vpop.f32.mrb[0].mxu0
      %3217 = vmatprep.mubr.f32.mxu0 0.0
      %3218 = vmatmul.mubr.f32.gmra.mrb[0].mxu0 %v1120
      %v3219 = vpop.f32.mrb[0].mxu0
      %v3220 = vadd.f32 0.0, %v3219
      %v3221 = vpop.f32.mrb[0].mxu0
      %3222 = vmatprep.mubr.f32.mxu0 0.0
      %3223 = vmatmul.mubr.f32.gmra.mrb[0].mxu0 %v1122
      %v3224 = vpop.f32.mrb[0].mxu0
      %v3225 = vadd.f32 0.0, %v3224
      %v3226 = vpop.f32.mrb[0].mxu0
      %3227 = vmatprep.mubr.f32.mxu0 0.0
      %3228 = vmatmul.mubr.f32.gmra.mrb[0].mxu0 %v1124
      %v3229 = vpop.f32.mrb[0].mxu0
      %v3230 = vadd.f32 0.0, %v3229
      %v3231 = vpop.f32.mrb[0].mxu0
      %3232 = vmatprep.mubr.f32.mxu0 0.0
      %3233 = vmatmul.mubr.f32.gmra.mrb[0].mxu0 %v1126
      %v3234 = vpop.f32.mrb[0].mxu0
      %v3235 = vadd.f32 0.0, %v3234
      %v3236 = vpop.f32.mrb[0].mxu0
      %3237 = vmatprep.mubr.f32.mxu0 0.0
      %3238 = vmatmul.mubr.f32.gmra.mrb[0].mxu0 %v1128
      %v3239 = vpop.f32.mrb[0].mxu0
      %v3240 = vadd.f32 0.0, %v3239
      %v3241 = vpop.f32.mrb[0].mxu0
      %3242 = vmatprep.mubr.f32.mxu0 0.0
      %3243 = vmatmul.mubr.f32.gmra.mrb[0].mxu0 %v1130
      %v3244 = vpop.f32.mrb[0].mxu0
      %v3245 = vadd.f32 0.0, %v3244
      %v3246 = vpop.f32.mrb[0].mxu0
      %3247 = vmatprep.mubr.f32.mxu0 0.0
      %3248 = vmatmul.mubr.f32.gmra.mrb[0].mxu0 %v1132
      %v3249 = vpop.f32.mrb[0].mxu0
      %v3250 = vadd.f32 0.0, %v3249
      %v3251 = vpop.f32.mrb[0].mxu0
      %3252 = vmatprep.mubr.f32.mxu0 0.0
      %3253 = vmatmul.mubr.f32.gmra.mrb[0].mxu0 %v1134
      %v3254 = vpop.f32.mrb[0].mxu0
      %v3255 = vadd.f32 0.0, %v3254
      %v3256 = vpop.f32.mrb[0].mxu0
      %3257 = vmatprep.mubr.f32.mxu0 0.0
      %3258 = vmatmul.mubr.f32.gmra.mrb[0].mxu0 %v1136
      %v3259 = vpop.f32.mrb[0].mxu0
      %v3260 = vadd.f32 0.0, %v3259
      %v3261 = vpop.f32.mrb[0].mxu0
      %3262 = vmatprep.mubr.f32.mxu0 0.0
      %3263 = vmatmul.mubr.f32.gmra.mrb[0].mxu0 %v1138
      %v3264 = vpop.f32.mrb[0].mxu0
      %v3265 = vadd.f32 0.0, %v3264
      %v3266 = vpop.f32.mrb[0].mxu0
      %3267 = vmatprep.mubr.f32.mxu0 0.0
      %3268 = vmatmul.mubr.f32.gmra.mrb[0].mxu0 %v1140
      %v3269 = vpop.f32.mrb[0].mxu0
      %v3270 = vadd.f32 0.0, %v3269
      %v3271 = vpop.f32.mrb[0].mxu0
      %3272 = vmatprep.mubr.f32.mxu0 0.0
      %3273 = vmatmul.mubr.f32.gmra.mrb[0].mxu0 %v1142
      %v3274 = vpop.f32.mrb[0].mxu0
      %v3275 = vadd.f32 0.0, %v3274
      %v3276 = vpop.f32.mrb[0].mxu0
      %3277 = vmatprep.mubr.f32.mxu0 0.0
      %3278 = vmatmul.mubr.f32.gmra.mrb[0].mxu0 %v1144
      %v3279 = vpop.f32.mrb[0].mxu0
      %v3280 = vadd.f32 0.0, %v3279
      %v3281 = vpop.f32.mrb[0].mxu0
      %3282 = vmatprep.mubr.f32.mxu0 0.0
      %3283 = vmatmul.mubr.f32.gmra.mrb[0].mxu0 %v1146
      %v3284 = vpop.f32.mrb[0].mxu0
      %v3285 = vadd.f32 0.0, %v3284
      %v3286 = vpop.f32.mrb[0].mxu0
      %3287 = vmatprep.mubr.f32.mxu0 0.0
      %3288 = vmatmul.mubr.f32.gmra.mrb[0].mxu0 %v1148
      %v3289 = vpop.f32.mrb[0].mxu0
      %v3290 = vadd.f32 0.0, %v3289
      %v3291 = vpop.f32.mrb[0].mxu0
      %3292 = vmatprep.mubr.f32.mxu0 0.0
      %3293 = vmatmul.mubr.f32.gmra.mrb[0].mxu0 %v1150
      %v3294 = vpop.f32.mrb[0].mxu0
      %v3295 = vadd.f32 0.0, %v3294
      %v3296 = vpop.f32.mrb[0].mxu0
      %3297 = vmatprep.mubr.f32.mxu0 0.0
      %3298 = vmatmul.mubr.f32.gmra.mrb[0].mxu0 %v1152
      %v3299 = vpop.f32.mrb[0].mxu0
      %v3300 = vadd.f32 0.0, %v3299
      %v3301 = vpop.f32.mrb[0].mxu0
      %3302 = vmatprep.mubr.f32.mxu0 0.0
      %3303 = vmatmul.mubr.f32.gmra.mrb[0].mxu0 %v1154
      %v3304 = vpop.f32.mrb[0].mxu0
      %v3305 = vadd.f32 0.0, %v3304
      %v3306 = vpop.f32.mrb[0].mxu0
      %3307 = vmatprep.mubr.f32.mxu0 0.0
      %3308 = vmatmul.mubr.f32.gmra.mrb[0].mxu0 %v3086
      %v3309 = vpop.f32.mrb[0].mxu0
      %v3310 = vadd.f32 0.0, %v3309
      %v3311 = vpop.f32.mrb[0].mxu0
      %3312 = vmatprep.mubr.f32.mxu0 0.0
      %3313 = vmatmul.mubr.f32.gmra.mrb[0].mxu0 %v3088
      %v3314 = vpop.f32.mrb[0].mxu0
      %v3315 = vadd.f32 0.0, %v3314
      %v3316 = vpop.f32.mrb[0].mxu0
      %3317 = vdwg.mxu0
      %v3318 = vadd.f32 %v3048, %v3160
      %v3319 = vadd.f32 %v3049, %v3165
      %v3320 = vadd.f32 %v3050, %v3170
      %v3321 = vadd.f32 %v3051, %v3175
      %v3322 = vadd.f32 %v3052, %v3180
      %v3323 = vadd.f32 %v3053, %v3185
      %v3324 = vadd.f32 %v3054, %v3190
      %v3325 = vadd.f32 %v3055, %v3195
      %v3326 = vadd.f32 %v3056, %v3200
      %v3327 = vadd.f32 %v3057, %v3205
      %v3328 = vadd.f32 %v3058, %v3210
      %v3329 = vadd.f32 %v3059, %v3215
      %v3330 = vadd.f32 %v3060, %v3220
      %v3331 = vadd.f32 %v3061, %v3225
      %v3332 = vadd.f32 %v3062, %v3230
      %v3333 = vadd.f32 %v3063, %v3235
      %v3334 = vadd.f32 %v3064, %v3240
      %v3335 = vadd.f32 %v3065, %v3245
      %v3336 = vadd.f32 %v3066, %v3250
      %v3337 = vadd.f32 %v3067, %v3255
      %v3338 = vadd.f32 %v3068, %v3260
      %v3339 = vadd.f32 %v3069, %v3265
      %v3340 = vadd.f32 %v3070, %v3270
      %v3341 = vadd.f32 %v3071, %v3275
      %v3342 = vadd.f32 %v3072, %v3280
      %v3343 = vadd.f32 %v3073, %v3285
      %v3344 = vadd.f32 %v3074, %v3290
      %v3345 = vadd.f32 %v3075, %v3295
      %v3346 = vadd.f32 %v3076, %v3300
      %v3347 = vadd.f32 %v3077, %v3305
      %v3348 = vadd.f32 %v3078, %v3310
      %v3349 = vadd.f32 %v3079, %v3315
      %v3350 = vld [vmem:[%s2] sm:$0x1]
      %v3352 = vlaneseq
      %v3353 = vshrl.u32 %v3352, 7
      %v3354 = vsub.s32 0, %v3353
      %v3355 = vrot.slane %v3350, %v3354
      %v3357 = vadd.f32 %v3318, %v3355
      %v3358 = vadd.f32 %v3319, %v3355
      %v3359 = vadd.f32 %v3320, %v3355
      %v3360 = vadd.f32 %v3321, %v3355
      %v3361 = vadd.f32 %v3322, %v3355
      %v3362 = vadd.f32 %v3323, %v3355
      %v3363 = vadd.f32 %v3324, %v3355
      %v3364 = vadd.f32 %v3325, %v3355
      %v3365 = vadd.f32 %v3326, %v3355
      %v3366 = vadd.f32 %v3327, %v3355
      %v3367 = vadd.f32 %v3328, %v3355
      %v3368 = vadd.f32 %v3329, %v3355
      %v3369 = vadd.f32 %v3330, %v3355
      %v3370 = vadd.f32 %v3331, %v3355
      %v3371 = vadd.f32 %v3332, %v3355
      %v3372 = vadd.f32 %v3333, %v3355
      %v3373 = vadd.f32 %v3334, %v3355
      %v3374 = vadd.f32 %v3335, %v3355
      %v3375 = vadd.f32 %v3336, %v3355
      %v3376 = vadd.f32 %v3337, %v3355
      %v3377 = vadd.f32 %v3338, %v3355
      %v3378 = vadd.f32 %v3339, %v3355
      %v3379 = vadd.f32 %v3340, %v3355
      %v3380 = vadd.f32 %v3341, %v3355
      %v3381 = vadd.f32 %v3342, %v3355
      %v3382 = vadd.f32 %v3343, %v3355
      %v3383 = vadd.f32 %v3344, %v3355
      %v3384 = vadd.f32 %v3345, %v3355
      %v3385 = vadd.f32 %v3346, %v3355
      %v3386 = vadd.f32 %v3347, %v3355
      %v3387 = vadd.f32 %v3348, %v3355
      %v3388 = vadd.f32 %v3349, %v3355
      %v3389 = vmax.f32 %v3357, 0.0
      %v3390 = vmax.f32 %v3358, 0.0
      %v3391 = vmax.f32 %v3359, 0.0
      %v3392 = vmax.f32 %v3360, 0.0
      %v3393 = vmax.f32 %v3361, 0.0
      %v3394 = vmax.f32 %v3362, 0.0
      %v3395 = vmax.f32 %v3363, 0.0
      %v3396 = vmax.f32 %v3364, 0.0
      %v3397 = vmax.f32 %v3365, 0.0
      %v3398 = vmax.f32 %v3366, 0.0
      %v3399 = vmax.f32 %v3367, 0.0
      %v3400 = vmax.f32 %v3368, 0.0
      %v3401 = vmax.f32 %v3369, 0.0
      %v3402 = vmax.f32 %v3370, 0.0
      %v3403 = vmax.f32 %v3371, 0.0
      %v3404 = vmax.f32 %v3372, 0.0
      %v3405 = vmax.f32 %v3373, 0.0
      %v3406 = vmax.f32 %v3374, 0.0
      %v3407 = vmax.f32 %v3375, 0.0
      %v3408 = vmax.f32 %v3376, 0.0
      %v3409 = vmax.f32 %v3377, 0.0
      %v3410 = vmax.f32 %v3378, 0.0
      %v3411 = vmax.f32 %v3379, 0.0
      %v3412 = vmax.f32 %v3380, 0.0
      %v3413 = vmax.f32 %v3381, 0.0
      %v3414 = vmax.f32 %v3382, 0.0
      %v3415 = vmax.f32 %v3383, 0.0
      %v3416 = vmax.f32 %v3384, 0.0
      %v3417 = vmax.f32 %v3385, 0.0
      %v3418 = vmax.f32 %v3386, 0.0
      %v3419 = vmax.f32 %v3387, 0.0
      %v3420 = vmax.f32 %v3388, 0.0
      %vm3421 = vcmask 261120
      %3422 = vst.msk [vmem:[%s170] sm:$0xff] %vm3421, %v3389
      %3423 = vst.msk [vmem:[%s170 + $0x8] sm:$0xff] %vm3421, %v3390
      %3424 = vst.msk [vmem:[%s170 + $0x10] sm:$0xff] %vm3421, %v3391
      %3425 = vst.msk [vmem:[%s170 + $0x18] sm:$0xff] %vm3421, %v3392
      %3426 = vst.msk [vmem:[%s170 + $0x20] sm:$0xff] %vm3421, %v3393
      %3427 = vst.msk [vmem:[%s170 + $0x28] sm:$0xff] %vm3421, %v3394
      %3428 = vst.msk [vmem:[%s170 + $0x30] sm:$0xff] %vm3421, %v3395
      %3429 = vst.msk [vmem:[%s170 + $0x38] sm:$0xff] %vm3421, %v3396
      %3430 = vst.msk [vmem:[%s170 + $0x40] sm:$0xff] %vm3421, %v3397
      %3431 = vst.msk [vmem:[%s170 + $0x48] sm:$0xff] %vm3421, %v3398
      %3432 = vst.msk [vmem:[%s170 + $0x50] sm:$0xff] %vm3421, %v3399
      %3433 = vst.msk [vmem:[%s170 + $0x58] sm:$0xff] %vm3421, %v3400
      %3434 = vst.msk [vmem:[%s170 + $0x60] sm:$0xff] %vm3421, %v3401
      %3435 = vst.msk [vmem:[%s170 + $0x68] sm:$0xff] %vm3421, %v3402
      %3436 = vst.msk [vmem:[%s170 + $0x70] sm:$0xff] %vm3421, %v3403
      %3437 = vst.msk [vmem:[%s170 + $0x78] sm:$0xff] %vm3421, %v3404
      %3438 = vst.msk [vmem:[%s170 + $0x80] sm:$0xff] %vm3421, %v3405
      %3439 = vst.msk [vmem:[%s170 + $0x88] sm:$0xff] %vm3421, %v3406
      %3440 = vst.msk [vmem:[%s170 + $0x90] sm:$0xff] %vm3421, %v3407
      %3441 = vst.msk [vmem:[%s170 + $0x98] sm:$0xff] %vm3421, %v3408
      %3442 = vst.msk [vmem:[%s170 + $0xa0] sm:$0xff] %vm3421, %v3409
      %3443 = vst.msk [vmem:[%s170 + $0xa8] sm:$0xff] %vm3421, %v3410
      %3444 = vst.msk [vmem:[%s170 + $0xb0] sm:$0xff] %vm3421, %v3411
      %3445 = vst.msk [vmem:[%s170 + $0xb8] sm:$0xff] %vm3421, %v3412
      %3446 = vst.msk [vmem:[%s170 + $0xc0] sm:$0xff] %vm3421, %v3413
      %3447 = vst.msk [vmem:[%s170 + $0xc8] sm:$0xff] %vm3421, %v3414
      %3448 = vst.msk [vmem:[%s170 + $0xd0] sm:$0xff] %vm3421, %v3415
      %3449 = vst.msk [vmem:[%s170 + $0xd8] sm:$0xff] %vm3421, %v3416
      %3450 = vst.msk [vmem:[%s170 + $0xe0] sm:$0xff] %vm3421, %v3417
      %3451 = vst.msk [vmem:[%s170 + $0xe8] sm:$0xff] %vm3421, %v3418
      %3452 = vst.msk [vmem:[%s170 + $0xf0] sm:$0xff] %vm3421, %v3419
      %3453 = vst.msk [vmem:[%s170 + $0xf8] sm:$0xff] %vm3421, %v3420
      %p3454 = scmp.lt.s32.totalorder %s14, 1
      %s3455 = scalar_select %p3454, %s14, 1
      %s3456 = smul.addr %s3455, 32
      %s3457 = smul.addr %s3456, 8
      %s3458 = scalar_lea.vmem %s3, %s3457
      // Predicated region
      $region33: #{spatial_path_forward.4} parent=31 // pred_check
        %p3459 = pneg %p100
      $region34: #{spatial_path_forward.4} parent=31 // pred_check_branch
        %3461 = sbr.rel (%p3459) target = $region36
      $region35: #{spatial_path_forward.4} parent=31 // pred_region
        _
      $region36: #{spatial_path_forward.4} parent=31 // pred_fallthru
        _
    $region32: #{spatial_path_forward.4} parent=5 // pred_fallthru
      _
    %p3462 = scmp.le.s32.totalorder 2, %s9
    // Predicated region
    $region37: #{spatial_path_forward.4} parent=5 // pred_check
      %p3463 = pneg %p3462
    $region38: #{spatial_path_forward.4} parent=5 // pred_check_branch
      %3465 = sbr.rel (%p3463) target = $region40
    $region39: #{spatial_path_forward.4} parent=5 // pred_region
      %s3466 = ssub.s32 %s9, 2
      // Predicated region
      $region41: #{spatial_path_forward.4} parent=39 // pred_check
        %p3467 = pneg %p106
      $region42: #{spatial_path_forward.4} parent=39 // pred_check_branch
        %3469 = sbr.rel (%p3467) target = $region44
      $region43: #{spatial_path_forward.4} parent=39 // pred_region
        %p3470 = scmp.lt.s32.totalorder %s15, 1
        %s3471 = scalar_select %p3470, %s15, 1
        %s3472 = smul.addr %s3471, 32
        %s3473 = smul.addr %s3472, 8
        %s3474 = scalar_lea.vmem %s3, %s3473
      $region44: #{spatial_path_forward.4} parent=39 // pred_fallthru
        _
    $region40: #{spatial_path_forward.4} parent=5 // pred_fallthru
      _
  $region6: #{spatial_path_forward.4} parent=0 // loop_footer
    %s13 = sadd.s32 1, %s9
  $region7: #{spatial_path_forward.4} parent=0 // loop_footer_branch
    %8 = sbr.rel target = $region3
  $region8: #{spatial_path_forward.4} parent=0 // loop_exit
    _

// kernel: spatial_path_forward.5
$region0: #{spatial_path_forward.5}
  #allocation0 [shape = 'u32[]', space=smem, size = 0x4, offset = 0x4, fixed_abs, tag = 'smem constant byte address 0x4 - core index']
  #allocation1 [shape = 'u32[144,128]{1,0:T(1,128)}', space=vmem, size = 0x12000, scoped, tag = 'internal scratch']
  %s0 = inlined_call_operand.vmem [shape: f32[2,36,9,32], index: 0, kind: input, shape index: {}]
  %s1 = inlined_call_operand.vmem [shape: f32[2,3,3,32], index: 1, kind: input, shape index: {}]
  %s2 = inlined_call_operand.vmem [shape: bf16[2,32,64], index: 2, kind: input, shape index: {}]
  %s3 = inlined_call_operand.vmem [shape: f32[1,64], index: 3, kind: input, shape index: {}]
  %s4 = inlined_call_operand.vmem [shape: f32[2,64,64], index: 4, kind: output, shape index: {}]
  %s5 = sld [smem:[#allocation0]]
  $region49: #{spatial_path_forward.5} parent=0
    _
  %s7 = ssub.s32 1, %s5
  %s8 = scalar_select 0, %s7, %s5
  loop: start=0, step=1, limit=4
  $region2: #{spatial_path_forward.5} parent=0 // loop_pre_header
    _
  $region3: #{spatial_path_forward.5} parent=0 // loop_header
    %s10 = sphi 0, %s14
    %p11 = scmp.ge.s32.totalorder %s10, 4
    %s20 = sphi 0, %s22
    %s23 = sphi 0, %s20
    %s24 = sphi 0, %s23
    %s40 = sphi 0, %s24
    %s44 = sphi 0, %s44
    %s46 = sphi 0, %s44
    %s47 = sphi 0, %s46
    %s61 = sphi 0, %s47
    %s65 = sphi 0, %s65
    %s67 = sphi 0, %s65
    %s68 = sphi 0, %s67
    %s82 = sphi 0, %s68
    %s86 = sphi 0, %s86
    %s88 = sphi 0, %s86
    %s89 = sphi 0, %s88
    %s103 = sphi 0, %s89
    %s109 = sphi 0, %s111
    %s112 = sphi 0, %s109
    %s113 = sphi 0, %s112
    %s129 = sphi 0, %s113
  $region4: #{spatial_path_forward.5} parent=0 // loop_header_branch
    %13 = sbr.rel (%p11) target = $region8
  $region5: #{spatial_path_forward.5} parent=0 // loop_body
    %s15 = ssub.s32 %s10, 1
    %s16 = ssub.s32 %s10, 2
    %s17 = sadd.s32 %s10, 1
    %s18 = ssub.s32 %s10, %s17
    %p19 = scmp.eq.s32.totalorder %s18, 0
    %s21 = sadd.s32 %s20, 1
    %s22 = scalar_select %p19, %s20, %s21
    %p25 = pneg %p19
    %p26 = scmp.eq.s32.totalorder %s10, 1
    %p27 = por %p25, %p26
    %p28 = scmp.ne.s32.totalorder %s20, %s23
    %p29 = scmp.eq.s32.totalorder %s10, 0
    %p30 = por %p28, %p29
    %p31 = scmp.ne.s32.totalorder %s20, %s23
    %p32 = scmp.eq.s32.totalorder %s15, 1
    %p33 = por %p31, %p32
    %p34 = scmp.ne.s32.totalorder %s23, %s24
    %p35 = scmp.eq.s32.totalorder %s15, 0
    %p36 = por %p34, %p35
    %p37 = scmp.ne.s32.totalorder %s23, %s24
    %p38 = scmp.eq.s32.totalorder %s16, 1
    %p39 = por %p37, %p38
    %p41 = scmp.ne.s32.totalorder %s24, %s40
    %p42 = scmp.eq.s32.totalorder %s16, 0
    %p43 = por %p41, %p42
    %s45 = sadd.s32 %s44, 1
    %p48 = scmp.eq.s32.totalorder %s10, 1
    %p49 = scmp.ne.s32.totalorder %s44, %s46
    %p50 = scmp.eq.s32.totalorder %s10, 0
    %p51 = por %p49, %p50
    %p52 = scmp.ne.s32.totalorder %s44, %s46
    %p53 = scmp.eq.s32.totalorder %s15, 1
    %p54 = por %p52, %p53
    %p55 = scmp.ne.s32.totalorder %s46, %s47
    %p56 = scmp.eq.s32.totalorder %s15, 0
    %p57 = por %p55, %p56
    %p58 = scmp.ne.s32.totalorder %s46, %s47
    %p59 = scmp.eq.s32.totalorder %s16, 1
    %p60 = por %p58, %p59
    %p62 = scmp.ne.s32.totalorder %s47, %s61
    %p63 = scmp.eq.s32.totalorder %s16, 0
    %p64 = por %p62, %p63
    %s66 = sadd.s32 %s65, 1
    %p69 = scmp.eq.s32.totalorder %s10, 1
    %p70 = scmp.ne.s32.totalorder %s65, %s67
    %p71 = scmp.eq.s32.totalorder %s10, 0
    %p72 = por %p70, %p71
    %p73 = scmp.ne.s32.totalorder %s65, %s67
    %p74 = scmp.eq.s32.totalorder %s15, 1
    %p75 = por %p73, %p74
    %p76 = scmp.ne.s32.totalorder %s67, %s68
    %p77 = scmp.eq.s32.totalorder %s15, 0
    %p78 = por %p76, %p77
    %p79 = scmp.ne.s32.totalorder %s67, %s68
    %p80 = scmp.eq.s32.totalorder %s16, 1
    %p81 = por %p79, %p80
    %p83 = scmp.ne.s32.totalorder %s68, %s82
    %p84 = scmp.eq.s32.totalorder %s16, 0
    %p85 = por %p83, %p84
    %s87 = sadd.s32 %s86, 1
    %p90 = scmp.eq.s32.totalorder %s10, 1
    %p91 = scmp.ne.s32.totalorder %s86, %s88
    %p92 = scmp.eq.s32.totalorder %s10, 0
    %p93 = por %p91, %p92
    %p94 = scmp.ne.s32.totalorder %s86, %s88
    %p95 = scmp.eq.s32.totalorder %s15, 1
    %p96 = por %p94, %p95
    %p97 = scmp.ne.s32.totalorder %s88, %s89
    %p98 = scmp.eq.s32.totalorder %s15, 0
    %p99 = por %p97, %p98
    %p100 = scmp.ne.s32.totalorder %s88, %s89
    %p101 = scmp.eq.s32.totalorder %s16, 1
    %p102 = por %p100, %p101
    %p104 = scmp.ne.s32.totalorder %s89, %s103
    %p105 = scmp.eq.s32.totalorder %s16, 0
    %p106 = por %p104, %p105
    %s107 = ssub.s32 %s10, %s17
    %p108 = scmp.eq.s32.totalorder %s107, 0
    %s110 = sadd.s32 %s109, 1
    %s111 = scalar_select %p108, %s109, %s110
    %p114 = pneg %p108
    %p115 = scmp.eq.s32.totalorder %s10, 1
    %p116 = por %p114, %p115
    %p117 = scmp.ne.s32.totalorder %s109, %s112
    %p118 = scmp.eq.s32.totalorder %s10, 0
    %p119 = por %p117, %p118
    %p120 = scmp.ne.s32.totalorder %s109, %s112
    %p121 = scmp.eq.s32.totalorder %s15, 1
    %p122 = por %p120, %p121
    %p123 = scmp.ne.s32.totalorder %s112, %s113
    %p124 = scmp.eq.s32.totalorder %s15, 0
    %p125 = por %p123, %p124
    %p126 = scmp.ne.s32.totalorder %s112, %s113
    %p127 = scmp.eq.s32.totalorder %s16, 1
    %p128 = por %p126, %p127
    %p130 = scmp.ne.s32.totalorder %s113, %s129
    %p131 = scmp.eq.s32.totalorder %s16, 0
    %p132 = por %p130, %p131
    %p133 = scmp.le.s32.totalorder 1, %s10
    %p134 = scmp.lt.s32.totalorder %s10, 3
    %p135 = pnand %p133, %p134
    %p136 = pneg %p135
    // Predicated region
    $region9: #{spatial_path_forward.5} parent=5 // pred_check
      _
    $region10: #{spatial_path_forward.5} parent=5 // pred_check_branch
      %138 = sbr.rel (%p135) target = $region12
    $region11: #{spatial_path_forward.5} parent=5 // pred_region
      %s139 = ssub.s32 %s10, 1
      // Predicated region
      $region13: #{spatial_path_forward.5} parent=11 // pred_check
        %p140 = pneg %p57
      $region14: #{spatial_path_forward.5} parent=11 // pred_check_branch
        %142 = sbr.rel (%p140) target = $region16
      $region15: #{spatial_path_forward.5} parent=11 // pred_region
        _
      $region16: #{spatial_path_forward.5} parent=11 // pred_fallthru
        _
      // Predicated region
      $region17: #{spatial_path_forward.5} parent=11 // pred_check
        %p143 = pneg %p78
      $region18: #{spatial_path_forward.5} parent=11 // pred_check_branch
        %145 = sbr.rel (%p143) target = $region20
      $region19: #{spatial_path_forward.5} parent=11 // pred_region
        _
      $region20: #{spatial_path_forward.5} parent=11 // pred_fallthru
        _
      // Predicated region
      $region21: #{spatial_path_forward.5} parent=11 // pred_check
        %p146 = pneg %p99
      $region22: #{spatial_path_forward.5} parent=11 // pred_check_branch
        %148 = sbr.rel (%p146) target = $region24
      $region23: #{spatial_path_forward.5} parent=11 // pred_region
        _
      $region24: #{spatial_path_forward.5} parent=11 // pred_fallthru
        _
    $region12: #{spatial_path_forward.5} parent=5 // pred_fallthru
      _
    %p149 = scmp.lt.s32.totalorder %s10, 2
    // Predicated region
    $region25: #{spatial_path_forward.5} parent=5 // pred_check
      %p150 = pneg %p149
    $region26: #{spatial_path_forward.5} parent=5 // pred_check_branch
      %152 = sbr.rel (%p150) target = $region28
    $region27: #{spatial_path_forward.5} parent=5 // pred_region
      // Predicated region
      $region29: #{spatial_path_forward.5} parent=27 // pred_check
        %p153 = pneg %p30
      $region30: #{spatial_path_forward.5} parent=27 // pred_check_branch
        %155 = sbr.rel (%p153) target = $region32
      $region31: #{spatial_path_forward.5} parent=27 // pred_region
        %p156 = scmp.lt.s32.totalorder %s10, 1
        %s157 = scalar_select %p156, %s10, 1
        %s158 = smul.addr %s157, 72
        %s159 = smul.addr %s158, 8
        %s160 = scalar_lea.vmem %s0, %s159
      $region32: #{spatial_path_forward.5} parent=27 // pred_fallthru
        _
    $region28: #{spatial_path_forward.5} parent=5 // pred_fallthru
      _
    %p161 = scmp.le.s32.totalorder 1, %s10
    %p162 = scmp.lt.s32.totalorder %s10, 3
    %p163 = pnand %p161, %p162
    %p164 = pneg %p163
    // Predicated region
    $region33: #{spatial_path_forward.5} parent=5 // pred_check
      _
    $region34: #{spatial_path_forward.5} parent=5 // pred_check_branch
      %166 = sbr.rel (%p163) target = $region36
    $region35: #{spatial_path_forward.5} parent=5 // pred_region
      %s167 = ssub.s32 %s10, 1
      %p168 = scmp.lt.s32.totalorder %s15, 1
      %s169 = scalar_select %p168, %s15, 1
      %s170 = smul.addr %s169, 72
      %s171 = smul.addr %s170, 8
      %s172 = scalar_lea.vmem %s0, %s171
      %p173 = pneg %p36
      %p174 = pneg %p33
      %p175 = pneg %p57
      %p176 = pneg %p54
      %p177 = pneg %p78
      %p178 = pneg %p75
      %p179 = pneg %p99
      %p180 = pneg %p96
      %p181 = pneg %p125
      %p182 = pneg %p122
      %p183 = scmp.lt.s32.totalorder %s15, 1
      %s184 = scalar_select %p183, %s15, 1
      %s185 = smul.addr %s184, 8
      %s186 = smul.addr %s185, 8
      %s187 = scalar_lea.vmem %s4, %s186
      %p188 = scmp.lt.s32.totalorder %s15, 1
      %s189 = scalar_select %p188, %s15, 1
      %s190 = smul.addr %s189, 72
      %s191 = smul.addr %s190, 8
      %s192 = scalar_lea.vmem %s0, %s191
      %p193 = scmp.lt.s32.totalorder %s15, 1
      %s194 = scalar_select %p193, %s15, 1
      %s195 = smul.addr %s194, 8
      %s196 = smul.addr %s195, 8
      %s197 = scalar_lea.vmem %s4, %s196
      %v199 = vld [vmem:[%s192] sm:$0xff]
      %v200 = vld [vmem:[%s192 + $0x8] sm:$0x1]
      %v201 = vld [vmem:[%s192 + $0x10] sm:$0xff]
      %v202 = vld [vmem:[%s192 + $0x18] sm:$0x1]
      %v203 = vld [vmem:[%s192 + $0x20] sm:$0xff]
      %v204 = vld [vmem:[%s192 + $0x28] sm:$0x1]
      %v205 = vld [vmem:[%s192 + $0x30] sm:$0xff]
      %v206 = vld [vmem:[%s192 + $0x38] sm:$0x1]
      %v207 = vld [vmem:[%s192 + $0x40] sm:$0xff]
      %v208 = vld [vmem:[%s192 + $0x48] sm:$0x1]
      %v209 = vld [vmem:[%s192 + $0x50] sm:$0xff]
      %v210 = vld [vmem:[%s192 + $0x58] sm:$0x1]
      %v211 = vld [vmem:[%s192 + $0x60] sm:$0xff]
      %v212 = vld [vmem:[%s192 + $0x68] sm:$0x1]
      %v213 = vld [vmem:[%s192 + $0x70] sm:$0xff]
      %v214 = vld [vmem:[%s192 + $0x78] sm:$0x1]
      %v215 = vld [vmem:[%s192 + $0x80] sm:$0xff]
      %v216 = vld [vmem:[%s192 + $0x88] sm:$0x1]
      %v217 = vld [vmem:[%s192 + $0x90] sm:$0xff]
      %v218 = vld [vmem:[%s192 + $0xa0] sm:$0xff]
      %v219 = vld [vmem:[%s192 + $0xb0] sm:$0xff]
      %v220 = vld [vmem:[%s192 + $0xc0] sm:$0xff]
      %v221 = vld [vmem:[%s192 + $0xd0] sm:$0xff]
      %v222 = vld [vmem:[%s192 + $0xe0] sm:$0xff]
      %v223 = vld [vmem:[%s192 + $0xf0] sm:$0xff]
      %v224 = vld [vmem:[%s192 + $0x100] sm:$0xff]
      %v225 = vld [vmem:[%s192 + $0x110] sm:$0xff]
      %v226 = vld [vmem:[%s192 + $0x120] sm:$0xff]
      %v227 = vld [vmem:[%s192 + $0x128] sm:$0x1]
      %v228 = vld [vmem:[%s192 + $0x130] sm:$0xff]
      %v229 = vld [vmem:[%s192 + $0x138] sm:$0x1]
      %v230 = vld [vmem:[%s192 + $0x140] sm:$0xff]
      %v231 = vld [vmem:[%s192 + $0x148] sm:$0x1]
      %v232 = vld [vmem:[%s192 + $0x150] sm:$0xff]
      %v233 = vld [vmem:[%s192 + $0x158] sm:$0x1]
      %v234 = vld [vmem:[%s192 + $0x160] sm:$0xff]
      %v235 = vld [vmem:[%s192 + $0x168] sm:$0x1]
      %v236 = vld [vmem:[%s192 + $0x170] sm:$0xff]
      %v237 = vld [vmem:[%s192 + $0x178] sm:$0x1]
      %v238 = vld [vmem:[%s192 + $0x180] sm:$0xff]
      %v239 = vld [vmem:[%s192 + $0x188] sm:$0x1]
      %v240 = vld [vmem:[%s192 + $0x190] sm:$0xff]
      %v241 = vld [vmem:[%s192 + $0x198] sm:$0x1]
      %v242 = vld [vmem:[%s192 + $0x1b0] sm:$0xff]
      %v243 = vld [vmem:[%s192 + $0x1c0] sm:$0xff]
      %v244 = vld [vmem:[%s192 + $0x1d0] sm:$0xff]
      %v245 = vld [vmem:[%s192 + $0x1e0] sm:$0xff]
      %v246 = vld [vmem:[%s192 + $0x1f0] sm:$0xff]
      %v247 = vld [vmem:[%s192 + $0x200] sm:$0xff]
      %v248 = vld [vmem:[%s192 + $0x210] sm:$0xff]
      %v249 = vld [vmem:[%s192 + $0x220] sm:$0xff]
      %v250 = vld [vmem:[%s1] sm:$0x7]
      %v251 = vld [vmem:[%s1 + $0x4] sm:$0x7]
      %v252 = vld [vmem:[%s1 + $0x8] sm:$0x7]
      %v253 = vld [vmem:[%s1 + $0xc] sm:$0x7]
      %v254 = vld [vmem:[%s1 + $0x10] sm:$0x7]
      %v255 = vld [vmem:[%s1 + $0x14] sm:$0x7]
      %v256 = vld [vmem:[%s2] sm:$0xf]
      %v257 = vld [vmem:[%s2 + $0x4] sm:$0xf]
      %v258 = vld [vmem:[%s2 + $0x8] sm:$0xf]
      %v259 = vld [vmem:[%s2 + $0xc] sm:$0xf]
      %v260 = vld [vmem:[%s2 + $0x10] sm:$0xf]
      %v261 = vld [vmem:[%s2 + $0x14] sm:$0xf]
      %v262 = vld [vmem:[%s2 + $0x18] sm:$0xf]
      %v263 = vld [vmem:[%s2 + $0x1c] sm:$0xf]
      %v264 = vlaneseq
      %v265 = vshrl.u32 %v264, 7
      %v266 = vsub.s32 0, %v265
      %v267 = vrot.slane %v250, %v266
      %v268 = vmul.f32 %v199, %v267
      %v269 = vmul.f32 %v201, %v267
      %v270 = vmul.f32 %v203, %v267
      %v271 = vmul.f32 %v205, %v267
      %v272 = vmul.f32 %v207, %v267
      %v273 = vmul.f32 %v209, %v267
      %v274 = vmul.f32 %v211, %v267
      %v275 = vmul.f32 %v213, %v267
      %v276 = vadd.f32 %v268, 0.0
      %v277 = vadd.f32 %v269, 0.0
      %v278 = vadd.f32 %v270, 0.0
      %v279 = vadd.f32 %v271, 0.0
      %v280 = vadd.f32 %v272, 0.0
      %v281 = vadd.f32 %v273, 0.0
      %v282 = vadd.f32 %v274, 0.0
      %v283 = vadd.f32 %v275, 0.0
      %v284 = vlaneseq
      %v285 = vshrl.u32 %v284, 7
      %v286 = vsub.s32 1, %v285
      %v287 = vrot.slane %v250, %v286
      %v288 = vmul.f32 %v217, %v287
      %v289 = vmul.f32 %v218, %v287
      %v290 = vmul.f32 %v219, %v287
      %v291 = vmul.f32 %v220, %v287
      %v292 = vmul.f32 %v221, %v287
      %v293 = vmul.f32 %v222, %v287
      %v294 = vmul.f32 %v223, %v287
      %v295 = vmul.f32 %v224, %v287
      %v296 = vadd.f32 %v276, %v288
      %v297 = vadd.f32 %v277, %v289
      %v298 = vadd.f32 %v278, %v290
      %v299 = vadd.f32 %v279, %v291
      %v300 = vadd.f32 %v280, %v292
      %v301 = vadd.f32 %v281, %v293
      %v302 = vadd.f32 %v282, %v294
      %v303 = vadd.f32 %v283, %v295
      %v304 = vlaneseq
      %v305 = vshrl.u32 %v304, 7
      %v306 = vsub.s32 2, %v305
      %v307 = vrot.slane %v250, %v306
      %v308 = vmul.f32 %v199, %v307
      %v309 = vmul.f32 %v200, %v307
      %v310 = vmul.f32 %v201, %v307
      %v311 = vmul.f32 %v202, %v307
      %v312 = vmul.f32 %v203, %v307
      %v313 = vmul.f32 %v204, %v307
      %v314 = vmul.f32 %v205, %v307
      %v315 = vmul.f32 %v206, %v307
      %v316 = vmul.f32 %v207, %v307
      %v317 = vmul.f32 %v208, %v307
      %v318 = vmul.f32 %v209, %v307
      %v319 = vmul.f32 %v210, %v307
      %v320 = vmul.f32 %v211, %v307
      %v321 = vmul.f32 %v212, %v307
      %v322 = vmul.f32 %v213, %v307
      %v323 = vmul.f32 %v214, %v307
      %vm340 = vcmask 1046528
      %v341 = vrot.slane %v308, 1
      %v342 = vrot.slane %v309, 1
      %v343 = vsel %vm340, %v341, %v342
      %v344 = vrot.slane %v310, 1
      %v345 = vrot.slane %v311, 1
      %v346 = vsel %vm340, %v344, %v345
      %v347 = vrot.slane %v312, 1
      %v348 = vrot.slane %v313, 1
      %v349 = vsel %vm340, %v347, %v348
      %v350 = vrot.slane %v314, 1
      %v351 = vrot.slane %v315, 1
      %v352 = vsel %vm340, %v350, %v351
      %v353 = vrot.slane %v316, 1
      %v354 = vrot.slane %v317, 1
      %v355 = vsel %vm340, %v353, %v354
      %v356 = vrot.slane %v318, 1
      %v357 = vrot.slane %v319, 1
      %v358 = vsel %vm340, %v356, %v357
      %v359 = vrot.slane %v320, 1
      %v360 = vrot.slane %v321, 1
      %v361 = vsel %vm340, %v359, %v360
      %v362 = vrot.slane %v322, 1
      %v363 = vrot.slane %v323, 1
      %v364 = vsel %vm340, %v362, %v363
      %v373 = vadd.f32 %v296, %v343
      %v374 = vadd.f32 %v297, %v346
      %v375 = vadd.f32 %v298, %v349
      %v376 = vadd.f32 %v299, %v352
      %v377 = vadd.f32 %v300, %v355
      %v378 = vadd.f32 %v301, %v358
      %v379 = vadd.f32 %v302, %v361
      %v380 = vadd.f32 %v303, %v364
      %v381 = vlaneseq
      %v382 = vshrl.u32 %v381, 7
      %v383 = vsub.s32 0, %v382
      %v384 = vrot.slane %v251, %v383
      %v385 = vmul.f32 %v226, %v384
      %v386 = vmul.f32 %v228, %v384
      %v387 = vmul.f32 %v230, %v384
      %v388 = vmul.f32 %v232, %v384
      %v389 = vmul.f32 %v234, %v384
      %v390 = vmul.f32 %v236, %v384
      %v391 = vmul.f32 %v238, %v384
      %v392 = vmul.f32 %v240, %v384
      %v393 = vadd.f32 %v373, %v385
      %v394 = vadd.f32 %v374, %v386
      %v395 = vadd.f32 %v375, %v387
      %v396 = vadd.f32 %v376, %v388
      %v397 = vadd.f32 %v377, %v389
      %v398 = vadd.f32 %v378, %v390
      %v399 = vadd.f32 %v379, %v391
      %v400 = vadd.f32 %v380, %v392
      %v401 = vlaneseq
      %v402 = vshrl.u32 %v401, 7
      %v403 = vsub.s32 1, %v402
      %v404 = vrot.slane %v251, %v403
      %v405 = vmul.f32 %v242, %v404
      %v406 = vmul.f32 %v243, %v404
      %v407 = vmul.f32 %v244, %v404
      %v408 = vmul.f32 %v245, %v404
      %v409 = vmul.f32 %v246, %v404
      %v410 = vmul.f32 %v247, %v404
      %v411 = vmul.f32 %v248, %v404
      %v412 = vmul.f32 %v249, %v404
      %v413 = vadd.f32 %v393, %v405
      %v414 = vadd.f32 %v394, %v406
      %v415 = vadd.f32 %v395, %v407
      %v416 = vadd.f32 %v396, %v408
      %v417 = vadd.f32 %v397, %v409
      %v418 = vadd.f32 %v398, %v410
      %v419 = vadd.f32 %v399, %v411
      %v420 = vadd.f32 %v400, %v412
      %v421 = vlaneseq
      %v422 = vshrl.u32 %v421, 7
      %v423 = vsub.s32 2, %v422
      %v424 = vrot.slane %v251, %v423
      %v425 = vmul.f32 %v226, %v424
      %v426 = vmul.f32 %v227, %v424
      %v427 = vmul.f32 %v228, %v424
      %v428 = vmul.f32 %v229, %v424
      %v429 = vmul.f32 %v230, %v424
      %v430 = vmul.f32 %v231, %v424
      %v431 = vmul.f32 %v232, %v424
      %v432 = vmul.f32 %v233, %v424
      %v433 = vmul.f32 %v234, %v424
      %v434 = vmul.f32 %v235, %v424
      %v435 = vmul.f32 %v236, %v424
      %v436 = vmul.f32 %v237, %v424
      %v437 = vmul.f32 %v238, %v424
      %v438 = vmul.f32 %v239, %v424
      %v439 = vmul.f32 %v240, %v424
      %v440 = vmul.f32 %v241, %v424
      %v457 = vrot.slane %v425, 1
      %v458 = vrot.slane %v426, 1
      %v459 = vsel %vm340, %v457, %v458
      %v460 = vrot.slane %v427, 1
      %v461 = vrot.slane %v428, 1
      %v462 = vsel %vm340, %v460, %v461
      %v463 = vrot.slane %v429, 1
      %v464 = vrot.slane %v430, 1
      %v465 = vsel %vm340, %v463, %v464
      %v466 = vrot.slane %v431, 1
      %v467 = vrot.slane %v432, 1
      %v468 = vsel %vm340, %v466, %v467
      %v469 = vrot.slane %v433, 1
      %v470 = vrot.slane %v434, 1
      %v471 = vsel %vm340, %v469, %v470
      %v472 = vrot.slane %v435, 1
      %v473 = vrot.slane %v436, 1
      %v474 = vsel %vm340, %v472, %v473
      %v475 = vrot.slane %v437, 1
      %v476 = vrot.slane %v438, 1
      %v477 = vsel %vm340, %v475, %v476
      %v478 = vrot.slane %v439, 1
      %v479 = vrot.slane %v440, 1
      %v480 = vsel %vm340, %v478, %v479
      %v489 = vadd.f32 %v413, %v459
      %v490 = vadd.f32 %v414, %v462
      %v491 = vadd.f32 %v415, %v465
      %v492 = vadd.f32 %v416, %v468
      %v493 = vadd.f32 %v417, %v471
      %v494 = vadd.f32 %v418, %v474
      %v495 = vadd.f32 %v419, %v477
      %v496 = vadd.f32 %v420, %v480
      %v497 = vlaneseq
      %v498 = vshrl.u32 %v497, 7
      %v499 = vsub.s32 0, %v498
      %v500 = vrot.slane %v252, %v499
      %v501 = vmul.f32 %v201, %v500
      %v502 = vmul.f32 %v203, %v500
      %v503 = vmul.f32 %v205, %v500
      %v504 = vmul.f32 %v207, %v500
      %v505 = vmul.f32 %v209, %v500
      %v506 = vmul.f32 %v211, %v500
      %v507 = vmul.f32 %v213, %v500
      %v508 = vmul.f32 %v215, %v500
      %v509 = vadd.f32 %v489, %v501
      %v510 = vadd.f32 %v490, %v502
      %v511 = vadd.f32 %v491, %v503
      %v512 = vadd.f32 %v492, %v504
      %v513 = vadd.f32 %v493, %v505
      %v514 = vadd.f32 %v494, %v506
      %v515 = vadd.f32 %v495, %v507
      %v516 = vadd.f32 %v496, %v508
      %v517 = vlaneseq
      %v518 = vshrl.u32 %v517, 7
      %v519 = vsub.s32 1, %v518
      %v520 = vrot.slane %v252, %v519
      %v521 = vmul.f32 %v218, %v520
      %v522 = vmul.f32 %v219, %v520
      %v523 = vmul.f32 %v220, %v520
      %v524 = vmul.f32 %v221, %v520
      %v525 = vmul.f32 %v222, %v520
      %v526 = vmul.f32 %v223, %v520
      %v527 = vmul.f32 %v224, %v520
      %v528 = vmul.f32 %v225, %v520
      %v529 = vadd.f32 %v509, %v521
      %v530 = vadd.f32 %v510, %v522
      %v531 = vadd.f32 %v511, %v523
      %v532 = vadd.f32 %v512, %v524
      %v533 = vadd.f32 %v513, %v525
      %v534 = vadd.f32 %v514, %v526
      %v535 = vadd.f32 %v515, %v527
      %v536 = vadd.f32 %v516, %v528
      %v537 = vlaneseq
      %v538 = vshrl.u32 %v537, 7
      %v539 = vsub.s32 2, %v538
      %v540 = vrot.slane %v252, %v539
      %v541 = vmul.f32 %v201, %v540
      %v542 = vmul.f32 %v202, %v540
      %v543 = vmul.f32 %v203, %v540
      %v544 = vmul.f32 %v204, %v540
      %v545 = vmul.f32 %v205, %v540
      %v546 = vmul.f32 %v206, %v540
      %v547 = vmul.f32 %v207, %v540
      %v548 = vmul.f32 %v208, %v540
      %v549 = vmul.f32 %v209, %v540
      %v550 = vmul.f32 %v210, %v540
      %v551 = vmul.f32 %v211, %v540
      %v552 = vmul.f32 %v212, %v540
      %v553 = vmul.f32 %v213, %v540
      %v554 = vmul.f32 %v214, %v540
      %v555 = vmul.f32 %v215, %v540
      %v556 = vmul.f32 %v216, %v540
      %v573 = vrot.slane %v541, 1
      %v574 = vrot.slane %v542, 1
      %v575 = vsel %vm340, %v573, %v574
      %v576 = vrot.slane %v543, 1
      %v577 = vrot.slane %v544, 1
      %v578 = vsel %vm340, %v576, %v577
      %v579 = vrot.slane %v545, 1
      %v580 = vrot.slane %v546, 1
      %v581 = vsel %vm340, %v579, %v580
      %v582 = vrot.slane %v547, 1
      %v583 = vrot.slane %v548, 1
      %v584 = vsel %vm340, %v582, %v583
      %v585 = vrot.slane %v549, 1
      %v586 = vrot.slane %v550, 1
      %v587 = vsel %vm340, %v585, %v586
      %v588 = vrot.slane %v551, 1
      %v589 = vrot.slane %v552, 1
      %v590 = vsel %vm340, %v588, %v589
      %v591 = vrot.slane %v553, 1
      %v592 = vrot.slane %v554, 1
      %v593 = vsel %vm340, %v591, %v592
      %v594 = vrot.slane %v555, 1
      %v595 = vrot.slane %v556, 1
      %v596 = vsel %vm340, %v594, %v595
      %v605 = vadd.f32 %v529, %v575
      %v606 = vadd.f32 %v530, %v578
      %v607 = vadd.f32 %v531, %v581
      %v608 = vadd.f32 %v532, %v584
      %v609 = vadd.f32 %v533, %v587
      %v610 = vadd.f32 %v534, %v590
      %v611 = vadd.f32 %v535, %v593
      %v612 = vadd.f32 %v536, %v596
      %v613 = vpack.c.bf16 %v606, %v605
      %v614 = vpack.c.bf16 %v608, %v607
      %v615 = vpack.c.bf16 %v610, %v609
      %v616 = vpack.c.bf16 %v612, %v611
      %v617 = vlaneseq
      %v618 = vshrl.u32 %v617, 7
      %v619 = vsub.s32 0, %v618
      %v620 = vrot.slane %v253, %v619
      %v621 = vmul.f32 %v199, %v620
      %v622 = vmul.f32 %v201, %v620
      %v623 = vmul.f32 %v203, %v620
      %v624 = vmul.f32 %v205, %v620
      %v625 = vmul.f32 %v207, %v620
      %v626 = vmul.f32 %v209, %v620
      %v627 = vmul.f32 %v211, %v620
      %v628 = vmul.f32 %v213, %v620
      %v629 = vadd.f32 %v621, 0.0
      %v630 = vadd.f32 %v622, 0.0
      %v631 = vadd.f32 %v623, 0.0
      %v632 = vadd.f32 %v624, 0.0
      %v633 = vadd.f32 %v625, 0.0
      %v634 = vadd.f32 %v626, 0.0
      %v635 = vadd.f32 %v627, 0.0
      %v636 = vadd.f32 %v628, 0.0
      %v637 = vlaneseq
      %v638 = vshrl.u32 %v637, 7
      %v639 = vsub.s32 1, %v638
      %v640 = vrot.slane %v253, %v639
      %v641 = vmul.f32 %v217, %v640
      %v642 = vmul.f32 %v218, %v640
      %v643 = vmul.f32 %v219, %v640
      %v644 = vmul.f32 %v220, %v640
      %v645 = vmul.f32 %v221, %v640
      %v646 = vmul.f32 %v222, %v640
      %v647 = vmul.f32 %v223, %v640
      %v648 = vmul.f32 %v224, %v640
      %v649 = vadd.f32 %v629, %v641
      %v650 = vadd.f32 %v630, %v642
      %v651 = vadd.f32 %v631, %v643
      %v652 = vadd.f32 %v632, %v644
      %v653 = vadd.f32 %v633, %v645
      %v654 = vadd.f32 %v634, %v646
      %v655 = vadd.f32 %v635, %v647
      %v656 = vadd.f32 %v636, %v648
      %v657 = vlaneseq
      %v658 = vshrl.u32 %v657, 7
      %v659 = vsub.s32 2, %v658
      %v660 = vrot.slane %v253, %v659
      %v661 = vmul.f32 %v199, %v660
      %v662 = vmul.f32 %v200, %v660
      %v663 = vmul.f32 %v201, %v660
      %v664 = vmul.f32 %v202, %v660
      %v665 = vmul.f32 %v203, %v660
      %v666 = vmul.f32 %v204, %v660
      %v667 = vmul.f32 %v205, %v660
      %v668 = vmul.f32 %v206, %v660
      %v669 = vmul.f32 %v207, %v660
      %v670 = vmul.f32 %v208, %v660
      %v671 = vmul.f32 %v209, %v660
      %v672 = vmul.f32 %v210, %v660
      %v673 = vmul.f32 %v211, %v660
      %v674 = vmul.f32 %v212, %v660
      %v675 = vmul.f32 %v213, %v660
      %v676 = vmul.f32 %v214, %v660
      %v693 = vrot.slane %v661, 1
      %v694 = vrot.slane %v662, 1
      %v695 = vsel %vm340, %v693, %v694
      %v696 = vrot.slane %v663, 1
      %v697 = vrot.slane %v664, 1
      %v698 = vsel %vm340, %v696, %v697
      %v699 = vrot.slane %v665, 1
      %v700 = vrot.slane %v666, 1
      %v701 = vsel %vm340, %v699, %v700
      %v702 = vrot.slane %v667, 1
      %v703 = vrot.slane %v668, 1
      %v704 = vsel %vm340, %v702, %v703
      %v705 = vrot.slane %v669, 1
      %v706 = vrot.slane %v670, 1
      %v707 = vsel %vm340, %v705, %v706
      %v708 = vrot.slane %v671, 1
      %v709 = vrot.slane %v672, 1
      %v710 = vsel %vm340, %v708, %v709
      %v711 = vrot.slane %v673, 1
      %v712 = vrot.slane %v674, 1
      %v713 = vsel %vm340, %v711, %v712
      %v714 = vrot.slane %v675, 1
      %v715 = vrot.slane %v676, 1
      %v716 = vsel %vm340, %v714, %v715
      %v725 = vadd.f32 %v649, %v695
      %v726 = vadd.f32 %v650, %v698
      %v727 = vadd.f32 %v651, %v701
      %v728 = vadd.f32 %v652, %v704
      %v729 = vadd.f32 %v653, %v707
      %v730 = vadd.f32 %v654, %v710
      %v731 = vadd.f32 %v655, %v713
      %v732 = vadd.f32 %v656, %v716
      %v733 = vlaneseq
      %v734 = vshrl.u32 %v733, 7
      %v735 = vsub.s32 0, %v734
      %v736 = vrot.slane %v254, %v735
      %v737 = vmul.f32 %v226, %v736
      %v738 = vmul.f32 %v228, %v736
      %v739 = vmul.f32 %v230, %v736
      %v740 = vmul.f32 %v232, %v736
      %v741 = vmul.f32 %v234, %v736
      %v742 = vmul.f32 %v236, %v736
      %v743 = vmul.f32 %v238, %v736
      %v744 = vmul.f32 %v240, %v736
      %v745 = vadd.f32 %v725, %v737
      %v746 = vadd.f32 %v726, %v738
      %v747 = vadd.f32 %v727, %v739
      %v748 = vadd.f32 %v728, %v740
      %v749 = vadd.f32 %v729, %v741
      %v750 = vadd.f32 %v730, %v742
      %v751 = vadd.f32 %v731, %v743
      %v752 = vadd.f32 %v732, %v744
      %v753 = vlaneseq
      %v754 = vshrl.u32 %v753, 7
      %v755 = vsub.s32 1, %v754
      %v756 = vrot.slane %v254, %v755
      %v757 = vmul.f32 %v242, %v756
      %v758 = vmul.f32 %v243, %v756
      %v759 = vmul.f32 %v244, %v756
      %v760 = vmul.f32 %v245, %v756
      %v761 = vmul.f32 %v246, %v756
      %v762 = vmul.f32 %v247, %v756
      %v763 = vmul.f32 %v248, %v756
      %v764 = vmul.f32 %v249, %v756
      %v765 = vadd.f32 %v745, %v757
      %v766 = vadd.f32 %v746, %v758
      %v767 = vadd.f32 %v747, %v759
      %v768 = vadd.f32 %v748, %v760
      %v769 = vadd.f32 %v749, %v761
      %v770 = vadd.f32 %v750, %v762
      %v771 = vadd.f32 %v751, %v763
      %v772 = vadd.f32 %v752, %v764
      %v773 = vlaneseq
      %v774 = vshrl.u32 %v773, 7
      %v775 = vsub.s32 2, %v774
      %v776 = vrot.slane %v254, %v775
      %v777 = vmul.f32 %v226, %v776
      %v778 = vmul.f32 %v227, %v776
      %v779 = vmul.f32 %v228, %v776
      %v780 = vmul.f32 %v229, %v776
      %v781 = vmul.f32 %v230, %v776
      %v782 = vmul.f32 %v231, %v776
      %v783 = vmul.f32 %v232, %v776
      %v784 = vmul.f32 %v233, %v776
      %v785 = vmul.f32 %v234, %v776
      %v786 = vmul.f32 %v235, %v776
      %v787 = vmul.f32 %v236, %v776
      %v788 = vmul.f32 %v237, %v776
      %v789 = vmul.f32 %v238, %v776
      %v790 = vmul.f32 %v239, %v776
      %v791 = vmul.f32 %v240, %v776
      %v792 = vmul.f32 %v241, %v776
      %v809 = vrot.slane %v777, 1
      %v810 = vrot.slane %v778, 1
      %v811 = vsel %vm340, %v809, %v810
      %v812 = vrot.slane %v779, 1
      %v813 = vrot.slane %v780, 1
      %v814 = vsel %vm340, %v812, %v813
      %v815 = vrot.slane %v781, 1
      %v816 = vrot.slane %v782, 1
      %v817 = vsel %vm340, %v815, %v816
      %v818 = vrot.slane %v783, 1
      %v819 = vrot.slane %v784, 1
      %v820 = vsel %vm340, %v818, %v819
      %v821 = vrot.slane %v785, 1
      %v822 = vrot.slane %v786, 1
      %v823 = vsel %vm340, %v821, %v822
      %v824 = vrot.slane %v787, 1
      %v825 = vrot.slane %v788, 1
      %v826 = vsel %vm340, %v824, %v825
      %v827 = vrot.slane %v789, 1
      %v828 = vrot.slane %v790, 1
      %v829 = vsel %vm340, %v827, %v828
      %v830 = vrot.slane %v791, 1
      %v831 = vrot.slane %v792, 1
      %v832 = vsel %vm340, %v830, %v831
      %v841 = vadd.f32 %v765, %v811
      %v842 = vadd.f32 %v766, %v814
      %v843 = vadd.f32 %v767, %v817
      %v844 = vadd.f32 %v768, %v820
      %v845 = vadd.f32 %v769, %v823
      %v846 = vadd.f32 %v770, %v826
      %v847 = vadd.f32 %v771, %v829
      %v848 = vadd.f32 %v772, %v832
      %v849 = vlaneseq
      %v850 = vshrl.u32 %v849, 7
      %v851 = vsub.s32 0, %v850
      %v852 = vrot.slane %v255, %v851
      %v853 = vmul.f32 %v201, %v852
      %v854 = vmul.f32 %v203, %v852
      %v855 = vmul.f32 %v205, %v852
      %v856 = vmul.f32 %v207, %v852
      %v857 = vmul.f32 %v209, %v852
      %v858 = vmul.f32 %v211, %v852
      %v859 = vmul.f32 %v213, %v852
      %v860 = vmul.f32 %v215, %v852
      %v861 = vadd.f32 %v841, %v853
      %v862 = vadd.f32 %v842, %v854
      %v863 = vadd.f32 %v843, %v855
      %v864 = vadd.f32 %v844, %v856
      %v865 = vadd.f32 %v845, %v857
      %v866 = vadd.f32 %v846, %v858
      %v867 = vadd.f32 %v847, %v859
      %v868 = vadd.f32 %v848, %v860
      %v869 = vlaneseq
      %v870 = vshrl.u32 %v869, 7
      %v871 = vsub.s32 1, %v870
      %v872 = vrot.slane %v255, %v871
      %v873 = vmul.f32 %v218, %v872
      %v874 = vmul.f32 %v219, %v872
      %v875 = vmul.f32 %v220, %v872
      %v876 = vmul.f32 %v221, %v872
      %v877 = vmul.f32 %v222, %v872
      %v878 = vmul.f32 %v223, %v872
      %v879 = vmul.f32 %v224, %v872
      %v880 = vmul.f32 %v225, %v872
      %v881 = vadd.f32 %v861, %v873
      %v882 = vadd.f32 %v862, %v874
      %v883 = vadd.f32 %v863, %v875
      %v884 = vadd.f32 %v864, %v876
      %v885 = vadd.f32 %v865, %v877
      %v886 = vadd.f32 %v866, %v878
      %v887 = vadd.f32 %v867, %v879
      %v888 = vadd.f32 %v868, %v880
      %v889 = vlaneseq
      %v890 = vshrl.u32 %v889, 7
      %v891 = vsub.s32 2, %v890
      %v892 = vrot.slane %v255, %v891
      %v893 = vmul.f32 %v201, %v892
      %v894 = vmul.f32 %v202, %v892
      %v895 = vmul.f32 %v203, %v892
      %v896 = vmul.f32 %v204, %v892
      %v897 = vmul.f32 %v205, %v892
      %v898 = vmul.f32 %v206, %v892
      %v899 = vmul.f32 %v207, %v892
      %v900 = vmul.f32 %v208, %v892
      %v901 = vmul.f32 %v209, %v892
      %v902 = vmul.f32 %v210, %v892
      %v903 = vmul.f32 %v211, %v892
      %v904 = vmul.f32 %v212, %v892
      %v905 = vmul.f32 %v213, %v892
      %v906 = vmul.f32 %v214, %v892
      %v907 = vmul.f32 %v215, %v892
      %v908 = vmul.f32 %v216, %v892
      %v925 = vrot.slane %v893, 1
      %v926 = vrot.slane %v894, 1
      %v927 = vsel %vm340, %v925, %v926
      %v928 = vrot.slane %v895, 1
      %v929 = vrot.slane %v896, 1
      %v930 = vsel %vm340, %v928, %v929
      %v931 = vrot.slane %v897, 1
      %v932 = vrot.slane %v898, 1
      %v933 = vsel %vm340, %v931, %v932
      %v934 = vrot.slane %v899, 1
      %v935 = vrot.slane %v900, 1
      %v936 = vsel %vm340, %v934, %v935
      %v937 = vrot.slane %v901, 1
      %v938 = vrot.slane %v902, 1
      %v939 = vsel %vm340, %v937, %v938
      %v940 = vrot.slane %v903, 1
      %v941 = vrot.slane %v904, 1
      %v942 = vsel %vm340, %v940, %v941
      %v943 = vrot.slane %v905, 1
      %v944 = vrot.slane %v906, 1
      %v945 = vsel %vm340, %v943, %v944
      %v946 = vrot.slane %v907, 1
      %v947 = vrot.slane %v908, 1
      %v948 = vsel %vm340, %v946, %v947
      %v957 = vadd.f32 %v881, %v927
      %v958 = vadd.f32 %v882, %v930
      %v959 = vadd.f32 %v883, %v933
      %v960 = vadd.f32 %v884, %v936
      %v961 = vadd.f32 %v885, %v939
      %v962 = vadd.f32 %v886, %v942
      %v963 = vadd.f32 %v887, %v945
      %v964 = vadd.f32 %v888, %v948
      %v965 = vpack.c.bf16 %v958, %v957
      %v966 = vpack.c.bf16 %v960, %v959
      %v967 = vpack.c.bf16 %v962, %v961
      %v968 = vpack.c.bf16 %v964, %v963
      %v973 = vunpack.c.l.b16 %v260
      %v974 = vunpack.c.l.b16 %v261
      %v975 = vunpack.c.l.b16 %v262
      %v976 = vunpack.c.l.b16 %v263
      %v977 = vpack.c.b16 %v974, %v973
      %v978 = vpack.c.b16 %v976, %v975
      %vm981 = vcmask 261120
      %v983 = vsel %vm981, %v965, 0
      %v986 = vsel %vm981, %v966, 0
      %v989 = vsel %vm981, %v967, 0
      %v992 = vsel %vm981, %v968, 0
      %994 = vmatprep.subr.bf16.mxu0 0
      %995 = vmatpush1.bf16.msra.mxu0 %v977
      %996 = vmatprep.subr.bf16.mxu0 0
      %997 = vmatpush1.bf16.msra.mxu0 %v978
      %998 = vmatprep.subr.bf16.mxu0 0
      %999 = vmatpush1.bf16.msra.mxu0 0
      %1000 = vmatprep.subr.bf16.mxu0 0
      %1001 = vmatpush1.bf16.msra.mxu0 0
      %1002 = vmatprep.subr.bf16.mxu0 0
      %1003 = vmatpush1.bf16.msra.mxu0 0
      %1004 = vmatprep.subr.bf16.mxu0 0
      %1005 = vmatpush1.bf16.msra.mxu0 0
      %1006 = vmatprep.subr.bf16.mxu0 0
      %1007 = vmatpush1.bf16.msra.mxu0 0
      %1008 = vmatprep.subr.bf16.mxu0 0
      %1009 = vmatpush1.bf16.msra.mxu0 0
      %1010 = vmatprep.subr.bf16.mxu0 0
      %1011 = vmatpush1.bf16.msra.mxu0 0
      %1012 = vmatprep.subr.bf16.mxu0 0
      %1013 = vmatpush1.bf16.msra.mxu0 0
      %1014 = vmatprep.subr.bf16.mxu0 0
      %1015 = vmatpush1.bf16.msra.mxu0 0
      %1016 = vmatprep.subr.bf16.mxu0 0
      %1017 = vmatpush1.bf16.msra.mxu0 0
      %1018 = vmatprep.subr.bf16.mxu0 0
      %1019 = vmatpush1.bf16.msra.mxu0 0
      %1020 = vmatprep.subr.bf16.mxu0 0
      %1021 = vmatpush1.bf16.msra.mxu0 0
      %1022 = vmatprep.subr.bf16.mxu0 0
      %1023 = vmatpush1.bf16.msra.mxu0 0
      %1024 = vmatprep.subr.bf16.mxu0 0
      %1025 = vmatpush1.bf16.msra.mxu0 0
      %1026 = vmatprep.mubr.bf16.mxu0 0
      %1027 = vmatmul.mubr.bf16.gmra.mrb[0].mxu0 %v983
      %v1028 = vpop.f32.mrb[0].mxu0
      %v1029 = vadd.f32 0.0, %v1028
      %v1030 = vpop.f32.mrb[0].mxu0
      %v1031 = vpop.f32.mrb[0].mxu0
      %v1032 = vadd.f32 0.0, %v1031
      %v1033 = vpop.f32.mrb[0].mxu0
      %1034 = vmatprep.mubr.bf16.mxu0 0
      %1035 = vmatmul.mubr.bf16.gmra.mrb[0].mxu0 %v986
      %v1036 = vpop.f32.mrb[0].mxu0
      %v1037 = vadd.f32 0.0, %v1036
      %v1038 = vpop.f32.mrb[0].mxu0
      %v1039 = vpop.f32.mrb[0].mxu0
      %v1040 = vadd.f32 0.0, %v1039
      %v1041 = vpop.f32.mrb[0].mxu0
      %1042 = vmatprep.mubr.bf16.mxu0 0
      %1043 = vmatmul.mubr.bf16.gmra.mrb[0].mxu0 %v989
      %v1044 = vpop.f32.mrb[0].mxu0
      %v1045 = vadd.f32 0.0, %v1044
      %v1046 = vpop.f32.mrb[0].mxu0
      %v1047 = vpop.f32.mrb[0].mxu0
      %v1048 = vadd.f32 0.0, %v1047
      %v1049 = vpop.f32.mrb[0].mxu0
      %1050 = vmatprep.mubr.bf16.mxu0 0
      %1051 = vmatmul.mubr.bf16.gmra.mrb[0].mxu0 %v992
      %v1052 = vpop.f32.mrb[0].mxu0
      %v1053 = vadd.f32 0.0, %v1052
      %v1054 = vpop.f32.mrb[0].mxu0
      %v1055 = vpop.f32.mrb[0].mxu0
      %v1056 = vadd.f32 0.0, %v1055
      %v1057 = vpop.f32.mrb[0].mxu0
      %1058 = vdwg.mxu0
      %v1063 = vunpack.c.l.b16 %v256
      %v1064 = vunpack.c.l.b16 %v257
      %v1065 = vunpack.c.l.b16 %v258
      %v1066 = vunpack.c.l.b16 %v259
      %v1067 = vpack.c.b16 %v1064, %v1063
      %v1068 = vpack.c.b16 %v1066, %v1065
      %v1072 = vsel %vm981, %v613, 0
      %v1075 = vsel %vm981, %v614, 0
      %v1078 = vsel %vm981, %v615, 0
      %v1081 = vsel %vm981, %v616, 0
      %1083 = vmatprep.subr.bf16.mxu0 0
      %1084 = vmatpush1.bf16.msra.mxu0 %v1067
      %1085 = vmatprep.subr.bf16.mxu0 0
      %1086 = vmatpush1.bf16.msra.mxu0 %v1068
      %1087 = vmatprep.subr.bf16.mxu0 0
      %1088 = vmatpush1.bf16.msra.mxu0 0
      %1089 = vmatprep.subr.bf16.mxu0 0
      %1090 = vmatpush1.bf16.msra.mxu0 0
      %1091 = vmatprep.subr.bf16.mxu0 0
      %1092 = vmatpush1.bf16.msra.mxu0 0
      %1093 = vmatprep.subr.bf16.mxu0 0
      %1094 = vmatpush1.bf16.msra.mxu0 0
      %1095 = vmatprep.subr.bf16.mxu0 0
      %1096 = vmatpush1.bf16.msra.mxu0 0
      %1097 = vmatprep.subr.bf16.mxu0 0
      %1098 = vmatpush1.bf16.msra.mxu0 0
      %1099 = vmatprep.subr.bf16.mxu0 0
      %1100 = vmatpush1.bf16.msra.mxu0 0
      %1101 = vmatprep.subr.bf16.mxu0 0
      %1102 = vmatpush1.bf16.msra.mxu0 0
      %1103 = vmatprep.subr.bf16.mxu0 0
      %1104 = vmatpush1.bf16.msra.mxu0 0
      %1105 = vmatprep.subr.bf16.mxu0 0
      %1106 = vmatpush1.bf16.msra.mxu0 0
      %1107 = vmatprep.subr.bf16.mxu0 0
      %1108 = vmatpush1.bf16.msra.mxu0 0
      %1109 = vmatprep.subr.bf16.mxu0 0
      %1110 = vmatpush1.bf16.msra.mxu0 0
      %1111 = vmatprep.subr.bf16.mxu0 0
      %1112 = vmatpush1.bf16.msra.mxu0 0
      %1113 = vmatprep.subr.bf16.mxu0 0
      %1114 = vmatpush1.bf16.msra.mxu0 0
      %1115 = vmatprep.mubr.bf16.mxu0 0
      %1116 = vmatmul.mubr.bf16.gmra.mrb[0].mxu0 %v1072
      %v1117 = vpop.f32.mrb[0].mxu0
      %v1118 = vadd.f32 %v1029, %v1117
      %v1119 = vpop.f32.mrb[0].mxu0
      %v1120 = vpop.f32.mrb[0].mxu0
      %v1121 = vadd.f32 %v1032, %v1120
      %v1122 = vpop.f32.mrb[0].mxu0
      %1123 = vmatprep.mubr.bf16.mxu0 0
      %1124 = vmatmul.mubr.bf16.gmra.mrb[0].mxu0 %v1075
      %v1125 = vpop.f32.mrb[0].mxu0
      %v1126 = vadd.f32 %v1037, %v1125
      %v1127 = vpop.f32.mrb[0].mxu0
      %v1128 = vpop.f32.mrb[0].mxu0
      %v1129 = vadd.f32 %v1040, %v1128
      %v1130 = vpop.f32.mrb[0].mxu0
      %1131 = vmatprep.mubr.bf16.mxu0 0
      %1132 = vmatmul.mubr.bf16.gmra.mrb[0].mxu0 %v1078
      %v1133 = vpop.f32.mrb[0].mxu0
      %v1134 = vadd.f32 %v1045, %v1133
      %v1135 = vpop.f32.mrb[0].mxu0
      %v1136 = vpop.f32.mrb[0].mxu0
      %v1137 = vadd.f32 %v1048, %v1136
      %v1138 = vpop.f32.mrb[0].mxu0
      %1139 = vmatprep.mubr.bf16.mxu0 0
      %1140 = vmatmul.mubr.bf16.gmra.mrb[0].mxu0 %v1081
      %v1141 = vpop.f32.mrb[0].mxu0
      %v1142 = vadd.f32 %v1053, %v1141
      %v1143 = vpop.f32.mrb[0].mxu0
      %v1144 = vpop.f32.mrb[0].mxu0
      %v1145 = vadd.f32 %v1056, %v1144
      %v1146 = vpop.f32.mrb[0].mxu0
      %1147 = vdwg.mxu0
      %v1148 = vld [vmem:[%s3] sm:$0x1]
      %v1150 = vlaneseq
      %v1151 = vshrl.u32 %v1150, 7
      %v1152 = vsub.s32 0, %v1151
      %v1153 = vrot.slane %v1148, %v1152
      %v1155 = vadd.f32 %v1118, %v1153
      %v1156 = vadd.f32 %v1121, %v1153
      %v1157 = vadd.f32 %v1126, %v1153
      %v1158 = vadd.f32 %v1129, %v1153
      %v1159 = vadd.f32 %v1134, %v1153
      %v1160 = vadd.f32 %v1137, %v1153
      %v1161 = vadd.f32 %v1142, %v1153
      %v1162 = vadd.f32 %v1145, %v1153
      %v1163 = vmax.f32 %v1155, 0.0
      %v1164 = vmax.f32 %v1156, 0.0
      %v1165 = vmax.f32 %v1157, 0.0
      %v1166 = vmax.f32 %v1158, 0.0
      %v1167 = vmax.f32 %v1159, 0.0
      %v1168 = vmax.f32 %v1160, 0.0
      %v1169 = vmax.f32 %v1161, 0.0
      %v1170 = vmax.f32 %v1162, 0.0
      %vm1171 = vcmask 523264
      %1172 = vst.msk [vmem:[%s197] sm:$0xff] %vm1171, %v1163
      %1173 = vst.msk [vmem:[%s197 + $0x8] sm:$0xff] %vm1171, %v1164
      %1174 = vst.msk [vmem:[%s197 + $0x10] sm:$0xff] %vm1171, %v1165
      %1175 = vst.msk [vmem:[%s197 + $0x18] sm:$0xff] %vm1171, %v1166
      %1176 = vst.msk [vmem:[%s197 + $0x20] sm:$0xff] %vm1171, %v1167
      %1177 = vst.msk [vmem:[%s197 + $0x28] sm:$0xff] %vm1171, %v1168
      %1178 = vst.msk [vmem:[%s197 + $0x30] sm:$0xff] %vm1171, %v1169
      %1179 = vst.msk [vmem:[%s197 + $0x38] sm:$0xff] %vm1171, %v1170
      %p1180 = scmp.lt.s32.totalorder %s15, 1
      %s1181 = scalar_select %p1180, %s15, 1
      %s1182 = smul.addr %s1181, 8
      %s1183 = smul.addr %s1182, 8
      %s1184 = scalar_lea.vmem %s4, %s1183
      // Predicated region
      $region37: #{spatial_path_forward.5} parent=35 // pred_check
        %p1185 = pneg %p122
      $region38: #{spatial_path_forward.5} parent=35 // pred_check_branch
        %1187 = sbr.rel (%p1185) target = $region40
      $region39: #{spatial_path_forward.5} parent=35 // pred_region
        _
      $region40: #{spatial_path_forward.5} parent=35 // pred_fallthru
        _
    $region36: #{spatial_path_forward.5} parent=5 // pred_fallthru
      _
    %p1188 = scmp.le.s32.totalorder 2, %s10
    // Predicated region
    $region41: #{spatial_path_forward.5} parent=5 // pred_check
      %p1189 = pneg %p1188
    $region42: #{spatial_path_forward.5} parent=5 // pred_check_branch
      %1191 = sbr.rel (%p1189) target = $region44
    $region43: #{spatial_path_forward.5} parent=5 // pred_region
      %s1192 = ssub.s32 %s10, 2
      // Predicated region
      $region45: #{spatial_path_forward.5} parent=43 // pred_check
        %p1193 = pneg %p128
      $region46: #{spatial_path_forward.5} parent=43 // pred_check_branch
        %1195 = sbr.rel (%p1193) target = $region48
      $region47: #{spatial_path_forward.5} parent=43 // pred_region
        %p1196 = scmp.lt.s32.totalorder %s16, 1
        %s1197 = scalar_select %p1196, %s16, 1
        %s1198 = smul.addr %s1197, 8
        %s1199 = smul.addr %s1198, 8
        %s1200 = scalar_lea.vmem %s4, %s1199
      $region48: #{spatial_path_forward.5} parent=43 // pred_fallthru
        _
    $region44: #{spatial_path_forward.5} parent=5 // pred_fallthru
      _
  $region6: #{spatial_path_forward.5} parent=0 // loop_footer
    %s14 = sadd.s32 1, %s10
  $region7: #{spatial_path_forward.5} parent=0 // loop_footer_branch
    %9 = sbr.rel target = $region3
  $region8: #{spatial_path_forward.5} parent=0 // loop_exit
    _

// kernel: spatial_path_forward.6
$region0: #{spatial_path_forward.6}
  #allocation0 [shape = 'u32[]', space=smem, size = 0x4, offset = 0x4, fixed_abs, tag = 'smem constant byte address 0x4 - core index']
  #allocation1 [shape = 'u32[144,128]{1,0:T(1,128)}', space=vmem, size = 0x12000, scoped, tag = 'internal scratch']
  %s0 = inlined_call_operand.vmem [shape: f32[2,20,5,64], index: 0, kind: input, shape index: {}]
  %s1 = inlined_call_operand.vmem [shape: f32[2,3,3,64], index: 1, kind: input, shape index: {}]
  %s2 = inlined_call_operand.vmem [shape: bf16[2,64,128], index: 2, kind: input, shape index: {}]
  %s3 = inlined_call_operand.vmem [shape: f32[1,128], index: 3, kind: input, shape index: {}]
  %s4 = inlined_call_operand.vmem [shape: f32[2,16,128], index: 4, kind: output, shape index: {}]
  %s5 = sld [smem:[#allocation0]]
  $region49: #{spatial_path_forward.6} parent=0
    _
  %s7 = ssub.s32 1, %s5
  %s8 = scalar_select 0, %s7, %s5
  loop: start=0, step=1, limit=4
  $region2: #{spatial_path_forward.6} parent=0 // loop_pre_header
    _
  $region3: #{spatial_path_forward.6} parent=0 // loop_header
    %s10 = sphi 0, %s14
    %p11 = scmp.ge.s32.totalorder %s10, 4
    %s20 = sphi 0, %s22
    %s23 = sphi 0, %s20
    %s24 = sphi 0, %s23
    %s40 = sphi 0, %s24
    %s44 = sphi 0, %s44
    %s46 = sphi 0, %s44
    %s47 = sphi 0, %s46
    %s61 = sphi 0, %s47
    %s65 = sphi 0, %s65
    %s67 = sphi 0, %s65
    %s68 = sphi 0, %s67
    %s82 = sphi 0, %s68
    %s86 = sphi 0, %s86
    %s88 = sphi 0, %s86
    %s89 = sphi 0, %s88
    %s103 = sphi 0, %s89
    %s109 = sphi 0, %s111
    %s112 = sphi 0, %s109
    %s113 = sphi 0, %s112
    %s129 = sphi 0, %s113
  $region4: #{spatial_path_forward.6} parent=0 // loop_header_branch
    %13 = sbr.rel (%p11) target = $region8
  $region5: #{spatial_path_forward.6} parent=0 // loop_body
    %s15 = ssub.s32 %s10, 1
    %s16 = ssub.s32 %s10, 2
    %s17 = sadd.s32 %s10, 1
    %s18 = ssub.s32 %s10, %s17
    %p19 = scmp.eq.s32.totalorder %s18, 0
    %s21 = sadd.s32 %s20, 1
    %s22 = scalar_select %p19, %s20, %s21
    %p25 = pneg %p19
    %p26 = scmp.eq.s32.totalorder %s10, 1
    %p27 = por %p25, %p26
    %p28 = scmp.ne.s32.totalorder %s20, %s23
    %p29 = scmp.eq.s32.totalorder %s10, 0
    %p30 = por %p28, %p29
    %p31 = scmp.ne.s32.totalorder %s20, %s23
    %p32 = scmp.eq.s32.totalorder %s15, 1
    %p33 = por %p31, %p32
    %p34 = scmp.ne.s32.totalorder %s23, %s24
    %p35 = scmp.eq.s32.totalorder %s15, 0
    %p36 = por %p34, %p35
    %p37 = scmp.ne.s32.totalorder %s23, %s24
    %p38 = scmp.eq.s32.totalorder %s16, 1
    %p39 = por %p37, %p38
    %p41 = scmp.ne.s32.totalorder %s24, %s40
    %p42 = scmp.eq.s32.totalorder %s16, 0
    %p43 = por %p41, %p42
    %s45 = sadd.s32 %s44, 1
    %p48 = scmp.eq.s32.totalorder %s10, 1
    %p49 = scmp.ne.s32.totalorder %s44, %s46
    %p50 = scmp.eq.s32.totalorder %s10, 0
    %p51 = por %p49, %p50
    %p52 = scmp.ne.s32.totalorder %s44, %s46
    %p53 = scmp.eq.s32.totalorder %s15, 1
    %p54 = por %p52, %p53
    %p55 = scmp.ne.s32.totalorder %s46, %s47
    %p56 = scmp.eq.s32.totalorder %s15, 0
    %p57 = por %p55, %p56
    %p58 = scmp.ne.s32.totalorder %s46, %s47
    %p59 = scmp.eq.s32.totalorder %s16, 1
    %p60 = por %p58, %p59
    %p62 = scmp.ne.s32.totalorder %s47, %s61
    %p63 = scmp.eq.s32.totalorder %s16, 0
    %p64 = por %p62, %p63
    %s66 = sadd.s32 %s65, 1
    %p69 = scmp.eq.s32.totalorder %s10, 1
    %p70 = scmp.ne.s32.totalorder %s65, %s67
    %p71 = scmp.eq.s32.totalorder %s10, 0
    %p72 = por %p70, %p71
    %p73 = scmp.ne.s32.totalorder %s65, %s67
    %p74 = scmp.eq.s32.totalorder %s15, 1
    %p75 = por %p73, %p74
    %p76 = scmp.ne.s32.totalorder %s67, %s68
    %p77 = scmp.eq.s32.totalorder %s15, 0
    %p78 = por %p76, %p77
    %p79 = scmp.ne.s32.totalorder %s67, %s68
    %p80 = scmp.eq.s32.totalorder %s16, 1
    %p81 = por %p79, %p80
    %p83 = scmp.ne.s32.totalorder %s68, %s82
    %p84 = scmp.eq.s32.totalorder %s16, 0
    %p85 = por %p83, %p84
    %s87 = sadd.s32 %s86, 1
    %p90 = scmp.eq.s32.totalorder %s10, 1
    %p91 = scmp.ne.s32.totalorder %s86, %s88
    %p92 = scmp.eq.s32.totalorder %s10, 0
    %p93 = por %p91, %p92
    %p94 = scmp.ne.s32.totalorder %s86, %s88
    %p95 = scmp.eq.s32.totalorder %s15, 1
    %p96 = por %p94, %p95
    %p97 = scmp.ne.s32.totalorder %s88, %s89
    %p98 = scmp.eq.s32.totalorder %s15, 0
    %p99 = por %p97, %p98
    %p100 = scmp.ne.s32.totalorder %s88, %s89
    %p101 = scmp.eq.s32.totalorder %s16, 1
    %p102 = por %p100, %p101
    %p104 = scmp.ne.s32.totalorder %s89, %s103
    %p105 = scmp.eq.s32.totalorder %s16, 0
    %p106 = por %p104, %p105
    %s107 = ssub.s32 %s10, %s17
    %p108 = scmp.eq.s32.totalorder %s107, 0
    %s110 = sadd.s32 %s109, 1
    %s111 = scalar_select %p108, %s109, %s110
    %p114 = pneg %p108
    %p115 = scmp.eq.s32.totalorder %s10, 1
    %p116 = por %p114, %p115
    %p117 = scmp.ne.s32.totalorder %s109, %s112
    %p118 = scmp.eq.s32.totalorder %s10, 0
    %p119 = por %p117, %p118
    %p120 = scmp.ne.s32.totalorder %s109, %s112
    %p121 = scmp.eq.s32.totalorder %s15, 1
    %p122 = por %p120, %p121
    %p123 = scmp.ne.s32.totalorder %s112, %s113
    %p124 = scmp.eq.s32.totalorder %s15, 0
    %p125 = por %p123, %p124
    %p126 = scmp.ne.s32.totalorder %s112, %s113
    %p127 = scmp.eq.s32.totalorder %s16, 1
    %p128 = por %p126, %p127
    %p130 = scmp.ne.s32.totalorder %s113, %s129
    %p131 = scmp.eq.s32.totalorder %s16, 0
    %p132 = por %p130, %p131
    %p133 = scmp.le.s32.totalorder 1, %s10
    %p134 = scmp.lt.s32.totalorder %s10, 3
    %p135 = pnand %p133, %p134
    %p136 = pneg %p135
    // Predicated region
    $region9: #{spatial_path_forward.6} parent=5 // pred_check
      _
    $region10: #{spatial_path_forward.6} parent=5 // pred_check_branch
      %138 = sbr.rel (%p135) target = $region12
    $region11: #{spatial_path_forward.6} parent=5 // pred_region
      %s139 = ssub.s32 %s10, 1
      // Predicated region
      $region13: #{spatial_path_forward.6} parent=11 // pred_check
        %p140 = pneg %p57
      $region14: #{spatial_path_forward.6} parent=11 // pred_check_branch
        %142 = sbr.rel (%p140) target = $region16
      $region15: #{spatial_path_forward.6} parent=11 // pred_region
        _
      $region16: #{spatial_path_forward.6} parent=11 // pred_fallthru
        _
      // Predicated region
      $region17: #{spatial_path_forward.6} parent=11 // pred_check
        %p143 = pneg %p78
      $region18: #{spatial_path_forward.6} parent=11 // pred_check_branch
        %145 = sbr.rel (%p143) target = $region20
      $region19: #{spatial_path_forward.6} parent=11 // pred_region
        _
      $region20: #{spatial_path_forward.6} parent=11 // pred_fallthru
        _
      // Predicated region
      $region21: #{spatial_path_forward.6} parent=11 // pred_check
        %p146 = pneg %p99
      $region22: #{spatial_path_forward.6} parent=11 // pred_check_branch
        %148 = sbr.rel (%p146) target = $region24
      $region23: #{spatial_path_forward.6} parent=11 // pred_region
        _
      $region24: #{spatial_path_forward.6} parent=11 // pred_fallthru
        _
    $region12: #{spatial_path_forward.6} parent=5 // pred_fallthru
      _
    %p149 = scmp.lt.s32.totalorder %s10, 2
    // Predicated region
    $region25: #{spatial_path_forward.6} parent=5 // pred_check
      %p150 = pneg %p149
    $region26: #{spatial_path_forward.6} parent=5 // pred_check_branch
      %152 = sbr.rel (%p150) target = $region28
    $region27: #{spatial_path_forward.6} parent=5 // pred_region
      // Predicated region
      $region29: #{spatial_path_forward.6} parent=27 // pred_check
        %p153 = pneg %p30
      $region30: #{spatial_path_forward.6} parent=27 // pred_check_branch
        %155 = sbr.rel (%p153) target = $region32
      $region31: #{spatial_path_forward.6} parent=27 // pred_region
        %p156 = scmp.lt.s32.totalorder %s10, 1
        %s157 = scalar_select %p156, %s10, 1
        %s158 = smul.addr %s157, 20
        %s159 = smul.addr %s158, 8
        %s160 = scalar_lea.vmem %s0, %s159
      $region32: #{spatial_path_forward.6} parent=27 // pred_fallthru
        _
    $region28: #{spatial_path_forward.6} parent=5 // pred_fallthru
      _
    %p161 = scmp.le.s32.totalorder 1, %s10
    %p162 = scmp.lt.s32.totalorder %s10, 3
    %p163 = pnand %p161, %p162
    %p164 = pneg %p163
    // Predicated region
    $region33: #{spatial_path_forward.6} parent=5 // pred_check
      _
    $region34: #{spatial_path_forward.6} parent=5 // pred_check_branch
      %166 = sbr.rel (%p163) target = $region36
    $region35: #{spatial_path_forward.6} parent=5 // pred_region
      %s167 = ssub.s32 %s10, 1
      %p168 = scmp.lt.s32.totalorder %s15, 1
      %s169 = scalar_select %p168, %s15, 1
      %s170 = smul.addr %s169, 20
      %s171 = smul.addr %s170, 8
      %s172 = scalar_lea.vmem %s0, %s171
      %p173 = pneg %p36
      %p174 = pneg %p33
      %p175 = pneg %p57
      %p176 = pneg %p54
      %p177 = pneg %p78
      %p178 = pneg %p75
      %p179 = pneg %p99
      %p180 = pneg %p96
      %p181 = pneg %p125
      %p182 = pneg %p122
      %p183 = scmp.lt.s32.totalorder %s15, 1
      %s184 = scalar_select %p183, %s15, 1
      %s185 = smul.addr %s184, 2
      %s186 = smul.addr %s185, 8
      %s187 = scalar_lea.vmem %s4, %s186
      %p188 = scmp.lt.s32.totalorder %s15, 1
      %s189 = scalar_select %p188, %s15, 1
      %s190 = smul.addr %s189, 20
      %s191 = smul.addr %s190, 8
      %s192 = scalar_lea.vmem %s0, %s191
      %p193 = scmp.lt.s32.totalorder %s15, 1
      %s194 = scalar_select %p193, %s15, 1
      %s195 = smul.addr %s194, 2
      %s196 = smul.addr %s195, 8
      %s197 = scalar_lea.vmem %s4, %s196
      %v199 = vld [vmem:[%s192] sm:$0x1f]
      %v200 = vld [vmem:[%s192 + $0x8] sm:$0x1f]
      %v201 = vld [vmem:[%s192 + $0x10] sm:$0x1f]
      %v202 = vld [vmem:[%s192 + $0x18] sm:$0x1f]
      %v203 = vld [vmem:[%s192 + $0x20] sm:$0x1f]
      %v204 = vld [vmem:[%s192 + $0x28] sm:$0x1f]
      %v205 = vld [vmem:[%s192 + $0x30] sm:$0x1f]
      %v206 = vld [vmem:[%s192 + $0x38] sm:$0x1f]
      %v207 = vld [vmem:[%s192 + $0x40] sm:$0x1f]
      %v208 = vld [vmem:[%s192 + $0x48] sm:$0x1f]
      %v209 = vld [vmem:[%s192 + $0x50] sm:$0x1f]
      %v210 = vld [vmem:[%s192 + $0x58] sm:$0x1f]
      %v211 = vld [vmem:[%s192 + $0x60] sm:$0x1f]
      %v212 = vld [vmem:[%s192 + $0x68] sm:$0x1f]
      %v213 = vld [vmem:[%s192 + $0x78] sm:$0x1f]
      %v214 = vld [vmem:[%s192 + $0x80] sm:$0x1f]
      %v215 = vld [vmem:[%s192 + $0x88] sm:$0x1f]
      %v216 = vld [vmem:[%s192 + $0x90] sm:$0x1f]
      %v217 = vld [vmem:[%s1] sm:$0x7]
      %v218 = vld [vmem:[%s1 + $0x4] sm:$0x7]
      %v219 = vld [vmem:[%s1 + $0x8] sm:$0x7]
      %v220 = vld [vmem:[%s1 + $0xc] sm:$0x7]
      %v221 = vld [vmem:[%s1 + $0x10] sm:$0x7]
      %v222 = vld [vmem:[%s1 + $0x14] sm:$0x7]
      %v223 = vld [vmem:[%s2] sm:$0xf]
      %v224 = vld [vmem:[%s2 + $0x4] sm:$0xf]
      %v225 = vld [vmem:[%s2 + $0x8] sm:$0xf]
      %v226 = vld [vmem:[%s2 + $0xc] sm:$0xf]
      %v227 = vld [vmem:[%s2 + $0x10] sm:$0xf]
      %v228 = vld [vmem:[%s2 + $0x14] sm:$0xf]
      %v229 = vld [vmem:[%s2 + $0x18] sm:$0xf]
      %v230 = vld [vmem:[%s2 + $0x1c] sm:$0xf]
      %v231 = vld [vmem:[%s2 + $0x20] sm:$0xf]
      %v232 = vld [vmem:[%s2 + $0x24] sm:$0xf]
      %v233 = vld [vmem:[%s2 + $0x28] sm:$0xf]
      %v234 = vld [vmem:[%s2 + $0x2c] sm:$0xf]
      %v235 = vld [vmem:[%s2 + $0x30] sm:$0xf]
      %v236 = vld [vmem:[%s2 + $0x34] sm:$0xf]
      %v237 = vld [vmem:[%s2 + $0x38] sm:$0xf]
      %v238 = vld [vmem:[%s2 + $0x3c] sm:$0xf]
      %v239 = vlaneseq
      %v240 = vshrl.u32 %v239, 7
      %v241 = vsub.s32 0, %v240
      %v242 = vrot.slane %v217, %v241
      %v243 = vmul.f32 %v199, %v242
      %v244 = vmul.f32 %v200, %v242
      %v245 = vmul.f32 %v201, %v242
      %v246 = vmul.f32 %v202, %v242
      %v247 = vadd.f32 %v243, 0.0
      %v248 = vadd.f32 %v244, 0.0
      %v249 = vadd.f32 %v245, 0.0
      %v250 = vadd.f32 %v246, 0.0
      %v251 = vlaneseq
      %v252 = vshrl.u32 %v251, 7
      %v253 = vsub.s32 1, %v252
      %v254 = vrot.slane %v217, %v253
      %v255 = vmul.f32 %v204, %v254
      %v256 = vmul.f32 %v205, %v254
      %v257 = vmul.f32 %v206, %v254
      %v258 = vmul.f32 %v207, %v254
      %v259 = vadd.f32 %v247, %v255
      %v260 = vadd.f32 %v248, %v256
      %v261 = vadd.f32 %v249, %v257
      %v262 = vadd.f32 %v250, %v258
      %v263 = vlaneseq
      %v264 = vshrl.u32 %v263, 7
      %v265 = vsub.s32 2, %v264
      %v266 = vrot.slane %v217, %v265
      %v267 = vmul.f32 %v199, %v266
      %v268 = vmul.f32 %v200, %v266
      %v269 = vmul.f32 %v201, %v266
      %v270 = vmul.f32 %v202, %v266
      %v275 = vrot.slane %v267, 1
      %v276 = vrot.slane %v268, 1
      %v277 = vrot.slane %v269, 1
      %v278 = vrot.slane %v270, 1
      %v283 = vadd.f32 %v259, %v275
      %v284 = vadd.f32 %v260, %v276
      %v285 = vadd.f32 %v261, %v277
      %v286 = vadd.f32 %v262, %v278
      %v287 = vlaneseq
      %v288 = vshrl.u32 %v287, 7
      %v289 = vsub.s32 0, %v288
      %v290 = vrot.slane %v218, %v289
      %v291 = vmul.f32 %v209, %v290
      %v292 = vmul.f32 %v210, %v290
      %v293 = vmul.f32 %v211, %v290
      %v294 = vmul.f32 %v212, %v290
      %v295 = vadd.f32 %v283, %v291
      %v296 = vadd.f32 %v284, %v292
      %v297 = vadd.f32 %v285, %v293
      %v298 = vadd.f32 %v286, %v294
      %v299 = vlaneseq
      %v300 = vshrl.u32 %v299, 7
      %v301 = vsub.s32 1, %v300
      %v302 = vrot.slane %v218, %v301
      %v303 = vmul.f32 %v213, %v302
      %v304 = vmul.f32 %v214, %v302
      %v305 = vmul.f32 %v215, %v302
      %v306 = vmul.f32 %v216, %v302
      %v307 = vadd.f32 %v295, %v303
      %v308 = vadd.f32 %v296, %v304
      %v309 = vadd.f32 %v297, %v305
      %v310 = vadd.f32 %v298, %v306
      %v311 = vlaneseq
      %v312 = vshrl.u32 %v311, 7
      %v313 = vsub.s32 2, %v312
      %v314 = vrot.slane %v218, %v313
      %v315 = vmul.f32 %v209, %v314
      %v316 = vmul.f32 %v210, %v314
      %v317 = vmul.f32 %v211, %v314
      %v318 = vmul.f32 %v212, %v314
      %v323 = vrot.slane %v315, 1
      %v324 = vrot.slane %v316, 1
      %v325 = vrot.slane %v317, 1
      %v326 = vrot.slane %v318, 1
      %v331 = vadd.f32 %v307, %v323
      %v332 = vadd.f32 %v308, %v324
      %v333 = vadd.f32 %v309, %v325
      %v334 = vadd.f32 %v310, %v326
      %v335 = vlaneseq
      %v336 = vshrl.u32 %v335, 7
      %v337 = vsub.s32 0, %v336
      %v338 = vrot.slane %v219, %v337
      %v339 = vmul.f32 %v200, %v338
      %v340 = vmul.f32 %v201, %v338
      %v341 = vmul.f32 %v202, %v338
      %v342 = vmul.f32 %v203, %v338
      %v343 = vadd.f32 %v331, %v339
      %v344 = vadd.f32 %v332, %v340
      %v345 = vadd.f32 %v333, %v341
      %v346 = vadd.f32 %v334, %v342
      %v347 = vlaneseq
      %v348 = vshrl.u32 %v347, 7
      %v349 = vsub.s32 1, %v348
      %v350 = vrot.slane %v219, %v349
      %v351 = vmul.f32 %v205, %v350
      %v352 = vmul.f32 %v206, %v350
      %v353 = vmul.f32 %v207, %v350
      %v354 = vmul.f32 %v208, %v350
      %v355 = vadd.f32 %v343, %v351
      %v356 = vadd.f32 %v344, %v352
      %v357 = vadd.f32 %v345, %v353
      %v358 = vadd.f32 %v346, %v354
      %v359 = vlaneseq
      %v360 = vshrl.u32 %v359, 7
      %v361 = vsub.s32 2, %v360
      %v362 = vrot.slane %v219, %v361
      %v363 = vmul.f32 %v200, %v362
      %v364 = vmul.f32 %v201, %v362
      %v365 = vmul.f32 %v202, %v362
      %v366 = vmul.f32 %v203, %v362
      %v371 = vrot.slane %v363, 1
      %v372 = vrot.slane %v364, 1
      %v373 = vrot.slane %v365, 1
      %v374 = vrot.slane %v366, 1
      %v379 = vadd.f32 %v355, %v371
      %v380 = vadd.f32 %v356, %v372
      %v381 = vadd.f32 %v357, %v373
      %v382 = vadd.f32 %v358, %v374
      %v387 = vcombine.low %v379, %v380
      %v388 = vcombine.low %v381, %v382
      %v391 = vpack.c.bf16 %v388, %v387
      %v392 = vlaneseq
      %v393 = vshrl.u32 %v392, 7
      %v394 = vsub.s32 0, %v393
      %v395 = vrot.slane %v220, %v394
      %v396 = vmul.f32 %v199, %v395
      %v397 = vmul.f32 %v200, %v395
      %v398 = vmul.f32 %v201, %v395
      %v399 = vmul.f32 %v202, %v395
      %v400 = vadd.f32 %v396, 0.0
      %v401 = vadd.f32 %v397, 0.0
      %v402 = vadd.f32 %v398, 0.0
      %v403 = vadd.f32 %v399, 0.0
      %v404 = vlaneseq
      %v405 = vshrl.u32 %v404, 7
      %v406 = vsub.s32 1, %v405
      %v407 = vrot.slane %v220, %v406
      %v408 = vmul.f32 %v204, %v407
      %v409 = vmul.f32 %v205, %v407
      %v410 = vmul.f32 %v206, %v407
      %v411 = vmul.f32 %v207, %v407
      %v412 = vadd.f32 %v400, %v408
      %v413 = vadd.f32 %v401, %v409
      %v414 = vadd.f32 %v402, %v410
      %v415 = vadd.f32 %v403, %v411
      %v416 = vlaneseq
      %v417 = vshrl.u32 %v416, 7
      %v418 = vsub.s32 2, %v417
      %v419 = vrot.slane %v220, %v418
      %v420 = vmul.f32 %v199, %v419
      %v421 = vmul.f32 %v200, %v419
      %v422 = vmul.f32 %v201, %v419
      %v423 = vmul.f32 %v202, %v419
      %v428 = vrot.slane %v420, 1
      %v429 = vrot.slane %v421, 1
      %v430 = vrot.slane %v422, 1
      %v431 = vrot.slane %v423, 1
      %v436 = vadd.f32 %v412, %v428
      %v437 = vadd.f32 %v413, %v429
      %v438 = vadd.f32 %v414, %v430
      %v439 = vadd.f32 %v415, %v431
      %v440 = vlaneseq
      %v441 = vshrl.u32 %v440, 7
      %v442 = vsub.s32 0, %v441
      %v443 = vrot.slane %v221, %v442
      %v444 = vmul.f32 %v209, %v443
      %v445 = vmul.f32 %v210, %v443
      %v446 = vmul.f32 %v211, %v443
      %v447 = vmul.f32 %v212, %v443
      %v448 = vadd.f32 %v436, %v444
      %v449 = vadd.f32 %v437, %v445
      %v450 = vadd.f32 %v438, %v446
      %v451 = vadd.f32 %v439, %v447
      %v452 = vlaneseq
      %v453 = vshrl.u32 %v452, 7
      %v454 = vsub.s32 1, %v453
      %v455 = vrot.slane %v221, %v454
      %v456 = vmul.f32 %v213, %v455
      %v457 = vmul.f32 %v214, %v455
      %v458 = vmul.f32 %v215, %v455
      %v459 = vmul.f32 %v216, %v455
      %v460 = vadd.f32 %v448, %v456
      %v461 = vadd.f32 %v449, %v457
      %v462 = vadd.f32 %v450, %v458
      %v463 = vadd.f32 %v451, %v459
      %v464 = vlaneseq
      %v465 = vshrl.u32 %v464, 7
      %v466 = vsub.s32 2, %v465
      %v467 = vrot.slane %v221, %v466
      %v468 = vmul.f32 %v209, %v467
      %v469 = vmul.f32 %v210, %v467
      %v470 = vmul.f32 %v211, %v467
      %v471 = vmul.f32 %v212, %v467
      %v476 = vrot.slane %v468, 1
      %v477 = vrot.slane %v469, 1
      %v478 = vrot.slane %v470, 1
      %v479 = vrot.slane %v471, 1
      %v484 = vadd.f32 %v460, %v476
      %v485 = vadd.f32 %v461, %v477
      %v486 = vadd.f32 %v462, %v478
      %v487 = vadd.f32 %v463, %v479
      %v488 = vlaneseq
      %v489 = vshrl.u32 %v488, 7
      %v490 = vsub.s32 0, %v489
      %v491 = vrot.slane %v222, %v490
      %v492 = vmul.f32 %v200, %v491
      %v493 = vmul.f32 %v201, %v491
      %v494 = vmul.f32 %v202, %v491
      %v495 = vmul.f32 %v203, %v491
      %v496 = vadd.f32 %v484, %v492
      %v497 = vadd.f32 %v485, %v493
      %v498 = vadd.f32 %v486, %v494
      %v499 = vadd.f32 %v487, %v495
      %v500 = vlaneseq
      %v501 = vshrl.u32 %v500, 7
      %v502 = vsub.s32 1, %v501
      %v503 = vrot.slane %v222, %v502
      %v504 = vmul.f32 %v205, %v503
      %v505 = vmul.f32 %v206, %v503
      %v506 = vmul.f32 %v207, %v503
      %v507 = vmul.f32 %v208, %v503
      %v508 = vadd.f32 %v496, %v504
      %v509 = vadd.f32 %v497, %v505
      %v510 = vadd.f32 %v498, %v506
      %v511 = vadd.f32 %v499, %v507
      %v512 = vlaneseq
      %v513 = vshrl.u32 %v512, 7
      %v514 = vsub.s32 2, %v513
      %v515 = vrot.slane %v222, %v514
      %v516 = vmul.f32 %v200, %v515
      %v517 = vmul.f32 %v201, %v515
      %v518 = vmul.f32 %v202, %v515
      %v519 = vmul.f32 %v203, %v515
      %v524 = vrot.slane %v516, 1
      %v525 = vrot.slane %v517, 1
      %v526 = vrot.slane %v518, 1
      %v527 = vrot.slane %v519, 1
      %v532 = vadd.f32 %v508, %v524
      %v533 = vadd.f32 %v509, %v525
      %v534 = vadd.f32 %v510, %v526
      %v535 = vadd.f32 %v511, %v527
      %v540 = vcombine.low %v532, %v533
      %v541 = vcombine.low %v534, %v535
      %v544 = vpack.c.bf16 %v541, %v540
      %v553 = vunpack.c.l.b16 %v231
      %v554 = vunpack.c.l.b16 %v232
      %v555 = vunpack.c.l.b16 %v233
      %v556 = vunpack.c.l.b16 %v234
      %v557 = vunpack.c.l.b16 %v235
      %v558 = vunpack.c.l.b16 %v236
      %v559 = vunpack.c.l.b16 %v237
      %v560 = vunpack.c.l.b16 %v238
      %v561 = vpack.c.b16 %v554, %v553
      %v562 = vpack.c.b16 %v556, %v555
      %v563 = vpack.c.b16 %v558, %v557
      %v564 = vpack.c.b16 %v560, %v559
      %vm569 = vcmask 523264
      %v571 = vsel %vm569, %v544, 0
      %573 = vmatprep.subr.bf16.mxu0 0
      %574 = vmatpush1.bf16.msra.mxu0 %v561
      %575 = vmatprep.subr.bf16.mxu0 0
      %576 = vmatpush1.bf16.msra.mxu0 %v562
      %577 = vmatprep.subr.bf16.mxu0 0
      %578 = vmatpush1.bf16.msra.mxu0 %v563
      %579 = vmatprep.subr.bf16.mxu0 0
      %580 = vmatpush1.bf16.msra.mxu0 %v564
      %581 = vmatprep.subr.bf16.mxu0 0
      %582 = vmatpush1.bf16.msra.mxu0 0
      %583 = vmatprep.subr.bf16.mxu0 0
      %584 = vmatpush1.bf16.msra.mxu0 0
      %585 = vmatprep.subr.bf16.mxu0 0
      %586 = vmatpush1.bf16.msra.mxu0 0
      %587 = vmatprep.subr.bf16.mxu0 0
      %588 = vmatpush1.bf16.msra.mxu0 0
      %589 = vmatprep.subr.bf16.mxu0 0
      %590 = vmatpush1.bf16.msra.mxu0 0
      %591 = vmatprep.subr.bf16.mxu0 0
      %592 = vmatpush1.bf16.msra.mxu0 0
      %593 = vmatprep.subr.bf16.mxu0 0
      %594 = vmatpush1.bf16.msra.mxu0 0
      %595 = vmatprep.subr.bf16.mxu0 0
      %596 = vmatpush1.bf16.msra.mxu0 0
      %597 = vmatprep.subr.bf16.mxu0 0
      %598 = vmatpush1.bf16.msra.mxu0 0
      %599 = vmatprep.subr.bf16.mxu0 0
      %600 = vmatpush1.bf16.msra.mxu0 0
      %601 = vmatprep.subr.bf16.mxu0 0
      %602 = vmatpush1.bf16.msra.mxu0 0
      %603 = vmatprep.subr.bf16.mxu0 0
      %604 = vmatpush1.bf16.msra.mxu0 0
      %605 = vmatprep.mubr.bf16.mxu0 0
      %606 = vmatmul.mubr.bf16.gmra.mrb[0].mxu0 %v571
      %v607 = vpop.f32.mrb[0].mxu0
      %v608 = vadd.f32 0.0, %v607
      %v609 = vpop.f32.mrb[0].mxu0
      %v610 = vpop.f32.mrb[0].mxu0
      %v611 = vadd.f32 0.0, %v610
      %v612 = vpop.f32.mrb[0].mxu0
      %613 = vdwg.mxu0
      %v622 = vunpack.c.l.b16 %v223
      %v623 = vunpack.c.l.b16 %v224
      %v624 = vunpack.c.l.b16 %v225
      %v625 = vunpack.c.l.b16 %v226
      %v626 = vunpack.c.l.b16 %v227
      %v627 = vunpack.c.l.b16 %v228
      %v628 = vunpack.c.l.b16 %v229
      %v629 = vunpack.c.l.b16 %v230
      %v630 = vpack.c.b16 %v623, %v622
      %v631 = vpack.c.b16 %v625, %v624
      %v632 = vpack.c.b16 %v627, %v626
      %v633 = vpack.c.b16 %v629, %v628
      %v639 = vsel %vm569, %v391, 0
      %641 = vmatprep.subr.bf16.mxu0 0
      %642 = vmatpush1.bf16.msra.mxu0 %v630
      %643 = vmatprep.subr.bf16.mxu0 0
      %644 = vmatpush1.bf16.msra.mxu0 %v631
      %645 = vmatprep.subr.bf16.mxu0 0
      %646 = vmatpush1.bf16.msra.mxu0 %v632
      %647 = vmatprep.subr.bf16.mxu0 0
      %648 = vmatpush1.bf16.msra.mxu0 %v633
      %649 = vmatprep.subr.bf16.mxu0 0
      %650 = vmatpush1.bf16.msra.mxu0 0
      %651 = vmatprep.subr.bf16.mxu0 0
      %652 = vmatpush1.bf16.msra.mxu0 0
      %653 = vmatprep.subr.bf16.mxu0 0
      %654 = vmatpush1.bf16.msra.mxu0 0
      %655 = vmatprep.subr.bf16.mxu0 0
      %656 = vmatpush1.bf16.msra.mxu0 0
      %657 = vmatprep.subr.bf16.mxu0 0
      %658 = vmatpush1.bf16.msra.mxu0 0
      %659 = vmatprep.subr.bf16.mxu0 0
      %660 = vmatpush1.bf16.msra.mxu0 0
      %661 = vmatprep.subr.bf16.mxu0 0
      %662 = vmatpush1.bf16.msra.mxu0 0
      %663 = vmatprep.subr.bf16.mxu0 0
      %664 = vmatpush1.bf16.msra.mxu0 0
      %665 = vmatprep.subr.bf16.mxu0 0
      %666 = vmatpush1.bf16.msra.mxu0 0
      %667 = vmatprep.subr.bf16.mxu0 0
      %668 = vmatpush1.bf16.msra.mxu0 0
      %669 = vmatprep.subr.bf16.mxu0 0
      %670 = vmatpush1.bf16.msra.mxu0 0
      %671 = vmatprep.subr.bf16.mxu0 0
      %672 = vmatpush1.bf16.msra.mxu0 0
      %673 = vmatprep.mubr.bf16.mxu0 0
      %674 = vmatmul.mubr.bf16.gmra.mrb[0].mxu0 %v639
      %v675 = vpop.f32.mrb[0].mxu0
      %v676 = vadd.f32 %v608, %v675
      %v677 = vpop.f32.mrb[0].mxu0
      %v678 = vpop.f32.mrb[0].mxu0
      %v679 = vadd.f32 %v611, %v678
      %v680 = vpop.f32.mrb[0].mxu0
      %681 = vdwg.mxu0
      %v682 = vld [vmem:[%s3] sm:$0x1]
      %v684 = vlaneseq
      %v685 = vshrl.u32 %v684, 7
      %v686 = vsub.s32 0, %v685
      %v687 = vrot.slane %v682, %v686
      %v689 = vadd.f32 %v676, %v687
      %v690 = vadd.f32 %v679, %v687
      %v691 = vmax.f32 %v689, 0.0
      %v692 = vmax.f32 %v690, 0.0
      %693 = vst [vmem:[%s197] sm:$0xff] %v691
      %694 = vst [vmem:[%s197 + $0x8] sm:$0xff] %v692
      %p695 = scmp.lt.s32.totalorder %s15, 1
      %s696 = scalar_select %p695, %s15, 1
      %s697 = smul.addr %s696, 2
      %s698 = smul.addr %s697, 8
      %s699 = scalar_lea.vmem %s4, %s698
      // Predicated region
      $region37: #{spatial_path_forward.6} parent=35 // pred_check
        %p700 = pneg %p122
      $region38: #{spatial_path_forward.6} parent=35 // pred_check_branch
        %702 = sbr.rel (%p700) target = $region40
      $region39: #{spatial_path_forward.6} parent=35 // pred_region
        _
      $region40: #{spatial_path_forward.6} parent=35 // pred_fallthru
        _
    $region36: #{spatial_path_forward.6} parent=5 // pred_fallthru
      _
    %p703 = scmp.le.s32.totalorder 2, %s10
    // Predicated region
    $region41: #{spatial_path_forward.6} parent=5 // pred_check
      %p704 = pneg %p703
    $region42: #{spatial_path_forward.6} parent=5 // pred_check_branch
      %706 = sbr.rel (%p704) target = $region44
    $region43: #{spatial_path_forward.6} parent=5 // pred_region
      %s707 = ssub.s32 %s10, 2
      // Predicated region
      $region45: #{spatial_path_forward.6} parent=43 // pred_check
        %p708 = pneg %p128
      $region46: #{spatial_path_forward.6} parent=43 // pred_check_branch
        %710 = sbr.rel (%p708) target = $region48
      $region47: #{spatial_path_forward.6} parent=43 // pred_region
        %p711 = scmp.lt.s32.totalorder %s16, 1
        %s712 = scalar_select %p711, %s16, 1
        %s713 = smul.addr %s712, 2
        %s714 = smul.addr %s713, 8
        %s715 = scalar_lea.vmem %s4, %s714
      $region48: #{spatial_path_forward.6} parent=43 // pred_fallthru
        _
    $region44: #{spatial_path_forward.6} parent=5 // pred_fallthru
      _
  $region6: #{spatial_path_forward.6} parent=0 // loop_footer
    %s14 = sadd.s32 1, %s10
  $region7: #{spatial_path_forward.6} parent=0 // loop_footer_branch
    %9 = sbr.rel target = $region3
  $region8: #{spatial_path_forward.6} parent=0 // loop_exit
    _

// kernel: spatial_path_forward.7
$region0: #{spatial_path_forward.7}
  #allocation0 [shape = 'u32[]', space=smem, size = 0x4, offset = 0x4, fixed_abs, tag = 'smem constant byte address 0x4 - core index']
  #allocation1 [shape = 'u32[144,128]{1,0:T(1,128)}', space=vmem, size = 0x12000, scoped, tag = 'internal scratch']
  %s0 = inlined_call_operand.vmem [shape: f32[2,6,6,128], index: 0, kind: input, shape index: {}]
  %s1 = inlined_call_operand.vmem [shape: f32[1,3,3,128], index: 1, kind: input, shape index: {}]
  %s2 = inlined_call_operand.vmem [shape: bf16[1,128,128], index: 2, kind: input, shape index: {}]
  %s3 = inlined_call_operand.vmem [shape: f32[1,128], index: 3, kind: input, shape index: {}]
  %s4 = inlined_call_operand.hbm [shape: f32[2,16,128], index: 4, kind: output, shape index: {}]
  %s5 = sld [smem:[#allocation0]]
  $region49: #{spatial_path_forward.7} parent=0
    _
  %s7 = ssub.s32 1, %s5
  %s8 = scalar_select 0, %s7, %s5
  $region1: #{spatial_path_forward.7} parent=0
    #allocation2 [shape = 'u8[16384]{0}', space=vmem, size = 0x4000, scoped, tag = 'output window, operand 0']
    #allocation3 [shape = 's32[2]{0}', space=sflag, size = 0x8, scoped, tag = 'scoped memory for spatial_path_forward.7']
    %9 = vsyncpa [#allocation3], 0
    %s10 = scalar_lea.sflag [#allocation3], 1
    %11 = vsyncpa %s10, 0
    loop: start=0, step=1, limit=4
    $region2: #{spatial_path_forward.7} parent=1 // loop_pre_header
      _
    $region3: #{spatial_path_forward.7} parent=1 // loop_header
      %s13 = sphi 0, %s17
      %p14 = scmp.ge.s32.totalorder %s13, 4
      %s23 = sphi 0, %s25
      %s26 = sphi 0, %s23
      %s27 = sphi 0, %s26
      %s43 = sphi 0, %s27
      %s47 = sphi 0, %s47
      %s49 = sphi 0, %s47
      %s50 = sphi 0, %s49
      %s64 = sphi 0, %s50
      %s68 = sphi 0, %s68
      %s70 = sphi 0, %s68
      %s71 = sphi 0, %s70
      %s85 = sphi 0, %s71
      %s89 = sphi 0, %s89
      %s91 = sphi 0, %s89
      %s92 = sphi 0, %s91
      %s106 = sphi 0, %s92
      %s112 = sphi 0, %s114
      %s115 = sphi 0, %s112
      %s116 = sphi 0, %s115
      %s132 = sphi 0, %s116
    $region4: #{spatial_path_forward.7} parent=1 // loop_header_branch
      %16 = sbr.rel (%p14) target = $region8
    $region5: #{spatial_path_forward.7} parent=1 // loop_body
      %s18 = ssub.s32 %s13, 1
      %s19 = ssub.s32 %s13, 2
      %s20 = sadd.s32 %s13, 1
      %s21 = ssub.s32 %s13, %s20
      %p22 = scmp.eq.s32.totalorder %s21, 0
      %s24 = sadd.s32 %s23, 1
      %s25 = scalar_select %p22, %s23, %s24
      %p28 = pneg %p22
      %p29 = scmp.eq.s32.totalorder %s13, 1
      %p30 = por %p28, %p29
      %p31 = scmp.ne.s32.totalorder %s23, %s26
      %p32 = scmp.eq.s32.totalorder %s13, 0
      %p33 = por %p31, %p32
      %p34 = scmp.ne.s32.totalorder %s23, %s26
      %p35 = scmp.eq.s32.totalorder %s18, 1
      %p36 = por %p34, %p35
      %p37 = scmp.ne.s32.totalorder %s26, %s27
      %p38 = scmp.eq.s32.totalorder %s18, 0
      %p39 = por %p37, %p38
      %p40 = scmp.ne.s32.totalorder %s26, %s27
      %p41 = scmp.eq.s32.totalorder %s19, 1
      %p42 = por %p40, %p41
      %p44 = scmp.ne.s32.totalorder %s27, %s43
      %p45 = scmp.eq.s32.totalorder %s19, 0
      %p46 = por %p44, %p45
      %s48 = sadd.s32 %s47, 1
      %p51 = scmp.eq.s32.totalorder %s13, 1
      %p52 = scmp.ne.s32.totalorder %s47, %s49
      %p53 = scmp.eq.s32.totalorder %s13, 0
      %p54 = por %p52, %p53
      %p55 = scmp.ne.s32.totalorder %s47, %s49
      %p56 = scmp.eq.s32.totalorder %s18, 1
      %p57 = por %p55, %p56
      %p58 = scmp.ne.s32.totalorder %s49, %s50
      %p59 = scmp.eq.s32.totalorder %s18, 0
      %p60 = por %p58, %p59
      %p61 = scmp.ne.s32.totalorder %s49, %s50
      %p62 = scmp.eq.s32.totalorder %s19, 1
      %p63 = por %p61, %p62
      %p65 = scmp.ne.s32.totalorder %s50, %s64
      %p66 = scmp.eq.s32.totalorder %s19, 0
      %p67 = por %p65, %p66
      %s69 = sadd.s32 %s68, 1
      %p72 = scmp.eq.s32.totalorder %s13, 1
      %p73 = scmp.ne.s32.totalorder %s68, %s70
      %p74 = scmp.eq.s32.totalorder %s13, 0
      %p75 = por %p73, %p74
      %p76 = scmp.ne.s32.totalorder %s68, %s70
      %p77 = scmp.eq.s32.totalorder %s18, 1
      %p78 = por %p76, %p77
      %p79 = scmp.ne.s32.totalorder %s70, %s71
      %p80 = scmp.eq.s32.totalorder %s18, 0
      %p81 = por %p79, %p80
      %p82 = scmp.ne.s32.totalorder %s70, %s71
      %p83 = scmp.eq.s32.totalorder %s19, 1
      %p84 = por %p82, %p83
      %p86 = scmp.ne.s32.totalorder %s71, %s85
      %p87 = scmp.eq.s32.totalorder %s19, 0
      %p88 = por %p86, %p87
      %s90 = sadd.s32 %s89, 1
      %p93 = scmp.eq.s32.totalorder %s13, 1
      %p94 = scmp.ne.s32.totalorder %s89, %s91
      %p95 = scmp.eq.s32.totalorder %s13, 0
      %p96 = por %p94, %p95
      %p97 = scmp.ne.s32.totalorder %s89, %s91
      %p98 = scmp.eq.s32.totalorder %s18, 1
      %p99 = por %p97, %p98
      %p100 = scmp.ne.s32.totalorder %s91, %s92
      %p101 = scmp.eq.s32.totalorder %s18, 0
      %p102 = por %p100, %p101
      %p103 = scmp.ne.s32.totalorder %s91, %s92
      %p104 = scmp.eq.s32.totalorder %s19, 1
      %p105 = por %p103, %p104
      %p107 = scmp.ne.s32.totalorder %s92, %s106
      %p108 = scmp.eq.s32.totalorder %s19, 0
      %p109 = por %p107, %p108
      %s110 = ssub.s32 %s13, %s20
      %p111 = scmp.eq.s32.totalorder %s110, 0
      %s113 = sadd.s32 %s112, 1
      %s114 = scalar_select %p111, %s112, %s113
      %p117 = pneg %p111
      %p118 = scmp.eq.s32.totalorder %s13, 1
      %p119 = por %p117, %p118
      %p120 = scmp.ne.s32.totalorder %s112, %s115
      %p121 = scmp.eq.s32.totalorder %s13, 0
      %p122 = por %p120, %p121
      %p123 = scmp.ne.s32.totalorder %s112, %s115
      %p124 = scmp.eq.s32.totalorder %s18, 1
      %p125 = por %p123, %p124
      %p126 = scmp.ne.s32.totalorder %s115, %s116
      %p127 = scmp.eq.s32.totalorder %s18, 0
      %p128 = por %p126, %p127
      %p129 = scmp.ne.s32.totalorder %s115, %s116
      %p130 = scmp.eq.s32.totalorder %s19, 1
      %p131 = por %p129, %p130
      %p133 = scmp.ne.s32.totalorder %s116, %s132
      %p134 = scmp.eq.s32.totalorder %s19, 0
      %p135 = por %p133, %p134
      %p136 = scmp.le.s32.totalorder 1, %s13
      %p137 = scmp.lt.s32.totalorder %s13, 3
      %p138 = pnand %p136, %p137
      %p139 = pneg %p138
      // Predicated region
      $region9: #{spatial_path_forward.7} parent=5 // pred_check
        _
      $region10: #{spatial_path_forward.7} parent=5 // pred_check_branch
        %141 = sbr.rel (%p138) target = $region12
      $region11: #{spatial_path_forward.7} parent=5 // pred_region
        %s142 = ssub.s32 %s13, 1
        // Predicated region
        $region13: #{spatial_path_forward.7} parent=11 // pred_check
          %p143 = pneg %p60
        $region14: #{spatial_path_forward.7} parent=11 // pred_check_branch
          %145 = sbr.rel (%p143) target = $region16
        $region15: #{spatial_path_forward.7} parent=11 // pred_region
          _
        $region16: #{spatial_path_forward.7} parent=11 // pred_fallthru
          _
        // Predicated region
        $region17: #{spatial_path_forward.7} parent=11 // pred_check
          %p146 = pneg %p81
        $region18: #{spatial_path_forward.7} parent=11 // pred_check_branch
          %148 = sbr.rel (%p146) target = $region20
        $region19: #{spatial_path_forward.7} parent=11 // pred_region
          _
        $region20: #{spatial_path_forward.7} parent=11 // pred_fallthru
          _
        // Predicated region
        $region21: #{spatial_path_forward.7} parent=11 // pred_check
          %p149 = pneg %p102
        $region22: #{spatial_path_forward.7} parent=11 // pred_check_branch
          %151 = sbr.rel (%p149) target = $region24
        $region23: #{spatial_path_forward.7} parent=11 // pred_region
          _
        $region24: #{spatial_path_forward.7} parent=11 // pred_fallthru
          _
      $region12: #{spatial_path_forward.7} parent=5 // pred_fallthru
        _
      %p152 = scmp.lt.s32.totalorder %s13, 2
      // Predicated region
      $region25: #{spatial_path_forward.7} parent=5 // pred_check
        %p153 = pneg %p152
      $region26: #{spatial_path_forward.7} parent=5 // pred_check_branch
        %155 = sbr.rel (%p153) target = $region28
      $region27: #{spatial_path_forward.7} parent=5 // pred_region
        // Predicated region
        $region29: #{spatial_path_forward.7} parent=27 // pred_check
          %p156 = pneg %p33
        $region30: #{spatial_path_forward.7} parent=27 // pred_check_branch
          %158 = sbr.rel (%p156) target = $region32
        $region31: #{spatial_path_forward.7} parent=27 // pred_region
          %p159 = scmp.lt.s32.totalorder %s13, 1
          %s160 = scalar_select %p159, %s13, 1
          %s161 = smul.addr %s160, 6
          %s162 = smul.addr %s161, 8
          %s163 = scalar_lea.vmem %s0, %s162
        $region32: #{spatial_path_forward.7} parent=27 // pred_fallthru
          _
      $region28: #{spatial_path_forward.7} parent=5 // pred_fallthru
        _
      %p164 = scmp.le.s32.totalorder 1, %s13
      %p165 = scmp.lt.s32.totalorder %s13, 3
      %p166 = pnand %p164, %p165
      %p167 = pneg %p166
      // Predicated region
      $region33: #{spatial_path_forward.7} parent=5 // pred_check
        _
      $region34: #{spatial_path_forward.7} parent=5 // pred_check_branch
        %169 = sbr.rel (%p166) target = $region36
      $region35: #{spatial_path_forward.7} parent=5 // pred_region
        %s170 = ssub.s32 %s13, 1
        %p171 = scmp.lt.s32.totalorder %s18, 1
        %s172 = scalar_select %p171, %s18, 1
        %s173 = smul.addr %s172, 6
        %s174 = smul.addr %s173, 8
        %s175 = scalar_lea.vmem %s0, %s174
        %p176 = pneg %p39
        %p177 = pneg %p36
        %p178 = pneg %p60
        %p179 = pneg %p57
        %p180 = pneg %p81
        %p181 = pneg %p78
        %p182 = pneg %p102
        %p183 = pneg %p99
        %p184 = pneg %p128
        %p185 = pneg %p125
        %s186 = sand.u32 %s115, 1
        %s187 = scalar_lea.sflag [#allocation3], %s186
        %s188 = sand.u32 %s115, 1
        %s189 = smul.addr %s188, 16
        %s190 = scalar_lea.vmem [#allocation2], %s189
        %p191 = scmp.lt.s32.totalorder %s18, 1
        %s192 = scalar_select %p191, %s18, 1
        %s193 = smul.addr %s192, 6
        %s194 = smul.addr %s193, 8
        %s195 = scalar_lea.vmem %s0, %s194
        %v197 = vld [vmem:[%s195] sm:$0x3f]
        %v198 = vld [vmem:[%s195 + $0x8] sm:$0x3f]
        %v199 = vld [vmem:[%s195 + $0x10] sm:$0x3f]
        %v200 = vld [vmem:[%s195 + $0x18] sm:$0x3f]
        %v201 = vld [vmem:[%s195 + $0x20] sm:$0x3f]
        %v202 = vld [vmem:[%s195 + $0x28] sm:$0x3f]
        %v203 = vld [vmem:[%s1] sm:$0x7]
        %v204 = vld [vmem:[%s1 + $0x4] sm:$0x7]
        %v205 = vld [vmem:[%s1 + $0x8] sm:$0x7]
        %v206 = vld [vmem:[%s2] sm:$0xf]
        %v207 = vld [vmem:[%s2 + $0x4] sm:$0xf]
        %v208 = vld [vmem:[%s2 + $0x8] sm:$0xf]
        %v209 = vld [vmem:[%s2 + $0xc] sm:$0xf]
        %v210 = vld [vmem:[%s2 + $0x10] sm:$0xf]
        %v211 = vld [vmem:[%s2 + $0x14] sm:$0xf]
        %v212 = vld [vmem:[%s2 + $0x18] sm:$0xf]
        %v213 = vld [vmem:[%s2 + $0x1c] sm:$0xf]
        %v214 = vld [vmem:[%s2 + $0x20] sm:$0xf]
        %v215 = vld [vmem:[%s2 + $0x24] sm:$0xf]
        %v216 = vld [vmem:[%s2 + $0x28] sm:$0xf]
        %v217 = vld [vmem:[%s2 + $0x2c] sm:$0xf]
        %v218 = vld [vmem:[%s2 + $0x30] sm:$0xf]
        %v219 = vld [vmem:[%s2 + $0x34] sm:$0xf]
        %v220 = vld [vmem:[%s2 + $0x38] sm:$0xf]
        %v221 = vld [vmem:[%s2 + $0x3c] sm:$0xf]
        %v222 = vlaneseq
        %v223 = vshrl.u32 %v222, 7
        %v224 = vsub.s32 0, %v223
        %v225 = vrot.slane %v203, %v224
        %v226 = vmul.f32 %v197, %v225
        %v227 = vmul.f32 %v198, %v225
        %v228 = vmul.f32 %v199, %v225
        %v229 = vmul.f32 %v200, %v225
        %v230 = vadd.f32 %v226, 0.0
        %v231 = vadd.f32 %v227, 0.0
        %v232 = vadd.f32 %v228, 0.0
        %v233 = vadd.f32 %v229, 0.0
        %v234 = vlaneseq
        %v235 = vshrl.u32 %v234, 7
        %v236 = vsub.s32 1, %v235
        %v237 = vrot.slane %v203, %v236
        %v238 = vmul.f32 %v197, %v237
        %v239 = vmul.f32 %v198, %v237
        %v240 = vmul.f32 %v199, %v237
        %v241 = vmul.f32 %v200, %v237
        %v246 = vrot.slane %v238, 1
        %v247 = vrot.slane %v239, 1
        %v248 = vrot.slane %v240, 1
        %v249 = vrot.slane %v241, 1
        %v254 = vadd.f32 %v230, %v246
        %v255 = vadd.f32 %v231, %v247
        %v256 = vadd.f32 %v232, %v248
        %v257 = vadd.f32 %v233, %v249
        %v258 = vlaneseq
        %v259 = vshrl.u32 %v258, 7
        %v260 = vsub.s32 2, %v259
        %v261 = vrot.slane %v203, %v260
        %v262 = vmul.f32 %v197, %v261
        %v263 = vmul.f32 %v198, %v261
        %v264 = vmul.f32 %v199, %v261
        %v265 = vmul.f32 %v200, %v261
        %v270 = vrot.slane %v262, 2
        %v271 = vrot.slane %v263, 2
        %v272 = vrot.slane %v264, 2
        %v273 = vrot.slane %v265, 2
        %v278 = vadd.f32 %v254, %v270
        %v279 = vadd.f32 %v255, %v271
        %v280 = vadd.f32 %v256, %v272
        %v281 = vadd.f32 %v257, %v273
        %v282 = vlaneseq
        %v283 = vshrl.u32 %v282, 7
        %v284 = vsub.s32 0, %v283
        %v285 = vrot.slane %v204, %v284
        %v286 = vmul.f32 %v198, %v285
        %v287 = vmul.f32 %v199, %v285
        %v288 = vmul.f32 %v200, %v285
        %v289 = vmul.f32 %v201, %v285
        %v290 = vadd.f32 %v278, %v286
        %v291 = vadd.f32 %v279, %v287
        %v292 = vadd.f32 %v280, %v288
        %v293 = vadd.f32 %v281, %v289
        %v294 = vlaneseq
        %v295 = vshrl.u32 %v294, 7
        %v296 = vsub.s32 1, %v295
        %v297 = vrot.slane %v204, %v296
        %v298 = vmul.f32 %v198, %v297
        %v299 = vmul.f32 %v199, %v297
        %v300 = vmul.f32 %v200, %v297
        %v301 = vmul.f32 %v201, %v297
        %v306 = vrot.slane %v298, 1
        %v307 = vrot.slane %v299, 1
        %v308 = vrot.slane %v300, 1
        %v309 = vrot.slane %v301, 1
        %v314 = vadd.f32 %v290, %v306
        %v315 = vadd.f32 %v291, %v307
        %v316 = vadd.f32 %v292, %v308
        %v317 = vadd.f32 %v293, %v309
        %v318 = vlaneseq
        %v319 = vshrl.u32 %v318, 7
        %v320 = vsub.s32 2, %v319
        %v321 = vrot.slane %v204, %v320
        %v322 = vmul.f32 %v198, %v321
        %v323 = vmul.f32 %v199, %v321
        %v324 = vmul.f32 %v200, %v321
        %v325 = vmul.f32 %v201, %v321
        %v330 = vrot.slane %v322, 2
        %v331 = vrot.slane %v323, 2
        %v332 = vrot.slane %v324, 2
        %v333 = vrot.slane %v325, 2
        %v338 = vadd.f32 %v314, %v330
        %v339 = vadd.f32 %v315, %v331
        %v340 = vadd.f32 %v316, %v332
        %v341 = vadd.f32 %v317, %v333
        %v342 = vlaneseq
        %v343 = vshrl.u32 %v342, 7
        %v344 = vsub.s32 0, %v343
        %v345 = vrot.slane %v205, %v344
        %v346 = vmul.f32 %v199, %v345
        %v347 = vmul.f32 %v200, %v345
        %v348 = vmul.f32 %v201, %v345
        %v349 = vmul.f32 %v202, %v345
        %v350 = vadd.f32 %v338, %v346
        %v351 = vadd.f32 %v339, %v347
        %v352 = vadd.f32 %v340, %v348
        %v353 = vadd.f32 %v341, %v349
        %v354 = vlaneseq
        %v355 = vshrl.u32 %v354, 7
        %v356 = vsub.s32 1, %v355
        %v357 = vrot.slane %v205, %v356
        %v358 = vmul.f32 %v199, %v357
        %v359 = vmul.f32 %v200, %v357
        %v360 = vmul.f32 %v201, %v357
        %v361 = vmul.f32 %v202, %v357
        %v366 = vrot.slane %v358, 1
        %v367 = vrot.slane %v359, 1
        %v368 = vrot.slane %v360, 1
        %v369 = vrot.slane %v361, 1
        %v374 = vadd.f32 %v350, %v366
        %v375 = vadd.f32 %v351, %v367
        %v376 = vadd.f32 %v352, %v368
        %v377 = vadd.f32 %v353, %v369
        %v378 = vlaneseq
        %v379 = vshrl.u32 %v378, 7
        %v380 = vsub.s32 2, %v379
        %v381 = vrot.slane %v205, %v380
        %v382 = vmul.f32 %v199, %v381
        %v383 = vmul.f32 %v200, %v381
        %v384 = vmul.f32 %v201, %v381
        %v385 = vmul.f32 %v202, %v381
        %v390 = vrot.slane %v382, 2
        %v391 = vrot.slane %v383, 2
        %v392 = vrot.slane %v384, 2
        %v393 = vrot.slane %v385, 2
        %v398 = vadd.f32 %v374, %v390
        %v399 = vadd.f32 %v375, %v391
        %v400 = vadd.f32 %v376, %v392
        %v401 = vadd.f32 %v377, %v393
        %v406 = vcombine.low %v398, %v399
        %v407 = vcombine.low %v400, %v401
        %v410 = vpack.c.bf16 %v407, %v406
        %v411 = vld [vmem:[%s3] sm:$0x1]
        %v413 = vlaneseq
        %v414 = vshrl.u32 %v413, 7
        %v415 = vsub.s32 0, %v414
        %v416 = vrot.slane %v411, %v415
        %v434 = vunpack.c.l.b16 %v206
        %v435 = vunpack.c.l.b16 %v207
        %v436 = vunpack.c.l.b16 %v208
        %v437 = vunpack.c.l.b16 %v209
        %v438 = vunpack.c.l.b16 %v210
        %v439 = vunpack.c.l.b16 %v211
        %v440 = vunpack.c.l.b16 %v212
        %v441 = vunpack.c.l.b16 %v213
        %v442 = vunpack.c.l.b16 %v214
        %v443 = vunpack.c.l.b16 %v215
        %v444 = vunpack.c.l.b16 %v216
        %v445 = vunpack.c.l.b16 %v217
        %v446 = vunpack.c.l.b16 %v218
        %v447 = vunpack.c.l.b16 %v219
        %v448 = vunpack.c.l.b16 %v220
        %v449 = vunpack.c.l.b16 %v221
        %v450 = vpack.c.b16 %v435, %v434
        %v451 = vpack.c.b16 %v437, %v436
        %v452 = vpack.c.b16 %v439, %v438
        %v453 = vpack.c.b16 %v441, %v440
        %v454 = vpack.c.b16 %v443, %v442
        %v455 = vpack.c.b16 %v445, %v444
        %v456 = vpack.c.b16 %v447, %v446
        %v457 = vpack.c.b16 %v449, %v448
        %466 = vmatprep.subr.bf16.mxu0 0
        %467 = vmatpush1.bf16.msra.mxu0 %v450
        %468 = vmatprep.subr.bf16.mxu0 0
        %469 = vmatpush1.bf16.msra.mxu0 %v451
        %470 = vmatprep.subr.bf16.mxu0 0
        %471 = vmatpush1.bf16.msra.mxu0 %v452
        %472 = vmatprep.subr.bf16.mxu0 0
        %473 = vmatpush1.bf16.msra.mxu0 %v453
        %474 = vmatprep.subr.bf16.mxu0 0
        %475 = vmatpush1.bf16.msra.mxu0 %v454
        %476 = vmatprep.subr.bf16.mxu0 0
        %477 = vmatpush1.bf16.msra.mxu0 %v455
        %478 = vmatprep.subr.bf16.mxu0 0
        %479 = vmatpush1.bf16.msra.mxu0 %v456
        %480 = vmatprep.subr.bf16.mxu0 0
        %481 = vmatpush1.bf16.msra.mxu0 %v457
        %482 = vmatprep.subr.bf16.mxu0 0
        %483 = vmatpush1.bf16.msra.mxu0 0
        %484 = vmatprep.subr.bf16.mxu0 0
        %485 = vmatpush1.bf16.msra.mxu0 0
        %486 = vmatprep.subr.bf16.mxu0 0
        %487 = vmatpush1.bf16.msra.mxu0 0
        %488 = vmatprep.subr.bf16.mxu0 0
        %489 = vmatpush1.bf16.msra.mxu0 0
        %490 = vmatprep.subr.bf16.mxu0 0
        %491 = vmatpush1.bf16.msra.mxu0 0
        %492 = vmatprep.subr.bf16.mxu0 0
        %493 = vmatpush1.bf16.msra.mxu0 0
        %494 = vmatprep.subr.bf16.mxu0 0
        %495 = vmatpush1.bf16.msra.mxu0 0
        %496 = vmatprep.subr.bf16.mxu0 0
        %497 = vmatpush1.bf16.msra.mxu0 0
        %498 = vmatprep.mubr.bf16.mxu0 0
        %499 = vmatmul.mubr.bf16.gmra.mrb[0].mxu0 %v410
        %v500 = vpop.f32.mrb[0].mxu0
        %v501 = vadd.f32 %v416, %v500
        %v502 = vpop.f32.mrb[0].mxu0
        %v503 = vpop.f32.mrb[0].mxu0
        %v504 = vadd.f32 %v416, %v503
        %v505 = vpop.f32.mrb[0].mxu0
        %506 = vdwg.mxu0
        %v507 = vmax.f32 %v501, 0.0
        %v508 = vmax.f32 %v504, 0.0
        %509 = vst [vmem:[%s190] sm:$0xff] %v507
        %510 = vst [vmem:[%s190 + $0x8] sm:$0xff] %v508
        %s511 = sand.u32 %s115, 1
        %s512 = scalar_lea.sflag [#allocation3], %s511
        %s513 = sand.u32 %s115, 1
        %s514 = smul.addr %s513, 16
        %s515 = scalar_lea.vmem [#allocation2], %s514
        // Predicated region
        $region37: #{spatial_path_forward.7} parent=35 // pred_check
          %p516 = pneg %p125
        $region38: #{spatial_path_forward.7} parent=35 // pred_check_branch
          %518 = sbr.rel (%p516) target = $region40
        $region39: #{spatial_path_forward.7} parent=35 // pred_region
          %s520 = ssub.s32 256, 256
          %521 = vsyncadd %s512, %s520
          %s522 = smul.addr %s18, 2
          %s523 = smul.addr %s522, 128
          %s524 = scalar_lea.hbm %s4, %s523
          %s525 = sshll.u32 %s515, 4
          %s526 = int_to_ptr.vmem [resolvable:$true] %s525
          %531 = dma.vmem_to_hbm [thread:$0]  %s526, 256, %s524, %s512, 128, 128, 8
        $region40: #{spatial_path_forward.7} parent=35 // pred_fallthru
          _
      $region36: #{spatial_path_forward.7} parent=5 // pred_fallthru
        _
      %p532 = scmp.le.s32.totalorder 2, %s13
      // Predicated region
      $region41: #{spatial_path_forward.7} parent=5 // pred_check
        %p533 = pneg %p532
      $region42: #{spatial_path_forward.7} parent=5 // pred_check_branch
        %535 = sbr.rel (%p533) target = $region44
      $region43: #{spatial_path_forward.7} parent=5 // pred_region
        %s536 = ssub.s32 %s13, 2
        // Predicated region
        $region45: #{spatial_path_forward.7} parent=43 // pred_check
          %p537 = pneg %p131
        $region46: #{spatial_path_forward.7} parent=43 // pred_check_branch
          %539 = sbr.rel (%p537) target = $region48
        $region47: #{spatial_path_forward.7} parent=43 // pred_region
          %s540 = sand.u32 %s116, 1
          %s541 = scalar_lea.sflag [#allocation3], %s540
          %s542 = sand.u32 %s116, 1
          %s543 = smul.addr %s542, 16
          %s544 = scalar_lea.vmem [#allocation2], %s543
          %545 = dma.done %s541, 256
        $region48: #{spatial_path_forward.7} parent=43 // pred_fallthru
          _
      $region44: #{spatial_path_forward.7} parent=5 // pred_fallthru
        _
    $region6: #{spatial_path_forward.7} parent=1 // loop_footer
      %s17 = sadd.s32 1, %s13
    $region7: #{spatial_path_forward.7} parent=1 // loop_footer_branch
      %12 = sbr.rel target = $region3
    $region8: #{spatial_path_forward.7} parent=1 // loop_exit
      _
    %546 = vsyncpa [#allocation3], 1
    %s547 = scalar_lea.sflag [#allocation3], 1
    %548 = vsyncpa %s547, 1

</llo_original>
